<compile_context>
chip_gen: v5e
topology: v5e:2x2
jax: 0.10.0
libtpu: 0.0.40
codegen_flags: <defaults>
</compile_context>

<pallas_src>
import numpy as np
import jax
import jax.numpy as jnp
from jax.experimental import pallas as pl
from jax.experimental.pallas import tpu as pltpu


# --------------------------- static layout constants -----------------------

Q_PAD = 128                                # lane-dense padded width of the q output
GAT_CFG = ((4, 64), (4, 64), (2, 128))     # (heads, out_channels) per GATv2 layer
HC = 256                                   # heads * out_channels (same for all layers)
ATT_PAD = 4                                # att slab column padding (max heads)
FIN_PAD = 256                              # node-feature lane padding (layer-1 K dim)
AGENT_PAD = 128                            # agent-feature lane padding

# head layers inside head_w slab: (weight_rows, col_offset, out_cols, relu)
HEAD_LAYOUT = (
    (384,    0, 512, True),    # blockdiag(graph_fc.L1, agent_fc.L1)
    (512,  512, 512, True),    # blockdiag(graph_fc.L2, agent_fc.L2)
    (512, 1024, 256, True),    # blockdiag(graph_fc.L3, agent_fc.L3)
    (256, 1280, 128, False),   # blockdiag(graph_fc.L4, agent_fc.L4) -> [graph|agent]
    (128, 1408, 256, True),    # fc_output.L1 (acts on the fused 128-wide embedding)
    (256, 1664, 128, True),    # fc_output.L2
    (128, 1792, Q_PAD, False), # fc_output.L3 (zero-padded to Q_PAD lanes)
)
HEAD_W_COLS = 1920


# ----------------------------- fused Pallas kernel -------------------------

def dqnv2_kernel(x_ref, mask_ref, eattr_ref, memberT_ref, agent_ref,
                 w_lr_ref, att_ref, head_w_ref, gat_b_ref, head_b_ref, out_ref):
    mask = mask_ref[0]           # [N, N]  (1 iff edge j->i, self loops included)
    eattr = eattr_ref[0]         # [N, N]  scalar edge attribute
    h = x_ref[0]                 # [N, 256] node features (zero-padded lanes)
    N = h.shape[0]

    # -------- 3x GATv2Conv(edge_dim=1, concat=True, slope=0.2) + ReLU --------
    for l, (H, C) in enumerate(GAT_CFG):
        gb = gat_b_ref[l]                                    # [4, 256] f32
        bl, br, we, b_out = gb[0:1], gb[1:2], gb[2:3], gb[3:4]
        xlr = jnp.dot(h.astype(jnp.bfloat16), w_lr_ref[l],
                      preferred_element_type=jnp.float32)    # [N, 512] = [x_l | x_r]
        xl = xlr[:, :HC] + bl                                # source messages
        xr = xlr[:, HC:] + br                                # target
        # comb[i, j, :] = x_l[j] + x_r[i] + W_e * e_ij  (all heads, lane width HC)
        comb = xl[None, :, :] + xr[:, None, :] + eattr[:, :, None] * we
        act = jnp.maximum(comb, 0.2 * comb)                  # LeakyReLU(0.2)
        # all-head attention logits: one MXU matmul vs block-diag [HC, heads] att
        logits = jnp.dot(act.reshape(N * N, HC).astype(jnp.bfloat16), att_ref[l],
                         preferred_element_type=jnp.float32)[:, :H].reshape(N, N, H)
        masked = jnp.where(mask[:, :, None] > 0, logits, -1e30)
        mmax = jnp.max(masked, axis=1, keepdims=True)
        p = jnp.exp(masked - mmax)          # masked entries underflow to exactly 0
        alpha = p * pl.reciprocal(jnp.sum(p, axis=1, keepdims=True), approx=True)
        # per-head aggregation (einsum('ijh,jhc->ihc') unrolled over the <=4 heads):
        # avoids the old [N,N,HC] f32 temp and the f32 expand matmul.
        head_outs = []
        for k in range(H):
            a_k = alpha[:, :, k].astype(jnp.bfloat16)               # [N, N]
            xl_k = xl[:, k * C:(k + 1) * C].astype(jnp.bfloat16)    # [N, C]
            head_outs.append(jnp.dot(a_k, xl_k, preferred_element_type=jnp.float32))
        h = jnp.maximum(jnp.concatenate(head_outs, axis=-1) + b_out, 0.0)  # [N, 256]

    # -------- GlobalAttention pooling: softmax(gate_nn(h)) within each graph ---
    hb = h.astype(jnp.bfloat16)
    gate = jnp.dot(hb, att_ref[3][:, 0:1],
                   preferred_element_type=jnp.float32) + head_b_ref[7:8, 0:1]  # [N, 1]
    memberT = memberT_ref[0]                                  # [N, B] one-hot membership
    # NOTE: a graph with zero member nodes would silently get a uniform pooling
    # distribution over all nodes; callers must supply >= 1 node per pooled graph.
    scores = jnp.where(memberT > 0, gate, -1e30)
    smax = jnp.max(scores, axis=0, keepdims=True)
    sp = jnp.exp(scores - smax)
    pool_alpha = sp * pl.reciprocal(jnp.sum(sp, axis=0, keepdims=True), approx=True)
    pooled = jax.lax.dot_general(pool_alpha.astype(jnp.bfloat16), hb,
                                 (((0,), (0,)), ((), ())),
                                 preferred_element_type=jnp.float32)          # [B, 256]

    # -------- graph_fc (+) agent_fc (block-diagonal) + fc_output ---------------
    z = jnp.concatenate([pooled, agent_ref[0]], axis=-1)     # [B, 384] = [pooled|agent]
    for i, (rows, c0, cols, relu) in enumerate(HEAD_LAYOUT):
        w = head_w_ref[0:rows, c0:c0 + cols]                  # bf16 weight slice
        z = jnp.dot(z.astype(jnp.bfloat16), w,
                    preferred_element_type=jnp.float32) + head_b_ref[i:i + 1, 0:cols]
        if relu:
            z = jnp.maximum(z, 0.0)
    out_ref[0] = z                                            # [B, Q_PAD]


# ----------------------------- pallas_call glue ----------------------------

def dqnv2_forward(kernel_params, x_pad, dense_mask, dense_eattr, memberT, agent_pad,
                  num_actions):
    """All data inputs carry a leading G (graph-instance / timestep) axis."""
    G = x_pad.shape[0]
    B = memberT.shape[-1]
    data = [x_pad, dense_mask, dense_eattr, memberT, agent_pad]

    def batched(shape):
        nd = len(shape)
        return pl.BlockSpec((1,) + tuple(shape[1:]),
                            lambda g, _nd=nd: (g,) + (0,) * (_nd - 1))

    def pinned(shape):
        nd = len(shape)
        return pl.BlockSpec(tuple(shape), lambda g, _nd=nd: (0,) * _nd)

    out = pl.pallas_call(
        dqnv2_kernel,
        grid=(G,),
        in_specs=[batched(a.shape) for a in data]
                 + [pinned(p.shape) for p in kernel_params],
        out_specs=batched((G, B, Q_PAD)),
        out_shape=jax.ShapeDtypeStruct((G, B, Q_PAD), jnp.float32),
        compiler_params=pltpu.CompilerParams(dimension_semantics=("parallel",)),
    )(*data, *kernel_params)
    return out[:, :, :num_actions]        # host glue: drop lane padding


# ----------------------------- parameters ----------------------------------

def xavier_uniform(key, fan_in, fan_out):
    limit = float(np.sqrt(6.0 / (fan_in + fan_out)))
    return jax.random.uniform(key, (fan_in, fan_out), jnp.float32, -limit, limit)


def make_linear(key, fin, fout):
    kw, kb = jax.random.split(key)
    w = xavier_uniform(kw, fin, fout)
    bound = float(1.0 / np.sqrt(fin))
    b = jax.random.uniform(kb, (fout,), jnp.float32, -bound, bound)
    return w, b


def make_gat_params(key, fin, cout, heads):
    ks = jax.random.split(key, 4)
    hc = heads * cout
    return dict(
        wl=xavier_uniform(ks[0], fin, hc), bl=jnp.zeros((hc,), jnp.float32),
        wr=xavier_uniform(ks[1], fin, hc), br=jnp.zeros((hc,), jnp.float32),
        we=xavier_uniform(ks[2], 1, hc),                  # lin_edge (no bias)
        att=xavier_uniform(ks[3], heads, cout),           # attention vector (glorot)
        bias=jnp.zeros((hc,), jnp.float32),
    )


def make_params(key, num_actions):
    ks = jax.random.split(key, 15)
    p = {}
    p["gat1"] = make_gat_params(ks[0], 4, 64, 4)
    p["gat2"] = make_gat_params(ks[1], 256, 64, 4)
    p["gat3"] = make_gat_params(ks[2], 256, 128, 2)
    p["gate"] = make_linear(ks[3], 256, 1)
    p["graph_fc"] = [make_linear(ks[4], 256, 256), make_linear(ks[5], 256, 256),
                     make_linear(ks[6], 256, 128), make_linear(ks[7], 128, 64)]
    p["agent_fc"] = [make_linear(ks[8], 68, 256), make_linear(ks[9], 256, 256),
                     make_linear(ks[10], 256, 128), make_linear(ks[11], 128, 64)]
    p["fc_output"] = [make_linear(ks[12], 128, 256), make_linear(ks[13], 256, 128),
                      make_linear(ks[14], 128, num_actions)]
    return p


def prepare_kernel_params(params, num_actions):
    """One-time packing of all weights/biases into 5 kernel-ready slabs."""
    # -- GAT slabs ------------------------------------------------------------
    w_lr = np.zeros((3, FIN_PAD, 2 * HC), np.float32)
    att = np.zeros((4, HC, ATT_PAD), np.float32)
    gat_b = np.zeros((3, 4, HC), np.float32)
    for l, (name, (H, C)) in enumerate(zip(("gat1", "gat2", "gat3"), GAT_CFG)):
        gp = params[name]
        fin = gp["wl"].shape[0]
        w_lr[l, :fin, :HC] = np.asarray(gp["wl"])
        w_lr[l, :fin, HC:] = np.asarray(gp["wr"])
        for h in range(H):
            att[l, h * C:(h + 1) * C, h] = np.asarray(gp["att"][h])  # block-diag att
        gat_b[l, 0] = np.asarray(gp["bl"])
        gat_b[l, 1] = np.asarray(gp["br"])
        gat_b[l, 2] = np.asarray(gp["we"]).reshape(-1)
        gat_b[l, 3] = np.asarray(gp["bias"])
    wg, bg = params["gate"]
    att[3, :, 0] = np.asarray(wg).reshape(-1)                        # pooling gate weight

    # -- fused head: graph_fc (+) agent_fc block-diagonals, then fc_output -----
    head_w = np.zeros((512, HEAD_W_COLS), np.float32)
    head_b = np.zeros((8, 512), np.float32)
    gfc, afc = params["graph_fc"], params["agent_fc"]
    for i in range(4):
        rows, c0, cols, _ = HEAD_LAYOUT[i]
        gw, gbias = gfc[i]
        aw, abias = afc[i]
        gw, aw = np.asarray(gw), np.asarray(aw)
        g_out = gw.shape[1]
        head_w[0:gw.shape[0], c0:c0 + g_out] = gw                     # graph block
        head_w[gw.shape[0]:gw.shape[0] + aw.shape[0],
               c0 + g_out:c0 + cols] = aw                             # agent block
        head_b[i, 0:g_out] = np.asarray(gbias)
        head_b[i, g_out:cols] = np.asarray(abias)
    for i, (w, b) in enumerate(params["fc_output"]):
        rows, c0, cols, _ = HEAD_LAYOUT[4 + i]
        w, b = np.asarray(w), np.asarray(b)
        head_w[0:w.shape[0], c0:c0 + w.shape[1]] = w                  # last layer: zero-padded to Q_PAD
        head_b[4 + i, 0:b.shape[0]] = b
    head_b[7, 0] = float(np.asarray(bg).reshape(-1)[0])               # pooling gate bias

    return [jnp.asarray(w_lr, jnp.bfloat16), jnp.asarray(att, jnp.bfloat16),
            jnp.asarray(head_w, jnp.bfloat16), jnp.asarray(gat_b, jnp.float32),
            jnp.asarray(head_b, jnp.float32)]


# -------------------- sparse -> dense graph conversion (glue) --------------

def build_dense_graph(edge_index, edge_attr, num_nodes):
    # Matches GATv2Conv(add_self_loops=True, fill_value='mean'): drop existing
    # self loops, add self loops whose edge_attr is the per-target mean of
    # incoming edge attributes (0 if none).
    # TODO(synk): parallel (duplicate) edges between the same node pair collapse
    # in this dense form; PyG would treat them as separate softmax entries.
    src = np.asarray(edge_index[0]); dst = np.asarray(edge_index[1])
    ea = np.asarray(edge_attr).reshape(-1)
    keep = src != dst
    src, dst, ea = src[keep], dst[keep], ea[keep]
    mask = np.zeros((num_nodes, num_nodes), np.float32)
    dense_ea = np.zeros((num_nodes, num_nodes), np.float32)
    mask[dst, src] = 1.0
    dense_ea[dst, src] = ea
    idx = np.arange(num_nodes)
    loop_attr = np.zeros((num_nodes,), np.float32)
    for i in range(num_nodes):
        inc = ea[dst == i]
        if inc.size:
            loop_attr[i] = float(inc.mean())
    mask[idx, idx] = 1.0
    dense_ea[idx, idx] = loop_attr
    return mask, dense_ea


# ----------------------------- main ----------------------------------------

if __name__ == "__main__":
    N, E, B, G, NUM_ACTIONS = 8, 12, 2, 4, 4   # G graph instances per kernel launch
    key = jax.random.PRNGKey(0)
    k_x, k_ea, k_as = jax.random.split(key, 3)

    edge_index = np.array([                                      # [2, E] (src, dst)
        [0, 1, 2, 3, 0, 2, 4, 5, 6, 7, 4, 6],
        [1, 2, 3, 0, 2, 0, 5, 6, 7, 4, 6, 4],
    ], dtype=np.int32)
    pool_batch = np.array([0, 0, 0, 0, 1, 1, 1, 1], np.int32)    # node -> graph id

    x = jax.random.normal(k_x, (G, N, 4), jnp.float32)           # node features
    edge_attr = jax.random.normal(k_ea, (G, E, 1), jnp.float32)  # edge_dim = 1
    agent_state = jax.random.normal(k_as, (G, B, 68), jnp.float32)

    masks, eattrs = [], []
    for g in range(G):
        m, e = build_dense_graph(edge_index, np.asarray(edge_attr[g]), N)
        masks.append(m); eattrs.append(e)
    dense_mask = jnp.asarray(np.stack(masks))                    # [G, N, N]
    dense_eattr = jnp.asarray(np.stack(eattrs))                  # [G, N, N]
    memb = (pool_batch[:, None] == np.arange(B)[None, :]).astype(np.float32)
    memberT = jnp.asarray(np.stack([memb] * G))                  # [G, N, B]

    # lane-pad node features to 256 and agent features to 128 (zero rows in the
    # packed weights make this mathematically identical to the unpadded model)
    x_pad = jnp.zeros((G, N, FIN_PAD), jnp.float32).at[:, :, :4].set(x)
    agent_pad = jnp.zeros((G, B, AGENT_PAD), jnp.float32).at[:, :, :68].set(agent_state)

    params = make_params(jax.random.PRNGKey(42), NUM_ACTIONS)
    kernel_params = prepare_kernel_params(params, NUM_ACTIONS)

    q = dqnv2_forward(kernel_params, x_pad, dense_mask, dense_eattr, memberT,
                      agent_pad, NUM_ACTIONS)
    q = jax.block_until_ready(q)

    assert q.shape == (G, B, NUM_ACTIONS), q.shape
    assert bool(jnp.all(jnp.isfinite(q)))
    print("KERNEL_OK")
</pallas_src>

<mosaic_0001>
module attributes {stable_mosaic.version = 11 : i64} {
  func.func @dqnv2_kernel(%arg0: i32, %arg1: memref<1x8x256xf32, #tpu.memory_space<vmem>>, %arg2: memref<1x8x8xf32, #tpu.memory_space<vmem>>, %arg3: memref<1x8x8xf32, #tpu.memory_space<vmem>>, %arg4: memref<1x8x2xf32, #tpu.memory_space<vmem>>, %arg5: memref<1x2x128xf32, #tpu.memory_space<vmem>>, %arg6: memref<3x256x512xbf16, #tpu.memory_space<vmem>>, %arg7: memref<4x256x4xbf16, #tpu.memory_space<vmem>>, %arg8: memref<512x1920xbf16, #tpu.memory_space<vmem>>, %arg9: memref<3x4x256xf32, #tpu.memory_space<vmem>>, %arg10: memref<8x512xf32, #tpu.memory_space<vmem>>, %arg11: memref<1x2x128xf32, #tpu.memory_space<vmem>>) attributes {dimension_semantics = [#tpu.dimension_semantics<parallel>], iteration_bounds = array<i64: 4>, scalar_prefetch = 0 : i64, scratch_operands = 0 : i64, tpu.core_type = #tpu.core_type<tc>, window_params = [{transform_indices = @transform_0, window_bounds = array<i64: 1, 8, 256>}, {transform_indices = @transform_1, window_bounds = array<i64: 1, 8, 8>}, {transform_indices = @transform_2, window_bounds = array<i64: 1, 8, 8>}, {transform_indices = @transform_3, window_bounds = array<i64: 1, 8, 2>}, {transform_indices = @transform_4, window_bounds = array<i64: 1, 2, 128>}, {pipeline_mode = #tpu.pipeline_mode<synchronous>, transform_indices = @transform_5, window_bounds = array<i64: 3, 256, 512>}, {pipeline_mode = #tpu.pipeline_mode<synchronous>, transform_indices = @transform_6, window_bounds = array<i64: 4, 256, 4>}, {pipeline_mode = #tpu.pipeline_mode<synchronous>, transform_indices = @transform_7, window_bounds = array<i64: 512, 1920>}, {pipeline_mode = #tpu.pipeline_mode<synchronous>, transform_indices = @transform_8, window_bounds = array<i64: 3, 4, 256>}, {pipeline_mode = #tpu.pipeline_mode<synchronous>, transform_indices = @transform_9, window_bounds = array<i64: 8, 512>}, {transform_indices = @transform_10, window_bounds = array<i64: 1, 2, 128>}]} {
    %c0 = arith.constant 0 : index
    %c0_0 = arith.constant 0 : index
    %c0_1 = arith.constant 0 : index
    %0 = vector.load %arg2[%c0, %c0_0, %c0_1] : memref<1x8x8xf32, #tpu.memory_space<vmem>>, vector<1x8x8xf32>
    %1 = vector.shape_cast %0 : vector<1x8x8xf32> to vector<8x8xf32>
    %c0_2 = arith.constant 0 : index
    %c0_3 = arith.constant 0 : index
    %c0_4 = arith.constant 0 : index
    %2 = vector.load %arg3[%c0_2, %c0_3, %c0_4] : memref<1x8x8xf32, #tpu.memory_space<vmem>>, vector<1x8x8xf32>
    %3 = vector.shape_cast %2 : vector<1x8x8xf32> to vector<8x8xf32>
    %c0_5 = arith.constant 0 : index
    %c0_6 = arith.constant 0 : index
    %c0_7 = arith.constant 0 : index
    %4 = vector.load %arg1[%c0_5, %c0_6, %c0_7] : memref<1x8x256xf32, #tpu.memory_space<vmem>>, vector<1x8x256xf32>
    %5 = vector.shape_cast %4 : vector<1x8x256xf32> to vector<8x256xf32>
    %c0_8 = arith.constant 0 : index
    %c0_9 = arith.constant 0 : index
    %c0_10 = arith.constant 0 : index
    %6 = vector.load %arg9[%c0_8, %c0_9, %c0_10] : memref<3x4x256xf32, #tpu.memory_space<vmem>>, vector<1x4x256xf32>
    %7 = vector.shape_cast %6 : vector<1x4x256xf32> to vector<4x256xf32>
    %8 = vector.extract_strided_slice %7 {offsets = [0, 0], sizes = [1, 256], strides = [1, 1]} : vector<4x256xf32> to vector<1x256xf32>
    %9 = vector.extract_strided_slice %7 {offsets = [1, 0], sizes = [1, 256], strides = [1, 1]} : vector<4x256xf32> to vector<1x256xf32>
    %10 = vector.extract_strided_slice %7 {offsets = [2, 0], sizes = [1, 256], strides = [1, 1]} : vector<4x256xf32> to vector<1x256xf32>
    %11 = vector.extract_strided_slice %7 {offsets = [3, 0], sizes = [1, 256], strides = [1, 1]} : vector<4x256xf32> to vector<1x256xf32>
    %12 = arith.truncf %5 : vector<8x256xf32> to vector<8x256xbf16>
    %c0_11 = arith.constant 0 : index
    %c0_12 = arith.constant 0 : index
    %c0_13 = arith.constant 0 : index
    %13 = vector.load %arg6[%c0_11, %c0_12, %c0_13] : memref<3x256x512xbf16, #tpu.memory_space<vmem>>, vector<1x256x512xbf16>
    %14 = vector.shape_cast %13 : vector<1x256x512xbf16> to vector<256x512xbf16>
    %cst = arith.constant dense<0.000000e+00> : vector<8x512xf32>
    %15 = tpu.matmul %12, %14, %cst {dimension_numbers = #tpu.dot_dimension_numbers<[1], [0], [0], [1], [0, 0, 1, 1], [], []>} : vector<8x256xbf16>, vector<256x512xbf16>, vector<8x512xf32> -> vector<8x512xf32>
    %16 = vector.extract_strided_slice %15 {offsets = [0, 0], sizes = [8, 256], strides = [1, 1]} : vector<8x512xf32> to vector<8x256xf32>
    %17 = vector.broadcast %8 : vector<1x256xf32> to vector<8x256xf32>
    %18 = arith.addf %16, %17 : vector<8x256xf32>
    %19 = vector.extract_strided_slice %15 {offsets = [0, 256], sizes = [8, 256], strides = [1, 1]} : vector<8x512xf32> to vector<8x256xf32>
    %20 = vector.broadcast %9 : vector<1x256xf32> to vector<8x256xf32>
    %21 = arith.addf %19, %20 : vector<8x256xf32>
    %22 = vector.shape_cast %18 : vector<8x256xf32> to vector<1x8x256xf32>
    %23 = vector.shape_cast %21 : vector<8x256xf32> to vector<8x1x256xf32>
    %24 = vector.broadcast %22 : vector<1x8x256xf32> to vector<8x8x256xf32>
    %25 = vector.broadcast %23 : vector<8x1x256xf32> to vector<8x8x256xf32>
    %26 = arith.addf %24, %25 : vector<8x8x256xf32>
    %27 = vector.shape_cast %3 : vector<8x8xf32> to vector<8x8x1xf32>
    %28 = vector.shape_cast %10 : vector<1x256xf32> to vector<1x1x256xf32>
    %29 = vector.broadcast %27 : vector<8x8x1xf32> to vector<8x8x256xf32>
    %30 = vector.broadcast %28 : vector<1x1x256xf32> to vector<8x8x256xf32>
    %31 = arith.mulf %29, %30 : vector<8x8x256xf32>
    %32 = arith.addf %26, %31 : vector<8x8x256xf32>
    %cst_14 = arith.constant 2.000000e-01 : f32
    %33 = vector.broadcast %cst_14 : f32 to vector<8x8x256xf32>
    %34 = arith.mulf %33, %32 : vector<8x8x256xf32>
    %35 = arith.maximumf %32, %34 : vector<8x8x256xf32>
    %36 = vector.shape_cast %35 : vector<8x8x256xf32> to vector<64x256xf32>
    %37 = arith.truncf %36 : vector<64x256xf32> to vector<64x256xbf16>
    %c0_15 = arith.constant 0 : index
    %c0_16 = arith.constant 0 : index
    %c0_17 = arith.constant 0 : index
    %38 = vector.load %arg7[%c0_15, %c0_16, %c0_17] : memref<4x256x4xbf16, #tpu.memory_space<vmem>>, vector<1x256x4xbf16>
    %39 = vector.shape_cast %38 : vector<1x256x4xbf16> to vector<256x4xbf16>
    %cst_18 = arith.constant dense<0.000000e+00> : vector<64x4xf32>
    %40 = tpu.matmul %37, %39, %cst_18 {dimension_numbers = #tpu.dot_dimension_numbers<[1], [0], [0], [1], [0, 0, 1, 1], [], []>} : vector<64x256xbf16>, vector<256x4xbf16>, vector<64x4xf32> -> vector<64x4xf32>
    %41 = vector.shape_cast %40 : vector<64x4xf32> to vector<8x8x4xf32>
    %42 = vector.shape_cast %1 : vector<8x8xf32> to vector<8x8x1xf32>
    %cst_19 = arith.constant 0.000000e+00 : f32
    %43 = vector.broadcast %cst_19 : f32 to vector<8x8x1xf32>
    %44 = arith.cmpf ogt, %42, %43 : vector<8x8x1xf32>
    %cst_20 = arith.constant -1.000000e+30 : f32
    %45 = vector.shape_cast %44 : vector<8x8x1xi1> to vector<8x8x1xi1>
    %46 = vector.broadcast %45 : vector<8x8x1xi1> to vector<8x8x4xi1>
    %47 = vector.broadcast %cst_20 : f32 to vector<8x8x4xf32>
    %48 = arith.select %46, %41, %47 : vector<8x8x4xi1>, vector<8x8x4xf32>
    %cst_21 = arith.constant dense<0xFF800000> : vector<8x4xf32>
    %49 = vector.multi_reduction <maximumf>, %48, %cst_21 [1] : vector<8x8x4xf32> to vector<8x4xf32>
    %50 = vector.shape_cast %49 : vector<8x4xf32> to vector<8x1x4xf32>
    %51 = vector.broadcast %50 : vector<8x1x4xf32> to vector<8x8x4xf32>
    %52 = arith.subf %48, %51 : vector<8x8x4xf32>
    %53 = math.exp %52 : vector<8x8x4xf32>
    %cst_22 = arith.constant dense<0.000000e+00> : vector<8x4xf32>
    %54 = vector.multi_reduction <add>, %53, %cst_22 [1] : vector<8x8x4xf32> to vector<8x4xf32>
    %55 = vector.shape_cast %54 : vector<8x4xf32> to vector<8x1x4xf32>
    %56 = tpu.reciprocal %55 {approx = true} : vector<8x1x4xf32> -> vector<8x1x4xf32>
    %57 = vector.broadcast %56 : vector<8x1x4xf32> to vector<8x8x4xf32>
    %58 = arith.mulf %53, %57 : vector<8x8x4xf32>
    %59 = vector.extract_strided_slice %58 {offsets = [0, 0, 0], sizes = [8, 8, 1], strides = [1, 1, 1]} : vector<8x8x4xf32> to vector<8x8x1xf32>
    %60 = vector.shape_cast %59 : vector<8x8x1xf32> to vector<8x8xf32>
    %61 = arith.truncf %60 : vector<8x8xf32> to vector<8x8xbf16>
    %62 = vector.extract_strided_slice %18 {offsets = [0, 0], sizes = [8, 64], strides = [1, 1]} : vector<8x256xf32> to vector<8x64xf32>
    %63 = arith.truncf %62 : vector<8x64xf32> to vector<8x64xbf16>
    %cst_23 = arith.constant dense<0.000000e+00> : vector<8x64xf32>
    %64 = tpu.matmul %61, %63, %cst_23 {dimension_numbers = #tpu.dot_dimension_numbers<[1], [0], [0], [1], [0, 0, 1, 1], [], []>} : vector<8x8xbf16>, vector<8x64xbf16>, vector<8x64xf32> -> vector<8x64xf32>
    %65 = vector.extract_strided_slice %58 {offsets = [0, 0, 1], sizes = [8, 8, 1], strides = [1, 1, 1]} : vector<8x8x4xf32> to vector<8x8x1xf32>
    %66 = vector.shape_cast %65 : vector<8x8x1xf32> to vector<8x8xf32>
    %67 = arith.truncf %66 : vector<8x8xf32> to vector<8x8xbf16>
    %68 = vector.extract_strided_slice %18 {offsets = [0, 64], sizes = [8, 64], strides = [1, 1]} : vector<8x256xf32> to vector<8x64xf32>
    %69 = arith.truncf %68 : vector<8x64xf32> to vector<8x64xbf16>
    %cst_24 = arith.constant dense<0.000000e+00> : vector<8x64xf32>
    %70 = tpu.matmul %67, %69, %cst_24 {dimension_numbers = #tpu.dot_dimension_numbers<[1], [0], [0], [1], [0, 0, 1, 1], [], []>} : vector<8x8xbf16>, vector<8x64xbf16>, vector<8x64xf32> -> vector<8x64xf32>
    %71 = vector.extract_strided_slice %58 {offsets = [0, 0, 2], sizes = [8, 8, 1], strides = [1, 1, 1]} : vector<8x8x4xf32> to vector<8x8x1xf32>
    %72 = vector.shape_cast %71 : vector<8x8x1xf32> to vector<8x8xf32>
    %73 = arith.truncf %72 : vector<8x8xf32> to vector<8x8xbf16>
    %74 = vector.extract_strided_slice %18 {offsets = [0, 128], sizes = [8, 64], strides = [1, 1]} : vector<8x256xf32> to vector<8x64xf32>
    %75 = arith.truncf %74 : vector<8x64xf32> to vector<8x64xbf16>
    %cst_25 = arith.constant dense<0.000000e+00> : vector<8x64xf32>
    %76 = tpu.matmul %73, %75, %cst_25 {dimension_numbers = #tpu.dot_dimension_numbers<[1], [0], [0], [1], [0, 0, 1, 1], [], []>} : vector<8x8xbf16>, vector<8x64xbf16>, vector<8x64xf32> -> vector<8x64xf32>
    %77 = vector.extract_strided_slice %58 {offsets = [0, 0, 3], sizes = [8, 8, 1], strides = [1, 1, 1]} : vector<8x8x4xf32> to vector<8x8x1xf32>
    %78 = vector.shape_cast %77 : vector<8x8x1xf32> to vector<8x8xf32>
    %79 = arith.truncf %78 : vector<8x8xf32> to vector<8x8xbf16>
    %80 = vector.extract_strided_slice %18 {offsets = [0, 192], sizes = [8, 64], strides = [1, 1]} : vector<8x256xf32> to vector<8x64xf32>
    %81 = arith.truncf %80 : vector<8x64xf32> to vector<8x64xbf16>
    %cst_26 = arith.constant dense<0.000000e+00> : vector<8x64xf32>
    %82 = tpu.matmul %79, %81, %cst_26 {dimension_numbers = #tpu.dot_dimension_numbers<[1], [0], [0], [1], [0, 0, 1, 1], [], []>} : vector<8x8xbf16>, vector<8x64xbf16>, vector<8x64xf32> -> vector<8x64xf32>
    %83 = tpu.concatenate %64, %70, %76, %82 in 1 : vector<8x64xf32>, vector<8x64xf32>, vector<8x64xf32>, vector<8x64xf32> -> vector<8x256xf32>
    %84 = vector.broadcast %11 : vector<1x256xf32> to vector<8x256xf32>
    %85 = arith.addf %83, %84 : vector<8x256xf32>
    %cst_27 = arith.constant 0.000000e+00 : f32
    %86 = vector.broadcast %cst_27 : f32 to vector<8x256xf32>
    %87 = arith.maximumf %85, %86 : vector<8x256xf32>
    %c1 = arith.constant 1 : index
    %c0_28 = arith.constant 0 : index
    %c0_29 = arith.constant 0 : index
    %88 = vector.load %arg9[%c1, %c0_28, %c0_29] : memref<3x4x256xf32, #tpu.memory_space<vmem>>, vector<1x4x256xf32>
    %89 = vector.shape_cast %88 : vector<1x4x256xf32> to vector<4x256xf32>
    %90 = vector.extract_strided_slice %89 {offsets = [0, 0], sizes = [1, 256], strides = [1, 1]} : vector<4x256xf32> to vector<1x256xf32>
    %91 = vector.extract_strided_slice %89 {offsets = [1, 0], sizes = [1, 256], strides = [1, 1]} : vector<4x256xf32> to vector<1x256xf32>
    %92 = vector.extract_strided_slice %89 {offsets = [2, 0], sizes = [1, 256], strides = [1, 1]} : vector<4x256xf32> to vector<1x256xf32>
    %93 = vector.extract_strided_slice %89 {offsets = [3, 0], sizes = [1, 256], strides = [1, 1]} : vector<4x256xf32> to vector<1x256xf32>
    %94 = arith.truncf %87 : vector<8x256xf32> to vector<8x256xbf16>
    %c1_30 = arith.constant 1 : index
    %c0_31 = arith.constant 0 : index
    %c0_32 = arith.constant 0 : index
    %95 = vector.load %arg6[%c1_30, %c0_31, %c0_32] : memref<3x256x512xbf16, #tpu.memory_space<vmem>>, vector<1x256x512xbf16>
    %96 = vector.shape_cast %95 : vector<1x256x512xbf16> to vector<256x512xbf16>
    %cst_33 = arith.constant dense<0.000000e+00> : vector<8x512xf32>
    %97 = tpu.matmul %94, %96, %cst_33 {dimension_numbers = #tpu.dot_dimension_numbers<[1], [0], [0], [1], [0, 0, 1, 1], [], []>} : vector<8x256xbf16>, vector<256x512xbf16>, vector<8x512xf32> -> vector<8x512xf32>
    %98 = vector.extract_strided_slice %97 {offsets = [0, 0], sizes = [8, 256], strides = [1, 1]} : vector<8x512xf32> to vector<8x256xf32>
    %99 = vector.broadcast %90 : vector<1x256xf32> to vector<8x256xf32>
    %100 = arith.addf %98, %99 : vector<8x256xf32>
    %101 = vector.extract_strided_slice %97 {offsets = [0, 256], sizes = [8, 256], strides = [1, 1]} : vector<8x512xf32> to vector<8x256xf32>
    %102 = vector.broadcast %91 : vector<1x256xf32> to vector<8x256xf32>
    %103 = arith.addf %101, %102 : vector<8x256xf32>
    %104 = vector.shape_cast %100 : vector<8x256xf32> to vector<1x8x256xf32>
    %105 = vector.shape_cast %103 : vector<8x256xf32> to vector<8x1x256xf32>
    %106 = vector.broadcast %104 : vector<1x8x256xf32> to vector<8x8x256xf32>
    %107 = vector.broadcast %105 : vector<8x1x256xf32> to vector<8x8x256xf32>
    %108 = arith.addf %106, %107 : vector<8x8x256xf32>
    %109 = vector.shape_cast %3 : vector<8x8xf32> to vector<8x8x1xf32>
    %110 = vector.shape_cast %92 : vector<1x256xf32> to vector<1x1x256xf32>
    %111 = vector.broadcast %109 : vector<8x8x1xf32> to vector<8x8x256xf32>
    %112 = vector.broadcast %110 : vector<1x1x256xf32> to vector<8x8x256xf32>
    %113 = arith.mulf %111, %112 : vector<8x8x256xf32>
    %114 = arith.addf %108, %113 : vector<8x8x256xf32>
    %cst_34 = arith.constant 2.000000e-01 : f32
    %115 = vector.broadcast %cst_34 : f32 to vector<8x8x256xf32>
    %116 = arith.mulf %115, %114 : vector<8x8x256xf32>
    %117 = arith.maximumf %114, %116 : vector<8x8x256xf32>
    %118 = vector.shape_cast %117 : vector<8x8x256xf32> to vector<64x256xf32>
    %119 = arith.truncf %118 : vector<64x256xf32> to vector<64x256xbf16>
    %c1_35 = arith.constant 1 : index
    %c0_36 = arith.constant 0 : index
    %c0_37 = arith.constant 0 : index
    %120 = vector.load %arg7[%c1_35, %c0_36, %c0_37] : memref<4x256x4xbf16, #tpu.memory_space<vmem>>, vector<1x256x4xbf16>
    %121 = vector.shape_cast %120 : vector<1x256x4xbf16> to vector<256x4xbf16>
    %cst_38 = arith.constant dense<0.000000e+00> : vector<64x4xf32>
    %122 = tpu.matmul %119, %121, %cst_38 {dimension_numbers = #tpu.dot_dimension_numbers<[1], [0], [0], [1], [0, 0, 1, 1], [], []>} : vector<64x256xbf16>, vector<256x4xbf16>, vector<64x4xf32> -> vector<64x4xf32>
    %123 = vector.shape_cast %122 : vector<64x4xf32> to vector<8x8x4xf32>
    %124 = vector.shape_cast %1 : vector<8x8xf32> to vector<8x8x1xf32>
    %cst_39 = arith.constant 0.000000e+00 : f32
    %125 = vector.broadcast %cst_39 : f32 to vector<8x8x1xf32>
    %126 = arith.cmpf ogt, %124, %125 : vector<8x8x1xf32>
    %cst_40 = arith.constant -1.000000e+30 : f32
    %127 = vector.shape_cast %126 : vector<8x8x1xi1> to vector<8x8x1xi1>
    %128 = vector.broadcast %127 : vector<8x8x1xi1> to vector<8x8x4xi1>
    %129 = vector.broadcast %cst_40 : f32 to vector<8x8x4xf32>
    %130 = arith.select %128, %123, %129 : vector<8x8x4xi1>, vector<8x8x4xf32>
    %cst_41 = arith.constant dense<0xFF800000> : vector<8x4xf32>
    %131 = vector.multi_reduction <maximumf>, %130, %cst_41 [1] : vector<8x8x4xf32> to vector<8x4xf32>
    %132 = vector.shape_cast %131 : vector<8x4xf32> to vector<8x1x4xf32>
    %133 = vector.broadcast %132 : vector<8x1x4xf32> to vector<8x8x4xf32>
    %134 = arith.subf %130, %133 : vector<8x8x4xf32>
    %135 = math.exp %134 : vector<8x8x4xf32>
    %cst_42 = arith.constant dense<0.000000e+00> : vector<8x4xf32>
    %136 = vector.multi_reduction <add>, %135, %cst_42 [1] : vector<8x8x4xf32> to vector<8x4xf32>
    %137 = vector.shape_cast %136 : vector<8x4xf32> to vector<8x1x4xf32>
    %138 = tpu.reciprocal %137 {approx = true} : vector<8x1x4xf32> -> vector<8x1x4xf32>
    %139 = vector.broadcast %138 : vector<8x1x4xf32> to vector<8x8x4xf32>
    %140 = arith.mulf %135, %139 : vector<8x8x4xf32>
    %141 = vector.extract_strided_slice %140 {offsets = [0, 0, 0], sizes = [8, 8, 1], strides = [1, 1, 1]} : vector<8x8x4xf32> to vector<8x8x1xf32>
    %142 = vector.shape_cast %141 : vector<8x8x1xf32> to vector<8x8xf32>
    %143 = arith.truncf %142 : vector<8x8xf32> to vector<8x8xbf16>
    %144 = vector.extract_strided_slice %100 {offsets = [0, 0], sizes = [8, 64], strides = [1, 1]} : vector<8x256xf32> to vector<8x64xf32>
    %145 = arith.truncf %144 : vector<8x64xf32> to vector<8x64xbf16>
    %cst_43 = arith.constant dense<0.000000e+00> : vector<8x64xf32>
    %146 = tpu.matmul %143, %145, %cst_43 {dimension_numbers = #tpu.dot_dimension_numbers<[1], [0], [0], [1], [0, 0, 1, 1], [], []>} : vector<8x8xbf16>, vector<8x64xbf16>, vector<8x64xf32> -> vector<8x64xf32>
    %147 = vector.extract_strided_slice %140 {offsets = [0, 0, 1], sizes = [8, 8, 1], strides = [1, 1, 1]} : vector<8x8x4xf32> to vector<8x8x1xf32>
    %148 = vector.shape_cast %147 : vector<8x8x1xf32> to vector<8x8xf32>
    %149 = arith.truncf %148 : vector<8x8xf32> to vector<8x8xbf16>
    %150 = vector.extract_strided_slice %100 {offsets = [0, 64], sizes = [8, 64], strides = [1, 1]} : vector<8x256xf32> to vector<8x64xf32>
    %151 = arith.truncf %150 : vector<8x64xf32> to vector<8x64xbf16>
    %cst_44 = arith.constant dense<0.000000e+00> : vector<8x64xf32>
    %152 = tpu.matmul %149, %151, %cst_44 {dimension_numbers = #tpu.dot_dimension_numbers<[1], [0], [0], [1], [0, 0, 1, 1], [], []>} : vector<8x8xbf16>, vector<8x64xbf16>, vector<8x64xf32> -> vector<8x64xf32>
    %153 = vector.extract_strided_slice %140 {offsets = [0, 0, 2], sizes = [8, 8, 1], strides = [1, 1, 1]} : vector<8x8x4xf32> to vector<8x8x1xf32>
    %154 = vector.shape_cast %153 : vector<8x8x1xf32> to vector<8x8xf32>
    %155 = arith.truncf %154 : vector<8x8xf32> to vector<8x8xbf16>
    %156 = vector.extract_strided_slice %100 {offsets = [0, 128], sizes = [8, 64], strides = [1, 1]} : vector<8x256xf32> to vector<8x64xf32>
    %157 = arith.truncf %156 : vector<8x64xf32> to vector<8x64xbf16>
    %cst_45 = arith.constant dense<0.000000e+00> : vector<8x64xf32>
    %158 = tpu.matmul %155, %157, %cst_45 {dimension_numbers = #tpu.dot_dimension_numbers<[1], [0], [0], [1], [0, 0, 1, 1], [], []>} : vector<8x8xbf16>, vector<8x64xbf16>, vector<8x64xf32> -> vector<8x64xf32>
    %159 = vector.extract_strided_slice %140 {offsets = [0, 0, 3], sizes = [8, 8, 1], strides = [1, 1, 1]} : vector<8x8x4xf32> to vector<8x8x1xf32>
    %160 = vector.shape_cast %159 : vector<8x8x1xf32> to vector<8x8xf32>
    %161 = arith.truncf %160 : vector<8x8xf32> to vector<8x8xbf16>
    %162 = vector.extract_strided_slice %100 {offsets = [0, 192], sizes = [8, 64], strides = [1, 1]} : vector<8x256xf32> to vector<8x64xf32>
    %163 = arith.truncf %162 : vector<8x64xf32> to vector<8x64xbf16>
    %cst_46 = arith.constant dense<0.000000e+00> : vector<8x64xf32>
    %164 = tpu.matmul %161, %163, %cst_46 {dimension_numbers = #tpu.dot_dimension_numbers<[1], [0], [0], [1], [0, 0, 1, 1], [], []>} : vector<8x8xbf16>, vector<8x64xbf16>, vector<8x64xf32> -> vector<8x64xf32>
    %165 = tpu.concatenate %146, %152, %158, %164 in 1 : vector<8x64xf32>, vector<8x64xf32>, vector<8x64xf32>, vector<8x64xf32> -> vector<8x256xf32>
    %166 = vector.broadcast %93 : vector<1x256xf32> to vector<8x256xf32>
    %167 = arith.addf %165, %166 : vector<8x256xf32>
    %cst_47 = arith.constant 0.000000e+00 : f32
    %168 = vector.broadcast %cst_47 : f32 to vector<8x256xf32>
    %169 = arith.maximumf %167, %168 : vector<8x256xf32>
    %c2 = arith.constant 2 : index
    %c0_48 = arith.constant 0 : index
    %c0_49 = arith.constant 0 : index
    %170 = vector.load %arg9[%c2, %c0_48, %c0_49] : memref<3x4x256xf32, #tpu.memory_space<vmem>>, vector<1x4x256xf32>
    %171 = vector.shape_cast %170 : vector<1x4x256xf32> to vector<4x256xf32>
    %172 = vector.extract_strided_slice %171 {offsets = [0, 0], sizes = [1, 256], strides = [1, 1]} : vector<4x256xf32> to vector<1x256xf32>
    %173 = vector.extract_strided_slice %171 {offsets = [1, 0], sizes = [1, 256], strides = [1, 1]} : vector<4x256xf32> to vector<1x256xf32>
    %174 = vector.extract_strided_slice %171 {offsets = [2, 0], sizes = [1, 256], strides = [1, 1]} : vector<4x256xf32> to vector<1x256xf32>
    %175 = vector.extract_strided_slice %171 {offsets = [3, 0], sizes = [1, 256], strides = [1, 1]} : vector<4x256xf32> to vector<1x256xf32>
    %176 = arith.truncf %169 : vector<8x256xf32> to vector<8x256xbf16>
    %c2_50 = arith.constant 2 : index
    %c0_51 = arith.constant 0 : index
    %c0_52 = arith.constant 0 : index
    %177 = vector.load %arg6[%c2_50, %c0_51, %c0_52] : memref<3x256x512xbf16, #tpu.memory_space<vmem>>, vector<1x256x512xbf16>
    %178 = vector.shape_cast %177 : vector<1x256x512xbf16> to vector<256x512xbf16>
    %cst_53 = arith.constant dense<0.000000e+00> : vector<8x512xf32>
    %179 = tpu.matmul %176, %178, %cst_53 {dimension_numbers = #tpu.dot_dimension_numbers<[1], [0], [0], [1], [0, 0, 1, 1], [], []>} : vector<8x256xbf16>, vector<256x512xbf16>, vector<8x512xf32> -> vector<8x512xf32>
    %180 = vector.extract_strided_slice %179 {offsets = [0, 0], sizes = [8, 256], strides = [1, 1]} : vector<8x512xf32> to vector<8x256xf32>
    %181 = vector.broadcast %172 : vector<1x256xf32> to vector<8x256xf32>
    %182 = arith.addf %180, %181 : vector<8x256xf32>
    %183 = vector.extract_strided_slice %179 {offsets = [0, 256], sizes = [8, 256], strides = [1, 1]} : vector<8x512xf32> to vector<8x256xf32>
    %184 = vector.broadcast %173 : vector<1x256xf32> to vector<8x256xf32>
    %185 = arith.addf %183, %184 : vector<8x256xf32>
    %186 = vector.shape_cast %182 : vector<8x256xf32> to vector<1x8x256xf32>
    %187 = vector.shape_cast %185 : vector<8x256xf32> to vector<8x1x256xf32>
    %188 = vector.broadcast %186 : vector<1x8x256xf32> to vector<8x8x256xf32>
    %189 = vector.broadcast %187 : vector<8x1x256xf32> to vector<8x8x256xf32>
    %190 = arith.addf %188, %189 : vector<8x8x256xf32>
    %191 = vector.shape_cast %3 : vector<8x8xf32> to vector<8x8x1xf32>
    %192 = vector.shape_cast %174 : vector<1x256xf32> to vector<1x1x256xf32>
    %193 = vector.broadcast %191 : vector<8x8x1xf32> to vector<8x8x256xf32>
    %194 = vector.broadcast %192 : vector<1x1x256xf32> to vector<8x8x256xf32>
    %195 = arith.mulf %193, %194 : vector<8x8x256xf32>
    %196 = arith.addf %190, %195 : vector<8x8x256xf32>
    %cst_54 = arith.constant 2.000000e-01 : f32
    %197 = vector.broadcast %cst_54 : f32 to vector<8x8x256xf32>
    %198 = arith.mulf %197, %196 : vector<8x8x256xf32>
    %199 = arith.maximumf %196, %198 : vector<8x8x256xf32>
    %200 = vector.shape_cast %199 : vector<8x8x256xf32> to vector<64x256xf32>
    %201 = arith.truncf %200 : vector<64x256xf32> to vector<64x256xbf16>
    %c2_55 = arith.constant 2 : index
    %c0_56 = arith.constant 0 : index
    %c0_57 = arith.constant 0 : index
    %202 = vector.load %arg7[%c2_55, %c0_56, %c0_57] : memref<4x256x4xbf16, #tpu.memory_space<vmem>>, vector<1x256x4xbf16>
    %203 = vector.shape_cast %202 : vector<1x256x4xbf16> to vector<256x4xbf16>
    %cst_58 = arith.constant dense<0.000000e+00> : vector<64x4xf32>
    %204 = tpu.matmul %201, %203, %cst_58 {dimension_numbers = #tpu.dot_dimension_numbers<[1], [0], [0], [1], [0, 0, 1, 1], [], []>} : vector<64x256xbf16>, vector<256x4xbf16>, vector<64x4xf32> -> vector<64x4xf32>
    %205 = vector.extract_strided_slice %204 {offsets = [0, 0], sizes = [64, 2], strides = [1, 1]} : vector<64x4xf32> to vector<64x2xf32>
    %206 = vector.shape_cast %205 : vector<64x2xf32> to vector<8x8x2xf32>
    %207 = vector.shape_cast %1 : vector<8x8xf32> to vector<8x8x1xf32>
    %cst_59 = arith.constant 0.000000e+00 : f32
    %208 = vector.broadcast %cst_59 : f32 to vector<8x8x1xf32>
    %209 = arith.cmpf ogt, %207, %208 : vector<8x8x1xf32>
    %cst_60 = arith.constant -1.000000e+30 : f32
    %210 = vector.shape_cast %209 : vector<8x8x1xi1> to vector<8x8x1xi1>
    %211 = vector.broadcast %210 : vector<8x8x1xi1> to vector<8x8x2xi1>
    %212 = vector.broadcast %cst_60 : f32 to vector<8x8x2xf32>
    %213 = arith.select %211, %206, %212 : vector<8x8x2xi1>, vector<8x8x2xf32>
    %cst_61 = arith.constant dense<0xFF800000> : vector<8x2xf32>
    %214 = vector.multi_reduction <maximumf>, %213, %cst_61 [1] : vector<8x8x2xf32> to vector<8x2xf32>
    %215 = vector.shape_cast %214 : vector<8x2xf32> to vector<8x1x2xf32>
    %216 = vector.broadcast %215 : vector<8x1x2xf32> to vector<8x8x2xf32>
    %217 = arith.subf %213, %216 : vector<8x8x2xf32>
    %218 = math.exp %217 : vector<8x8x2xf32>
    %cst_62 = arith.constant dense<0.000000e+00> : vector<8x2xf32>
    %219 = vector.multi_reduction <add>, %218, %cst_62 [1] : vector<8x8x2xf32> to vector<8x2xf32>
    %220 = vector.shape_cast %219 : vector<8x2xf32> to vector<8x1x2xf32>
    %221 = tpu.reciprocal %220 {approx = true} : vector<8x1x2xf32> -> vector<8x1x2xf32>
    %222 = vector.broadcast %221 : vector<8x1x2xf32> to vector<8x8x2xf32>
    %223 = arith.mulf %218, %222 : vector<8x8x2xf32>
    %224 = vector.extract_strided_slice %223 {offsets = [0, 0, 0], sizes = [8, 8, 1], strides = [1, 1, 1]} : vector<8x8x2xf32> to vector<8x8x1xf32>
    %225 = vector.shape_cast %224 : vector<8x8x1xf32> to vector<8x8xf32>
    %226 = arith.truncf %225 : vector<8x8xf32> to vector<8x8xbf16>
    %227 = vector.extract_strided_slice %182 {offsets = [0, 0], sizes = [8, 128], strides = [1, 1]} : vector<8x256xf32> to vector<8x128xf32>
    %228 = arith.truncf %227 : vector<8x128xf32> to vector<8x128xbf16>
    %cst_63 = arith.constant dense<0.000000e+00> : vector<8x128xf32>
    %229 = tpu.matmul %226, %228, %cst_63 {dimension_numbers = #tpu.dot_dimension_numbers<[1], [0], [0], [1], [0, 0, 1, 1], [], []>} : vector<8x8xbf16>, vector<8x128xbf16>, vector<8x128xf32> -> vector<8x128xf32>
    %230 = vector.extract_strided_slice %223 {offsets = [0, 0, 1], sizes = [8, 8, 1], strides = [1, 1, 1]} : vector<8x8x2xf32> to vector<8x8x1xf32>
    %231 = vector.shape_cast %230 : vector<8x8x1xf32> to vector<8x8xf32>
    %232 = arith.truncf %231 : vector<8x8xf32> to vector<8x8xbf16>
    %233 = vector.extract_strided_slice %182 {offsets = [0, 128], sizes = [8, 128], strides = [1, 1]} : vector<8x256xf32> to vector<8x128xf32>
    %234 = arith.truncf %233 : vector<8x128xf32> to vector<8x128xbf16>
    %cst_64 = arith.constant dense<0.000000e+00> : vector<8x128xf32>
    %235 = tpu.matmul %232, %234, %cst_64 {dimension_numbers = #tpu.dot_dimension_numbers<[1], [0], [0], [1], [0, 0, 1, 1], [], []>} : vector<8x8xbf16>, vector<8x128xbf16>, vector<8x128xf32> -> vector<8x128xf32>
    %236 = tpu.concatenate %229, %235 in 1 : vector<8x128xf32>, vector<8x128xf32> -> vector<8x256xf32>
    %237 = vector.broadcast %175 : vector<1x256xf32> to vector<8x256xf32>
    %238 = arith.addf %236, %237 : vector<8x256xf32>
    %cst_65 = arith.constant 0.000000e+00 : f32
    %239 = vector.broadcast %cst_65 : f32 to vector<8x256xf32>
    %240 = arith.maximumf %238, %239 : vector<8x256xf32>
    %241 = arith.truncf %240 : vector<8x256xf32> to vector<8x256xbf16>
    %c3 = arith.constant 3 : index
    %c0_66 = arith.constant 0 : index
    %c0_67 = arith.constant 0 : index
    %242 = vector.load %arg7[%c3, %c0_66, %c0_67] : memref<4x256x4xbf16, #tpu.memory_space<vmem>>, vector<1x256x4xbf16>
    %243 = vector.shape_cast %242 : vector<1x256x4xbf16> to vector<256x4xbf16>
    %244 = vector.extract_strided_slice %243 {offsets = [0, 0], sizes = [256, 1], strides = [1, 1]} : vector<256x4xbf16> to vector<256x1xbf16>
    %cst_68 = arith.constant dense<0.000000e+00> : vector<8x1xf32>
    %245 = tpu.matmul %241, %244, %cst_68 {dimension_numbers = #tpu.dot_dimension_numbers<[1], [0], [0], [1], [0, 0, 1, 1], [], []>} : vector<8x256xbf16>, vector<256x1xbf16>, vector<8x1xf32> -> vector<8x1xf32>
    %c7 = arith.constant 7 : index
    %c0_69 = arith.constant 0 : index
    %246 = vector.load %arg10[%c7, %c0_69] : memref<8x512xf32, #tpu.memory_space<vmem>>, vector<1x1xf32>
    %247 = vector.broadcast %246 : vector<1x1xf32> to vector<8x1xf32>
    %248 = arith.addf %245, %247 : vector<8x1xf32>
    %c0_70 = arith.constant 0 : index
    %c0_71 = arith.constant 0 : index
    %c0_72 = arith.constant 0 : index
    %249 = vector.load %arg4[%c0_70, %c0_71, %c0_72] : memref<1x8x2xf32, #tpu.memory_space<vmem>>, vector<1x8x2xf32>
    %250 = vector.shape_cast %249 : vector<1x8x2xf32> to vector<8x2xf32>
    %cst_73 = arith.constant 0.000000e+00 : f32
    %251 = vector.broadcast %cst_73 : f32 to vector<8x2xf32>
    %252 = arith.cmpf ogt, %250, %251 : vector<8x2xf32>
    %cst_74 = arith.constant -1.000000e+30 : f32
    %253 = vector.shape_cast %248 : vector<8x1xf32> to vector<8x1xf32>
    %254 = vector.broadcast %253 : vector<8x1xf32> to vector<8x2xf32>
    %255 = vector.broadcast %cst_74 : f32 to vector<8x2xf32>
    %256 = arith.select %252, %254, %255 : vector<8x2xi1>, vector<8x2xf32>
    %cst_75 = arith.constant dense<0xFF800000> : vector<2xf32>
    %257 = vector.multi_reduction <maximumf>, %256, %cst_75 [0] : vector<8x2xf32> to vector<2xf32>
    %258 = vector.shape_cast %257 : vector<2xf32> to vector<1x2xf32>
    %259 = vector.broadcast %258 : vector<1x2xf32> to vector<8x2xf32>
    %260 = arith.subf %256, %259 : vector<8x2xf32>
    %261 = math.exp %260 : vector<8x2xf32>
    %cst_76 = arith.constant dense<0.000000e+00> : vector<2xf32>
    %262 = vector.multi_reduction <add>, %261, %cst_76 [0] : vector<8x2xf32> to vector<2xf32>
    %263 = vector.shape_cast %262 : vector<2xf32> to vector<1x2xf32>
    %264 = tpu.reciprocal %263 {approx = true} : vector<1x2xf32> -> vector<1x2xf32>
    %265 = vector.broadcast %264 : vector<1x2xf32> to vector<8x2xf32>
    %266 = arith.mulf %261, %265 : vector<8x2xf32>
    %267 = arith.truncf %266 : vector<8x2xf32> to vector<8x2xbf16>
    %cst_77 = arith.constant dense<0.000000e+00> : vector<2x256xf32>
    %268 = tpu.matmul %267, %241, %cst_77 {dimension_numbers = #tpu.dot_dimension_numbers<[0], [0], [1], [1], [0, 1, 1, 1], [], []>} : vector<8x2xbf16>, vector<8x256xbf16>, vector<2x256xf32> -> vector<2x256xf32>
    %c0_78 = arith.constant 0 : index
    %c0_79 = arith.constant 0 : index
    %c0_80 = arith.constant 0 : index
    %269 = vector.load %arg5[%c0_78, %c0_79, %c0_80] : memref<1x2x128xf32, #tpu.memory_space<vmem>>, vector<1x2x128xf32>
    %270 = vector.shape_cast %269 : vector<1x2x128xf32> to vector<2x128xf32>
    %271 = tpu.concatenate %268, %270 in 1 : vector<2x256xf32>, vector<2x128xf32> -> vector<2x384xf32>
    %c0_81 = arith.constant 0 : index
    %c0_82 = arith.constant 0 : index
    %272 = vector.load %arg8[%c0_81, %c0_82] : memref<512x1920xbf16, #tpu.memory_space<vmem>>, vector<384x512xbf16>
    %273 = arith.truncf %271 : vector<2x384xf32> to vector<2x384xbf16>
    %cst_83 = arith.constant dense<0.000000e+00> : vector<2x512xf32>
    %274 = tpu.matmul %273, %272, %cst_83 {dimension_numbers = #tpu.dot_dimension_numbers<[1], [0], [0], [1], [0, 0, 1, 1], [], []>} : vector<2x384xbf16>, vector<384x512xbf16>, vector<2x512xf32> -> vector<2x512xf32>
    %c0_84 = arith.constant 0 : index
    %c0_85 = arith.constant 0 : index
    %275 = vector.load %arg10[%c0_84, %c0_85] : memref<8x512xf32, #tpu.memory_space<vmem>>, vector<1x512xf32>
    %276 = vector.broadcast %275 : vector<1x512xf32> to vector<2x512xf32>
    %277 = arith.addf %274, %276 : vector<2x512xf32>
    %cst_86 = arith.constant 0.000000e+00 : f32
    %278 = vector.broadcast %cst_86 : f32 to vector<2x512xf32>
    %279 = arith.maximumf %277, %278 : vector<2x512xf32>
    %c0_87 = arith.constant 0 : index
    %c512 = arith.constant 512 : index
    %280 = vector.load %arg8[%c0_87, %c512] : memref<512x1920xbf16, #tpu.memory_space<vmem>>, vector<512x512xbf16>
    %281 = arith.truncf %279 : vector<2x512xf32> to vector<2x512xbf16>
    %cst_88 = arith.constant dense<0.000000e+00> : vector<2x512xf32>
    %282 = tpu.matmul %281, %280, %cst_88 {dimension_numbers = #tpu.dot_dimension_numbers<[1], [0], [0], [1], [0, 0, 1, 1], [], []>} : vector<2x512xbf16>, vector<512x512xbf16>, vector<2x512xf32> -> vector<2x512xf32>
    %c1_89 = arith.constant 1 : index
    %c0_90 = arith.constant 0 : index
    %283 = vector.load %arg10[%c1_89, %c0_90] : memref<8x512xf32, #tpu.memory_space<vmem>>, vector<1x512xf32>
    %284 = vector.broadcast %283 : vector<1x512xf32> to vector<2x512xf32>
    %285 = arith.addf %282, %284 : vector<2x512xf32>
    %cst_91 = arith.constant 0.000000e+00 : f32
    %286 = vector.broadcast %cst_91 : f32 to vector<2x512xf32>
    %287 = arith.maximumf %285, %286 : vector<2x512xf32>
    %c0_92 = arith.constant 0 : index
    %c1024 = arith.constant 1024 : index
    %288 = vector.load %arg8[%c0_92, %c1024] : memref<512x1920xbf16, #tpu.memory_space<vmem>>, vector<512x256xbf16>
    %289 = arith.truncf %287 : vector<2x512xf32> to vector<2x512xbf16>
    %cst_93 = arith.constant dense<0.000000e+00> : vector<2x256xf32>
    %290 = tpu.matmul %289, %288, %cst_93 {dimension_numbers = #tpu.dot_dimension_numbers<[1], [0], [0], [1], [0, 0, 1, 1], [], []>} : vector<2x512xbf16>, vector<512x256xbf16>, vector<2x256xf32> -> vector<2x256xf32>
    %c2_94 = arith.constant 2 : index
    %c0_95 = arith.constant 0 : index
    %291 = vector.load %arg10[%c2_94, %c0_95] : memref<8x512xf32, #tpu.memory_space<vmem>>, vector<1x256xf32>
    %292 = vector.broadcast %291 : vector<1x256xf32> to vector<2x256xf32>
    %293 = arith.addf %290, %292 : vector<2x256xf32>
    %cst_96 = arith.constant 0.000000e+00 : f32
    %294 = vector.broadcast %cst_96 : f32 to vector<2x256xf32>
    %295 = arith.maximumf %293, %294 : vector<2x256xf32>
    %c0_97 = arith.constant 0 : index
    %c1280 = arith.constant 1280 : index
    %296 = vector.load %arg8[%c0_97, %c1280] : memref<512x1920xbf16, #tpu.memory_space<vmem>>, vector<256x128xbf16>
    %297 = arith.truncf %295 : vector<2x256xf32> to vector<2x256xbf16>
    %cst_98 = arith.constant dense<0.000000e+00> : vector<2x128xf32>
    %298 = tpu.matmul %297, %296, %cst_98 {dimension_numbers = #tpu.dot_dimension_numbers<[1], [0], [0], [1], [0, 0, 1, 1], [], []>} : vector<2x256xbf16>, vector<256x128xbf16>, vector<2x128xf32> -> vector<2x128xf32>
    %c3_99 = arith.constant 3 : index
    %c0_100 = arith.constant 0 : index
    %299 = vector.load %arg10[%c3_99, %c0_100] : memref<8x512xf32, #tpu.memory_space<vmem>>, vector<1x128xf32>
    %300 = vector.broadcast %299 : vector<1x128xf32> to vector<2x128xf32>
    %301 = arith.addf %298, %300 : vector<2x128xf32>
    %c0_101 = arith.constant 0 : index
    %c1408 = arith.constant 1408 : index
    %302 = vector.load %arg8[%c0_101, %c1408] : memref<512x1920xbf16, #tpu.memory_space<vmem>>, vector<128x256xbf16>
    %303 = arith.truncf %301 : vector<2x128xf32> to vector<2x128xbf16>
    %cst_102 = arith.constant dense<0.000000e+00> : vector<2x256xf32>
    %304 = tpu.matmul %303, %302, %cst_102 {dimension_numbers = #tpu.dot_dimension_numbers<[1], [0], [0], [1], [0, 0, 1, 1], [], []>} : vector<2x128xbf16>, vector<128x256xbf16>, vector<2x256xf32> -> vector<2x256xf32>
    %c4 = arith.constant 4 : index
    %c0_103 = arith.constant 0 : index
    %305 = vector.load %arg10[%c4, %c0_103] : memref<8x512xf32, #tpu.memory_space<vmem>>, vector<1x256xf32>
    %306 = vector.broadcast %305 : vector<1x256xf32> to vector<2x256xf32>
    %307 = arith.addf %304, %306 : vector<2x256xf32>
    %cst_104 = arith.constant 0.000000e+00 : f32
    %308 = vector.broadcast %cst_104 : f32 to vector<2x256xf32>
    %309 = arith.maximumf %307, %308 : vector<2x256xf32>
    %c0_105 = arith.constant 0 : index
    %c1664 = arith.constant 1664 : index
    %310 = vector.load %arg8[%c0_105, %c1664] : memref<512x1920xbf16, #tpu.memory_space<vmem>>, vector<256x128xbf16>
    %311 = arith.truncf %309 : vector<2x256xf32> to vector<2x256xbf16>
    %cst_106 = arith.constant dense<0.000000e+00> : vector<2x128xf32>
    %312 = tpu.matmul %311, %310, %cst_106 {dimension_numbers = #tpu.dot_dimension_numbers<[1], [0], [0], [1], [0, 0, 1, 1], [], []>} : vector<2x256xbf16>, vector<256x128xbf16>, vector<2x128xf32> -> vector<2x128xf32>
    %c5 = arith.constant 5 : index
    %c0_107 = arith.constant 0 : index
    %313 = vector.load %arg10[%c5, %c0_107] : memref<8x512xf32, #tpu.memory_space<vmem>>, vector<1x128xf32>
    %314 = vector.broadcast %313 : vector<1x128xf32> to vector<2x128xf32>
    %315 = arith.addf %312, %314 : vector<2x128xf32>
    %cst_108 = arith.constant 0.000000e+00 : f32
    %316 = vector.broadcast %cst_108 : f32 to vector<2x128xf32>
    %317 = arith.maximumf %315, %316 : vector<2x128xf32>
    %c0_109 = arith.constant 0 : index
    %c1792 = arith.constant 1792 : index
    %318 = vector.load %arg8[%c0_109, %c1792] : memref<512x1920xbf16, #tpu.memory_space<vmem>>, vector<128x128xbf16>
    %319 = arith.truncf %317 : vector<2x128xf32> to vector<2x128xbf16>
    %cst_110 = arith.constant dense<0.000000e+00> : vector<2x128xf32>
    %320 = tpu.matmul %319, %318, %cst_110 {dimension_numbers = #tpu.dot_dimension_numbers<[1], [0], [0], [1], [0, 0, 1, 1], [], []>} : vector<2x128xbf16>, vector<128x128xbf16>, vector<2x128xf32> -> vector<2x128xf32>
    %c6 = arith.constant 6 : index
    %c0_111 = arith.constant 0 : index
    %321 = vector.load %arg10[%c6, %c0_111] : memref<8x512xf32, #tpu.memory_space<vmem>>, vector<1x128xf32>
    %322 = vector.broadcast %321 : vector<1x128xf32> to vector<2x128xf32>
    %323 = arith.addf %320, %322 : vector<2x128xf32>
    %c0_112 = arith.constant 0 : index
    %c0_113 = arith.constant 0 : index
    %c0_114 = arith.constant 0 : index
    %324 = vector.load %arg11[%c0_112, %c0_113, %c0_114] : memref<1x2x128xf32, #tpu.memory_space<vmem>>, vector<1x2x128xf32>
    %325 = vector.shape_cast %324 : vector<1x2x128xf32> to vector<2x128xf32>
    %326 = vector.shape_cast %323 : vector<2x128xf32> to vector<1x2x128xf32>
    tpu.vector_store %arg11[%c0_112, %c0_113, %c0_114], %326 {strides = array<i32>} : memref<1x2x128xf32, #tpu.memory_space<vmem>>, vector<1x2x128xf32>,
    return
  }
  func.func @transform_0(%arg0: i32) -> (i32, i32, i32) {
    %c0_i32 = arith.constant 0 : i32
    %c0_i32_0 = arith.constant 0 : i32
    %c0_i32_1 = arith.constant 0 : i32
    return %arg0, %c0_i32, %c0_i32_0 : i32, i32, i32
  }
  func.func @transform_1(%arg0: i32) -> (i32, i32, i32) {
    %c0_i32 = arith.constant 0 : i32
    %c0_i32_0 = arith.constant 0 : i32
    %c0_i32_1 = arith.constant 0 : i32
    return %arg0, %c0_i32, %c0_i32_0 : i32, i32, i32
  }
  func.func @transform_2(%arg0: i32) -> (i32, i32, i32) {
    %c0_i32 = arith.constant 0 : i32
    %c0_i32_0 = arith.constant 0 : i32
    %c0_i32_1 = arith.constant 0 : i32
    return %arg0, %c0_i32, %c0_i32_0 : i32, i32, i32
  }
  func.func @transform_3(%arg0: i32) -> (i32, i32, i32) {
    %c0_i32 = arith.constant 0 : i32
    %c0_i32_0 = arith.constant 0 : i32
    %c0_i32_1 = arith.constant 0 : i32
    return %arg0, %c0_i32, %c0_i32_0 : i32, i32, i32
  }
  func.func @transform_4(%arg0: i32) -> (i32, i32, i32) {
    %c0_i32 = arith.constant 0 : i32
    %c0_i32_0 = arith.constant 0 : i32
    %c0_i32_1 = arith.constant 0 : i32
    return %arg0, %c0_i32, %c0_i32_0 : i32, i32, i32
  }
  func.func @transform_5(%arg0: i32) -> (i32, i32, i32) {
    %c0_i32 = arith.constant 0 : i32
    %c0_i32_0 = arith.constant 0 : i32
    %c0_i32_1 = arith.constant 0 : i32
    %c0_i32_2 = arith.constant 0 : i32
    return %c0_i32, %c0_i32_0, %c0_i32_1 : i32, i32, i32
  }
  func.func @transform_6(%arg0: i32) -> (i32, i32, i32) {
    %c0_i32 = arith.constant 0 : i32
    %c0_i32_0 = arith.constant 0 : i32
    %c0_i32_1 = arith.constant 0 : i32
    %c0_i32_2 = arith.constant 0 : i32
    return %c0_i32, %c0_i32_0, %c0_i32_1 : i32, i32, i32
  }
  func.func @transform_7(%arg0: i32) -> (i32, i32) {
    %c0_i32 = arith.constant 0 : i32
    %c0_i32_0 = arith.constant 0 : i32
    %c0_i32_1 = arith.constant 0 : i32
    return %c0_i32, %c0_i32_0 : i32, i32
  }
  func.func @transform_8(%arg0: i32) -> (i32, i32, i32) {
    %c0_i32 = arith.constant 0 : i32
    %c0_i32_0 = arith.constant 0 : i32
    %c0_i32_1 = arith.constant 0 : i32
    %c0_i32_2 = arith.constant 0 : i32
    return %c0_i32, %c0_i32_0, %c0_i32_1 : i32, i32, i32
  }
  func.func @transform_9(%arg0: i32) -> (i32, i32) {
    %c0_i32 = arith.constant 0 : i32
    %c0_i32_0 = arith.constant 0 : i32
    %c0_i32_1 = arith.constant 0 : i32
    return %c0_i32, %c0_i32_0 : i32, i32
  }
  func.func @transform_10(%arg0: i32) -> (i32, i32, i32) {
    %c0_i32 = arith.constant 0 : i32
    %c0_i32_0 = arith.constant 0 : i32
    %c0_i32_1 = arith.constant 0 : i32
    return %arg0, %c0_i32, %c0_i32_0 : i32, i32, i32
  }
}

</mosaic_0001>

<llo_original>
// kernel: tpu_custom_call.1
$region0: #{tpu_custom_call.1}
  #allocation0 [shape = 'u32[]', space=smem, size = 0x4, offset = 0x4, fixed_abs, tag = 'smem constant byte address 0x4 - core index']
  #allocation1 [shape = 'u32[72,128]{1,0:T(1,128)}', space=vmem, size = 0x9000, scoped, tag = 'internal scratch']
  %s0 = inlined_call_operand.hbm [shape: f32[4,8,256], index: 0, kind: input, shape index: {}]
  %s1 = inlined_call_operand.hbm [shape: f32[4,8,8], index: 1, kind: input, shape index: {}]
  %s2 = inlined_call_operand.hbm [shape: f32[4,8,8], index: 2, kind: input, shape index: {}]
  %s3 = inlined_call_operand.vmem [shape: f32[4,8,2], index: 3, kind: input, shape index: {}]
  %s4 = inlined_call_operand.hbm [shape: f32[4,2,128], index: 4, kind: input, shape index: {}]
  %s5 = inlined_call_operand.hbm [shape: bf16[3,256,512], index: 5, kind: input, shape index: {}]
  %s6 = inlined_call_operand.vmem [shape: bf16[4,256,4], index: 6, kind: input, shape index: {}]
  %s7 = inlined_call_operand.hbm [shape: bf16[512,1920], index: 7, kind: input, shape index: {}]
  %s8 = inlined_call_operand.hbm [shape: f32[3,4,256], index: 8, kind: input, shape index: {}]
  %s9 = inlined_call_operand.hbm [shape: f32[8,512], index: 9, kind: input, shape index: {}]
  %s10 = inlined_call_operand.hbm [shape: f32[4,2,128], index: 10, kind: output, shape index: {}]
  %s11 = sld [smem:[#allocation0]]
  $region105: #{tpu_custom_call.1} parent=0
    _
  %s13 = ssub.s32 1, %s11
  %s14 = scalar_select 0, %s13, %s11
  $region1: #{tpu_custom_call.1} parent=0
    #allocation2 [shape = 'u8[16384]{0}', space=vmem, size = 0x4000, scoped, tag = 'input window, operand 0']
    #allocation3 [shape = 's32[2]{0}', space=sflag, size = 0x8, scoped, tag = 'scoped memory for tpu_custom_call.1']
    #allocation4 [shape = 's32[2]{0}', space=sflag, size = 0x8, scoped, tag = 'scoped memory for tpu_custom_call.1']
    #allocation5 [shape = 'u8[8192]{0}', space=vmem, size = 0x2000, scoped, tag = 'input window, operand 1']
    #allocation6 [shape = 's32[2]{0}', space=sflag, size = 0x8, scoped, tag = 'scoped memory for tpu_custom_call.1']
    #allocation7 [shape = 'u8[8192]{0}', space=vmem, size = 0x2000, scoped, tag = 'input window, operand 2']
    #allocation8 [shape = 'u8[2048]{0}', space=vmem, size = 0x800, scoped, tag = 'input window, operand 4']
    #allocation9 [shape = 's32[2]{0}', space=sflag, size = 0x8, scoped, tag = 'scoped memory for tpu_custom_call.1']
    #allocation10 [shape = 'u8[786432]{0}', space=vmem, size = 0xc0000, scoped, tag = 'input window, operand 5, single buffered']
    #allocation11 [shape = 'u8[1966080]{0}', space=vmem, size = 0x1e0000, scoped, tag = 'input window, operand 7, single buffered']
    #allocation12 [shape = 's32[1]{0}', space=sflag, size = 0x4, scoped, tag = 'scoped memory for tpu_custom_call.1']
    #allocation13 [shape = 'u8[12288]{0}', space=vmem, size = 0x3000, scoped, tag = 'input window, operand 8, single buffered']
    #allocation14 [shape = 'u8[16384]{0}', space=vmem, size = 0x4000, scoped, tag = 'input window, operand 9, single buffered']
    #allocation15 [shape = 's32[1]{0}', space=sflag, size = 0x4, scoped, tag = 'scoped memory for tpu_custom_call.1']
    #allocation16 [shape = 'u8[2048]{0}', space=vmem, size = 0x800, scoped, tag = 'output window, operand 0']
    %15 = vsyncpa [#allocation3], 0
    %s16 = scalar_lea.sflag [#allocation3], 1
    %17 = vsyncpa %s16, 0
    %18 = vsyncpa [#allocation6], 0
    %s19 = scalar_lea.sflag [#allocation6], 1
    %20 = vsyncpa %s19, 0
    %21 = vsyncpa [#allocation9], 0
    %s22 = scalar_lea.sflag [#allocation9], 1
    %23 = vsyncpa %s22, 0
    %24 = vsyncpa [#allocation12], 0
    %25 = vsyncpa [#allocation15], 0
    %26 = vsyncpa [#allocation4], 0
    %s27 = scalar_lea.sflag [#allocation4], 1
    %28 = vsyncpa %s27, 0
    loop: start=0, step=1, limit=6
    $region2: #{tpu_custom_call.1} parent=1 // loop_pre_header
      _
    $region3: #{tpu_custom_call.1} parent=1 // loop_header
      %s30 = sphi 0, %s34
      %p31 = scmp.ge.s32.totalorder %s30, 6
      %s40 = sphi 0, %s42
      %s43 = sphi 0, %s40
      %s44 = sphi 0, %s43
      %s60 = sphi 0, %s44
      %s66 = sphi 0, %s68
      %s69 = sphi 0, %s66
      %s70 = sphi 0, %s69
      %s86 = sphi 0, %s70
      %s92 = sphi 0, %s94
      %s95 = sphi 0, %s92
      %s96 = sphi 0, %s95
      %s112 = sphi 0, %s96
      %s118 = sphi 0, %s120
      %s121 = sphi 0, %s118
      %s122 = sphi 0, %s121
      %s138 = sphi 0, %s122
      %s144 = sphi 0, %s146
      %s147 = sphi 0, %s144
      %s148 = sphi 0, %s147
      %s164 = sphi 0, %s148
      %s168 = sphi 0, %s168
      %s170 = sphi 0, %s168
      %s171 = sphi 0, %s170
      %s185 = sphi 0, %s171
      %s189 = sphi 0, %s189
      %s191 = sphi 0, %s189
      %s192 = sphi 0, %s191
      %s206 = sphi 0, %s192
      %s210 = sphi 0, %s210
      %s212 = sphi 0, %s210
      %s213 = sphi 0, %s212
      %s227 = sphi 0, %s213
      %s231 = sphi 0, %s231
      %s233 = sphi 0, %s231
      %s234 = sphi 0, %s233
      %s248 = sphi 0, %s234
      %s252 = sphi 0, %s252
      %s254 = sphi 0, %s252
      %s255 = sphi 0, %s254
      %s269 = sphi 0, %s255
      %s275 = sphi 0, %s277
      %s278 = sphi 0, %s275
      %s279 = sphi 0, %s278
      %s295 = sphi 0, %s279
    $region4: #{tpu_custom_call.1} parent=1 // loop_header_branch
      %33 = sbr.rel (%p31) target = $region8
    $region5: #{tpu_custom_call.1} parent=1 // loop_body
      %s35 = ssub.s32 %s30, 1
      %s36 = ssub.s32 %s30, 2
      %s37 = sadd.s32 %s30, 1
      %s38 = ssub.s32 %s30, %s37
      %p39 = scmp.eq.s32.totalorder %s38, 0
      %s41 = sadd.s32 %s40, 1
      %s42 = scalar_select %p39, %s40, %s41
      %p45 = pneg %p39
      %p46 = scmp.eq.s32.totalorder %s30, 3
      %p47 = por %p45, %p46
      %p48 = scmp.ne.s32.totalorder %s40, %s43
      %p49 = scmp.eq.s32.totalorder %s30, 0
      %p50 = por %p48, %p49
      %p51 = scmp.ne.s32.totalorder %s40, %s43
      %p52 = scmp.eq.s32.totalorder %s35, 3
      %p53 = por %p51, %p52
      %p54 = scmp.ne.s32.totalorder %s43, %s44
      %p55 = scmp.eq.s32.totalorder %s35, 0
      %p56 = por %p54, %p55
      %p57 = scmp.ne.s32.totalorder %s43, %s44
      %p58 = scmp.eq.s32.totalorder %s36, 3
      %p59 = por %p57, %p58
      %p61 = scmp.ne.s32.totalorder %s44, %s60
      %p62 = scmp.eq.s32.totalorder %s36, 0
      %p63 = por %p61, %p62
      %s64 = ssub.s32 %s30, %s37
      %p65 = scmp.eq.s32.totalorder %s64, 0
      %s67 = sadd.s32 %s66, 1
      %s68 = scalar_select %p65, %s66, %s67
      %p71 = pneg %p65
      %p72 = scmp.eq.s32.totalorder %s30, 3
      %p73 = por %p71, %p72
      %p74 = scmp.ne.s32.totalorder %s66, %s69
      %p75 = scmp.eq.s32.totalorder %s30, 0
      %p76 = por %p74, %p75
      %p77 = scmp.ne.s32.totalorder %s66, %s69
      %p78 = scmp.eq.s32.totalorder %s35, 3
      %p79 = por %p77, %p78
      %p80 = scmp.ne.s32.totalorder %s69, %s70
      %p81 = scmp.eq.s32.totalorder %s35, 0
      %p82 = por %p80, %p81
      %p83 = scmp.ne.s32.totalorder %s69, %s70
      %p84 = scmp.eq.s32.totalorder %s36, 3
      %p85 = por %p83, %p84
      %p87 = scmp.ne.s32.totalorder %s70, %s86
      %p88 = scmp.eq.s32.totalorder %s36, 0
      %p89 = por %p87, %p88
      %s90 = ssub.s32 %s30, %s37
      %p91 = scmp.eq.s32.totalorder %s90, 0
      %s93 = sadd.s32 %s92, 1
      %s94 = scalar_select %p91, %s92, %s93
      %p97 = pneg %p91
      %p98 = scmp.eq.s32.totalorder %s30, 3
      %p99 = por %p97, %p98
      %p100 = scmp.ne.s32.totalorder %s92, %s95
      %p101 = scmp.eq.s32.totalorder %s30, 0
      %p102 = por %p100, %p101
      %p103 = scmp.ne.s32.totalorder %s92, %s95
      %p104 = scmp.eq.s32.totalorder %s35, 3
      %p105 = por %p103, %p104
      %p106 = scmp.ne.s32.totalorder %s95, %s96
      %p107 = scmp.eq.s32.totalorder %s35, 0
      %p108 = por %p106, %p107
      %p109 = scmp.ne.s32.totalorder %s95, %s96
      %p110 = scmp.eq.s32.totalorder %s36, 3
      %p111 = por %p109, %p110
      %p113 = scmp.ne.s32.totalorder %s96, %s112
      %p114 = scmp.eq.s32.totalorder %s36, 0
      %p115 = por %p113, %p114
      %s116 = ssub.s32 %s30, %s37
      %p117 = scmp.eq.s32.totalorder %s116, 0
      %s119 = sadd.s32 %s118, 1
      %s120 = scalar_select %p117, %s118, %s119
      %p123 = pneg %p117
      %p124 = scmp.eq.s32.totalorder %s30, 3
      %p125 = por %p123, %p124
      %p126 = scmp.ne.s32.totalorder %s118, %s121
      %p127 = scmp.eq.s32.totalorder %s30, 0
      %p128 = por %p126, %p127
      %p129 = scmp.ne.s32.totalorder %s118, %s121
      %p130 = scmp.eq.s32.totalorder %s35, 3
      %p131 = por %p129, %p130
      %p132 = scmp.ne.s32.totalorder %s121, %s122
      %p133 = scmp.eq.s32.totalorder %s35, 0
      %p134 = por %p132, %p133
      %p135 = scmp.ne.s32.totalorder %s121, %s122
      %p136 = scmp.eq.s32.totalorder %s36, 3
      %p137 = por %p135, %p136
      %p139 = scmp.ne.s32.totalorder %s122, %s138
      %p140 = scmp.eq.s32.totalorder %s36, 0
      %p141 = por %p139, %p140
      %s142 = ssub.s32 %s30, %s37
      %p143 = scmp.eq.s32.totalorder %s142, 0
      %s145 = sadd.s32 %s144, 1
      %s146 = scalar_select %p143, %s144, %s145
      %p149 = pneg %p143
      %p150 = scmp.eq.s32.totalorder %s30, 3
      %p151 = por %p149, %p150
      %p152 = scmp.ne.s32.totalorder %s144, %s147
      %p153 = scmp.eq.s32.totalorder %s30, 0
      %p154 = por %p152, %p153
      %p155 = scmp.ne.s32.totalorder %s144, %s147
      %p156 = scmp.eq.s32.totalorder %s35, 3
      %p157 = por %p155, %p156
      %p158 = scmp.ne.s32.totalorder %s147, %s148
      %p159 = scmp.eq.s32.totalorder %s35, 0
      %p160 = por %p158, %p159
      %p161 = scmp.ne.s32.totalorder %s147, %s148
      %p162 = scmp.eq.s32.totalorder %s36, 3
      %p163 = por %p161, %p162
      %p165 = scmp.ne.s32.totalorder %s148, %s164
      %p166 = scmp.eq.s32.totalorder %s36, 0
      %p167 = por %p165, %p166
      %s169 = sadd.s32 %s168, 1
      %p172 = scmp.eq.s32.totalorder %s30, 3
      %p173 = scmp.ne.s32.totalorder %s168, %s170
      %p174 = scmp.eq.s32.totalorder %s30, 0
      %p175 = por %p173, %p174
      %p176 = scmp.ne.s32.totalorder %s168, %s170
      %p177 = scmp.eq.s32.totalorder %s35, 3
      %p178 = por %p176, %p177
      %p179 = scmp.ne.s32.totalorder %s170, %s171
      %p180 = scmp.eq.s32.totalorder %s35, 0
      %p181 = por %p179, %p180
      %p182 = scmp.ne.s32.totalorder %s170, %s171
      %p183 = scmp.eq.s32.totalorder %s36, 3
      %p184 = por %p182, %p183
      %p186 = scmp.ne.s32.totalorder %s171, %s185
      %p187 = scmp.eq.s32.totalorder %s36, 0
      %p188 = por %p186, %p187
      %s190 = sadd.s32 %s189, 1
      %p193 = scmp.eq.s32.totalorder %s30, 3
      %p194 = scmp.ne.s32.totalorder %s189, %s191
      %p195 = scmp.eq.s32.totalorder %s30, 0
      %p196 = por %p194, %p195
      %p197 = scmp.ne.s32.totalorder %s189, %s191
      %p198 = scmp.eq.s32.totalorder %s35, 3
      %p199 = por %p197, %p198
      %p200 = scmp.ne.s32.totalorder %s191, %s192
      %p201 = scmp.eq.s32.totalorder %s35, 0
      %p202 = por %p200, %p201
      %p203 = scmp.ne.s32.totalorder %s191, %s192
      %p204 = scmp.eq.s32.totalorder %s36, 3
      %p205 = por %p203, %p204
      %p207 = scmp.ne.s32.totalorder %s192, %s206
      %p208 = scmp.eq.s32.totalorder %s36, 0
      %p209 = por %p207, %p208
      %s211 = sadd.s32 %s210, 1
      %p214 = scmp.eq.s32.totalorder %s30, 3
      %p215 = scmp.ne.s32.totalorder %s210, %s212
      %p216 = scmp.eq.s32.totalorder %s30, 0
      %p217 = por %p215, %p216
      %p218 = scmp.ne.s32.totalorder %s210, %s212
      %p219 = scmp.eq.s32.totalorder %s35, 3
      %p220 = por %p218, %p219
      %p221 = scmp.ne.s32.totalorder %s212, %s213
      %p222 = scmp.eq.s32.totalorder %s35, 0
      %p223 = por %p221, %p222
      %p224 = scmp.ne.s32.totalorder %s212, %s213
      %p225 = scmp.eq.s32.totalorder %s36, 3
      %p226 = por %p224, %p225
      %p228 = scmp.ne.s32.totalorder %s213, %s227
      %p229 = scmp.eq.s32.totalorder %s36, 0
      %p230 = por %p228, %p229
      %s232 = sadd.s32 %s231, 1
      %p235 = scmp.eq.s32.totalorder %s30, 3
      %p236 = scmp.ne.s32.totalorder %s231, %s233
      %p237 = scmp.eq.s32.totalorder %s30, 0
      %p238 = por %p236, %p237
      %p239 = scmp.ne.s32.totalorder %s231, %s233
      %p240 = scmp.eq.s32.totalorder %s35, 3
      %p241 = por %p239, %p240
      %p242 = scmp.ne.s32.totalorder %s233, %s234
      %p243 = scmp.eq.s32.totalorder %s35, 0
      %p244 = por %p242, %p243
      %p245 = scmp.ne.s32.totalorder %s233, %s234
      %p246 = scmp.eq.s32.totalorder %s36, 3
      %p247 = por %p245, %p246
      %p249 = scmp.ne.s32.totalorder %s234, %s248
      %p250 = scmp.eq.s32.totalorder %s36, 0
      %p251 = por %p249, %p250
      %s253 = sadd.s32 %s252, 1
      %p256 = scmp.eq.s32.totalorder %s30, 3
      %p257 = scmp.ne.s32.totalorder %s252, %s254
      %p258 = scmp.eq.s32.totalorder %s30, 0
      %p259 = por %p257, %p258
      %p260 = scmp.ne.s32.totalorder %s252, %s254
      %p261 = scmp.eq.s32.totalorder %s35, 3
      %p262 = por %p260, %p261
      %p263 = scmp.ne.s32.totalorder %s254, %s255
      %p264 = scmp.eq.s32.totalorder %s35, 0
      %p265 = por %p263, %p264
      %p266 = scmp.ne.s32.totalorder %s254, %s255
      %p267 = scmp.eq.s32.totalorder %s36, 3
      %p268 = por %p266, %p267
      %p270 = scmp.ne.s32.totalorder %s255, %s269
      %p271 = scmp.eq.s32.totalorder %s36, 0
      %p272 = por %p270, %p271
      %s273 = ssub.s32 %s30, %s37
      %p274 = scmp.eq.s32.totalorder %s273, 0
      %s276 = sadd.s32 %s275, 1
      %s277 = scalar_select %p274, %s275, %s276
      %p280 = pneg %p274
      %p281 = scmp.eq.s32.totalorder %s30, 3
      %p282 = por %p280, %p281
      %p283 = scmp.ne.s32.totalorder %s275, %s278
      %p284 = scmp.eq.s32.totalorder %s30, 0
      %p285 = por %p283, %p284
      %p286 = scmp.ne.s32.totalorder %s275, %s278
      %p287 = scmp.eq.s32.totalorder %s35, 3
      %p288 = por %p286, %p287
      %p289 = scmp.ne.s32.totalorder %s278, %s279
      %p290 = scmp.eq.s32.totalorder %s35, 0
      %p291 = por %p289, %p290
      %p292 = scmp.ne.s32.totalorder %s278, %s279
      %p293 = scmp.eq.s32.totalorder %s36, 3
      %p294 = por %p292, %p293
      %p296 = scmp.ne.s32.totalorder %s279, %s295
      %p297 = scmp.eq.s32.totalorder %s36, 0
      %p298 = por %p296, %p297
      %p299 = scmp.le.s32.totalorder 1, %s30
      %p300 = scmp.lt.s32.totalorder %s30, 5
      %p301 = pnand %p299, %p300
      %p302 = pneg %p301
      // Predicated region
      $region9: #{tpu_custom_call.1} parent=5 // pred_check
        _
      $region10: #{tpu_custom_call.1} parent=5 // pred_check_branch
        %304 = sbr.rel (%p301) target = $region12
      $region11: #{tpu_custom_call.1} parent=5 // pred_region
        %s305 = ssub.s32 %s30, 1
        // Predicated region
        $region13: #{tpu_custom_call.1} parent=11 // pred_check
          %p306 = pneg %p181
        $region14: #{tpu_custom_call.1} parent=11 // pred_check_branch
          %308 = sbr.rel (%p306) target = $region16
        $region15: #{tpu_custom_call.1} parent=11 // pred_region
          %310 = vsyncadd [#allocation9], 0
          %s311 = sshll.u32 %s5, 4
          %s312 = int_to_ptr.hbm [resolvable:$true] %s311
          %s313 = sshll.u32 [#allocation10], 4
          %s314 = int_to_ptr.vmem [resolvable:$true] %s313
          %319 = dma.hbm_to_vmem [thread:$0]  %s312, 24576, %s314, [#allocation9], 256, 256, 16
        $region16: #{tpu_custom_call.1} parent=11 // pred_fallthru
          _
        // Predicated region
        $region17: #{tpu_custom_call.1} parent=11 // pred_check
          %p320 = pneg %p202
        $region18: #{tpu_custom_call.1} parent=11 // pred_check_branch
          %322 = sbr.rel (%p320) target = $region20
        $region19: #{tpu_custom_call.1} parent=11 // pred_region
          _
        $region20: #{tpu_custom_call.1} parent=11 // pred_fallthru
          _
        // Predicated region
        $region21: #{tpu_custom_call.1} parent=11 // pred_check
          %p323 = pneg %p223
        $region22: #{tpu_custom_call.1} parent=11 // pred_check_branch
          %325 = sbr.rel (%p323) target = $region24
        $region23: #{tpu_custom_call.1} parent=11 // pred_region
          %327 = vsyncadd [#allocation12], 0
          %s328 = sshll.u32 %s7, 4
          %s329 = int_to_ptr.hbm [resolvable:$true] %s328
          %s330 = sshll.u32 [#allocation11], 4
          %s331 = int_to_ptr.vmem [resolvable:$true] %s330
          %336 = dma.hbm_to_vmem [thread:$0]  %s329, 61440, %s331, [#allocation12], 960, 960, 60
        $region24: #{tpu_custom_call.1} parent=11 // pred_fallthru
          _
        // Predicated region
        $region25: #{tpu_custom_call.1} parent=11 // pred_check
          %p337 = pneg %p244
        $region26: #{tpu_custom_call.1} parent=11 // pred_check_branch
          %339 = sbr.rel (%p337) target = $region28
        $region27: #{tpu_custom_call.1} parent=11 // pred_region
          %341 = vsyncadd [#allocation12], 0
          %s342 = sshll.u32 %s8, 4
          %s343 = int_to_ptr.hbm [resolvable:$true] %s342
          %s344 = sshll.u32 [#allocation13], 4
          %s345 = int_to_ptr.vmem [resolvable:$true] %s344
          %350 = dma.hbm_to_vmem [thread:$0]  %s343, 384, %s345, [#allocation12], 128, 128, 8
        $region28: #{tpu_custom_call.1} parent=11 // pred_fallthru
          _
        // Predicated region
        $region29: #{tpu_custom_call.1} parent=11 // pred_check
          %p351 = pneg %p265
        $region30: #{tpu_custom_call.1} parent=11 // pred_check_branch
          %353 = sbr.rel (%p351) target = $region32
        $region31: #{tpu_custom_call.1} parent=11 // pred_region
          %355 = vsyncadd [#allocation15], 0
          %s357 = sshll.u32 %s9, 4
          %s358 = int_to_ptr.hbm [resolvable:$true] %s357
          %s359 = sshll.u32 [#allocation14], 4
          %s360 = int_to_ptr.vmem [resolvable:$true] %s359
          %362 = dma.hbm_to_vmem [thread:$0]  %s358, 512, %s360, [#allocation15]
        $region32: #{tpu_custom_call.1} parent=11 // pred_fallthru
          _
      $region12: #{tpu_custom_call.1} parent=5 // pred_fallthru
        _
      %p363 = scmp.lt.s32.totalorder %s30, 4
      // Predicated region
      $region33: #{tpu_custom_call.1} parent=5 // pred_check
        %p364 = pneg %p363
      $region34: #{tpu_custom_call.1} parent=5 // pred_check_branch
        %366 = sbr.rel (%p364) target = $region36
      $region35: #{tpu_custom_call.1} parent=5 // pred_region
        // Predicated region
        $region37: #{tpu_custom_call.1} parent=35 // pred_check
          %p367 = pneg %p50
        $region38: #{tpu_custom_call.1} parent=35 // pred_check_branch
          %369 = sbr.rel (%p367) target = $region40
        $region39: #{tpu_custom_call.1} parent=35 // pred_region
          %s370 = sand.u32 %s40, 1
          %s371 = scalar_lea.sflag [#allocation3], %s370
          %s372 = sand.u32 %s40, 1
          %s373 = smul.addr %s372, 16
          %s374 = scalar_lea.vmem [#allocation2], %s373
          %376 = vsyncadd %s371, 0
          %s377 = smul.addr %s30, 2
          %s378 = smul.addr %s377, 8
          %s379 = scalar_lea.hbm %s0, %s378
          %s381 = sshll.u32 %s379, 4
          %s382 = int_to_ptr.hbm [resolvable:$true] %s381
          %s383 = sshll.u32 %s374, 4
          %s384 = int_to_ptr.vmem [resolvable:$true] %s383
          %386 = dma.hbm_to_vmem [thread:$0]  %s382, 256, %s384, %s371
        $region40: #{tpu_custom_call.1} parent=35 // pred_fallthru
          _
        // Predicated region
        $region41: #{tpu_custom_call.1} parent=35 // pred_check
          %p387 = pneg %p76
        $region42: #{tpu_custom_call.1} parent=35 // pred_check_branch
          %389 = sbr.rel (%p387) target = $region44
        $region43: #{tpu_custom_call.1} parent=35 // pred_region
          %s390 = sand.u32 %s30, 1
          %s391 = scalar_lea.sflag [#allocation6], %s390
          %s392 = sand.u32 %s66, 1
          %s393 = smul.addr %s392, 8
          %s394 = scalar_lea.vmem [#allocation5], %s393
          %396 = vsyncadd %s391, 0
          %s397 = smul.addr %s30, 8
          %s398 = scalar_lea.hbm %s1, %s397
          %s400 = sshll.u32 %s398, 4
          %s401 = int_to_ptr.hbm [resolvable:$true] %s400
          %s402 = sshll.u32 %s394, 4
          %s403 = int_to_ptr.vmem [resolvable:$true] %s402
          %405 = dma.hbm_to_vmem [thread:$0]  %s401, 128, %s403, %s391
        $region44: #{tpu_custom_call.1} parent=35 // pred_fallthru
          _
        // Predicated region
        $region45: #{tpu_custom_call.1} parent=35 // pred_check
          %p406 = pneg %p102
        $region46: #{tpu_custom_call.1} parent=35 // pred_check_branch
          %408 = sbr.rel (%p406) target = $region48
        $region47: #{tpu_custom_call.1} parent=35 // pred_region
          %s409 = sand.u32 %s30, 1
          %s410 = scalar_lea.sflag [#allocation6], %s409
          %s411 = sand.u32 %s92, 1
          %s412 = smul.addr %s411, 8
          %s413 = scalar_lea.vmem [#allocation7], %s412
          %415 = vsyncadd %s410, 0
          %s416 = smul.addr %s30, 8
          %s417 = scalar_lea.hbm %s2, %s416
          %s419 = sshll.u32 %s417, 4
          %s420 = int_to_ptr.hbm [resolvable:$true] %s419
          %s421 = sshll.u32 %s413, 4
          %s422 = int_to_ptr.vmem [resolvable:$true] %s421
          %424 = dma.hbm_to_vmem [thread:$0]  %s420, 128, %s422, %s410
        $region48: #{tpu_custom_call.1} parent=35 // pred_fallthru
          _
        // Predicated region
        $region49: #{tpu_custom_call.1} parent=35 // pred_check
          %p425 = pneg %p128
        $region50: #{tpu_custom_call.1} parent=35 // pred_check_branch
          %427 = sbr.rel (%p425) target = $region52
        $region51: #{tpu_custom_call.1} parent=35 // pred_region
          %p428 = scmp.lt.s32.totalorder %s30, 3
          %s429 = scalar_select %p428, %s30, 3
          %s430 = smul.addr %s429, 8
          %s431 = scalar_lea.vmem %s3, %s430
        $region52: #{tpu_custom_call.1} parent=35 // pred_fallthru
          _
        // Predicated region
        $region53: #{tpu_custom_call.1} parent=35 // pred_check
          %p432 = pneg %p154
        $region54: #{tpu_custom_call.1} parent=35 // pred_check_branch
          %434 = sbr.rel (%p432) target = $region56
        $region55: #{tpu_custom_call.1} parent=35 // pred_region
          %s435 = sand.u32 %s30, 1
          %s436 = scalar_lea.sflag [#allocation9], %s435
          %s437 = sand.u32 %s144, 1
          %s438 = smul.addr %s437, 2
          %s439 = scalar_lea.vmem [#allocation8], %s438
          %441 = vsyncadd %s436, 0
          %s442 = smul.addr %s30, 2
          %s443 = scalar_lea.hbm %s4, %s442
          %s445 = sshll.u32 %s443, 4
          %s446 = int_to_ptr.hbm [resolvable:$true] %s445
          %s447 = sshll.u32 %s439, 4
          %s448 = int_to_ptr.vmem [resolvable:$true] %s447
          %450 = dma.hbm_to_vmem [thread:$0]  %s446, 32, %s448, %s436
        $region56: #{tpu_custom_call.1} parent=35 // pred_fallthru
          _
      $region36: #{tpu_custom_call.1} parent=5 // pred_fallthru
        _
      %p451 = scmp.le.s32.totalorder 1, %s30
      %p452 = scmp.lt.s32.totalorder %s30, 5
      %p453 = pnand %p451, %p452
      %p454 = pneg %p453
      // Predicated region
      $region57: #{tpu_custom_call.1} parent=5 // pred_check
        _
      $region58: #{tpu_custom_call.1} parent=5 // pred_check_branch
        %456 = sbr.rel (%p453) target = $region60
      $region59: #{tpu_custom_call.1} parent=5 // pred_region
        %s457 = ssub.s32 %s30, 1
        %s458 = sand.u32 %s43, 1
        %s459 = scalar_lea.sflag [#allocation3], %s458
        %s460 = sand.u32 %s43, 1
        %s461 = smul.addr %s460, 16
        %s462 = scalar_lea.vmem [#allocation2], %s461
        // Predicated region
        $region61: #{tpu_custom_call.1} parent=59 // pred_check
          %p463 = pneg %p56
        $region62: #{tpu_custom_call.1} parent=59 // pred_check_branch
          %465 = sbr.rel (%p463) target = $region64
        $region63: #{tpu_custom_call.1} parent=59 // pred_region
          %467 = dma.done %s459, 256
        $region64: #{tpu_custom_call.1} parent=59 // pred_fallthru
          _
        %s468 = sand.u32 %s35, 1
        %s469 = scalar_lea.sflag [#allocation6], %s468
        %s470 = sand.u32 %s69, 1
        %s471 = smul.addr %s470, 8
        %s472 = scalar_lea.vmem [#allocation5], %s471
        // Predicated region
        $region65: #{tpu_custom_call.1} parent=59 // pred_check
          %p473 = pneg %p82
        $region66: #{tpu_custom_call.1} parent=59 // pred_check_branch
          %475 = sbr.rel (%p473) target = $region68
        $region67: #{tpu_custom_call.1} parent=59 // pred_region
          %477 = dma.done %s469, 128
        $region68: #{tpu_custom_call.1} parent=59 // pred_fallthru
          _
        %s478 = sand.u32 %s35, 1
        %s479 = scalar_lea.sflag [#allocation6], %s478
        %s480 = sand.u32 %s95, 1
        %s481 = smul.addr %s480, 8
        %s482 = scalar_lea.vmem [#allocation7], %s481
        // Predicated region
        $region69: #{tpu_custom_call.1} parent=59 // pred_check
          %p483 = pneg %p108
        $region70: #{tpu_custom_call.1} parent=59 // pred_check_branch
          %485 = sbr.rel (%p483) target = $region72
        $region71: #{tpu_custom_call.1} parent=59 // pred_region
          %487 = dma.done %s479, 128
        $region72: #{tpu_custom_call.1} parent=59 // pred_fallthru
          _
        %s488 = sand.u32 %s35, 1
        %s489 = scalar_lea.sflag [#allocation9], %s488
        %s490 = sand.u32 %s147, 1
        %s491 = smul.addr %s490, 2
        %s492 = scalar_lea.vmem [#allocation8], %s491
        // Predicated region
        $region73: #{tpu_custom_call.1} parent=59 // pred_check
          %p493 = pneg %p160
        $region74: #{tpu_custom_call.1} parent=59 // pred_check_branch
          %495 = sbr.rel (%p493) target = $region76
        $region75: #{tpu_custom_call.1} parent=59 // pred_region
          %497 = dma.done %s489, 32
        $region76: #{tpu_custom_call.1} parent=59 // pred_fallthru
          _
        // Predicated region
        $region77: #{tpu_custom_call.1} parent=59 // pred_check
          %p498 = pneg %p181
        $region78: #{tpu_custom_call.1} parent=59 // pred_check_branch
          %500 = sbr.rel (%p498) target = $region80
        $region79: #{tpu_custom_call.1} parent=59 // pred_region
          %502 = dma.done [#allocation9], 24576
        $region80: #{tpu_custom_call.1} parent=59 // pred_fallthru
          _
        // Predicated region
        $region81: #{tpu_custom_call.1} parent=59 // pred_check
          %p503 = pneg %p223
        $region82: #{tpu_custom_call.1} parent=59 // pred_check_branch
          %505 = sbr.rel (%p503) target = $region84
        $region83: #{tpu_custom_call.1} parent=59 // pred_region
          %507 = dma.done [#allocation12], 61440
        $region84: #{tpu_custom_call.1} parent=59 // pred_fallthru
          _
        // Predicated region
        $region85: #{tpu_custom_call.1} parent=59 // pred_check
          %p508 = pneg %p244
        $region86: #{tpu_custom_call.1} parent=59 // pred_check_branch
          %510 = sbr.rel (%p508) target = $region88
        $region87: #{tpu_custom_call.1} parent=59 // pred_region
          %512 = dma.done [#allocation12], 384
        $region88: #{tpu_custom_call.1} parent=59 // pred_fallthru
          _
        // Predicated region
        $region89: #{tpu_custom_call.1} parent=59 // pred_check
          %p513 = pneg %p265
        $region90: #{tpu_custom_call.1} parent=59 // pred_check_branch
          %515 = sbr.rel (%p513) target = $region92
        $region91: #{tpu_custom_call.1} parent=59 // pred_region
          %517 = dma.done [#allocation15], 512
        $region92: #{tpu_custom_call.1} parent=59 // pred_fallthru
          _
        %s518 = sand.u32 %s43, 1
        %s519 = scalar_lea.sflag [#allocation3], %s518
        %s520 = sand.u32 %s43, 1
        %s521 = smul.addr %s520, 16
        %s522 = scalar_lea.vmem [#allocation2], %s521
        %p523 = pneg %p56
        %p524 = pneg %p53
        %s525 = sand.u32 %s35, 1
        %s526 = scalar_lea.sflag [#allocation6], %s525
        %s527 = sand.u32 %s69, 1
        %s528 = smul.addr %s527, 8
        %s529 = scalar_lea.vmem [#allocation5], %s528
        %p530 = pneg %p82
        %p531 = pneg %p79
        %s532 = sand.u32 %s35, 1
        %s533 = scalar_lea.sflag [#allocation6], %s532
        %s534 = sand.u32 %s95, 1
        %s535 = smul.addr %s534, 8
        %s536 = scalar_lea.vmem [#allocation7], %s535
        %p537 = pneg %p108
        %p538 = pneg %p105
        %p539 = scmp.lt.s32.totalorder %s35, 3
        %s540 = scalar_select %p539, %s35, 3
        %s541 = smul.addr %s540, 8
        %s542 = scalar_lea.vmem %s3, %s541
        %p543 = pneg %p134
        %p544 = pneg %p131
        %s545 = sand.u32 %s35, 1
        %s546 = scalar_lea.sflag [#allocation9], %s545
        %s547 = sand.u32 %s147, 1
        %s548 = smul.addr %s547, 2
        %s549 = scalar_lea.vmem [#allocation8], %s548
        %p550 = pneg %p160
        %p551 = pneg %p157
        %p552 = pneg %p181
        %p553 = pneg %p178
        %p554 = pneg %p202
        %p555 = pneg %p199
        %p556 = pneg %p223
        %p557 = pneg %p220
        %p558 = pneg %p244
        %p559 = pneg %p241
        %p560 = pneg %p265
        %p561 = pneg %p262
        %p562 = pneg %p291
        %p563 = pneg %p288
        %s564 = sand.u32 %s278, 1
        %s565 = scalar_lea.sflag [#allocation4], %s564
        %s566 = sand.u32 %s278, 1
        %s567 = smul.addr %s566, 2
        %s568 = scalar_lea.vmem [#allocation16], %s567
        %p569 = scmp.lt.s32.totalorder %s35, 3
        %s570 = scalar_select %p569, %s35, 3
        %s571 = smul.addr %s570, 8
        %s572 = scalar_lea.vmem %s3, %s571
        %v574 = vld [vmem:[%s472] sm:$0xff]
        %v575 = vld [vmem:[%s482] sm:$0xff]
        %v576 = vld [vmem:[%s462] sm:$0xff]
        %v577 = vld [vmem:[%s462 + $0x8] sm:$0xff]
        %v578 = vld [vmem:[#allocation13] sm:$0xff]
        %v579 = vpack.c.bf16 %v576, %v576
        %v580 = vpack.c.bf16 %v577, %v577
        %v581 = vld [vmem:[#allocation10] sm:$0xff]
        %v582 = vld [vmem:[#allocation10 + $0x8] sm:$0xff]
        %v583 = vld [vmem:[#allocation10 + $0x10] sm:$0xff]
        %v584 = vld [vmem:[#allocation10 + $0x18] sm:$0xff]
        %v585 = vld [vmem:[#allocation10 + $0x20] sm:$0xff]
        %v586 = vld [vmem:[#allocation10 + $0x28] sm:$0xff]
        %v587 = vld [vmem:[#allocation10 + $0x30] sm:$0xff]
        %v588 = vld [vmem:[#allocation10 + $0x38] sm:$0xff]
        %v589 = vld [vmem:[#allocation10 + $0x40] sm:$0xff]
        %v590 = vld [vmem:[#allocation10 + $0x48] sm:$0xff]
        %v591 = vld [vmem:[#allocation10 + $0x50] sm:$0xff]
        %v592 = vld [vmem:[#allocation10 + $0x58] sm:$0xff]
        %v593 = vld [vmem:[#allocation10 + $0x60] sm:$0xff]
        %v594 = vld [vmem:[#allocation10 + $0x68] sm:$0xff]
        %v595 = vld [vmem:[#allocation10 + $0x70] sm:$0xff]
        %v596 = vld [vmem:[#allocation10 + $0x78] sm:$0xff]
        %v597 = vld [vmem:[#allocation10 + $0x80] sm:$0xff]
        %v598 = vld [vmem:[#allocation10 + $0x88] sm:$0xff]
        %v599 = vld [vmem:[#allocation10 + $0x90] sm:$0xff]
        %v600 = vld [vmem:[#allocation10 + $0x98] sm:$0xff]
        %v601 = vld [vmem:[#allocation10 + $0xa0] sm:$0xff]
        %v602 = vld [vmem:[#allocation10 + $0xa8] sm:$0xff]
        %v603 = vld [vmem:[#allocation10 + $0xb0] sm:$0xff]
        %v604 = vld [vmem:[#allocation10 + $0xb8] sm:$0xff]
        %v605 = vld [vmem:[#allocation10 + $0xc0] sm:$0xff]
        %v606 = vld [vmem:[#allocation10 + $0xc8] sm:$0xff]
        %v607 = vld [vmem:[#allocation10 + $0xd0] sm:$0xff]
        %v608 = vld [vmem:[#allocation10 + $0xd8] sm:$0xff]
        %v609 = vld [vmem:[#allocation10 + $0xe0] sm:$0xff]
        %v610 = vld [vmem:[#allocation10 + $0xe8] sm:$0xff]
        %v611 = vld [vmem:[#allocation10 + $0xf0] sm:$0xff]
        %v612 = vld [vmem:[#allocation10 + $0xf8] sm:$0xff]
        %v613 = vld [vmem:[#allocation10 + $0x100] sm:$0xff]
        %v614 = vld [vmem:[#allocation10 + $0x108] sm:$0xff]
        %v615 = vld [vmem:[#allocation10 + $0x110] sm:$0xff]
        %v616 = vld [vmem:[#allocation10 + $0x118] sm:$0xff]
        %v617 = vld [vmem:[#allocation10 + $0x120] sm:$0xff]
        %v618 = vld [vmem:[#allocation10 + $0x128] sm:$0xff]
        %v619 = vld [vmem:[#allocation10 + $0x130] sm:$0xff]
        %v620 = vld [vmem:[#allocation10 + $0x138] sm:$0xff]
        %v621 = vld [vmem:[#allocation10 + $0x140] sm:$0xff]
        %v622 = vld [vmem:[#allocation10 + $0x148] sm:$0xff]
        %v623 = vld [vmem:[#allocation10 + $0x150] sm:$0xff]
        %v624 = vld [vmem:[#allocation10 + $0x158] sm:$0xff]
        %v625 = vld [vmem:[#allocation10 + $0x160] sm:$0xff]
        %v626 = vld [vmem:[#allocation10 + $0x168] sm:$0xff]
        %v627 = vld [vmem:[#allocation10 + $0x170] sm:$0xff]
        %v628 = vld [vmem:[#allocation10 + $0x178] sm:$0xff]
        %v629 = vld [vmem:[#allocation10 + $0x180] sm:$0xff]
        %v630 = vld [vmem:[#allocation10 + $0x188] sm:$0xff]
        %v631 = vld [vmem:[#allocation10 + $0x190] sm:$0xff]
        %v632 = vld [vmem:[#allocation10 + $0x198] sm:$0xff]
        %v633 = vld [vmem:[#allocation10 + $0x1a0] sm:$0xff]
        %v634 = vld [vmem:[#allocation10 + $0x1a8] sm:$0xff]
        %v635 = vld [vmem:[#allocation10 + $0x1b0] sm:$0xff]
        %v636 = vld [vmem:[#allocation10 + $0x1b8] sm:$0xff]
        %v637 = vld [vmem:[#allocation10 + $0x1c0] sm:$0xff]
        %v638 = vld [vmem:[#allocation10 + $0x1c8] sm:$0xff]
        %v639 = vld [vmem:[#allocation10 + $0x1d0] sm:$0xff]
        %v640 = vld [vmem:[#allocation10 + $0x1d8] sm:$0xff]
        %v641 = vld [vmem:[#allocation10 + $0x1e0] sm:$0xff]
        %v642 = vld [vmem:[#allocation10 + $0x1e8] sm:$0xff]
        %v643 = vld [vmem:[#allocation10 + $0x1f0] sm:$0xff]
        %v644 = vld [vmem:[#allocation10 + $0x1f8] sm:$0xff]
        %v709 = vunpack.c.l.b16 %v581
        %v710 = vunpack.c.h.b16 %v581
        %v711 = vunpack.c.l.b16 %v582
        %v712 = vunpack.c.h.b16 %v582
        %v713 = vunpack.c.l.b16 %v583
        %v714 = vunpack.c.h.b16 %v583
        %v715 = vunpack.c.l.b16 %v584
        %v716 = vunpack.c.h.b16 %v584
        %v717 = vunpack.c.l.b16 %v585
        %v718 = vunpack.c.h.b16 %v585
        %v719 = vunpack.c.l.b16 %v586
        %v720 = vunpack.c.h.b16 %v586
        %v721 = vunpack.c.l.b16 %v587
        %v722 = vunpack.c.h.b16 %v587
        %v723 = vunpack.c.l.b16 %v588
        %v724 = vunpack.c.h.b16 %v588
        %v725 = vunpack.c.l.b16 %v589
        %v726 = vunpack.c.h.b16 %v589
        %v727 = vunpack.c.l.b16 %v590
        %v728 = vunpack.c.h.b16 %v590
        %v729 = vunpack.c.l.b16 %v591
        %v730 = vunpack.c.h.b16 %v591
        %v731 = vunpack.c.l.b16 %v592
        %v732 = vunpack.c.h.b16 %v592
        %v733 = vunpack.c.l.b16 %v593
        %v734 = vunpack.c.h.b16 %v593
        %v735 = vunpack.c.l.b16 %v594
        %v736 = vunpack.c.h.b16 %v594
        %v737 = vunpack.c.l.b16 %v595
        %v738 = vunpack.c.h.b16 %v595
        %v739 = vunpack.c.l.b16 %v596
        %v740 = vunpack.c.h.b16 %v596
        %v741 = vunpack.c.l.b16 %v597
        %v742 = vunpack.c.h.b16 %v597
        %v743 = vunpack.c.l.b16 %v598
        %v744 = vunpack.c.h.b16 %v598
        %v745 = vunpack.c.l.b16 %v599
        %v746 = vunpack.c.h.b16 %v599
        %v747 = vunpack.c.l.b16 %v600
        %v748 = vunpack.c.h.b16 %v600
        %v749 = vunpack.c.l.b16 %v601
        %v750 = vunpack.c.h.b16 %v601
        %v751 = vunpack.c.l.b16 %v602
        %v752 = vunpack.c.h.b16 %v602
        %v753 = vunpack.c.l.b16 %v603
        %v754 = vunpack.c.h.b16 %v603
        %v755 = vunpack.c.l.b16 %v604
        %v756 = vunpack.c.h.b16 %v604
        %v757 = vunpack.c.l.b16 %v605
        %v758 = vunpack.c.h.b16 %v605
        %v759 = vunpack.c.l.b16 %v606
        %v760 = vunpack.c.h.b16 %v606
        %v761 = vunpack.c.l.b16 %v607
        %v762 = vunpack.c.h.b16 %v607
        %v763 = vunpack.c.l.b16 %v608
        %v764 = vunpack.c.h.b16 %v608
        %v765 = vunpack.c.l.b16 %v609
        %v766 = vunpack.c.h.b16 %v609
        %v767 = vunpack.c.l.b16 %v610
        %v768 = vunpack.c.h.b16 %v610
        %v769 = vunpack.c.l.b16 %v611
        %v770 = vunpack.c.h.b16 %v611
        %v771 = vunpack.c.l.b16 %v612
        %v772 = vunpack.c.h.b16 %v612
        %v773 = vunpack.c.l.b16 %v613
        %v774 = vunpack.c.h.b16 %v613
        %v775 = vunpack.c.l.b16 %v614
        %v776 = vunpack.c.h.b16 %v614
        %v777 = vunpack.c.l.b16 %v615
        %v778 = vunpack.c.h.b16 %v615
        %v779 = vunpack.c.l.b16 %v616
        %v780 = vunpack.c.h.b16 %v616
        %v781 = vunpack.c.l.b16 %v617
        %v782 = vunpack.c.h.b16 %v617
        %v783 = vunpack.c.l.b16 %v618
        %v784 = vunpack.c.h.b16 %v618
        %v785 = vunpack.c.l.b16 %v619
        %v786 = vunpack.c.h.b16 %v619
        %v787 = vunpack.c.l.b16 %v620
        %v788 = vunpack.c.h.b16 %v620
        %v789 = vunpack.c.l.b16 %v621
        %v790 = vunpack.c.h.b16 %v621
        %v791 = vunpack.c.l.b16 %v622
        %v792 = vunpack.c.h.b16 %v622
        %v793 = vunpack.c.l.b16 %v623
        %v794 = vunpack.c.h.b16 %v623
        %v795 = vunpack.c.l.b16 %v624
        %v796 = vunpack.c.h.b16 %v624
        %v797 = vunpack.c.l.b16 %v625
        %v798 = vunpack.c.h.b16 %v625
        %v799 = vunpack.c.l.b16 %v626
        %v800 = vunpack.c.h.b16 %v626
        %v801 = vunpack.c.l.b16 %v627
        %v802 = vunpack.c.h.b16 %v627
        %v803 = vunpack.c.l.b16 %v628
        %v804 = vunpack.c.h.b16 %v628
        %v805 = vunpack.c.l.b16 %v629
        %v806 = vunpack.c.h.b16 %v629
        %v807 = vunpack.c.l.b16 %v630
        %v808 = vunpack.c.h.b16 %v630
        %v809 = vunpack.c.l.b16 %v631
        %v810 = vunpack.c.h.b16 %v631
        %v811 = vunpack.c.l.b16 %v632
        %v812 = vunpack.c.h.b16 %v632
        %v813 = vunpack.c.l.b16 %v633
        %v814 = vunpack.c.h.b16 %v633
        %v815 = vunpack.c.l.b16 %v634
        %v816 = vunpack.c.h.b16 %v634
        %v817 = vunpack.c.l.b16 %v635
        %v818 = vunpack.c.h.b16 %v635
        %v819 = vunpack.c.l.b16 %v636
        %v820 = vunpack.c.h.b16 %v636
        %v821 = vunpack.c.l.b16 %v637
        %v822 = vunpack.c.h.b16 %v637
        %v823 = vunpack.c.l.b16 %v638
        %v824 = vunpack.c.h.b16 %v638
        %v825 = vunpack.c.l.b16 %v639
        %v826 = vunpack.c.h.b16 %v639
        %v827 = vunpack.c.l.b16 %v640
        %v828 = vunpack.c.h.b16 %v640
        %v829 = vunpack.c.l.b16 %v641
        %v830 = vunpack.c.h.b16 %v641
        %v831 = vunpack.c.l.b16 %v642
        %v832 = vunpack.c.h.b16 %v642
        %v833 = vunpack.c.l.b16 %v643
        %v834 = vunpack.c.h.b16 %v643
        %v835 = vunpack.c.l.b16 %v644
        %v836 = vunpack.c.h.b16 %v644
        %v837 = vpack.c.b16 %v713, %v709
        %v838 = vpack.c.b16 %v714, %v710
        %v839 = vpack.c.b16 %v715, %v711
        %v840 = vpack.c.b16 %v716, %v712
        %v841 = vpack.c.b16 %v721, %v717
        %v842 = vpack.c.b16 %v722, %v718
        %v843 = vpack.c.b16 %v723, %v719
        %v844 = vpack.c.b16 %v724, %v720
        %v845 = vpack.c.b16 %v729, %v725
        %v846 = vpack.c.b16 %v730, %v726
        %v847 = vpack.c.b16 %v731, %v727
        %v848 = vpack.c.b16 %v732, %v728
        %v849 = vpack.c.b16 %v737, %v733
        %v850 = vpack.c.b16 %v738, %v734
        %v851 = vpack.c.b16 %v739, %v735
        %v852 = vpack.c.b16 %v740, %v736
        %v853 = vpack.c.b16 %v745, %v741
        %v854 = vpack.c.b16 %v746, %v742
        %v855 = vpack.c.b16 %v747, %v743
        %v856 = vpack.c.b16 %v748, %v744
        %v857 = vpack.c.b16 %v753, %v749
        %v858 = vpack.c.b16 %v754, %v750
        %v859 = vpack.c.b16 %v755, %v751
        %v860 = vpack.c.b16 %v756, %v752
        %v861 = vpack.c.b16 %v761, %v757
        %v862 = vpack.c.b16 %v762, %v758
        %v863 = vpack.c.b16 %v763, %v759
        %v864 = vpack.c.b16 %v764, %v760
        %v865 = vpack.c.b16 %v769, %v765
        %v866 = vpack.c.b16 %v770, %v766
        %v867 = vpack.c.b16 %v771, %v767
        %v868 = vpack.c.b16 %v772, %v768
        %v869 = vpack.c.b16 %v777, %v773
        %v870 = vpack.c.b16 %v778, %v774
        %v871 = vpack.c.b16 %v779, %v775
        %v872 = vpack.c.b16 %v780, %v776
        %v873 = vpack.c.b16 %v785, %v781
        %v874 = vpack.c.b16 %v786, %v782
        %v875 = vpack.c.b16 %v787, %v783
        %v876 = vpack.c.b16 %v788, %v784
        %v877 = vpack.c.b16 %v793, %v789
        %v878 = vpack.c.b16 %v794, %v790
        %v879 = vpack.c.b16 %v795, %v791
        %v880 = vpack.c.b16 %v796, %v792
        %v881 = vpack.c.b16 %v801, %v797
        %v882 = vpack.c.b16 %v802, %v798
        %v883 = vpack.c.b16 %v803, %v799
        %v884 = vpack.c.b16 %v804, %v800
        %v885 = vpack.c.b16 %v809, %v805
        %v886 = vpack.c.b16 %v810, %v806
        %v887 = vpack.c.b16 %v811, %v807
        %v888 = vpack.c.b16 %v812, %v808
        %v889 = vpack.c.b16 %v817, %v813
        %v890 = vpack.c.b16 %v818, %v814
        %v891 = vpack.c.b16 %v819, %v815
        %v892 = vpack.c.b16 %v820, %v816
        %v893 = vpack.c.b16 %v825, %v821
        %v894 = vpack.c.b16 %v826, %v822
        %v895 = vpack.c.b16 %v827, %v823
        %v896 = vpack.c.b16 %v828, %v824
        %v897 = vpack.c.b16 %v833, %v829
        %v898 = vpack.c.b16 %v834, %v830
        %v899 = vpack.c.b16 %v835, %v831
        %v900 = vpack.c.b16 %v836, %v832
        %965 = vmatpush.bf16.msra.mxu0 %v865
        %966 = vmatpush.bf16.msra.mxu0 %v861
        %967 = vmatpush.bf16.msra.mxu0 %v857
        %968 = vmatpush.bf16.msra.mxu0 %v853
        %969 = vmatpush.bf16.msra.mxu0 %v849
        %970 = vmatpush.bf16.msra.mxu0 %v845
        %971 = vmatpush.bf16.msra.mxu0 %v841
        %972 = vmatpush.bf16.msra.mxu0 %v837
        %973 = vmatmul.bf16.gmra.mxu0 %v579
        %v974 = vpop.f32.mrf.mxu0
        %v975 = vadd.f32 0.0, %v974
        %v976 = vpop.f32.mrf.mxu0
        %977 = vdwg.mxu0
        %978 = vmatpush.bf16.msra.mxu0 %v897
        %979 = vmatpush.bf16.msra.mxu0 %v893
        %980 = vmatpush.bf16.msra.mxu0 %v889
        %981 = vmatpush.bf16.msra.mxu0 %v885
        %982 = vmatpush.bf16.msra.mxu0 %v881
        %983 = vmatpush.bf16.msra.mxu0 %v877
        %984 = vmatpush.bf16.msra.mxu0 %v873
        %985 = vmatpush.bf16.msra.mxu0 %v869
        %986 = vmatmul.bf16.gmra.mxu0 %v580
        %v987 = vpop.f32.mrf.mxu0
        %v988 = vadd.f32 %v975, %v987
        %v989 = vpop.f32.mrf.mxu0
        %990 = vdwg.mxu0
        %991 = vmatpush.bf16.msra.mxu0 %v866
        %992 = vmatpush.bf16.msra.mxu0 %v862
        %993 = vmatpush.bf16.msra.mxu0 %v858
        %994 = vmatpush.bf16.msra.mxu0 %v854
        %995 = vmatpush.bf16.msra.mxu0 %v850
        %996 = vmatpush.bf16.msra.mxu0 %v846
        %997 = vmatpush.bf16.msra.mxu0 %v842
        %998 = vmatpush.bf16.msra.mxu0 %v838
        %999 = vmatmul.bf16.gmra.mxu0 %v579
        %v1000 = vpop.f32.mrf.mxu0
        %v1001 = vadd.f32 0.0, %v1000
        %v1002 = vpop.f32.mrf.mxu0
        %1003 = vdwg.mxu0
        %1004 = vmatpush.bf16.msra.mxu0 %v898
        %1005 = vmatpush.bf16.msra.mxu0 %v894
        %1006 = vmatpush.bf16.msra.mxu0 %v890
        %1007 = vmatpush.bf16.msra.mxu0 %v886
        %1008 = vmatpush.bf16.msra.mxu0 %v882
        %1009 = vmatpush.bf16.msra.mxu0 %v878
        %1010 = vmatpush.bf16.msra.mxu0 %v874
        %1011 = vmatpush.bf16.msra.mxu0 %v870
        %1012 = vmatmul.bf16.gmra.mxu0 %v580
        %v1013 = vpop.f32.mrf.mxu0
        %v1014 = vadd.f32 %v1001, %v1013
        %v1015 = vpop.f32.mrf.mxu0
        %1016 = vdwg.mxu0
        %1017 = vmatpush.bf16.msra.mxu0 %v867
        %1018 = vmatpush.bf16.msra.mxu0 %v863
        %1019 = vmatpush.bf16.msra.mxu0 %v859
        %1020 = vmatpush.bf16.msra.mxu0 %v855
        %1021 = vmatpush.bf16.msra.mxu0 %v851
        %1022 = vmatpush.bf16.msra.mxu0 %v847
        %1023 = vmatpush.bf16.msra.mxu0 %v843
        %1024 = vmatpush.bf16.msra.mxu0 %v839
        %1025 = vmatmul.bf16.gmra.mxu0 %v579
        %v1026 = vpop.f32.mrf.mxu0
        %v1027 = vadd.f32 0.0, %v1026
        %v1028 = vpop.f32.mrf.mxu0
        %1029 = vdwg.mxu0
        %1030 = vmatpush.bf16.msra.mxu0 %v899
        %1031 = vmatpush.bf16.msra.mxu0 %v895
        %1032 = vmatpush.bf16.msra.mxu0 %v891
        %1033 = vmatpush.bf16.msra.mxu0 %v887
        %1034 = vmatpush.bf16.msra.mxu0 %v883
        %1035 = vmatpush.bf16.msra.mxu0 %v879
        %1036 = vmatpush.bf16.msra.mxu0 %v875
        %1037 = vmatpush.bf16.msra.mxu0 %v871
        %1038 = vmatmul.bf16.gmra.mxu0 %v580
        %v1039 = vpop.f32.mrf.mxu0
        %v1040 = vadd.f32 %v1027, %v1039
        %v1041 = vpop.f32.mrf.mxu0
        %1042 = vdwg.mxu0
        %1043 = vmatpush.bf16.msra.mxu0 %v868
        %1044 = vmatpush.bf16.msra.mxu0 %v864
        %1045 = vmatpush.bf16.msra.mxu0 %v860
        %1046 = vmatpush.bf16.msra.mxu0 %v856
        %1047 = vmatpush.bf16.msra.mxu0 %v852
        %1048 = vmatpush.bf16.msra.mxu0 %v848
        %1049 = vmatpush.bf16.msra.mxu0 %v844
        %1050 = vmatpush.bf16.msra.mxu0 %v840
        %1051 = vmatmul.bf16.gmra.mxu0 %v579
        %v1052 = vpop.f32.mrf.mxu0
        %v1053 = vadd.f32 0.0, %v1052
        %v1054 = vpop.f32.mrf.mxu0
        %1055 = vdwg.mxu0
        %1056 = vmatpush.bf16.msra.mxu0 %v900
        %1057 = vmatpush.bf16.msra.mxu0 %v896
        %1058 = vmatpush.bf16.msra.mxu0 %v892
        %1059 = vmatpush.bf16.msra.mxu0 %v888
        %1060 = vmatpush.bf16.msra.mxu0 %v884
        %1061 = vmatpush.bf16.msra.mxu0 %v880
        %1062 = vmatpush.bf16.msra.mxu0 %v876
        %1063 = vmatpush.bf16.msra.mxu0 %v872
        %1064 = vmatmul.bf16.gmra.mxu0 %v580
        %v1065 = vpop.f32.mrf.mxu0
        %v1066 = vadd.f32 %v1053, %v1065
        %v1067 = vpop.f32.mrf.mxu0
        %1068 = vdwg.mxu0
        %v1070 = vperm.slane %v578, 0
        %v1071 = vperm.slane %v578, 4
        %v1074 = vperm.slane %v1070, 0
        %v1075 = vperm.slane %v1071, 0
        %v1076 = vadd.f32 %v988, %v1074
        %v1077 = vadd.f32 %v1014, %v1075
        %v1078 = vperm.slane %v578, 1
        %v1079 = vperm.slane %v578, 5
        %v1082 = vperm.slane %v1078, 1
        %v1083 = vperm.slane %v1079, 1
        %v1084 = vadd.f32 %v1040, %v1082
        %v1085 = vadd.f32 %v1066, %v1083
        %v1088 = vrot.slane %v1085, 7
        %vm1089 = vcmask 1040384
        %v1090 = vsel %vm1089, %v1084, %v1088
        %vm1091 = vcmask 1041409
        %v1092 = vsel %vm1091, %v1084, %v1088
        %v1093 = vrot.slane %v1092, 1
        %vm1094 = vcmask 1042434
        %v1095 = vsel %vm1094, %v1084, %v1088
        %v1096 = vrot.slane %v1095, 2
        %vm1097 = vcmask 1043459
        %v1098 = vsel %vm1097, %v1084, %v1088
        %v1099 = vrot.slane %v1098, 3
        %vm1100 = vcmask 1044484
        %v1101 = vsel %vm1100, %v1084, %v1088
        %v1102 = vrot.slane %v1101, 4
        %vm1103 = vcmask 1045509
        %v1104 = vsel %vm1103, %v1084, %v1088
        %v1105 = vrot.slane %v1104, 5
        %vm1106 = vcmask 1046534
        %v1107 = vsel %vm1106, %v1084, %v1088
        %v1108 = vrot.slane %v1107, 6
        %vm1109 = vcmask 1046528
        %v1110 = vsel %vm1109, %v1088, %v1084
        %v1111 = vrot.slane %v1110, 7
        %v1112 = vperm.slane %v1090, 0
        %v1113 = vperm.slane %v1090, 1
        %v1114 = vperm.slane %v1093, 0
        %v1115 = vperm.slane %v1093, 1
        %v1116 = vperm.slane %v1096, 0
        %v1117 = vperm.slane %v1096, 1
        %v1118 = vperm.slane %v1099, 0
        %v1119 = vperm.slane %v1099, 1
        %v1120 = vperm.slane %v1102, 0
        %v1121 = vperm.slane %v1102, 1
        %v1122 = vperm.slane %v1105, 0
        %v1123 = vperm.slane %v1105, 1
        %v1124 = vperm.slane %v1108, 0
        %v1125 = vperm.slane %v1108, 1
        %v1126 = vperm.slane %v1111, 0
        %v1127 = vperm.slane %v1111, 1
        %v1144 = vadd.f32 %v1076, %v1112
        %v1145 = vadd.f32 %v1077, %v1113
        %v1146 = vadd.f32 %v1076, %v1114
        %v1147 = vadd.f32 %v1077, %v1115
        %v1148 = vadd.f32 %v1076, %v1116
        %v1149 = vadd.f32 %v1077, %v1117
        %v1150 = vadd.f32 %v1076, %v1118
        %v1151 = vadd.f32 %v1077, %v1119
        %v1152 = vadd.f32 %v1076, %v1120
        %v1153 = vadd.f32 %v1077, %v1121
        %v1154 = vadd.f32 %v1076, %v1122
        %v1155 = vadd.f32 %v1077, %v1123
        %v1156 = vadd.f32 %v1076, %v1124
        %v1157 = vadd.f32 %v1077, %v1125
        %v1158 = vadd.f32 %v1076, %v1126
        %v1159 = vadd.f32 %v1077, %v1127
        %v1160 = vperm.slane %v575, 0
        %v1161 = vlaneseq
        %v1162 = vshrl.u32 %v1161, 7
        %1164 = vset.pattern.permute.xlu0 %v1162
        %1165 = vperm.xlu0 %1164, %v1160
        %v1166 = vpop.permute.xlu0 %1165
        %v1167 = vperm.slane %v575, 1
        %v1168 = vlaneseq
        %v1169 = vshrl.u32 %v1168, 7
        %1171 = vset.pattern.permute.xlu0 %v1169
        %1172 = vperm.xlu0 %1171, %v1167
        %v1173 = vpop.permute.xlu0 %1172
        %v1174 = vperm.slane %v575, 2
        %v1175 = vlaneseq
        %v1176 = vshrl.u32 %v1175, 7
        %1178 = vset.pattern.permute.xlu0 %v1176
        %1179 = vperm.xlu0 %1178, %v1174
        %v1180 = vpop.permute.xlu0 %1179
        %v1181 = vperm.slane %v575, 3
        %v1182 = vlaneseq
        %v1183 = vshrl.u32 %v1182, 7
        %1185 = vset.pattern.permute.xlu0 %v1183
        %1186 = vperm.xlu0 %1185, %v1181
        %v1187 = vpop.permute.xlu0 %1186
        %v1188 = vperm.slane %v575, 4
        %v1189 = vlaneseq
        %v1190 = vshrl.u32 %v1189, 7
        %1192 = vset.pattern.permute.xlu0 %v1190
        %1193 = vperm.xlu0 %1192, %v1188
        %v1194 = vpop.permute.xlu0 %1193
        %v1195 = vperm.slane %v575, 5
        %v1196 = vlaneseq
        %v1197 = vshrl.u32 %v1196, 7
        %1199 = vset.pattern.permute.xlu0 %v1197
        %1200 = vperm.xlu0 %1199, %v1195
        %v1201 = vpop.permute.xlu0 %1200
        %v1202 = vperm.slane %v575, 6
        %v1203 = vlaneseq
        %v1204 = vshrl.u32 %v1203, 7
        %1206 = vset.pattern.permute.xlu0 %v1204
        %1207 = vperm.xlu0 %1206, %v1202
        %v1208 = vpop.permute.xlu0 %1207
        %v1209 = vperm.slane %v575, 7
        %v1210 = vlaneseq
        %v1211 = vshrl.u32 %v1210, 7
        %1213 = vset.pattern.permute.xlu0 %v1211
        %1214 = vperm.xlu0 %1213, %v1209
        %v1215 = vpop.permute.xlu0 %1214
        %v1216 = vperm.slane %v578, 2
        %v1217 = vperm.slane %v578, 6
        %v1220 = vperm.slane %v1216, 2
        %v1221 = vperm.slane %v1217, 2
        %v1222 = vmul.f32 %v1166, %v1220
        %v1223 = vmul.f32 %v1166, %v1221
        %v1224 = vmul.f32 %v1173, %v1220
        %v1225 = vmul.f32 %v1173, %v1221
        %v1226 = vmul.f32 %v1180, %v1220
        %v1227 = vmul.f32 %v1180, %v1221
        %v1228 = vmul.f32 %v1187, %v1220
        %v1229 = vmul.f32 %v1187, %v1221
        %v1230 = vmul.f32 %v1194, %v1220
        %v1231 = vmul.f32 %v1194, %v1221
        %v1232 = vmul.f32 %v1201, %v1220
        %v1233 = vmul.f32 %v1201, %v1221
        %v1234 = vmul.f32 %v1208, %v1220
        %v1235 = vmul.f32 %v1208, %v1221
        %v1236 = vmul.f32 %v1215, %v1220
        %v1237 = vmul.f32 %v1215, %v1221
        %v1238 = vadd.f32 %v1144, %v1222
        %v1239 = vadd.f32 %v1145, %v1223
        %v1240 = vadd.f32 %v1146, %v1224
        %v1241 = vadd.f32 %v1147, %v1225
        %v1242 = vadd.f32 %v1148, %v1226
        %v1243 = vadd.f32 %v1149, %v1227
        %v1244 = vadd.f32 %v1150, %v1228
        %v1245 = vadd.f32 %v1151, %v1229
        %v1246 = vadd.f32 %v1152, %v1230
        %v1247 = vadd.f32 %v1153, %v1231
        %v1248 = vadd.f32 %v1154, %v1232
        %v1249 = vadd.f32 %v1155, %v1233
        %v1250 = vadd.f32 %v1156, %v1234
        %v1251 = vadd.f32 %v1157, %v1235
        %v1252 = vadd.f32 %v1158, %v1236
        %v1253 = vadd.f32 %v1159, %v1237
        %v1254 = vmul.f32 %v1238, 0.2
        %v1255 = vmul.f32 %v1239, 0.2
        %v1256 = vmul.f32 %v1240, 0.2
        %v1257 = vmul.f32 %v1241, 0.2
        %v1258 = vmul.f32 %v1242, 0.2
        %v1259 = vmul.f32 %v1243, 0.2
        %v1260 = vmul.f32 %v1244, 0.2
        %v1261 = vmul.f32 %v1245, 0.2
        %v1262 = vmul.f32 %v1246, 0.2
        %v1263 = vmul.f32 %v1247, 0.2
        %v1264 = vmul.f32 %v1248, 0.2
        %v1265 = vmul.f32 %v1249, 0.2
        %v1266 = vmul.f32 %v1250, 0.2
        %v1267 = vmul.f32 %v1251, 0.2
        %v1268 = vmul.f32 %v1252, 0.2
        %v1269 = vmul.f32 %v1253, 0.2
        %v1270 = vmax.f32 %v1238, %v1254
        %v1271 = vmax.f32 %v1239, %v1255
        %v1272 = vmax.f32 %v1240, %v1256
        %v1273 = vmax.f32 %v1241, %v1257
        %v1274 = vmax.f32 %v1242, %v1258
        %v1275 = vmax.f32 %v1243, %v1259
        %v1276 = vmax.f32 %v1244, %v1260
        %v1277 = vmax.f32 %v1245, %v1261
        %v1278 = vmax.f32 %v1246, %v1262
        %v1279 = vmax.f32 %v1247, %v1263
        %v1280 = vmax.f32 %v1248, %v1264
        %v1281 = vmax.f32 %v1249, %v1265
        %v1282 = vmax.f32 %v1250, %v1266
        %v1283 = vmax.f32 %v1251, %v1267
        %v1284 = vmax.f32 %v1252, %v1268
        %v1285 = vmax.f32 %v1253, %v1269
        %v1286 = vpack.c.bf16 %v1272, %v1270
        %v1287 = vpack.c.bf16 %v1273, %v1271
        %v1288 = vpack.c.bf16 %v1276, %v1274
        %v1289 = vpack.c.bf16 %v1277, %v1275
        %v1290 = vpack.c.bf16 %v1280, %v1278
        %v1291 = vpack.c.bf16 %v1281, %v1279
        %v1292 = vpack.c.bf16 %v1284, %v1282
        %v1293 = vpack.c.bf16 %v1285, %v1283
        %v1294 = vld [vmem:[%s6] sm:$0xf]
        %v1295 = vld [vmem:[%s6 + $0x4] sm:$0xf]
        %v1296 = vld [vmem:[%s6 + $0x8] sm:$0xf]
        %v1297 = vld [vmem:[%s6 + $0xc] sm:$0xf]
        %v1298 = vld [vmem:[%s6 + $0x10] sm:$0xf]
        %v1299 = vld [vmem:[%s6 + $0x14] sm:$0xf]
        %v1300 = vld [vmem:[%s6 + $0x18] sm:$0xf]
        %v1301 = vld [vmem:[%s6 + $0x1c] sm:$0xf]
        %v1302 = vld [vmem:[%s6 + $0x20] sm:$0xf]
        %v1303 = vld [vmem:[%s6 + $0x24] sm:$0xf]
        %v1304 = vld [vmem:[%s6 + $0x28] sm:$0xf]
        %v1305 = vld [vmem:[%s6 + $0x2c] sm:$0xf]
        %v1306 = vld [vmem:[%s6 + $0x30] sm:$0xf]
        %v1307 = vld [vmem:[%s6 + $0x34] sm:$0xf]
        %v1308 = vld [vmem:[%s6 + $0x38] sm:$0xf]
        %v1309 = vld [vmem:[%s6 + $0x3c] sm:$0xf]
        %v1310 = vld [vmem:[%s6 + $0x40] sm:$0xf]
        %v1311 = vld [vmem:[%s6 + $0x44] sm:$0xf]
        %v1312 = vld [vmem:[%s6 + $0x48] sm:$0xf]
        %v1313 = vld [vmem:[%s6 + $0x4c] sm:$0xf]
        %v1314 = vld [vmem:[%s6 + $0x50] sm:$0xf]
        %v1315 = vld [vmem:[%s6 + $0x54] sm:$0xf]
        %v1316 = vld [vmem:[%s6 + $0x58] sm:$0xf]
        %v1317 = vld [vmem:[%s6 + $0x5c] sm:$0xf]
        %v1318 = vld [vmem:[%s6 + $0x60] sm:$0xf]
        %v1319 = vld [vmem:[%s6 + $0x64] sm:$0xf]
        %v1320 = vld [vmem:[%s6 + $0x68] sm:$0xf]
        %v1321 = vld [vmem:[%s6 + $0x6c] sm:$0xf]
        %v1322 = vld [vmem:[%s6 + $0x70] sm:$0xf]
        %v1323 = vld [vmem:[%s6 + $0x74] sm:$0xf]
        %v1324 = vld [vmem:[%s6 + $0x78] sm:$0xf]
        %v1325 = vld [vmem:[%s6 + $0x7c] sm:$0xf]
        %v1358 = vunpack.c.l.b16 %v1294
        %v1359 = vunpack.c.l.b16 %v1295
        %v1360 = vunpack.c.l.b16 %v1296
        %v1361 = vunpack.c.l.b16 %v1297
        %v1362 = vunpack.c.l.b16 %v1298
        %v1363 = vunpack.c.l.b16 %v1299
        %v1364 = vunpack.c.l.b16 %v1300
        %v1365 = vunpack.c.l.b16 %v1301
        %v1366 = vunpack.c.l.b16 %v1302
        %v1367 = vunpack.c.l.b16 %v1303
        %v1368 = vunpack.c.l.b16 %v1304
        %v1369 = vunpack.c.l.b16 %v1305
        %v1370 = vunpack.c.l.b16 %v1306
        %v1371 = vunpack.c.l.b16 %v1307
        %v1372 = vunpack.c.l.b16 %v1308
        %v1373 = vunpack.c.l.b16 %v1309
        %v1374 = vunpack.c.l.b16 %v1310
        %v1375 = vunpack.c.l.b16 %v1311
        %v1376 = vunpack.c.l.b16 %v1312
        %v1377 = vunpack.c.l.b16 %v1313
        %v1378 = vunpack.c.l.b16 %v1314
        %v1379 = vunpack.c.l.b16 %v1315
        %v1380 = vunpack.c.l.b16 %v1316
        %v1381 = vunpack.c.l.b16 %v1317
        %v1382 = vunpack.c.l.b16 %v1318
        %v1383 = vunpack.c.l.b16 %v1319
        %v1384 = vunpack.c.l.b16 %v1320
        %v1385 = vunpack.c.l.b16 %v1321
        %v1386 = vunpack.c.l.b16 %v1322
        %v1387 = vunpack.c.l.b16 %v1323
        %v1388 = vunpack.c.l.b16 %v1324
        %v1389 = vunpack.c.l.b16 %v1325
        %v1390 = vpack.c.b16 %v1359, %v1358
        %v1391 = vpack.c.b16 %v1361, %v1360
        %v1392 = vpack.c.b16 %v1363, %v1362
        %v1393 = vpack.c.b16 %v1365, %v1364
        %v1394 = vpack.c.b16 %v1367, %v1366
        %v1395 = vpack.c.b16 %v1369, %v1368
        %v1396 = vpack.c.b16 %v1371, %v1370
        %v1397 = vpack.c.b16 %v1373, %v1372
        %v1398 = vpack.c.b16 %v1375, %v1374
        %v1399 = vpack.c.b16 %v1377, %v1376
        %v1400 = vpack.c.b16 %v1379, %v1378
        %v1401 = vpack.c.b16 %v1381, %v1380
        %v1402 = vpack.c.b16 %v1383, %v1382
        %v1403 = vpack.c.b16 %v1385, %v1384
        %v1404 = vpack.c.b16 %v1387, %v1386
        %v1405 = vpack.c.b16 %v1389, %v1388
        %1422 = vmatpush.bf16.msra.mxu0 %v1397
        %1423 = vmatpush.bf16.msra.mxu0 %v1396
        %1424 = vmatpush.bf16.msra.mxu0 %v1395
        %1425 = vmatpush.bf16.msra.mxu0 %v1394
        %1426 = vmatpush.bf16.msra.mxu0 %v1393
        %1427 = vmatpush.bf16.msra.mxu0 %v1392
        %1428 = vmatpush.bf16.msra.mxu0 %v1391
        %1429 = vmatpush.bf16.msra.mxu0 %v1390
        %1430 = vmatmul.bf16.gmra.mxu0 %v1286
        %v1431 = vpop.f32.mrf.mxu0
        %v1432 = vadd.f32 0.0, %v1431
        %v1433 = vpop.f32.mrf.mxu0
        %v1434 = vadd.f32 0.0, %v1433
        %1435 = vmatmul.bf16.gmra.mxu0 %v1288
        %v1436 = vpop.f32.mrf.mxu0
        %v1437 = vadd.f32 0.0, %v1436
        %v1438 = vpop.f32.mrf.mxu0
        %v1439 = vadd.f32 0.0, %v1438
        %1440 = vmatmul.bf16.gmra.mxu0 %v1290
        %v1441 = vpop.f32.mrf.mxu0
        %v1442 = vadd.f32 0.0, %v1441
        %v1443 = vpop.f32.mrf.mxu0
        %v1444 = vadd.f32 0.0, %v1443
        %1445 = vmatmul.bf16.gmra.mxu0 %v1292
        %v1446 = vpop.f32.mrf.mxu0
        %v1447 = vadd.f32 0.0, %v1446
        %v1448 = vpop.f32.mrf.mxu0
        %v1449 = vadd.f32 0.0, %v1448
        %1450 = vdwg.mxu0
        %1451 = vmatpush.bf16.msra.mxu0 %v1405
        %1452 = vmatpush.bf16.msra.mxu0 %v1404
        %1453 = vmatpush.bf16.msra.mxu0 %v1403
        %1454 = vmatpush.bf16.msra.mxu0 %v1402
        %1455 = vmatpush.bf16.msra.mxu0 %v1401
        %1456 = vmatpush.bf16.msra.mxu0 %v1400
        %1457 = vmatpush.bf16.msra.mxu0 %v1399
        %1458 = vmatpush.bf16.msra.mxu0 %v1398
        %1459 = vmatmul.bf16.gmra.mxu0 %v1287
        %v1460 = vpop.f32.mrf.mxu0
        %v1461 = vadd.f32 %v1432, %v1460
        %v1462 = vpop.f32.mrf.mxu0
        %v1463 = vadd.f32 %v1434, %v1462
        %1464 = vmatmul.bf16.gmra.mxu0 %v1289
        %v1465 = vpop.f32.mrf.mxu0
        %v1466 = vadd.f32 %v1437, %v1465
        %v1467 = vpop.f32.mrf.mxu0
        %v1468 = vadd.f32 %v1439, %v1467
        %1469 = vmatmul.bf16.gmra.mxu0 %v1291
        %v1470 = vpop.f32.mrf.mxu0
        %v1471 = vadd.f32 %v1442, %v1470
        %v1472 = vpop.f32.mrf.mxu0
        %v1473 = vadd.f32 %v1444, %v1472
        %1474 = vmatmul.bf16.gmra.mxu0 %v1293
        %v1475 = vpop.f32.mrf.mxu0
        %v1476 = vadd.f32 %v1447, %v1475
        %v1477 = vpop.f32.mrf.mxu0
        %v1478 = vadd.f32 %v1449, %v1477
        %1479 = vdwg.mxu0
        %v1480 = vperm.slane %v574, 0
        %v1481 = vlaneseq
        %v1482 = vshrl.u32 %v1481, 7
        %1484 = vset.pattern.permute.xlu0 %v1482
        %1485 = vperm.xlu0 %1484, %v1480
        %v1486 = vpop.permute.xlu0 %1485
        %v1487 = vperm.slane %v574, 1
        %v1488 = vlaneseq
        %v1489 = vshrl.u32 %v1488, 7
        %1491 = vset.pattern.permute.xlu0 %v1489
        %1492 = vperm.xlu0 %1491, %v1487
        %v1493 = vpop.permute.xlu0 %1492
        %v1494 = vperm.slane %v574, 2
        %v1495 = vlaneseq
        %v1496 = vshrl.u32 %v1495, 7
        %1498 = vset.pattern.permute.xlu0 %v1496
        %1499 = vperm.xlu0 %1498, %v1494
        %v1500 = vpop.permute.xlu0 %1499
        %v1501 = vperm.slane %v574, 3
        %v1502 = vlaneseq
        %v1503 = vshrl.u32 %v1502, 7
        %1505 = vset.pattern.permute.xlu0 %v1503
        %1506 = vperm.xlu0 %1505, %v1501
        %v1507 = vpop.permute.xlu0 %1506
        %v1508 = vperm.slane %v574, 4
        %v1509 = vlaneseq
        %v1510 = vshrl.u32 %v1509, 7
        %1512 = vset.pattern.permute.xlu0 %v1510
        %1513 = vperm.xlu0 %1512, %v1508
        %v1514 = vpop.permute.xlu0 %1513
        %v1515 = vperm.slane %v574, 5
        %v1516 = vlaneseq
        %v1517 = vshrl.u32 %v1516, 7
        %1519 = vset.pattern.permute.xlu0 %v1517
        %1520 = vperm.xlu0 %1519, %v1515
        %v1521 = vpop.permute.xlu0 %1520
        %v1522 = vperm.slane %v574, 6
        %v1523 = vlaneseq
        %v1524 = vshrl.u32 %v1523, 7
        %1526 = vset.pattern.permute.xlu0 %v1524
        %1527 = vperm.xlu0 %1526, %v1522
        %v1528 = vpop.permute.xlu0 %1527
        %v1529 = vperm.slane %v574, 7
        %v1530 = vlaneseq
        %v1531 = vshrl.u32 %v1530, 7
        %1533 = vset.pattern.permute.xlu0 %v1531
        %1534 = vperm.xlu0 %1533, %v1529
        %v1535 = vpop.permute.xlu0 %1534
        %vm1536 = vcmp.gt.f32.partialorder %v1486, 0.0
        %vm1537 = vcmp.gt.f32.partialorder %v1493, 0.0
        %vm1538 = vcmp.gt.f32.partialorder %v1500, 0.0
        %vm1539 = vcmp.gt.f32.partialorder %v1507, 0.0
        %vm1540 = vcmp.gt.f32.partialorder %v1514, 0.0
        %vm1541 = vcmp.gt.f32.partialorder %v1521, 0.0
        %vm1542 = vcmp.gt.f32.partialorder %v1528, 0.0
        %vm1543 = vcmp.gt.f32.partialorder %v1535, 0.0
        %v1544 = vsel %vm1536, 1, 0
        %v1545 = vsel %vm1537, 1, 0
        %v1546 = vsel %vm1538, 1, 0
        %v1547 = vsel %vm1539, 1, 0
        %v1548 = vsel %vm1540, 1, 0
        %v1549 = vsel %vm1541, 1, 0
        %v1550 = vsel %vm1542, 1, 0
        %v1551 = vsel %vm1543, 1, 0
        %vm1552 = vcmp.eq.s32.totalorder %v1544, 1
        %vm1553 = vcmp.eq.s32.totalorder %v1545, 1
        %vm1554 = vcmp.eq.s32.totalorder %v1546, 1
        %vm1555 = vcmp.eq.s32.totalorder %v1547, 1
        %vm1556 = vcmp.eq.s32.totalorder %v1548, 1
        %vm1557 = vcmp.eq.s32.totalorder %v1549, 1
        %vm1558 = vcmp.eq.s32.totalorder %v1550, 1
        %vm1559 = vcmp.eq.s32.totalorder %v1551, 1
        %v1560 = vsel %vm1552, %v1461, -1e+30
        %v1561 = vsel %vm1553, %v1463, -1e+30
        %v1562 = vsel %vm1554, %v1466, -1e+30
        %v1563 = vsel %vm1555, %v1468, -1e+30
        %v1564 = vsel %vm1556, %v1471, -1e+30
        %v1565 = vsel %vm1557, %v1473, -1e+30
        %v1566 = vsel %vm1558, %v1476, -1e+30
        %v1567 = vsel %vm1559, %v1478, -1e+30
        %vm1568 = vcmask 31744
        %v1569 = vsel %vm1568, %v1560, -inf
        %v1570 = vrot.slane %v1569, 4
        %v1571 = vmax.f32 %v1569, %v1570
        %v1572 = vrot.slane %v1571, 2
        %v1573 = vmax.f32 %v1571, %v1572
        %v1574 = vrot.slane %v1573, 1
        %v1575 = vmax.f32 %v1573, %v1574
        %v1576 = vsel %vm1568, %v1561, -inf
        %v1577 = vrot.slane %v1576, 4
        %v1578 = vmax.f32 %v1576, %v1577
        %v1579 = vrot.slane %v1578, 2
        %v1580 = vmax.f32 %v1578, %v1579
        %v1581 = vrot.slane %v1580, 1
        %v1582 = vmax.f32 %v1580, %v1581
        %v1583 = vsel %vm1568, %v1562, -inf
        %v1584 = vrot.slane %v1583, 4
        %v1585 = vmax.f32 %v1583, %v1584
        %v1586 = vrot.slane %v1585, 2
        %v1587 = vmax.f32 %v1585, %v1586
        %v1588 = vrot.slane %v1587, 1
        %v1589 = vmax.f32 %v1587, %v1588
        %v1590 = vsel %vm1568, %v1563, -inf
        %v1591 = vrot.slane %v1590, 4
        %v1592 = vmax.f32 %v1590, %v1591
        %v1593 = vrot.slane %v1592, 2
        %v1594 = vmax.f32 %v1592, %v1593
        %v1595 = vrot.slane %v1594, 1
        %v1596 = vmax.f32 %v1594, %v1595
        %v1597 = vsel %vm1568, %v1564, -inf
        %v1598 = vrot.slane %v1597, 4
        %v1599 = vmax.f32 %v1597, %v1598
        %v1600 = vrot.slane %v1599, 2
        %v1601 = vmax.f32 %v1599, %v1600
        %v1602 = vrot.slane %v1601, 1
        %v1603 = vmax.f32 %v1601, %v1602
        %v1604 = vsel %vm1568, %v1565, -inf
        %v1605 = vrot.slane %v1604, 4
        %v1606 = vmax.f32 %v1604, %v1605
        %v1607 = vrot.slane %v1606, 2
        %v1608 = vmax.f32 %v1606, %v1607
        %v1609 = vrot.slane %v1608, 1
        %v1610 = vmax.f32 %v1608, %v1609
        %v1611 = vsel %vm1568, %v1566, -inf
        %v1612 = vrot.slane %v1611, 4
        %v1613 = vmax.f32 %v1611, %v1612
        %v1614 = vrot.slane %v1613, 2
        %v1615 = vmax.f32 %v1613, %v1614
        %v1616 = vrot.slane %v1615, 1
        %v1617 = vmax.f32 %v1615, %v1616
        %v1618 = vsel %vm1568, %v1567, -inf
        %v1619 = vrot.slane %v1618, 4
        %v1620 = vmax.f32 %v1618, %v1619
        %v1621 = vrot.slane %v1620, 2
        %v1622 = vmax.f32 %v1620, %v1621
        %v1623 = vrot.slane %v1622, 1
        %v1624 = vmax.f32 %v1622, %v1623
        %v1625 = vsub.f32 %v1560, %v1575
        %v1626 = vsub.f32 %v1561, %v1582
        %v1627 = vsub.f32 %v1562, %v1589
        %v1628 = vsub.f32 %v1563, %v1596
        %v1629 = vsub.f32 %v1564, %v1603
        %v1630 = vsub.f32 %v1565, %v1610
        %v1631 = vsub.f32 %v1566, %v1617
        %v1632 = vsub.f32 %v1567, %v1624
        %v1633 = vmul.f32 %v1625, 1.442695
        %v1634 = vpow.pop %v1633
        %v1635 = vmul.f32 %v1626, 1.442695
        %v1636 = vpow.pop %v1635
        %v1637 = vmul.f32 %v1627, 1.442695
        %v1638 = vpow.pop %v1637
        %v1639 = vmul.f32 %v1628, 1.442695
        %v1640 = vpow.pop %v1639
        %v1641 = vmul.f32 %v1629, 1.442695
        %v1642 = vpow.pop %v1641
        %v1643 = vmul.f32 %v1630, 1.442695
        %v1644 = vpow.pop %v1643
        %v1645 = vmul.f32 %v1631, 1.442695
        %v1646 = vpow.pop %v1645
        %v1647 = vmul.f32 %v1632, 1.442695
        %v1648 = vpow.pop %v1647
        %v1649 = vsel %vm1568, %v1634, 0.0
        %v1650 = vrot.slane %v1649, 4
        %v1651 = vadd.f32 %v1649, %v1650
        %v1652 = vrot.slane %v1651, 2
        %v1653 = vadd.f32 %v1651, %v1652
        %v1654 = vrot.slane %v1653, 1
        %v1655 = vadd.f32 %v1653, %v1654
        %v1656 = vsel %vm1568, %v1636, 0.0
        %v1657 = vrot.slane %v1656, 4
        %v1658 = vadd.f32 %v1656, %v1657
        %v1659 = vrot.slane %v1658, 2
        %v1660 = vadd.f32 %v1658, %v1659
        %v1661 = vrot.slane %v1660, 1
        %v1662 = vadd.f32 %v1660, %v1661
        %v1663 = vsel %vm1568, %v1638, 0.0
        %v1664 = vrot.slane %v1663, 4
        %v1665 = vadd.f32 %v1663, %v1664
        %v1666 = vrot.slane %v1665, 2
        %v1667 = vadd.f32 %v1665, %v1666
        %v1668 = vrot.slane %v1667, 1
        %v1669 = vadd.f32 %v1667, %v1668
        %v1670 = vsel %vm1568, %v1640, 0.0
        %v1671 = vrot.slane %v1670, 4
        %v1672 = vadd.f32 %v1670, %v1671
        %v1673 = vrot.slane %v1672, 2
        %v1674 = vadd.f32 %v1672, %v1673
        %v1675 = vrot.slane %v1674, 1
        %v1676 = vadd.f32 %v1674, %v1675
        %v1677 = vsel %vm1568, %v1642, 0.0
        %v1678 = vrot.slane %v1677, 4
        %v1679 = vadd.f32 %v1677, %v1678
        %v1680 = vrot.slane %v1679, 2
        %v1681 = vadd.f32 %v1679, %v1680
        %v1682 = vrot.slane %v1681, 1
        %v1683 = vadd.f32 %v1681, %v1682
        %v1684 = vsel %vm1568, %v1644, 0.0
        %v1685 = vrot.slane %v1684, 4
        %v1686 = vadd.f32 %v1684, %v1685
        %v1687 = vrot.slane %v1686, 2
        %v1688 = vadd.f32 %v1686, %v1687
        %v1689 = vrot.slane %v1688, 1
        %v1690 = vadd.f32 %v1688, %v1689
        %v1691 = vsel %vm1568, %v1646, 0.0
        %v1692 = vrot.slane %v1691, 4
        %v1693 = vadd.f32 %v1691, %v1692
        %v1694 = vrot.slane %v1693, 2
        %v1695 = vadd.f32 %v1693, %v1694
        %v1696 = vrot.slane %v1695, 1
        %v1697 = vadd.f32 %v1695, %v1696
        %v1698 = vsel %vm1568, %v1648, 0.0
        %v1699 = vrot.slane %v1698, 4
        %v1700 = vadd.f32 %v1698, %v1699
        %v1701 = vrot.slane %v1700, 2
        %v1702 = vadd.f32 %v1700, %v1701
        %v1703 = vrot.slane %v1702, 1
        %v1704 = vadd.f32 %v1702, %v1703
        %v1705 = vrcp.pop %v1655
        %v1706 = vrcp.pop %v1662
        %v1707 = vrcp.pop %v1669
        %v1708 = vrcp.pop %v1676
        %v1709 = vrcp.pop %v1683
        %v1710 = vrcp.pop %v1690
        %v1711 = vrcp.pop %v1697
        %v1712 = vrcp.pop %v1704
        %v1713 = vmul.f32 %v1634, %v1705
        %v1714 = vmul.f32 %v1636, %v1706
        %v1715 = vmul.f32 %v1638, %v1707
        %v1716 = vmul.f32 %v1640, %v1708
        %v1717 = vmul.f32 %v1642, %v1709
        %v1718 = vmul.f32 %v1644, %v1710
        %v1719 = vmul.f32 %v1646, %v1711
        %v1720 = vmul.f32 %v1648, %v1712
        %v1721 = vpack.c.bf16 %v1713, %v1713
        %v1722 = vpack.c.bf16 %v1714, %v1714
        %v1723 = vpack.c.bf16 %v1715, %v1715
        %v1724 = vpack.c.bf16 %v1716, %v1716
        %v1725 = vpack.c.bf16 %v1717, %v1717
        %v1726 = vpack.c.bf16 %v1718, %v1718
        %v1727 = vpack.c.bf16 %v1719, %v1719
        %v1728 = vpack.c.bf16 %v1720, %v1720
        %v1729 = vpack.c.bf16 %v1076, %v1076
        %v1738 = vunpack.c.l.b16 %v1721
        %v1739 = vunpack.c.l.b16 %v1722
        %v1740 = vunpack.c.l.b16 %v1723
        %v1741 = vunpack.c.l.b16 %v1724
        %v1742 = vunpack.c.l.b16 %v1725
        %v1743 = vunpack.c.l.b16 %v1726
        %v1744 = vunpack.c.l.b16 %v1727
        %v1745 = vunpack.c.l.b16 %v1728
        %1746 = vset.pattern.permute.xlu0 0
        %1747 = vperm.xlu0 %1746, %v1738
        %v1748 = vpop.permute.xlu0 %1747
        %1749 = vset.pattern.permute.xlu0 0
        %1750 = vperm.xlu0 %1749, %v1739
        %v1751 = vpop.permute.xlu0 %1750
        %1752 = vset.pattern.permute.xlu0 0
        %1753 = vperm.xlu0 %1752, %v1740
        %v1754 = vpop.permute.xlu0 %1753
        %1755 = vset.pattern.permute.xlu0 0
        %1756 = vperm.xlu0 %1755, %v1741
        %v1757 = vpop.permute.xlu0 %1756
        %1758 = vset.pattern.permute.xlu0 0
        %1759 = vperm.xlu0 %1758, %v1742
        %v1760 = vpop.permute.xlu0 %1759
        %1761 = vset.pattern.permute.xlu0 0
        %1762 = vperm.xlu0 %1761, %v1743
        %v1763 = vpop.permute.xlu0 %1762
        %1764 = vset.pattern.permute.xlu0 0
        %1765 = vperm.xlu0 %1764, %v1744
        %v1766 = vpop.permute.xlu0 %1765
        %1767 = vset.pattern.permute.xlu0 0
        %1768 = vperm.xlu0 %1767, %v1745
        %v1769 = vpop.permute.xlu0 %1768
        %v1770 = vlaneseq
        %v1771 = vand.u32 %v1770, 127
        %v1772 = vperm.slane %v1748, %v1771
        %v1773 = vperm.slane %v1751, %v1771
        %v1774 = vperm.slane %v1754, %v1771
        %v1775 = vperm.slane %v1757, %v1771
        %v1776 = vperm.slane %v1760, %v1771
        %v1777 = vperm.slane %v1763, %v1771
        %v1778 = vperm.slane %v1766, %v1771
        %v1779 = vperm.slane %v1769, %v1771
        %v1780 = vsel %vm1091, %v1773, %v1772
        %v1781 = vsel %vm1094, %v1774, %v1780
        %v1782 = vsel %vm1097, %v1775, %v1781
        %v1783 = vsel %vm1100, %v1776, %v1782
        %v1784 = vsel %vm1103, %v1777, %v1783
        %v1785 = vsel %vm1106, %v1778, %v1784
        %vm1786 = vcmask 1047559
        %v1787 = vsel %vm1786, %v1779, %v1785
        %v1788 = vpack.c.b16 %v1787, %v1787
        %vm1789 = vcmask 64512
        %v1791 = vsel %vm1789, %v1788, 0
        %vm1793 = vcmask 1043456
        %v1795 = vsel %vm1793, %v1729, 0
        %1797 = vmatpush.bf16.msra.mxu0 0
        %1798 = vmatpush.bf16.msra.mxu0 0
        %1799 = vmatpush.bf16.msra.mxu0 0
        %1800 = vmatpush.bf16.msra.mxu0 0
        %1801 = vmatpush.bf16.msra.mxu0 0
        %1802 = vmatpush.bf16.msra.mxu0 0
        %1803 = vmatpush.bf16.msra.mxu0 0
        %1804 = vmatpush.bf16.msra.mxu0 %v1795
        %1805 = vmatmul.bf16.gmra.mxu0 %v1791
        %v1806 = vpop.f32.mrf.mxu0
        %v1807 = vadd.f32 0.0, %v1806
        %v1808 = vpop.f32.mrf.mxu0
        %1809 = vdwg.mxu0
        %1810 = vset.pattern.permute.xlu0 1
        %1811 = vperm.xlu0 %1810, %v1738
        %v1812 = vpop.permute.xlu0 %1811
        %1813 = vset.pattern.permute.xlu0 1
        %1814 = vperm.xlu0 %1813, %v1739
        %v1815 = vpop.permute.xlu0 %1814
        %1816 = vset.pattern.permute.xlu0 1
        %1817 = vperm.xlu0 %1816, %v1740
        %v1818 = vpop.permute.xlu0 %1817
        %1819 = vset.pattern.permute.xlu0 1
        %1820 = vperm.xlu0 %1819, %v1741
        %v1821 = vpop.permute.xlu0 %1820
        %1822 = vset.pattern.permute.xlu0 1
        %1823 = vperm.xlu0 %1822, %v1742
        %v1824 = vpop.permute.xlu0 %1823
        %1825 = vset.pattern.permute.xlu0 1
        %1826 = vperm.xlu0 %1825, %v1743
        %v1827 = vpop.permute.xlu0 %1826
        %1828 = vset.pattern.permute.xlu0 1
        %1829 = vperm.xlu0 %1828, %v1744
        %v1830 = vpop.permute.xlu0 %1829
        %1831 = vset.pattern.permute.xlu0 1
        %1832 = vperm.xlu0 %1831, %v1745
        %v1833 = vpop.permute.xlu0 %1832
        %v1834 = vperm.slane %v1812, %v1771
        %v1835 = vperm.slane %v1815, %v1771
        %v1836 = vperm.slane %v1818, %v1771
        %v1837 = vperm.slane %v1821, %v1771
        %v1838 = vperm.slane %v1824, %v1771
        %v1839 = vperm.slane %v1827, %v1771
        %v1840 = vperm.slane %v1830, %v1771
        %v1841 = vperm.slane %v1833, %v1771
        %v1842 = vsel %vm1091, %v1835, %v1834
        %v1843 = vsel %vm1094, %v1836, %v1842
        %v1844 = vsel %vm1097, %v1837, %v1843
        %v1845 = vsel %vm1100, %v1838, %v1844
        %v1846 = vsel %vm1103, %v1839, %v1845
        %v1847 = vsel %vm1106, %v1840, %v1846
        %v1848 = vsel %vm1786, %v1841, %v1847
        %v1849 = vpack.c.b16 %v1848, %v1848
        %1851 = vrot.lane.b32.xlu0 %v1729, 64
        %v1852 = vpop.permute.xlu0 %1851
        %v1854 = vsel %vm1789, %v1849, 0
        %v1857 = vsel %vm1793, %v1852, 0
        %1859 = vmatpush.bf16.msra.mxu0 0
        %1860 = vmatpush.bf16.msra.mxu0 0
        %1861 = vmatpush.bf16.msra.mxu0 0
        %1862 = vmatpush.bf16.msra.mxu0 0
        %1863 = vmatpush.bf16.msra.mxu0 0
        %1864 = vmatpush.bf16.msra.mxu0 0
        %1865 = vmatpush.bf16.msra.mxu0 0
        %1866 = vmatpush.bf16.msra.mxu0 %v1857
        %1867 = vmatmul.bf16.gmra.mxu0 %v1854
        %v1868 = vpop.f32.mrf.mxu0
        %v1869 = vadd.f32 0.0, %v1868
        %v1870 = vpop.f32.mrf.mxu0
        %1871 = vdwg.mxu0
        %v1872 = vpack.c.bf16 %v1077, %v1077
        %1873 = vset.pattern.permute.xlu0 2
        %1874 = vperm.xlu0 %1873, %v1738
        %v1875 = vpop.permute.xlu0 %1874
        %1876 = vset.pattern.permute.xlu0 2
        %1877 = vperm.xlu0 %1876, %v1739
        %v1878 = vpop.permute.xlu0 %1877
        %1879 = vset.pattern.permute.xlu0 2
        %1880 = vperm.xlu0 %1879, %v1740
        %v1881 = vpop.permute.xlu0 %1880
        %1882 = vset.pattern.permute.xlu0 2
        %1883 = vperm.xlu0 %1882, %v1741
        %v1884 = vpop.permute.xlu0 %1883
        %1885 = vset.pattern.permute.xlu0 2
        %1886 = vperm.xlu0 %1885, %v1742
        %v1887 = vpop.permute.xlu0 %1886
        %1888 = vset.pattern.permute.xlu0 2
        %1889 = vperm.xlu0 %1888, %v1743
        %v1890 = vpop.permute.xlu0 %1889
        %1891 = vset.pattern.permute.xlu0 2
        %1892 = vperm.xlu0 %1891, %v1744
        %v1893 = vpop.permute.xlu0 %1892
        %1894 = vset.pattern.permute.xlu0 2
        %1895 = vperm.xlu0 %1894, %v1745
        %v1896 = vpop.permute.xlu0 %1895
        %v1897 = vperm.slane %v1875, %v1771
        %v1898 = vperm.slane %v1878, %v1771
        %v1899 = vperm.slane %v1881, %v1771
        %v1900 = vperm.slane %v1884, %v1771
        %v1901 = vperm.slane %v1887, %v1771
        %v1902 = vperm.slane %v1890, %v1771
        %v1903 = vperm.slane %v1893, %v1771
        %v1904 = vperm.slane %v1896, %v1771
        %v1905 = vsel %vm1091, %v1898, %v1897
        %v1906 = vsel %vm1094, %v1899, %v1905
        %v1907 = vsel %vm1097, %v1900, %v1906
        %v1908 = vsel %vm1100, %v1901, %v1907
        %v1909 = vsel %vm1103, %v1902, %v1908
        %v1910 = vsel %vm1106, %v1903, %v1909
        %v1911 = vsel %vm1786, %v1904, %v1910
        %v1912 = vpack.c.b16 %v1911, %v1911
        %v1914 = vsel %vm1789, %v1912, 0
        %v1917 = vsel %vm1793, %v1872, 0
        %1919 = vmatpush.bf16.msra.mxu0 0
        %1920 = vmatpush.bf16.msra.mxu0 0
        %1921 = vmatpush.bf16.msra.mxu0 0
        %1922 = vmatpush.bf16.msra.mxu0 0
        %1923 = vmatpush.bf16.msra.mxu0 0
        %1924 = vmatpush.bf16.msra.mxu0 0
        %1925 = vmatpush.bf16.msra.mxu0 0
        %1926 = vmatpush.bf16.msra.mxu0 %v1917
        %1927 = vmatmul.bf16.gmra.mxu0 %v1914
        %v1928 = vpop.f32.mrf.mxu0
        %v1929 = vadd.f32 0.0, %v1928
        %v1930 = vpop.f32.mrf.mxu0
        %1931 = vdwg.mxu0
        %1932 = vset.pattern.permute.xlu0 3
        %1933 = vperm.xlu0 %1932, %v1738
        %v1934 = vpop.permute.xlu0 %1933
        %1935 = vset.pattern.permute.xlu0 3
        %1936 = vperm.xlu0 %1935, %v1739
        %v1937 = vpop.permute.xlu0 %1936
        %1938 = vset.pattern.permute.xlu0 3
        %1939 = vperm.xlu0 %1938, %v1740
        %v1940 = vpop.permute.xlu0 %1939
        %1941 = vset.pattern.permute.xlu0 3
        %1942 = vperm.xlu0 %1941, %v1741
        %v1943 = vpop.permute.xlu0 %1942
        %1944 = vset.pattern.permute.xlu0 3
        %1945 = vperm.xlu0 %1944, %v1742
        %v1946 = vpop.permute.xlu0 %1945
        %1947 = vset.pattern.permute.xlu0 3
        %1948 = vperm.xlu0 %1947, %v1743
        %v1949 = vpop.permute.xlu0 %1948
        %1950 = vset.pattern.permute.xlu0 3
        %1951 = vperm.xlu0 %1950, %v1744
        %v1952 = vpop.permute.xlu0 %1951
        %1953 = vset.pattern.permute.xlu0 3
        %1954 = vperm.xlu0 %1953, %v1745
        %v1955 = vpop.permute.xlu0 %1954
        %v1956 = vperm.slane %v1934, %v1771
        %v1957 = vperm.slane %v1937, %v1771
        %v1958 = vperm.slane %v1940, %v1771
        %v1959 = vperm.slane %v1943, %v1771
        %v1960 = vperm.slane %v1946, %v1771
        %v1961 = vperm.slane %v1949, %v1771
        %v1962 = vperm.slane %v1952, %v1771
        %v1963 = vperm.slane %v1955, %v1771
        %v1964 = vsel %vm1091, %v1957, %v1956
        %v1965 = vsel %vm1094, %v1958, %v1964
        %v1966 = vsel %vm1097, %v1959, %v1965
        %v1967 = vsel %vm1100, %v1960, %v1966
        %v1968 = vsel %vm1103, %v1961, %v1967
        %v1969 = vsel %vm1106, %v1962, %v1968
        %v1970 = vsel %vm1786, %v1963, %v1969
        %v1971 = vpack.c.b16 %v1970, %v1970
        %1973 = vrot.lane.b32.xlu0 %v1872, 64
        %v1974 = vpop.permute.xlu0 %1973
        %v1976 = vsel %vm1789, %v1971, 0
        %v1979 = vsel %vm1793, %v1974, 0
        %1981 = vmatpush.bf16.msra.mxu0 0
        %1982 = vmatpush.bf16.msra.mxu0 0
        %1983 = vmatpush.bf16.msra.mxu0 0
        %1984 = vmatpush.bf16.msra.mxu0 0
        %1985 = vmatpush.bf16.msra.mxu0 0
        %1986 = vmatpush.bf16.msra.mxu0 0
        %1987 = vmatpush.bf16.msra.mxu0 0
        %1988 = vmatpush.bf16.msra.mxu0 %v1979
        %1989 = vmatmul.bf16.gmra.mxu0 %v1976
        %v1990 = vpop.f32.mrf.mxu0
        %v1991 = vadd.f32 0.0, %v1990
        %v1992 = vpop.f32.mrf.mxu0
        %1993 = vdwg.mxu0
        %1995 = vrot.lane.b32.xlu0 %v1869, 64
        %v1996 = vpop.permute.xlu0 %1995
        %1999 = vrot.lane.b32.xlu0 %v1991, 64
        %v2000 = vpop.permute.xlu0 %1999
        %vm2002 = vcmask 523264
        %v2003 = vsel %vm2002, %v1807, %v1996
        %v2004 = vsel %vm2002, %v1929, %v2000
        %v2005 = vperm.slane %v578, 3
        %v2006 = vperm.slane %v578, 7
        %v2009 = vperm.slane %v2005, 3
        %v2010 = vperm.slane %v2006, 3
        %v2011 = vadd.f32 %v2003, %v2009
        %v2012 = vadd.f32 %v2004, %v2010
        %v2013 = vmax.f32 %v2011, 0.0
        %v2014 = vmax.f32 %v2012, 0.0
        %s2015 = scalar_lea.vmem [#allocation13], 8
        %v2016 = vld [vmem:[%s2015] sm:$0xff]
        %v2017 = vpack.c.bf16 %v2013, %v2013
        %v2018 = vpack.c.bf16 %v2014, %v2014
        %s2019 = scalar_lea.vmem [#allocation10], 512
        %v2020 = vld [vmem:[%s2019] sm:$0xff]
        %v2021 = vld [vmem:[%s2019 + $0x8] sm:$0xff]
        %v2022 = vld [vmem:[%s2019 + $0x10] sm:$0xff]
        %v2023 = vld [vmem:[%s2019 + $0x18] sm:$0xff]
        %v2024 = vld [vmem:[%s2019 + $0x20] sm:$0xff]
        %v2025 = vld [vmem:[%s2019 + $0x28] sm:$0xff]
        %v2026 = vld [vmem:[%s2019 + $0x30] sm:$0xff]
        %v2027 = vld [vmem:[%s2019 + $0x38] sm:$0xff]
        %v2028 = vld [vmem:[%s2019 + $0x40] sm:$0xff]
        %v2029 = vld [vmem:[%s2019 + $0x48] sm:$0xff]
        %v2030 = vld [vmem:[%s2019 + $0x50] sm:$0xff]
        %v2031 = vld [vmem:[%s2019 + $0x58] sm:$0xff]
        %v2032 = vld [vmem:[%s2019 + $0x60] sm:$0xff]
        %v2033 = vld [vmem:[%s2019 + $0x68] sm:$0xff]
        %v2034 = vld [vmem:[%s2019 + $0x70] sm:$0xff]
        %v2035 = vld [vmem:[%s2019 + $0x78] sm:$0xff]
        %v2036 = vld [vmem:[%s2019 + $0x80] sm:$0xff]
        %v2037 = vld [vmem:[%s2019 + $0x88] sm:$0xff]
        %v2038 = vld [vmem:[%s2019 + $0x90] sm:$0xff]
        %v2039 = vld [vmem:[%s2019 + $0x98] sm:$0xff]
        %v2040 = vld [vmem:[%s2019 + $0xa0] sm:$0xff]
        %v2041 = vld [vmem:[%s2019 + $0xa8] sm:$0xff]
        %v2042 = vld [vmem:[%s2019 + $0xb0] sm:$0xff]
        %v2043 = vld [vmem:[%s2019 + $0xb8] sm:$0xff]
        %v2044 = vld [vmem:[%s2019 + $0xc0] sm:$0xff]
        %v2045 = vld [vmem:[%s2019 + $0xc8] sm:$0xff]
        %v2046 = vld [vmem:[%s2019 + $0xd0] sm:$0xff]
        %v2047 = vld [vmem:[%s2019 + $0xd8] sm:$0xff]
        %v2048 = vld [vmem:[%s2019 + $0xe0] sm:$0xff]
        %v2049 = vld [vmem:[%s2019 + $0xe8] sm:$0xff]
        %v2050 = vld [vmem:[%s2019 + $0xf0] sm:$0xff]
        %v2051 = vld [vmem:[%s2019 + $0xf8] sm:$0xff]
        %v2052 = vld [vmem:[%s2019 + $0x100] sm:$0xff]
        %v2053 = vld [vmem:[%s2019 + $0x108] sm:$0xff]
        %v2054 = vld [vmem:[%s2019 + $0x110] sm:$0xff]
        %v2055 = vld [vmem:[%s2019 + $0x118] sm:$0xff]
        %v2056 = vld [vmem:[%s2019 + $0x120] sm:$0xff]
        %v2057 = vld [vmem:[%s2019 + $0x128] sm:$0xff]
        %v2058 = vld [vmem:[%s2019 + $0x130] sm:$0xff]
        %v2059 = vld [vmem:[%s2019 + $0x138] sm:$0xff]
        %v2060 = vld [vmem:[%s2019 + $0x140] sm:$0xff]
        %v2061 = vld [vmem:[%s2019 + $0x148] sm:$0xff]
        %v2062 = vld [vmem:[%s2019 + $0x150] sm:$0xff]
        %v2063 = vld [vmem:[%s2019 + $0x158] sm:$0xff]
        %v2064 = vld [vmem:[%s2019 + $0x160] sm:$0xff]
        %v2065 = vld [vmem:[%s2019 + $0x168] sm:$0xff]
        %v2066 = vld [vmem:[%s2019 + $0x170] sm:$0xff]
        %v2067 = vld [vmem:[%s2019 + $0x178] sm:$0xff]
        %v2068 = vld [vmem:[%s2019 + $0x180] sm:$0xff]
        %v2069 = vld [vmem:[%s2019 + $0x188] sm:$0xff]
        %v2070 = vld [vmem:[%s2019 + $0x190] sm:$0xff]
        %v2071 = vld [vmem:[%s2019 + $0x198] sm:$0xff]
        %v2072 = vld [vmem:[%s2019 + $0x1a0] sm:$0xff]
        %v2073 = vld [vmem:[%s2019 + $0x1a8] sm:$0xff]
        %v2074 = vld [vmem:[%s2019 + $0x1b0] sm:$0xff]
        %v2075 = vld [vmem:[%s2019 + $0x1b8] sm:$0xff]
        %v2076 = vld [vmem:[%s2019 + $0x1c0] sm:$0xff]
        %v2077 = vld [vmem:[%s2019 + $0x1c8] sm:$0xff]
        %v2078 = vld [vmem:[%s2019 + $0x1d0] sm:$0xff]
        %v2079 = vld [vmem:[%s2019 + $0x1d8] sm:$0xff]
        %v2080 = vld [vmem:[%s2019 + $0x1e0] sm:$0xff]
        %v2081 = vld [vmem:[%s2019 + $0x1e8] sm:$0xff]
        %v2082 = vld [vmem:[%s2019 + $0x1f0] sm:$0xff]
        %v2083 = vld [vmem:[%s2019 + $0x1f8] sm:$0xff]
        %v2148 = vunpack.c.l.b16 %v2020
        %v2149 = vunpack.c.h.b16 %v2020
        %v2150 = vunpack.c.l.b16 %v2021
        %v2151 = vunpack.c.h.b16 %v2021
        %v2152 = vunpack.c.l.b16 %v2022
        %v2153 = vunpack.c.h.b16 %v2022
        %v2154 = vunpack.c.l.b16 %v2023
        %v2155 = vunpack.c.h.b16 %v2023
        %v2156 = vunpack.c.l.b16 %v2024
        %v2157 = vunpack.c.h.b16 %v2024
        %v2158 = vunpack.c.l.b16 %v2025
        %v2159 = vunpack.c.h.b16 %v2025
        %v2160 = vunpack.c.l.b16 %v2026
        %v2161 = vunpack.c.h.b16 %v2026
        %v2162 = vunpack.c.l.b16 %v2027
        %v2163 = vunpack.c.h.b16 %v2027
        %v2164 = vunpack.c.l.b16 %v2028
        %v2165 = vunpack.c.h.b16 %v2028
        %v2166 = vunpack.c.l.b16 %v2029
        %v2167 = vunpack.c.h.b16 %v2029
        %v2168 = vunpack.c.l.b16 %v2030
        %v2169 = vunpack.c.h.b16 %v2030
        %v2170 = vunpack.c.l.b16 %v2031
        %v2171 = vunpack.c.h.b16 %v2031
        %v2172 = vunpack.c.l.b16 %v2032
        %v2173 = vunpack.c.h.b16 %v2032
        %v2174 = vunpack.c.l.b16 %v2033
        %v2175 = vunpack.c.h.b16 %v2033
        %v2176 = vunpack.c.l.b16 %v2034
        %v2177 = vunpack.c.h.b16 %v2034
        %v2178 = vunpack.c.l.b16 %v2035
        %v2179 = vunpack.c.h.b16 %v2035
        %v2180 = vunpack.c.l.b16 %v2036
        %v2181 = vunpack.c.h.b16 %v2036
        %v2182 = vunpack.c.l.b16 %v2037
        %v2183 = vunpack.c.h.b16 %v2037
        %v2184 = vunpack.c.l.b16 %v2038
        %v2185 = vunpack.c.h.b16 %v2038
        %v2186 = vunpack.c.l.b16 %v2039
        %v2187 = vunpack.c.h.b16 %v2039
        %v2188 = vunpack.c.l.b16 %v2040
        %v2189 = vunpack.c.h.b16 %v2040
        %v2190 = vunpack.c.l.b16 %v2041
        %v2191 = vunpack.c.h.b16 %v2041
        %v2192 = vunpack.c.l.b16 %v2042
        %v2193 = vunpack.c.h.b16 %v2042
        %v2194 = vunpack.c.l.b16 %v2043
        %v2195 = vunpack.c.h.b16 %v2043
        %v2196 = vunpack.c.l.b16 %v2044
        %v2197 = vunpack.c.h.b16 %v2044
        %v2198 = vunpack.c.l.b16 %v2045
        %v2199 = vunpack.c.h.b16 %v2045
        %v2200 = vunpack.c.l.b16 %v2046
        %v2201 = vunpack.c.h.b16 %v2046
        %v2202 = vunpack.c.l.b16 %v2047
        %v2203 = vunpack.c.h.b16 %v2047
        %v2204 = vunpack.c.l.b16 %v2048
        %v2205 = vunpack.c.h.b16 %v2048
        %v2206 = vunpack.c.l.b16 %v2049
        %v2207 = vunpack.c.h.b16 %v2049
        %v2208 = vunpack.c.l.b16 %v2050
        %v2209 = vunpack.c.h.b16 %v2050
        %v2210 = vunpack.c.l.b16 %v2051
        %v2211 = vunpack.c.h.b16 %v2051
        %v2212 = vunpack.c.l.b16 %v2052
        %v2213 = vunpack.c.h.b16 %v2052
        %v2214 = vunpack.c.l.b16 %v2053
        %v2215 = vunpack.c.h.b16 %v2053
        %v2216 = vunpack.c.l.b16 %v2054
        %v2217 = vunpack.c.h.b16 %v2054
        %v2218 = vunpack.c.l.b16 %v2055
        %v2219 = vunpack.c.h.b16 %v2055
        %v2220 = vunpack.c.l.b16 %v2056
        %v2221 = vunpack.c.h.b16 %v2056
        %v2222 = vunpack.c.l.b16 %v2057
        %v2223 = vunpack.c.h.b16 %v2057
        %v2224 = vunpack.c.l.b16 %v2058
        %v2225 = vunpack.c.h.b16 %v2058
        %v2226 = vunpack.c.l.b16 %v2059
        %v2227 = vunpack.c.h.b16 %v2059
        %v2228 = vunpack.c.l.b16 %v2060
        %v2229 = vunpack.c.h.b16 %v2060
        %v2230 = vunpack.c.l.b16 %v2061
        %v2231 = vunpack.c.h.b16 %v2061
        %v2232 = vunpack.c.l.b16 %v2062
        %v2233 = vunpack.c.h.b16 %v2062
        %v2234 = vunpack.c.l.b16 %v2063
        %v2235 = vunpack.c.h.b16 %v2063
        %v2236 = vunpack.c.l.b16 %v2064
        %v2237 = vunpack.c.h.b16 %v2064
        %v2238 = vunpack.c.l.b16 %v2065
        %v2239 = vunpack.c.h.b16 %v2065
        %v2240 = vunpack.c.l.b16 %v2066
        %v2241 = vunpack.c.h.b16 %v2066
        %v2242 = vunpack.c.l.b16 %v2067
        %v2243 = vunpack.c.h.b16 %v2067
        %v2244 = vunpack.c.l.b16 %v2068
        %v2245 = vunpack.c.h.b16 %v2068
        %v2246 = vunpack.c.l.b16 %v2069
        %v2247 = vunpack.c.h.b16 %v2069
        %v2248 = vunpack.c.l.b16 %v2070
        %v2249 = vunpack.c.h.b16 %v2070
        %v2250 = vunpack.c.l.b16 %v2071
        %v2251 = vunpack.c.h.b16 %v2071
        %v2252 = vunpack.c.l.b16 %v2072
        %v2253 = vunpack.c.h.b16 %v2072
        %v2254 = vunpack.c.l.b16 %v2073
        %v2255 = vunpack.c.h.b16 %v2073
        %v2256 = vunpack.c.l.b16 %v2074
        %v2257 = vunpack.c.h.b16 %v2074
        %v2258 = vunpack.c.l.b16 %v2075
        %v2259 = vunpack.c.h.b16 %v2075
        %v2260 = vunpack.c.l.b16 %v2076
        %v2261 = vunpack.c.h.b16 %v2076
        %v2262 = vunpack.c.l.b16 %v2077
        %v2263 = vunpack.c.h.b16 %v2077
        %v2264 = vunpack.c.l.b16 %v2078
        %v2265 = vunpack.c.h.b16 %v2078
        %v2266 = vunpack.c.l.b16 %v2079
        %v2267 = vunpack.c.h.b16 %v2079
        %v2268 = vunpack.c.l.b16 %v2080
        %v2269 = vunpack.c.h.b16 %v2080
        %v2270 = vunpack.c.l.b16 %v2081
        %v2271 = vunpack.c.h.b16 %v2081
        %v2272 = vunpack.c.l.b16 %v2082
        %v2273 = vunpack.c.h.b16 %v2082
        %v2274 = vunpack.c.l.b16 %v2083
        %v2275 = vunpack.c.h.b16 %v2083
        %v2276 = vpack.c.b16 %v2152, %v2148
        %v2277 = vpack.c.b16 %v2153, %v2149
        %v2278 = vpack.c.b16 %v2154, %v2150
        %v2279 = vpack.c.b16 %v2155, %v2151
        %v2280 = vpack.c.b16 %v2160, %v2156
        %v2281 = vpack.c.b16 %v2161, %v2157
        %v2282 = vpack.c.b16 %v2162, %v2158
        %v2283 = vpack.c.b16 %v2163, %v2159
        %v2284 = vpack.c.b16 %v2168, %v2164
        %v2285 = vpack.c.b16 %v2169, %v2165
        %v2286 = vpack.c.b16 %v2170, %v2166
        %v2287 = vpack.c.b16 %v2171, %v2167
        %v2288 = vpack.c.b16 %v2176, %v2172
        %v2289 = vpack.c.b16 %v2177, %v2173
        %v2290 = vpack.c.b16 %v2178, %v2174
        %v2291 = vpack.c.b16 %v2179, %v2175
        %v2292 = vpack.c.b16 %v2184, %v2180
        %v2293 = vpack.c.b16 %v2185, %v2181
        %v2294 = vpack.c.b16 %v2186, %v2182
        %v2295 = vpack.c.b16 %v2187, %v2183
        %v2296 = vpack.c.b16 %v2192, %v2188
        %v2297 = vpack.c.b16 %v2193, %v2189
        %v2298 = vpack.c.b16 %v2194, %v2190
        %v2299 = vpack.c.b16 %v2195, %v2191
        %v2300 = vpack.c.b16 %v2200, %v2196
        %v2301 = vpack.c.b16 %v2201, %v2197
        %v2302 = vpack.c.b16 %v2202, %v2198
        %v2303 = vpack.c.b16 %v2203, %v2199
        %v2304 = vpack.c.b16 %v2208, %v2204
        %v2305 = vpack.c.b16 %v2209, %v2205
        %v2306 = vpack.c.b16 %v2210, %v2206
        %v2307 = vpack.c.b16 %v2211, %v2207
        %v2308 = vpack.c.b16 %v2216, %v2212
        %v2309 = vpack.c.b16 %v2217, %v2213
        %v2310 = vpack.c.b16 %v2218, %v2214
        %v2311 = vpack.c.b16 %v2219, %v2215
        %v2312 = vpack.c.b16 %v2224, %v2220
        %v2313 = vpack.c.b16 %v2225, %v2221
        %v2314 = vpack.c.b16 %v2226, %v2222
        %v2315 = vpack.c.b16 %v2227, %v2223
        %v2316 = vpack.c.b16 %v2232, %v2228
        %v2317 = vpack.c.b16 %v2233, %v2229
        %v2318 = vpack.c.b16 %v2234, %v2230
        %v2319 = vpack.c.b16 %v2235, %v2231
        %v2320 = vpack.c.b16 %v2240, %v2236
        %v2321 = vpack.c.b16 %v2241, %v2237
        %v2322 = vpack.c.b16 %v2242, %v2238
        %v2323 = vpack.c.b16 %v2243, %v2239
        %v2324 = vpack.c.b16 %v2248, %v2244
        %v2325 = vpack.c.b16 %v2249, %v2245
        %v2326 = vpack.c.b16 %v2250, %v2246
        %v2327 = vpack.c.b16 %v2251, %v2247
        %v2328 = vpack.c.b16 %v2256, %v2252
        %v2329 = vpack.c.b16 %v2257, %v2253
        %v2330 = vpack.c.b16 %v2258, %v2254
        %v2331 = vpack.c.b16 %v2259, %v2255
        %v2332 = vpack.c.b16 %v2264, %v2260
        %v2333 = vpack.c.b16 %v2265, %v2261
        %v2334 = vpack.c.b16 %v2266, %v2262
        %v2335 = vpack.c.b16 %v2267, %v2263
        %v2336 = vpack.c.b16 %v2272, %v2268
        %v2337 = vpack.c.b16 %v2273, %v2269
        %v2338 = vpack.c.b16 %v2274, %v2270
        %v2339 = vpack.c.b16 %v2275, %v2271
        %2404 = vmatpush.bf16.msra.mxu0 %v2304
        %2405 = vmatpush.bf16.msra.mxu0 %v2300
        %2406 = vmatpush.bf16.msra.mxu0 %v2296
        %2407 = vmatpush.bf16.msra.mxu0 %v2292
        %2408 = vmatpush.bf16.msra.mxu0 %v2288
        %2409 = vmatpush.bf16.msra.mxu0 %v2284
        %2410 = vmatpush.bf16.msra.mxu0 %v2280
        %2411 = vmatpush.bf16.msra.mxu0 %v2276
        %2412 = vmatmul.bf16.gmra.mxu0 %v2017
        %v2413 = vpop.f32.mrf.mxu0
        %v2414 = vadd.f32 0.0, %v2413
        %v2415 = vpop.f32.mrf.mxu0
        %2416 = vdwg.mxu0
        %2417 = vmatpush.bf16.msra.mxu0 %v2336
        %2418 = vmatpush.bf16.msra.mxu0 %v2332
        %2419 = vmatpush.bf16.msra.mxu0 %v2328
        %2420 = vmatpush.bf16.msra.mxu0 %v2324
        %2421 = vmatpush.bf16.msra.mxu0 %v2320
        %2422 = vmatpush.bf16.msra.mxu0 %v2316
        %2423 = vmatpush.bf16.msra.mxu0 %v2312
        %2424 = vmatpush.bf16.msra.mxu0 %v2308
        %2425 = vmatmul.bf16.gmra.mxu0 %v2018
        %v2426 = vpop.f32.mrf.mxu0
        %v2427 = vadd.f32 %v2414, %v2426
        %v2428 = vpop.f32.mrf.mxu0
        %2429 = vdwg.mxu0
        %2430 = vmatpush.bf16.msra.mxu0 %v2305
        %2431 = vmatpush.bf16.msra.mxu0 %v2301
        %2432 = vmatpush.bf16.msra.mxu0 %v2297
        %2433 = vmatpush.bf16.msra.mxu0 %v2293
        %2434 = vmatpush.bf16.msra.mxu0 %v2289
        %2435 = vmatpush.bf16.msra.mxu0 %v2285
        %2436 = vmatpush.bf16.msra.mxu0 %v2281
        %2437 = vmatpush.bf16.msra.mxu0 %v2277
        %2438 = vmatmul.bf16.gmra.mxu0 %v2017
        %v2439 = vpop.f32.mrf.mxu0
        %v2440 = vadd.f32 0.0, %v2439
        %v2441 = vpop.f32.mrf.mxu0
        %2442 = vdwg.mxu0
        %2443 = vmatpush.bf16.msra.mxu0 %v2337
        %2444 = vmatpush.bf16.msra.mxu0 %v2333
        %2445 = vmatpush.bf16.msra.mxu0 %v2329
        %2446 = vmatpush.bf16.msra.mxu0 %v2325
        %2447 = vmatpush.bf16.msra.mxu0 %v2321
        %2448 = vmatpush.bf16.msra.mxu0 %v2317
        %2449 = vmatpush.bf16.msra.mxu0 %v2313
        %2450 = vmatpush.bf16.msra.mxu0 %v2309
        %2451 = vmatmul.bf16.gmra.mxu0 %v2018
        %v2452 = vpop.f32.mrf.mxu0
        %v2453 = vadd.f32 %v2440, %v2452
        %v2454 = vpop.f32.mrf.mxu0
        %2455 = vdwg.mxu0
        %2456 = vmatpush.bf16.msra.mxu0 %v2306
        %2457 = vmatpush.bf16.msra.mxu0 %v2302
        %2458 = vmatpush.bf16.msra.mxu0 %v2298
        %2459 = vmatpush.bf16.msra.mxu0 %v2294
        %2460 = vmatpush.bf16.msra.mxu0 %v2290
        %2461 = vmatpush.bf16.msra.mxu0 %v2286
        %2462 = vmatpush.bf16.msra.mxu0 %v2282
        %2463 = vmatpush.bf16.msra.mxu0 %v2278
        %2464 = vmatmul.bf16.gmra.mxu0 %v2017
        %v2465 = vpop.f32.mrf.mxu0
        %v2466 = vadd.f32 0.0, %v2465
        %v2467 = vpop.f32.mrf.mxu0
        %2468 = vdwg.mxu0
        %2469 = vmatpush.bf16.msra.mxu0 %v2338
        %2470 = vmatpush.bf16.msra.mxu0 %v2334
        %2471 = vmatpush.bf16.msra.mxu0 %v2330
        %2472 = vmatpush.bf16.msra.mxu0 %v2326
        %2473 = vmatpush.bf16.msra.mxu0 %v2322
        %2474 = vmatpush.bf16.msra.mxu0 %v2318
        %2475 = vmatpush.bf16.msra.mxu0 %v2314
        %2476 = vmatpush.bf16.msra.mxu0 %v2310
        %2477 = vmatmul.bf16.gmra.mxu0 %v2018
        %v2478 = vpop.f32.mrf.mxu0
        %v2479 = vadd.f32 %v2466, %v2478
        %v2480 = vpop.f32.mrf.mxu0
        %2481 = vdwg.mxu0
        %2482 = vmatpush.bf16.msra.mxu0 %v2307
        %2483 = vmatpush.bf16.msra.mxu0 %v2303
        %2484 = vmatpush.bf16.msra.mxu0 %v2299
        %2485 = vmatpush.bf16.msra.mxu0 %v2295
        %2486 = vmatpush.bf16.msra.mxu0 %v2291
        %2487 = vmatpush.bf16.msra.mxu0 %v2287
        %2488 = vmatpush.bf16.msra.mxu0 %v2283
        %2489 = vmatpush.bf16.msra.mxu0 %v2279
        %2490 = vmatmul.bf16.gmra.mxu0 %v2017
        %v2491 = vpop.f32.mrf.mxu0
        %v2492 = vadd.f32 0.0, %v2491
        %v2493 = vpop.f32.mrf.mxu0
        %2494 = vdwg.mxu0
        %2495 = vmatpush.bf16.msra.mxu0 %v2339
        %2496 = vmatpush.bf16.msra.mxu0 %v2335
        %2497 = vmatpush.bf16.msra.mxu0 %v2331
        %2498 = vmatpush.bf16.msra.mxu0 %v2327
        %2499 = vmatpush.bf16.msra.mxu0 %v2323
        %2500 = vmatpush.bf16.msra.mxu0 %v2319
        %2501 = vmatpush.bf16.msra.mxu0 %v2315
        %2502 = vmatpush.bf16.msra.mxu0 %v2311
        %2503 = vmatmul.bf16.gmra.mxu0 %v2018
        %v2504 = vpop.f32.mrf.mxu0
        %v2505 = vadd.f32 %v2492, %v2504
        %v2506 = vpop.f32.mrf.mxu0
        %2507 = vdwg.mxu0
        %v2509 = vperm.slane %v2016, 0
        %v2510 = vperm.slane %v2016, 4
        %v2513 = vperm.slane %v2509, 0
        %v2514 = vperm.slane %v2510, 0
        %v2515 = vadd.f32 %v2427, %v2513
        %v2516 = vadd.f32 %v2453, %v2514
        %v2517 = vperm.slane %v2016, 1
        %v2518 = vperm.slane %v2016, 5
        %v2521 = vperm.slane %v2517, 1
        %v2522 = vperm.slane %v2518, 1
        %v2523 = vadd.f32 %v2479, %v2521
        %v2524 = vadd.f32 %v2505, %v2522
        %v2527 = vrot.slane %v2524, 7
        %v2528 = vsel %vm1089, %v2523, %v2527
        %v2529 = vsel %vm1091, %v2523, %v2527
        %v2530 = vrot.slane %v2529, 1
        %v2531 = vsel %vm1094, %v2523, %v2527
        %v2532 = vrot.slane %v2531, 2
        %v2533 = vsel %vm1097, %v2523, %v2527
        %v2534 = vrot.slane %v2533, 3
        %v2535 = vsel %vm1100, %v2523, %v2527
        %v2536 = vrot.slane %v2535, 4
        %v2537 = vsel %vm1103, %v2523, %v2527
        %v2538 = vrot.slane %v2537, 5
        %v2539 = vsel %vm1106, %v2523, %v2527
        %v2540 = vrot.slane %v2539, 6
        %v2541 = vsel %vm1109, %v2527, %v2523
        %v2542 = vrot.slane %v2541, 7
        %v2543 = vperm.slane %v2528, 0
        %v2544 = vperm.slane %v2528, 1
        %v2545 = vperm.slane %v2530, 0
        %v2546 = vperm.slane %v2530, 1
        %v2547 = vperm.slane %v2532, 0
        %v2548 = vperm.slane %v2532, 1
        %v2549 = vperm.slane %v2534, 0
        %v2550 = vperm.slane %v2534, 1
        %v2551 = vperm.slane %v2536, 0
        %v2552 = vperm.slane %v2536, 1
        %v2553 = vperm.slane %v2538, 0
        %v2554 = vperm.slane %v2538, 1
        %v2555 = vperm.slane %v2540, 0
        %v2556 = vperm.slane %v2540, 1
        %v2557 = vperm.slane %v2542, 0
        %v2558 = vperm.slane %v2542, 1
        %v2575 = vadd.f32 %v2515, %v2543
        %v2576 = vadd.f32 %v2516, %v2544
        %v2577 = vadd.f32 %v2515, %v2545
        %v2578 = vadd.f32 %v2516, %v2546
        %v2579 = vadd.f32 %v2515, %v2547
        %v2580 = vadd.f32 %v2516, %v2548
        %v2581 = vadd.f32 %v2515, %v2549
        %v2582 = vadd.f32 %v2516, %v2550
        %v2583 = vadd.f32 %v2515, %v2551
        %v2584 = vadd.f32 %v2516, %v2552
        %v2585 = vadd.f32 %v2515, %v2553
        %v2586 = vadd.f32 %v2516, %v2554
        %v2587 = vadd.f32 %v2515, %v2555
        %v2588 = vadd.f32 %v2516, %v2556
        %v2589 = vadd.f32 %v2515, %v2557
        %v2590 = vadd.f32 %v2516, %v2558
        %v2591 = vperm.slane %v2016, 2
        %v2592 = vperm.slane %v2016, 6
        %v2595 = vperm.slane %v2591, 2
        %v2596 = vperm.slane %v2592, 2
        %v2597 = vmul.f32 %v1166, %v2595
        %v2598 = vmul.f32 %v1166, %v2596
        %v2599 = vmul.f32 %v1173, %v2595
        %v2600 = vmul.f32 %v1173, %v2596
        %v2601 = vmul.f32 %v1180, %v2595
        %v2602 = vmul.f32 %v1180, %v2596
        %v2603 = vmul.f32 %v1187, %v2595
        %v2604 = vmul.f32 %v1187, %v2596
        %v2605 = vmul.f32 %v1194, %v2595
        %v2606 = vmul.f32 %v1194, %v2596
        %v2607 = vmul.f32 %v1201, %v2595
        %v2608 = vmul.f32 %v1201, %v2596
        %v2609 = vmul.f32 %v1208, %v2595
        %v2610 = vmul.f32 %v1208, %v2596
        %v2611 = vmul.f32 %v1215, %v2595
        %v2612 = vmul.f32 %v1215, %v2596
        %v2613 = vadd.f32 %v2575, %v2597
        %v2614 = vadd.f32 %v2576, %v2598
        %v2615 = vadd.f32 %v2577, %v2599
        %v2616 = vadd.f32 %v2578, %v2600
        %v2617 = vadd.f32 %v2579, %v2601
        %v2618 = vadd.f32 %v2580, %v2602
        %v2619 = vadd.f32 %v2581, %v2603
        %v2620 = vadd.f32 %v2582, %v2604
        %v2621 = vadd.f32 %v2583, %v2605
        %v2622 = vadd.f32 %v2584, %v2606
        %v2623 = vadd.f32 %v2585, %v2607
        %v2624 = vadd.f32 %v2586, %v2608
        %v2625 = vadd.f32 %v2587, %v2609
        %v2626 = vadd.f32 %v2588, %v2610
        %v2627 = vadd.f32 %v2589, %v2611
        %v2628 = vadd.f32 %v2590, %v2612
        %v2629 = vmul.f32 %v2613, 0.2
        %v2630 = vmul.f32 %v2614, 0.2
        %v2631 = vmul.f32 %v2615, 0.2
        %v2632 = vmul.f32 %v2616, 0.2
        %v2633 = vmul.f32 %v2617, 0.2
        %v2634 = vmul.f32 %v2618, 0.2
        %v2635 = vmul.f32 %v2619, 0.2
        %v2636 = vmul.f32 %v2620, 0.2
        %v2637 = vmul.f32 %v2621, 0.2
        %v2638 = vmul.f32 %v2622, 0.2
        %v2639 = vmul.f32 %v2623, 0.2
        %v2640 = vmul.f32 %v2624, 0.2
        %v2641 = vmul.f32 %v2625, 0.2
        %v2642 = vmul.f32 %v2626, 0.2
        %v2643 = vmul.f32 %v2627, 0.2
        %v2644 = vmul.f32 %v2628, 0.2
        %v2645 = vmax.f32 %v2613, %v2629
        %v2646 = vmax.f32 %v2614, %v2630
        %v2647 = vmax.f32 %v2615, %v2631
        %v2648 = vmax.f32 %v2616, %v2632
        %v2649 = vmax.f32 %v2617, %v2633
        %v2650 = vmax.f32 %v2618, %v2634
        %v2651 = vmax.f32 %v2619, %v2635
        %v2652 = vmax.f32 %v2620, %v2636
        %v2653 = vmax.f32 %v2621, %v2637
        %v2654 = vmax.f32 %v2622, %v2638
        %v2655 = vmax.f32 %v2623, %v2639
        %v2656 = vmax.f32 %v2624, %v2640
        %v2657 = vmax.f32 %v2625, %v2641
        %v2658 = vmax.f32 %v2626, %v2642
        %v2659 = vmax.f32 %v2627, %v2643
        %v2660 = vmax.f32 %v2628, %v2644
        %v2661 = vpack.c.bf16 %v2647, %v2645
        %v2662 = vpack.c.bf16 %v2648, %v2646
        %v2663 = vpack.c.bf16 %v2651, %v2649
        %v2664 = vpack.c.bf16 %v2652, %v2650
        %v2665 = vpack.c.bf16 %v2655, %v2653
        %v2666 = vpack.c.bf16 %v2656, %v2654
        %v2667 = vpack.c.bf16 %v2659, %v2657
        %v2668 = vpack.c.bf16 %v2660, %v2658
        %s2669 = scalar_lea.vmem %s6, 128
        %v2670 = vld [vmem:[%s2669] sm:$0xf]
        %v2671 = vld [vmem:[%s2669 + $0x4] sm:$0xf]
        %v2672 = vld [vmem:[%s2669 + $0x8] sm:$0xf]
        %v2673 = vld [vmem:[%s2669 + $0xc] sm:$0xf]
        %v2674 = vld [vmem:[%s2669 + $0x10] sm:$0xf]
        %v2675 = vld [vmem:[%s2669 + $0x14] sm:$0xf]
        %v2676 = vld [vmem:[%s2669 + $0x18] sm:$0xf]
        %v2677 = vld [vmem:[%s2669 + $0x1c] sm:$0xf]
        %v2678 = vld [vmem:[%s2669 + $0x20] sm:$0xf]
        %v2679 = vld [vmem:[%s2669 + $0x24] sm:$0xf]
        %v2680 = vld [vmem:[%s2669 + $0x28] sm:$0xf]
        %v2681 = vld [vmem:[%s2669 + $0x2c] sm:$0xf]
        %v2682 = vld [vmem:[%s2669 + $0x30] sm:$0xf]
        %v2683 = vld [vmem:[%s2669 + $0x34] sm:$0xf]
        %v2684 = vld [vmem:[%s2669 + $0x38] sm:$0xf]
        %v2685 = vld [vmem:[%s2669 + $0x3c] sm:$0xf]
        %v2686 = vld [vmem:[%s2669 + $0x40] sm:$0xf]
        %v2687 = vld [vmem:[%s2669 + $0x44] sm:$0xf]
        %v2688 = vld [vmem:[%s2669 + $0x48] sm:$0xf]
        %v2689 = vld [vmem:[%s2669 + $0x4c] sm:$0xf]
        %v2690 = vld [vmem:[%s2669 + $0x50] sm:$0xf]
        %v2691 = vld [vmem:[%s2669 + $0x54] sm:$0xf]
        %v2692 = vld [vmem:[%s2669 + $0x58] sm:$0xf]
        %v2693 = vld [vmem:[%s2669 + $0x5c] sm:$0xf]
        %v2694 = vld [vmem:[%s2669 + $0x60] sm:$0xf]
        %v2695 = vld [vmem:[%s2669 + $0x64] sm:$0xf]
        %v2696 = vld [vmem:[%s2669 + $0x68] sm:$0xf]
        %v2697 = vld [vmem:[%s2669 + $0x6c] sm:$0xf]
        %v2698 = vld [vmem:[%s2669 + $0x70] sm:$0xf]
        %v2699 = vld [vmem:[%s2669 + $0x74] sm:$0xf]
        %v2700 = vld [vmem:[%s2669 + $0x78] sm:$0xf]
        %v2701 = vld [vmem:[%s2669 + $0x7c] sm:$0xf]
        %v2734 = vunpack.c.l.b16 %v2670
        %v2735 = vunpack.c.l.b16 %v2671
        %v2736 = vunpack.c.l.b16 %v2672
        %v2737 = vunpack.c.l.b16 %v2673
        %v2738 = vunpack.c.l.b16 %v2674
        %v2739 = vunpack.c.l.b16 %v2675
        %v2740 = vunpack.c.l.b16 %v2676
        %v2741 = vunpack.c.l.b16 %v2677
        %v2742 = vunpack.c.l.b16 %v2678
        %v2743 = vunpack.c.l.b16 %v2679
        %v2744 = vunpack.c.l.b16 %v2680
        %v2745 = vunpack.c.l.b16 %v2681
        %v2746 = vunpack.c.l.b16 %v2682
        %v2747 = vunpack.c.l.b16 %v2683
        %v2748 = vunpack.c.l.b16 %v2684
        %v2749 = vunpack.c.l.b16 %v2685
        %v2750 = vunpack.c.l.b16 %v2686
        %v2751 = vunpack.c.l.b16 %v2687
        %v2752 = vunpack.c.l.b16 %v2688
        %v2753 = vunpack.c.l.b16 %v2689
        %v2754 = vunpack.c.l.b16 %v2690
        %v2755 = vunpack.c.l.b16 %v2691
        %v2756 = vunpack.c.l.b16 %v2692
        %v2757 = vunpack.c.l.b16 %v2693
        %v2758 = vunpack.c.l.b16 %v2694
        %v2759 = vunpack.c.l.b16 %v2695
        %v2760 = vunpack.c.l.b16 %v2696
        %v2761 = vunpack.c.l.b16 %v2697
        %v2762 = vunpack.c.l.b16 %v2698
        %v2763 = vunpack.c.l.b16 %v2699
        %v2764 = vunpack.c.l.b16 %v2700
        %v2765 = vunpack.c.l.b16 %v2701
        %v2766 = vpack.c.b16 %v2735, %v2734
        %v2767 = vpack.c.b16 %v2737, %v2736
        %v2768 = vpack.c.b16 %v2739, %v2738
        %v2769 = vpack.c.b16 %v2741, %v2740
        %v2770 = vpack.c.b16 %v2743, %v2742
        %v2771 = vpack.c.b16 %v2745, %v2744
        %v2772 = vpack.c.b16 %v2747, %v2746
        %v2773 = vpack.c.b16 %v2749, %v2748
        %v2774 = vpack.c.b16 %v2751, %v2750
        %v2775 = vpack.c.b16 %v2753, %v2752
        %v2776 = vpack.c.b16 %v2755, %v2754
        %v2777 = vpack.c.b16 %v2757, %v2756
        %v2778 = vpack.c.b16 %v2759, %v2758
        %v2779 = vpack.c.b16 %v2761, %v2760
        %v2780 = vpack.c.b16 %v2763, %v2762
        %v2781 = vpack.c.b16 %v2765, %v2764
        %2798 = vmatpush.bf16.msra.mxu0 %v2773
        %2799 = vmatpush.bf16.msra.mxu0 %v2772
        %2800 = vmatpush.bf16.msra.mxu0 %v2771
        %2801 = vmatpush.bf16.msra.mxu0 %v2770
        %2802 = vmatpush.bf16.msra.mxu0 %v2769
        %2803 = vmatpush.bf16.msra.mxu0 %v2768
        %2804 = vmatpush.bf16.msra.mxu0 %v2767
        %2805 = vmatpush.bf16.msra.mxu0 %v2766
        %2806 = vmatmul.bf16.gmra.mxu0 %v2661
        %v2807 = vpop.f32.mrf.mxu0
        %v2808 = vadd.f32 0.0, %v2807
        %v2809 = vpop.f32.mrf.mxu0
        %v2810 = vadd.f32 0.0, %v2809
        %2811 = vmatmul.bf16.gmra.mxu0 %v2663
        %v2812 = vpop.f32.mrf.mxu0
        %v2813 = vadd.f32 0.0, %v2812
        %v2814 = vpop.f32.mrf.mxu0
        %v2815 = vadd.f32 0.0, %v2814
        %2816 = vmatmul.bf16.gmra.mxu0 %v2665
        %v2817 = vpop.f32.mrf.mxu0
        %v2818 = vadd.f32 0.0, %v2817
        %v2819 = vpop.f32.mrf.mxu0
        %v2820 = vadd.f32 0.0, %v2819
        %2821 = vmatmul.bf16.gmra.mxu0 %v2667
        %v2822 = vpop.f32.mrf.mxu0
        %v2823 = vadd.f32 0.0, %v2822
        %v2824 = vpop.f32.mrf.mxu0
        %v2825 = vadd.f32 0.0, %v2824
        %2826 = vdwg.mxu0
        %2827 = vmatpush.bf16.msra.mxu0 %v2781
        %2828 = vmatpush.bf16.msra.mxu0 %v2780
        %2829 = vmatpush.bf16.msra.mxu0 %v2779
        %2830 = vmatpush.bf16.msra.mxu0 %v2778
        %2831 = vmatpush.bf16.msra.mxu0 %v2777
        %2832 = vmatpush.bf16.msra.mxu0 %v2776
        %2833 = vmatpush.bf16.msra.mxu0 %v2775
        %2834 = vmatpush.bf16.msra.mxu0 %v2774
        %2835 = vmatmul.bf16.gmra.mxu0 %v2662
        %v2836 = vpop.f32.mrf.mxu0
        %v2837 = vadd.f32 %v2808, %v2836
        %v2838 = vpop.f32.mrf.mxu0
        %v2839 = vadd.f32 %v2810, %v2838
        %2840 = vmatmul.bf16.gmra.mxu0 %v2664
        %v2841 = vpop.f32.mrf.mxu0
        %v2842 = vadd.f32 %v2813, %v2841
        %v2843 = vpop.f32.mrf.mxu0
        %v2844 = vadd.f32 %v2815, %v2843
        %2845 = vmatmul.bf16.gmra.mxu0 %v2666
        %v2846 = vpop.f32.mrf.mxu0
        %v2847 = vadd.f32 %v2818, %v2846
        %v2848 = vpop.f32.mrf.mxu0
        %v2849 = vadd.f32 %v2820, %v2848
        %2850 = vmatmul.bf16.gmra.mxu0 %v2668
        %v2851 = vpop.f32.mrf.mxu0
        %v2852 = vadd.f32 %v2823, %v2851
        %v2853 = vpop.f32.mrf.mxu0
        %v2854 = vadd.f32 %v2825, %v2853
        %2855 = vdwg.mxu0
        %v2856 = vsel %vm1552, %v2837, -1e+30
        %v2857 = vsel %vm1553, %v2839, -1e+30
        %v2858 = vsel %vm1554, %v2842, -1e+30
        %v2859 = vsel %vm1555, %v2844, -1e+30
        %v2860 = vsel %vm1556, %v2847, -1e+30
        %v2861 = vsel %vm1557, %v2849, -1e+30
        %v2862 = vsel %vm1558, %v2852, -1e+30
        %v2863 = vsel %vm1559, %v2854, -1e+30
        %v2864 = vsel %vm1568, %v2856, -inf
        %v2865 = vrot.slane %v2864, 4
        %v2866 = vmax.f32 %v2864, %v2865
        %v2867 = vrot.slane %v2866, 2
        %v2868 = vmax.f32 %v2866, %v2867
        %v2869 = vrot.slane %v2868, 1
        %v2870 = vmax.f32 %v2868, %v2869
        %v2871 = vsel %vm1568, %v2857, -inf
        %v2872 = vrot.slane %v2871, 4
        %v2873 = vmax.f32 %v2871, %v2872
        %v2874 = vrot.slane %v2873, 2
        %v2875 = vmax.f32 %v2873, %v2874
        %v2876 = vrot.slane %v2875, 1
        %v2877 = vmax.f32 %v2875, %v2876
        %v2878 = vsel %vm1568, %v2858, -inf
        %v2879 = vrot.slane %v2878, 4
        %v2880 = vmax.f32 %v2878, %v2879
        %v2881 = vrot.slane %v2880, 2
        %v2882 = vmax.f32 %v2880, %v2881
        %v2883 = vrot.slane %v2882, 1
        %v2884 = vmax.f32 %v2882, %v2883
        %v2885 = vsel %vm1568, %v2859, -inf
        %v2886 = vrot.slane %v2885, 4
        %v2887 = vmax.f32 %v2885, %v2886
        %v2888 = vrot.slane %v2887, 2
        %v2889 = vmax.f32 %v2887, %v2888
        %v2890 = vrot.slane %v2889, 1
        %v2891 = vmax.f32 %v2889, %v2890
        %v2892 = vsel %vm1568, %v2860, -inf
        %v2893 = vrot.slane %v2892, 4
        %v2894 = vmax.f32 %v2892, %v2893
        %v2895 = vrot.slane %v2894, 2
        %v2896 = vmax.f32 %v2894, %v2895
        %v2897 = vrot.slane %v2896, 1
        %v2898 = vmax.f32 %v2896, %v2897
        %v2899 = vsel %vm1568, %v2861, -inf
        %v2900 = vrot.slane %v2899, 4
        %v2901 = vmax.f32 %v2899, %v2900
        %v2902 = vrot.slane %v2901, 2
        %v2903 = vmax.f32 %v2901, %v2902
        %v2904 = vrot.slane %v2903, 1
        %v2905 = vmax.f32 %v2903, %v2904
        %v2906 = vsel %vm1568, %v2862, -inf
        %v2907 = vrot.slane %v2906, 4
        %v2908 = vmax.f32 %v2906, %v2907
        %v2909 = vrot.slane %v2908, 2
        %v2910 = vmax.f32 %v2908, %v2909
        %v2911 = vrot.slane %v2910, 1
        %v2912 = vmax.f32 %v2910, %v2911
        %v2913 = vsel %vm1568, %v2863, -inf
        %v2914 = vrot.slane %v2913, 4
        %v2915 = vmax.f32 %v2913, %v2914
        %v2916 = vrot.slane %v2915, 2
        %v2917 = vmax.f32 %v2915, %v2916
        %v2918 = vrot.slane %v2917, 1
        %v2919 = vmax.f32 %v2917, %v2918
        %v2920 = vsub.f32 %v2856, %v2870
        %v2921 = vsub.f32 %v2857, %v2877
        %v2922 = vsub.f32 %v2858, %v2884
        %v2923 = vsub.f32 %v2859, %v2891
        %v2924 = vsub.f32 %v2860, %v2898
        %v2925 = vsub.f32 %v2861, %v2905
        %v2926 = vsub.f32 %v2862, %v2912
        %v2927 = vsub.f32 %v2863, %v2919
        %v2928 = vmul.f32 %v2920, 1.442695
        %v2929 = vpow.pop %v2928
        %v2930 = vmul.f32 %v2921, 1.442695
        %v2931 = vpow.pop %v2930
        %v2932 = vmul.f32 %v2922, 1.442695
        %v2933 = vpow.pop %v2932
        %v2934 = vmul.f32 %v2923, 1.442695
        %v2935 = vpow.pop %v2934
        %v2936 = vmul.f32 %v2924, 1.442695
        %v2937 = vpow.pop %v2936
        %v2938 = vmul.f32 %v2925, 1.442695
        %v2939 = vpow.pop %v2938
        %v2940 = vmul.f32 %v2926, 1.442695
        %v2941 = vpow.pop %v2940
        %v2942 = vmul.f32 %v2927, 1.442695
        %v2943 = vpow.pop %v2942
        %v2944 = vsel %vm1568, %v2929, 0.0
        %v2945 = vrot.slane %v2944, 4
        %v2946 = vadd.f32 %v2944, %v2945
        %v2947 = vrot.slane %v2946, 2
        %v2948 = vadd.f32 %v2946, %v2947
        %v2949 = vrot.slane %v2948, 1
        %v2950 = vadd.f32 %v2948, %v2949
        %v2951 = vsel %vm1568, %v2931, 0.0
        %v2952 = vrot.slane %v2951, 4
        %v2953 = vadd.f32 %v2951, %v2952
        %v2954 = vrot.slane %v2953, 2
        %v2955 = vadd.f32 %v2953, %v2954
        %v2956 = vrot.slane %v2955, 1
        %v2957 = vadd.f32 %v2955, %v2956
        %v2958 = vsel %vm1568, %v2933, 0.0
        %v2959 = vrot.slane %v2958, 4
        %v2960 = vadd.f32 %v2958, %v2959
        %v2961 = vrot.slane %v2960, 2
        %v2962 = vadd.f32 %v2960, %v2961
        %v2963 = vrot.slane %v2962, 1
        %v2964 = vadd.f32 %v2962, %v2963
        %v2965 = vsel %vm1568, %v2935, 0.0
        %v2966 = vrot.slane %v2965, 4
        %v2967 = vadd.f32 %v2965, %v2966
        %v2968 = vrot.slane %v2967, 2
        %v2969 = vadd.f32 %v2967, %v2968
        %v2970 = vrot.slane %v2969, 1
        %v2971 = vadd.f32 %v2969, %v2970
        %v2972 = vsel %vm1568, %v2937, 0.0
        %v2973 = vrot.slane %v2972, 4
        %v2974 = vadd.f32 %v2972, %v2973
        %v2975 = vrot.slane %v2974, 2
        %v2976 = vadd.f32 %v2974, %v2975
        %v2977 = vrot.slane %v2976, 1
        %v2978 = vadd.f32 %v2976, %v2977
        %v2979 = vsel %vm1568, %v2939, 0.0
        %v2980 = vrot.slane %v2979, 4
        %v2981 = vadd.f32 %v2979, %v2980
        %v2982 = vrot.slane %v2981, 2
        %v2983 = vadd.f32 %v2981, %v2982
        %v2984 = vrot.slane %v2983, 1
        %v2985 = vadd.f32 %v2983, %v2984
        %v2986 = vsel %vm1568, %v2941, 0.0
        %v2987 = vrot.slane %v2986, 4
        %v2988 = vadd.f32 %v2986, %v2987
        %v2989 = vrot.slane %v2988, 2
        %v2990 = vadd.f32 %v2988, %v2989
        %v2991 = vrot.slane %v2990, 1
        %v2992 = vadd.f32 %v2990, %v2991
        %v2993 = vsel %vm1568, %v2943, 0.0
        %v2994 = vrot.slane %v2993, 4
        %v2995 = vadd.f32 %v2993, %v2994
        %v2996 = vrot.slane %v2995, 2
        %v2997 = vadd.f32 %v2995, %v2996
        %v2998 = vrot.slane %v2997, 1
        %v2999 = vadd.f32 %v2997, %v2998
        %v3000 = vrcp.pop %v2950
        %v3001 = vrcp.pop %v2957
        %v3002 = vrcp.pop %v2964
        %v3003 = vrcp.pop %v2971
        %v3004 = vrcp.pop %v2978
        %v3005 = vrcp.pop %v2985
        %v3006 = vrcp.pop %v2992
        %v3007 = vrcp.pop %v2999
        %v3008 = vmul.f32 %v2929, %v3000
        %v3009 = vmul.f32 %v2931, %v3001
        %v3010 = vmul.f32 %v2933, %v3002
        %v3011 = vmul.f32 %v2935, %v3003
        %v3012 = vmul.f32 %v2937, %v3004
        %v3013 = vmul.f32 %v2939, %v3005
        %v3014 = vmul.f32 %v2941, %v3006
        %v3015 = vmul.f32 %v2943, %v3007
        %v3016 = vpack.c.bf16 %v3008, %v3008
        %v3017 = vpack.c.bf16 %v3009, %v3009
        %v3018 = vpack.c.bf16 %v3010, %v3010
        %v3019 = vpack.c.bf16 %v3011, %v3011
        %v3020 = vpack.c.bf16 %v3012, %v3012
        %v3021 = vpack.c.bf16 %v3013, %v3013
        %v3022 = vpack.c.bf16 %v3014, %v3014
        %v3023 = vpack.c.bf16 %v3015, %v3015
        %v3024 = vpack.c.bf16 %v2515, %v2515
        %v3033 = vunpack.c.l.b16 %v3016
        %v3034 = vunpack.c.l.b16 %v3017
        %v3035 = vunpack.c.l.b16 %v3018
        %v3036 = vunpack.c.l.b16 %v3019
        %v3037 = vunpack.c.l.b16 %v3020
        %v3038 = vunpack.c.l.b16 %v3021
        %v3039 = vunpack.c.l.b16 %v3022
        %v3040 = vunpack.c.l.b16 %v3023
        %3041 = vset.pattern.permute.xlu0 0
        %3042 = vperm.xlu0 %3041, %v3033
        %v3043 = vpop.permute.xlu0 %3042
        %3044 = vset.pattern.permute.xlu0 0
        %3045 = vperm.xlu0 %3044, %v3034
        %v3046 = vpop.permute.xlu0 %3045
        %3047 = vset.pattern.permute.xlu0 0
        %3048 = vperm.xlu0 %3047, %v3035
        %v3049 = vpop.permute.xlu0 %3048
        %3050 = vset.pattern.permute.xlu0 0
        %3051 = vperm.xlu0 %3050, %v3036
        %v3052 = vpop.permute.xlu0 %3051
        %3053 = vset.pattern.permute.xlu0 0
        %3054 = vperm.xlu0 %3053, %v3037
        %v3055 = vpop.permute.xlu0 %3054
        %3056 = vset.pattern.permute.xlu0 0
        %3057 = vperm.xlu0 %3056, %v3038
        %v3058 = vpop.permute.xlu0 %3057
        %3059 = vset.pattern.permute.xlu0 0
        %3060 = vperm.xlu0 %3059, %v3039
        %v3061 = vpop.permute.xlu0 %3060
        %3062 = vset.pattern.permute.xlu0 0
        %3063 = vperm.xlu0 %3062, %v3040
        %v3064 = vpop.permute.xlu0 %3063
        %v3065 = vperm.slane %v3043, %v1771
        %v3066 = vperm.slane %v3046, %v1771
        %v3067 = vperm.slane %v3049, %v1771
        %v3068 = vperm.slane %v3052, %v1771
        %v3069 = vperm.slane %v3055, %v1771
        %v3070 = vperm.slane %v3058, %v1771
        %v3071 = vperm.slane %v3061, %v1771
        %v3072 = vperm.slane %v3064, %v1771
        %v3073 = vsel %vm1091, %v3066, %v3065
        %v3074 = vsel %vm1094, %v3067, %v3073
        %v3075 = vsel %vm1097, %v3068, %v3074
        %v3076 = vsel %vm1100, %v3069, %v3075
        %v3077 = vsel %vm1103, %v3070, %v3076
        %v3078 = vsel %vm1106, %v3071, %v3077
        %v3079 = vsel %vm1786, %v3072, %v3078
        %v3080 = vpack.c.b16 %v3079, %v3079
        %v3082 = vsel %vm1789, %v3080, 0
        %v3085 = vsel %vm1793, %v3024, 0
        %3087 = vmatpush.bf16.msra.mxu0 0
        %3088 = vmatpush.bf16.msra.mxu0 0
        %3089 = vmatpush.bf16.msra.mxu0 0
        %3090 = vmatpush.bf16.msra.mxu0 0
        %3091 = vmatpush.bf16.msra.mxu0 0
        %3092 = vmatpush.bf16.msra.mxu0 0
        %3093 = vmatpush.bf16.msra.mxu0 0
        %3094 = vmatpush.bf16.msra.mxu0 %v3085
        %3095 = vmatmul.bf16.gmra.mxu0 %v3082
        %v3096 = vpop.f32.mrf.mxu0
        %v3097 = vadd.f32 0.0, %v3096
        %v3098 = vpop.f32.mrf.mxu0
        %3099 = vdwg.mxu0
        %3100 = vset.pattern.permute.xlu0 1
        %3101 = vperm.xlu0 %3100, %v3033
        %v3102 = vpop.permute.xlu0 %3101
        %3103 = vset.pattern.permute.xlu0 1
        %3104 = vperm.xlu0 %3103, %v3034
        %v3105 = vpop.permute.xlu0 %3104
        %3106 = vset.pattern.permute.xlu0 1
        %3107 = vperm.xlu0 %3106, %v3035
        %v3108 = vpop.permute.xlu0 %3107
        %3109 = vset.pattern.permute.xlu0 1
        %3110 = vperm.xlu0 %3109, %v3036
        %v3111 = vpop.permute.xlu0 %3110
        %3112 = vset.pattern.permute.xlu0 1
        %3113 = vperm.xlu0 %3112, %v3037
        %v3114 = vpop.permute.xlu0 %3113
        %3115 = vset.pattern.permute.xlu0 1
        %3116 = vperm.xlu0 %3115, %v3038
        %v3117 = vpop.permute.xlu0 %3116
        %3118 = vset.pattern.permute.xlu0 1
        %3119 = vperm.xlu0 %3118, %v3039
        %v3120 = vpop.permute.xlu0 %3119
        %3121 = vset.pattern.permute.xlu0 1
        %3122 = vperm.xlu0 %3121, %v3040
        %v3123 = vpop.permute.xlu0 %3122
        %v3124 = vperm.slane %v3102, %v1771
        %v3125 = vperm.slane %v3105, %v1771
        %v3126 = vperm.slane %v3108, %v1771
        %v3127 = vperm.slane %v3111, %v1771
        %v3128 = vperm.slane %v3114, %v1771
        %v3129 = vperm.slane %v3117, %v1771
        %v3130 = vperm.slane %v3120, %v1771
        %v3131 = vperm.slane %v3123, %v1771
        %v3132 = vsel %vm1091, %v3125, %v3124
        %v3133 = vsel %vm1094, %v3126, %v3132
        %v3134 = vsel %vm1097, %v3127, %v3133
        %v3135 = vsel %vm1100, %v3128, %v3134
        %v3136 = vsel %vm1103, %v3129, %v3135
        %v3137 = vsel %vm1106, %v3130, %v3136
        %v3138 = vsel %vm1786, %v3131, %v3137
        %v3139 = vpack.c.b16 %v3138, %v3138
        %3141 = vrot.lane.b32.xlu0 %v3024, 64
        %v3142 = vpop.permute.xlu0 %3141
        %v3144 = vsel %vm1789, %v3139, 0
        %v3147 = vsel %vm1793, %v3142, 0
        %3149 = vmatpush.bf16.msra.mxu0 0
        %3150 = vmatpush.bf16.msra.mxu0 0
        %3151 = vmatpush.bf16.msra.mxu0 0
        %3152 = vmatpush.bf16.msra.mxu0 0
        %3153 = vmatpush.bf16.msra.mxu0 0
        %3154 = vmatpush.bf16.msra.mxu0 0
        %3155 = vmatpush.bf16.msra.mxu0 0
        %3156 = vmatpush.bf16.msra.mxu0 %v3147
        %3157 = vmatmul.bf16.gmra.mxu0 %v3144
        %v3158 = vpop.f32.mrf.mxu0
        %v3159 = vadd.f32 0.0, %v3158
        %v3160 = vpop.f32.mrf.mxu0
        %3161 = vdwg.mxu0
        %v3162 = vpack.c.bf16 %v2516, %v2516
        %3163 = vset.pattern.permute.xlu0 2
        %3164 = vperm.xlu0 %3163, %v3033
        %v3165 = vpop.permute.xlu0 %3164
        %3166 = vset.pattern.permute.xlu0 2
        %3167 = vperm.xlu0 %3166, %v3034
        %v3168 = vpop.permute.xlu0 %3167
        %3169 = vset.pattern.permute.xlu0 2
        %3170 = vperm.xlu0 %3169, %v3035
        %v3171 = vpop.permute.xlu0 %3170
        %3172 = vset.pattern.permute.xlu0 2
        %3173 = vperm.xlu0 %3172, %v3036
        %v3174 = vpop.permute.xlu0 %3173
        %3175 = vset.pattern.permute.xlu0 2
        %3176 = vperm.xlu0 %3175, %v3037
        %v3177 = vpop.permute.xlu0 %3176
        %3178 = vset.pattern.permute.xlu0 2
        %3179 = vperm.xlu0 %3178, %v3038
        %v3180 = vpop.permute.xlu0 %3179
        %3181 = vset.pattern.permute.xlu0 2
        %3182 = vperm.xlu0 %3181, %v3039
        %v3183 = vpop.permute.xlu0 %3182
        %3184 = vset.pattern.permute.xlu0 2
        %3185 = vperm.xlu0 %3184, %v3040
        %v3186 = vpop.permute.xlu0 %3185
        %v3187 = vperm.slane %v3165, %v1771
        %v3188 = vperm.slane %v3168, %v1771
        %v3189 = vperm.slane %v3171, %v1771
        %v3190 = vperm.slane %v3174, %v1771
        %v3191 = vperm.slane %v3177, %v1771
        %v3192 = vperm.slane %v3180, %v1771
        %v3193 = vperm.slane %v3183, %v1771
        %v3194 = vperm.slane %v3186, %v1771
        %v3195 = vsel %vm1091, %v3188, %v3187
        %v3196 = vsel %vm1094, %v3189, %v3195
        %v3197 = vsel %vm1097, %v3190, %v3196
        %v3198 = vsel %vm1100, %v3191, %v3197
        %v3199 = vsel %vm1103, %v3192, %v3198
        %v3200 = vsel %vm1106, %v3193, %v3199
        %v3201 = vsel %vm1786, %v3194, %v3200
        %v3202 = vpack.c.b16 %v3201, %v3201
        %v3204 = vsel %vm1789, %v3202, 0
        %v3207 = vsel %vm1793, %v3162, 0
        %3209 = vmatpush.bf16.msra.mxu0 0
        %3210 = vmatpush.bf16.msra.mxu0 0
        %3211 = vmatpush.bf16.msra.mxu0 0
        %3212 = vmatpush.bf16.msra.mxu0 0
        %3213 = vmatpush.bf16.msra.mxu0 0
        %3214 = vmatpush.bf16.msra.mxu0 0
        %3215 = vmatpush.bf16.msra.mxu0 0
        %3216 = vmatpush.bf16.msra.mxu0 %v3207
        %3217 = vmatmul.bf16.gmra.mxu0 %v3204
        %v3218 = vpop.f32.mrf.mxu0
        %v3219 = vadd.f32 0.0, %v3218
        %v3220 = vpop.f32.mrf.mxu0
        %3221 = vdwg.mxu0
        %3222 = vset.pattern.permute.xlu0 3
        %3223 = vperm.xlu0 %3222, %v3033
        %v3224 = vpop.permute.xlu0 %3223
        %3225 = vset.pattern.permute.xlu0 3
        %3226 = vperm.xlu0 %3225, %v3034
        %v3227 = vpop.permute.xlu0 %3226
        %3228 = vset.pattern.permute.xlu0 3
        %3229 = vperm.xlu0 %3228, %v3035
        %v3230 = vpop.permute.xlu0 %3229
        %3231 = vset.pattern.permute.xlu0 3
        %3232 = vperm.xlu0 %3231, %v3036
        %v3233 = vpop.permute.xlu0 %3232
        %3234 = vset.pattern.permute.xlu0 3
        %3235 = vperm.xlu0 %3234, %v3037
        %v3236 = vpop.permute.xlu0 %3235
        %3237 = vset.pattern.permute.xlu0 3
        %3238 = vperm.xlu0 %3237, %v3038
        %v3239 = vpop.permute.xlu0 %3238
        %3240 = vset.pattern.permute.xlu0 3
        %3241 = vperm.xlu0 %3240, %v3039
        %v3242 = vpop.permute.xlu0 %3241
        %3243 = vset.pattern.permute.xlu0 3
        %3244 = vperm.xlu0 %3243, %v3040
        %v3245 = vpop.permute.xlu0 %3244
        %v3246 = vperm.slane %v3224, %v1771
        %v3247 = vperm.slane %v3227, %v1771
        %v3248 = vperm.slane %v3230, %v1771
        %v3249 = vperm.slane %v3233, %v1771
        %v3250 = vperm.slane %v3236, %v1771
        %v3251 = vperm.slane %v3239, %v1771
        %v3252 = vperm.slane %v3242, %v1771
        %v3253 = vperm.slane %v3245, %v1771
        %v3254 = vsel %vm1091, %v3247, %v3246
        %v3255 = vsel %vm1094, %v3248, %v3254
        %v3256 = vsel %vm1097, %v3249, %v3255
        %v3257 = vsel %vm1100, %v3250, %v3256
        %v3258 = vsel %vm1103, %v3251, %v3257
        %v3259 = vsel %vm1106, %v3252, %v3258
        %v3260 = vsel %vm1786, %v3253, %v3259
        %v3261 = vpack.c.b16 %v3260, %v3260
        %3263 = vrot.lane.b32.xlu0 %v3162, 64
        %v3264 = vpop.permute.xlu0 %3263
        %v3266 = vsel %vm1789, %v3261, 0
        %v3269 = vsel %vm1793, %v3264, 0
        %3271 = vmatpush.bf16.msra.mxu0 0
        %3272 = vmatpush.bf16.msra.mxu0 0
        %3273 = vmatpush.bf16.msra.mxu0 0
        %3274 = vmatpush.bf16.msra.mxu0 0
        %3275 = vmatpush.bf16.msra.mxu0 0
        %3276 = vmatpush.bf16.msra.mxu0 0
        %3277 = vmatpush.bf16.msra.mxu0 0
        %3278 = vmatpush.bf16.msra.mxu0 %v3269
        %3279 = vmatmul.bf16.gmra.mxu0 %v3266
        %v3280 = vpop.f32.mrf.mxu0
        %v3281 = vadd.f32 0.0, %v3280
        %v3282 = vpop.f32.mrf.mxu0
        %3283 = vdwg.mxu0
        %3285 = vrot.lane.b32.xlu0 %v3159, 64
        %v3286 = vpop.permute.xlu0 %3285
        %3289 = vrot.lane.b32.xlu0 %v3281, 64
        %v3290 = vpop.permute.xlu0 %3289
        %v3292 = vsel %vm2002, %v3097, %v3286
        %v3293 = vsel %vm2002, %v3219, %v3290
        %v3294 = vperm.slane %v2016, 3
        %v3295 = vperm.slane %v2016, 7
        %v3298 = vperm.slane %v3294, 3
        %v3299 = vperm.slane %v3295, 3
        %v3300 = vadd.f32 %v3292, %v3298
        %v3301 = vadd.f32 %v3293, %v3299
        %v3302 = vmax.f32 %v3300, 0.0
        %v3303 = vmax.f32 %v3301, 0.0
        %s3304 = scalar_lea.vmem [#allocation13], 16
        %v3305 = vld [vmem:[%s3304] sm:$0xff]
        %v3306 = vpack.c.bf16 %v3302, %v3302
        %v3307 = vpack.c.bf16 %v3303, %v3303
        %s3308 = scalar_lea.vmem [#allocation10], 1024
        %v3309 = vld [vmem:[%s3308] sm:$0xff]
        %v3310 = vld [vmem:[%s3308 + $0x8] sm:$0xff]
        %v3311 = vld [vmem:[%s3308 + $0x10] sm:$0xff]
        %v3312 = vld [vmem:[%s3308 + $0x18] sm:$0xff]
        %v3313 = vld [vmem:[%s3308 + $0x20] sm:$0xff]
        %v3314 = vld [vmem:[%s3308 + $0x28] sm:$0xff]
        %v3315 = vld [vmem:[%s3308 + $0x30] sm:$0xff]
        %v3316 = vld [vmem:[%s3308 + $0x38] sm:$0xff]
        %v3317 = vld [vmem:[%s3308 + $0x40] sm:$0xff]
        %v3318 = vld [vmem:[%s3308 + $0x48] sm:$0xff]
        %v3319 = vld [vmem:[%s3308 + $0x50] sm:$0xff]
        %v3320 = vld [vmem:[%s3308 + $0x58] sm:$0xff]
        %v3321 = vld [vmem:[%s3308 + $0x60] sm:$0xff]
        %v3322 = vld [vmem:[%s3308 + $0x68] sm:$0xff]
        %v3323 = vld [vmem:[%s3308 + $0x70] sm:$0xff]
        %v3324 = vld [vmem:[%s3308 + $0x78] sm:$0xff]
        %v3325 = vld [vmem:[%s3308 + $0x80] sm:$0xff]
        %v3326 = vld [vmem:[%s3308 + $0x88] sm:$0xff]
        %v3327 = vld [vmem:[%s3308 + $0x90] sm:$0xff]
        %v3328 = vld [vmem:[%s3308 + $0x98] sm:$0xff]
        %v3329 = vld [vmem:[%s3308 + $0xa0] sm:$0xff]
        %v3330 = vld [vmem:[%s3308 + $0xa8] sm:$0xff]
        %v3331 = vld [vmem:[%s3308 + $0xb0] sm:$0xff]
        %v3332 = vld [vmem:[%s3308 + $0xb8] sm:$0xff]
        %v3333 = vld [vmem:[%s3308 + $0xc0] sm:$0xff]
        %v3334 = vld [vmem:[%s3308 + $0xc8] sm:$0xff]
        %v3335 = vld [vmem:[%s3308 + $0xd0] sm:$0xff]
        %v3336 = vld [vmem:[%s3308 + $0xd8] sm:$0xff]
        %v3337 = vld [vmem:[%s3308 + $0xe0] sm:$0xff]
        %v3338 = vld [vmem:[%s3308 + $0xe8] sm:$0xff]
        %v3339 = vld [vmem:[%s3308 + $0xf0] sm:$0xff]
        %v3340 = vld [vmem:[%s3308 + $0xf8] sm:$0xff]
        %v3341 = vld [vmem:[%s3308 + $0x100] sm:$0xff]
        %v3342 = vld [vmem:[%s3308 + $0x108] sm:$0xff]
        %v3343 = vld [vmem:[%s3308 + $0x110] sm:$0xff]
        %v3344 = vld [vmem:[%s3308 + $0x118] sm:$0xff]
        %v3345 = vld [vmem:[%s3308 + $0x120] sm:$0xff]
        %v3346 = vld [vmem:[%s3308 + $0x128] sm:$0xff]
        %v3347 = vld [vmem:[%s3308 + $0x130] sm:$0xff]
        %v3348 = vld [vmem:[%s3308 + $0x138] sm:$0xff]
        %v3349 = vld [vmem:[%s3308 + $0x140] sm:$0xff]
        %v3350 = vld [vmem:[%s3308 + $0x148] sm:$0xff]
        %v3351 = vld [vmem:[%s3308 + $0x150] sm:$0xff]
        %v3352 = vld [vmem:[%s3308 + $0x158] sm:$0xff]
        %v3353 = vld [vmem:[%s3308 + $0x160] sm:$0xff]
        %v3354 = vld [vmem:[%s3308 + $0x168] sm:$0xff]
        %v3355 = vld [vmem:[%s3308 + $0x170] sm:$0xff]
        %v3356 = vld [vmem:[%s3308 + $0x178] sm:$0xff]
        %v3357 = vld [vmem:[%s3308 + $0x180] sm:$0xff]
        %v3358 = vld [vmem:[%s3308 + $0x188] sm:$0xff]
        %v3359 = vld [vmem:[%s3308 + $0x190] sm:$0xff]
        %v3360 = vld [vmem:[%s3308 + $0x198] sm:$0xff]
        %v3361 = vld [vmem:[%s3308 + $0x1a0] sm:$0xff]
        %v3362 = vld [vmem:[%s3308 + $0x1a8] sm:$0xff]
        %v3363 = vld [vmem:[%s3308 + $0x1b0] sm:$0xff]
        %v3364 = vld [vmem:[%s3308 + $0x1b8] sm:$0xff]
        %v3365 = vld [vmem:[%s3308 + $0x1c0] sm:$0xff]
        %v3366 = vld [vmem:[%s3308 + $0x1c8] sm:$0xff]
        %v3367 = vld [vmem:[%s3308 + $0x1d0] sm:$0xff]
        %v3368 = vld [vmem:[%s3308 + $0x1d8] sm:$0xff]
        %v3369 = vld [vmem:[%s3308 + $0x1e0] sm:$0xff]
        %v3370 = vld [vmem:[%s3308 + $0x1e8] sm:$0xff]
        %v3371 = vld [vmem:[%s3308 + $0x1f0] sm:$0xff]
        %v3372 = vld [vmem:[%s3308 + $0x1f8] sm:$0xff]
        %v3437 = vunpack.c.l.b16 %v3309
        %v3438 = vunpack.c.h.b16 %v3309
        %v3439 = vunpack.c.l.b16 %v3310
        %v3440 = vunpack.c.h.b16 %v3310
        %v3441 = vunpack.c.l.b16 %v3311
        %v3442 = vunpack.c.h.b16 %v3311
        %v3443 = vunpack.c.l.b16 %v3312
        %v3444 = vunpack.c.h.b16 %v3312
        %v3445 = vunpack.c.l.b16 %v3313
        %v3446 = vunpack.c.h.b16 %v3313
        %v3447 = vunpack.c.l.b16 %v3314
        %v3448 = vunpack.c.h.b16 %v3314
        %v3449 = vunpack.c.l.b16 %v3315
        %v3450 = vunpack.c.h.b16 %v3315
        %v3451 = vunpack.c.l.b16 %v3316
        %v3452 = vunpack.c.h.b16 %v3316
        %v3453 = vunpack.c.l.b16 %v3317
        %v3454 = vunpack.c.h.b16 %v3317
        %v3455 = vunpack.c.l.b16 %v3318
        %v3456 = vunpack.c.h.b16 %v3318
        %v3457 = vunpack.c.l.b16 %v3319
        %v3458 = vunpack.c.h.b16 %v3319
        %v3459 = vunpack.c.l.b16 %v3320
        %v3460 = vunpack.c.h.b16 %v3320
        %v3461 = vunpack.c.l.b16 %v3321
        %v3462 = vunpack.c.h.b16 %v3321
        %v3463 = vunpack.c.l.b16 %v3322
        %v3464 = vunpack.c.h.b16 %v3322
        %v3465 = vunpack.c.l.b16 %v3323
        %v3466 = vunpack.c.h.b16 %v3323
        %v3467 = vunpack.c.l.b16 %v3324
        %v3468 = vunpack.c.h.b16 %v3324
        %v3469 = vunpack.c.l.b16 %v3325
        %v3470 = vunpack.c.h.b16 %v3325
        %v3471 = vunpack.c.l.b16 %v3326
        %v3472 = vunpack.c.h.b16 %v3326
        %v3473 = vunpack.c.l.b16 %v3327
        %v3474 = vunpack.c.h.b16 %v3327
        %v3475 = vunpack.c.l.b16 %v3328
        %v3476 = vunpack.c.h.b16 %v3328
        %v3477 = vunpack.c.l.b16 %v3329
        %v3478 = vunpack.c.h.b16 %v3329
        %v3479 = vunpack.c.l.b16 %v3330
        %v3480 = vunpack.c.h.b16 %v3330
        %v3481 = vunpack.c.l.b16 %v3331
        %v3482 = vunpack.c.h.b16 %v3331
        %v3483 = vunpack.c.l.b16 %v3332
        %v3484 = vunpack.c.h.b16 %v3332
        %v3485 = vunpack.c.l.b16 %v3333
        %v3486 = vunpack.c.h.b16 %v3333
        %v3487 = vunpack.c.l.b16 %v3334
        %v3488 = vunpack.c.h.b16 %v3334
        %v3489 = vunpack.c.l.b16 %v3335
        %v3490 = vunpack.c.h.b16 %v3335
        %v3491 = vunpack.c.l.b16 %v3336
        %v3492 = vunpack.c.h.b16 %v3336
        %v3493 = vunpack.c.l.b16 %v3337
        %v3494 = vunpack.c.h.b16 %v3337
        %v3495 = vunpack.c.l.b16 %v3338
        %v3496 = vunpack.c.h.b16 %v3338
        %v3497 = vunpack.c.l.b16 %v3339
        %v3498 = vunpack.c.h.b16 %v3339
        %v3499 = vunpack.c.l.b16 %v3340
        %v3500 = vunpack.c.h.b16 %v3340
        %v3501 = vunpack.c.l.b16 %v3341
        %v3502 = vunpack.c.h.b16 %v3341
        %v3503 = vunpack.c.l.b16 %v3342
        %v3504 = vunpack.c.h.b16 %v3342
        %v3505 = vunpack.c.l.b16 %v3343
        %v3506 = vunpack.c.h.b16 %v3343
        %v3507 = vunpack.c.l.b16 %v3344
        %v3508 = vunpack.c.h.b16 %v3344
        %v3509 = vunpack.c.l.b16 %v3345
        %v3510 = vunpack.c.h.b16 %v3345
        %v3511 = vunpack.c.l.b16 %v3346
        %v3512 = vunpack.c.h.b16 %v3346
        %v3513 = vunpack.c.l.b16 %v3347
        %v3514 = vunpack.c.h.b16 %v3347
        %v3515 = vunpack.c.l.b16 %v3348
        %v3516 = vunpack.c.h.b16 %v3348
        %v3517 = vunpack.c.l.b16 %v3349
        %v3518 = vunpack.c.h.b16 %v3349
        %v3519 = vunpack.c.l.b16 %v3350
        %v3520 = vunpack.c.h.b16 %v3350
        %v3521 = vunpack.c.l.b16 %v3351
        %v3522 = vunpack.c.h.b16 %v3351
        %v3523 = vunpack.c.l.b16 %v3352
        %v3524 = vunpack.c.h.b16 %v3352
        %v3525 = vunpack.c.l.b16 %v3353
        %v3526 = vunpack.c.h.b16 %v3353
        %v3527 = vunpack.c.l.b16 %v3354
        %v3528 = vunpack.c.h.b16 %v3354
        %v3529 = vunpack.c.l.b16 %v3355
        %v3530 = vunpack.c.h.b16 %v3355
        %v3531 = vunpack.c.l.b16 %v3356
        %v3532 = vunpack.c.h.b16 %v3356
        %v3533 = vunpack.c.l.b16 %v3357
        %v3534 = vunpack.c.h.b16 %v3357
        %v3535 = vunpack.c.l.b16 %v3358
        %v3536 = vunpack.c.h.b16 %v3358
        %v3537 = vunpack.c.l.b16 %v3359
        %v3538 = vunpack.c.h.b16 %v3359
        %v3539 = vunpack.c.l.b16 %v3360
        %v3540 = vunpack.c.h.b16 %v3360
        %v3541 = vunpack.c.l.b16 %v3361
        %v3542 = vunpack.c.h.b16 %v3361
        %v3543 = vunpack.c.l.b16 %v3362
        %v3544 = vunpack.c.h.b16 %v3362
        %v3545 = vunpack.c.l.b16 %v3363
        %v3546 = vunpack.c.h.b16 %v3363
        %v3547 = vunpack.c.l.b16 %v3364
        %v3548 = vunpack.c.h.b16 %v3364
        %v3549 = vunpack.c.l.b16 %v3365
        %v3550 = vunpack.c.h.b16 %v3365
        %v3551 = vunpack.c.l.b16 %v3366
        %v3552 = vunpack.c.h.b16 %v3366
        %v3553 = vunpack.c.l.b16 %v3367
        %v3554 = vunpack.c.h.b16 %v3367
        %v3555 = vunpack.c.l.b16 %v3368
        %v3556 = vunpack.c.h.b16 %v3368
        %v3557 = vunpack.c.l.b16 %v3369
        %v3558 = vunpack.c.h.b16 %v3369
        %v3559 = vunpack.c.l.b16 %v3370
        %v3560 = vunpack.c.h.b16 %v3370
        %v3561 = vunpack.c.l.b16 %v3371
        %v3562 = vunpack.c.h.b16 %v3371
        %v3563 = vunpack.c.l.b16 %v3372
        %v3564 = vunpack.c.h.b16 %v3372
        %v3565 = vpack.c.b16 %v3441, %v3437
        %v3566 = vpack.c.b16 %v3442, %v3438
        %v3567 = vpack.c.b16 %v3443, %v3439
        %v3568 = vpack.c.b16 %v3444, %v3440
        %v3569 = vpack.c.b16 %v3449, %v3445
        %v3570 = vpack.c.b16 %v3450, %v3446
        %v3571 = vpack.c.b16 %v3451, %v3447
        %v3572 = vpack.c.b16 %v3452, %v3448
        %v3573 = vpack.c.b16 %v3457, %v3453
        %v3574 = vpack.c.b16 %v3458, %v3454
        %v3575 = vpack.c.b16 %v3459, %v3455
        %v3576 = vpack.c.b16 %v3460, %v3456
        %v3577 = vpack.c.b16 %v3465, %v3461
        %v3578 = vpack.c.b16 %v3466, %v3462
        %v3579 = vpack.c.b16 %v3467, %v3463
        %v3580 = vpack.c.b16 %v3468, %v3464
        %v3581 = vpack.c.b16 %v3473, %v3469
        %v3582 = vpack.c.b16 %v3474, %v3470
        %v3583 = vpack.c.b16 %v3475, %v3471
        %v3584 = vpack.c.b16 %v3476, %v3472
        %v3585 = vpack.c.b16 %v3481, %v3477
        %v3586 = vpack.c.b16 %v3482, %v3478
        %v3587 = vpack.c.b16 %v3483, %v3479
        %v3588 = vpack.c.b16 %v3484, %v3480
        %v3589 = vpack.c.b16 %v3489, %v3485
        %v3590 = vpack.c.b16 %v3490, %v3486
        %v3591 = vpack.c.b16 %v3491, %v3487
        %v3592 = vpack.c.b16 %v3492, %v3488
        %v3593 = vpack.c.b16 %v3497, %v3493
        %v3594 = vpack.c.b16 %v3498, %v3494
        %v3595 = vpack.c.b16 %v3499, %v3495
        %v3596 = vpack.c.b16 %v3500, %v3496
        %v3597 = vpack.c.b16 %v3505, %v3501
        %v3598 = vpack.c.b16 %v3506, %v3502
        %v3599 = vpack.c.b16 %v3507, %v3503
        %v3600 = vpack.c.b16 %v3508, %v3504
        %v3601 = vpack.c.b16 %v3513, %v3509
        %v3602 = vpack.c.b16 %v3514, %v3510
        %v3603 = vpack.c.b16 %v3515, %v3511
        %v3604 = vpack.c.b16 %v3516, %v3512
        %v3605 = vpack.c.b16 %v3521, %v3517
        %v3606 = vpack.c.b16 %v3522, %v3518
        %v3607 = vpack.c.b16 %v3523, %v3519
        %v3608 = vpack.c.b16 %v3524, %v3520
        %v3609 = vpack.c.b16 %v3529, %v3525
        %v3610 = vpack.c.b16 %v3530, %v3526
        %v3611 = vpack.c.b16 %v3531, %v3527
        %v3612 = vpack.c.b16 %v3532, %v3528
        %v3613 = vpack.c.b16 %v3537, %v3533
        %v3614 = vpack.c.b16 %v3538, %v3534
        %v3615 = vpack.c.b16 %v3539, %v3535
        %v3616 = vpack.c.b16 %v3540, %v3536
        %v3617 = vpack.c.b16 %v3545, %v3541
        %v3618 = vpack.c.b16 %v3546, %v3542
        %v3619 = vpack.c.b16 %v3547, %v3543
        %v3620 = vpack.c.b16 %v3548, %v3544
        %v3621 = vpack.c.b16 %v3553, %v3549
        %v3622 = vpack.c.b16 %v3554, %v3550
        %v3623 = vpack.c.b16 %v3555, %v3551
        %v3624 = vpack.c.b16 %v3556, %v3552
        %v3625 = vpack.c.b16 %v3561, %v3557
        %v3626 = vpack.c.b16 %v3562, %v3558
        %v3627 = vpack.c.b16 %v3563, %v3559
        %v3628 = vpack.c.b16 %v3564, %v3560
        %3693 = vmatpush.bf16.msra.mxu0 %v3593
        %3694 = vmatpush.bf16.msra.mxu0 %v3589
        %3695 = vmatpush.bf16.msra.mxu0 %v3585
        %3696 = vmatpush.bf16.msra.mxu0 %v3581
        %3697 = vmatpush.bf16.msra.mxu0 %v3577
        %3698 = vmatpush.bf16.msra.mxu0 %v3573
        %3699 = vmatpush.bf16.msra.mxu0 %v3569
        %3700 = vmatpush.bf16.msra.mxu0 %v3565
        %3701 = vmatmul.bf16.gmra.mxu0 %v3306
        %v3702 = vpop.f32.mrf.mxu0
        %v3703 = vadd.f32 0.0, %v3702
        %v3704 = vpop.f32.mrf.mxu0
        %3705 = vdwg.mxu0
        %3706 = vmatpush.bf16.msra.mxu0 %v3625
        %3707 = vmatpush.bf16.msra.mxu0 %v3621
        %3708 = vmatpush.bf16.msra.mxu0 %v3617
        %3709 = vmatpush.bf16.msra.mxu0 %v3613
        %3710 = vmatpush.bf16.msra.mxu0 %v3609
        %3711 = vmatpush.bf16.msra.mxu0 %v3605
        %3712 = vmatpush.bf16.msra.mxu0 %v3601
        %3713 = vmatpush.bf16.msra.mxu0 %v3597
        %3714 = vmatmul.bf16.gmra.mxu0 %v3307
        %v3715 = vpop.f32.mrf.mxu0
        %v3716 = vadd.f32 %v3703, %v3715
        %v3717 = vpop.f32.mrf.mxu0
        %3718 = vdwg.mxu0
        %3719 = vmatpush.bf16.msra.mxu0 %v3594
        %3720 = vmatpush.bf16.msra.mxu0 %v3590
        %3721 = vmatpush.bf16.msra.mxu0 %v3586
        %3722 = vmatpush.bf16.msra.mxu0 %v3582
        %3723 = vmatpush.bf16.msra.mxu0 %v3578
        %3724 = vmatpush.bf16.msra.mxu0 %v3574
        %3725 = vmatpush.bf16.msra.mxu0 %v3570
        %3726 = vmatpush.bf16.msra.mxu0 %v3566
        %3727 = vmatmul.bf16.gmra.mxu0 %v3306
        %v3728 = vpop.f32.mrf.mxu0
        %v3729 = vadd.f32 0.0, %v3728
        %v3730 = vpop.f32.mrf.mxu0
        %3731 = vdwg.mxu0
        %3732 = vmatpush.bf16.msra.mxu0 %v3626
        %3733 = vmatpush.bf16.msra.mxu0 %v3622
        %3734 = vmatpush.bf16.msra.mxu0 %v3618
        %3735 = vmatpush.bf16.msra.mxu0 %v3614
        %3736 = vmatpush.bf16.msra.mxu0 %v3610
        %3737 = vmatpush.bf16.msra.mxu0 %v3606
        %3738 = vmatpush.bf16.msra.mxu0 %v3602
        %3739 = vmatpush.bf16.msra.mxu0 %v3598
        %3740 = vmatmul.bf16.gmra.mxu0 %v3307
        %v3741 = vpop.f32.mrf.mxu0
        %v3742 = vadd.f32 %v3729, %v3741
        %v3743 = vpop.f32.mrf.mxu0
        %3744 = vdwg.mxu0
        %3745 = vmatpush.bf16.msra.mxu0 %v3595
        %3746 = vmatpush.bf16.msra.mxu0 %v3591
        %3747 = vmatpush.bf16.msra.mxu0 %v3587
        %3748 = vmatpush.bf16.msra.mxu0 %v3583
        %3749 = vmatpush.bf16.msra.mxu0 %v3579
        %3750 = vmatpush.bf16.msra.mxu0 %v3575
        %3751 = vmatpush.bf16.msra.mxu0 %v3571
        %3752 = vmatpush.bf16.msra.mxu0 %v3567
        %3753 = vmatmul.bf16.gmra.mxu0 %v3306
        %v3754 = vpop.f32.mrf.mxu0
        %v3755 = vadd.f32 0.0, %v3754
        %v3756 = vpop.f32.mrf.mxu0
        %3757 = vdwg.mxu0
        %3758 = vmatpush.bf16.msra.mxu0 %v3627
        %3759 = vmatpush.bf16.msra.mxu0 %v3623
        %3760 = vmatpush.bf16.msra.mxu0 %v3619
        %3761 = vmatpush.bf16.msra.mxu0 %v3615
        %3762 = vmatpush.bf16.msra.mxu0 %v3611
        %3763 = vmatpush.bf16.msra.mxu0 %v3607
        %3764 = vmatpush.bf16.msra.mxu0 %v3603
        %3765 = vmatpush.bf16.msra.mxu0 %v3599
        %3766 = vmatmul.bf16.gmra.mxu0 %v3307
        %v3767 = vpop.f32.mrf.mxu0
        %v3768 = vadd.f32 %v3755, %v3767
        %v3769 = vpop.f32.mrf.mxu0
        %3770 = vdwg.mxu0
        %3771 = vmatpush.bf16.msra.mxu0 %v3596
        %3772 = vmatpush.bf16.msra.mxu0 %v3592
        %3773 = vmatpush.bf16.msra.mxu0 %v3588
        %3774 = vmatpush.bf16.msra.mxu0 %v3584
        %3775 = vmatpush.bf16.msra.mxu0 %v3580
        %3776 = vmatpush.bf16.msra.mxu0 %v3576
        %3777 = vmatpush.bf16.msra.mxu0 %v3572
        %3778 = vmatpush.bf16.msra.mxu0 %v3568
        %3779 = vmatmul.bf16.gmra.mxu0 %v3306
        %v3780 = vpop.f32.mrf.mxu0
        %v3781 = vadd.f32 0.0, %v3780
        %v3782 = vpop.f32.mrf.mxu0
        %3783 = vdwg.mxu0
        %3784 = vmatpush.bf16.msra.mxu0 %v3628
        %3785 = vmatpush.bf16.msra.mxu0 %v3624
        %3786 = vmatpush.bf16.msra.mxu0 %v3620
        %3787 = vmatpush.bf16.msra.mxu0 %v3616
        %3788 = vmatpush.bf16.msra.mxu0 %v3612
        %3789 = vmatpush.bf16.msra.mxu0 %v3608
        %3790 = vmatpush.bf16.msra.mxu0 %v3604
        %3791 = vmatpush.bf16.msra.mxu0 %v3600
        %3792 = vmatmul.bf16.gmra.mxu0 %v3307
        %v3793 = vpop.f32.mrf.mxu0
        %v3794 = vadd.f32 %v3781, %v3793
        %v3795 = vpop.f32.mrf.mxu0
        %3796 = vdwg.mxu0
        %v3798 = vperm.slane %v3305, 0
        %v3799 = vperm.slane %v3305, 4
        %v3802 = vperm.slane %v3798, 0
        %v3803 = vperm.slane %v3799, 0
        %v3804 = vadd.f32 %v3716, %v3802
        %v3805 = vadd.f32 %v3742, %v3803
        %v3806 = vperm.slane %v3305, 1
        %v3807 = vperm.slane %v3305, 5
        %v3810 = vperm.slane %v3806, 1
        %v3811 = vperm.slane %v3807, 1
        %v3812 = vadd.f32 %v3768, %v3810
        %v3813 = vadd.f32 %v3794, %v3811
        %v3816 = vrot.slane %v3813, 7
        %v3817 = vsel %vm1089, %v3812, %v3816
        %v3818 = vsel %vm1091, %v3812, %v3816
        %v3819 = vrot.slane %v3818, 1
        %v3820 = vsel %vm1094, %v3812, %v3816
        %v3821 = vrot.slane %v3820, 2
        %v3822 = vsel %vm1097, %v3812, %v3816
        %v3823 = vrot.slane %v3822, 3
        %v3824 = vsel %vm1100, %v3812, %v3816
        %v3825 = vrot.slane %v3824, 4
        %v3826 = vsel %vm1103, %v3812, %v3816
        %v3827 = vrot.slane %v3826, 5
        %v3828 = vsel %vm1106, %v3812, %v3816
        %v3829 = vrot.slane %v3828, 6
        %v3830 = vsel %vm1109, %v3816, %v3812
        %v3831 = vrot.slane %v3830, 7
        %v3832 = vperm.slane %v3817, 0
        %v3833 = vperm.slane %v3817, 1
        %v3834 = vperm.slane %v3819, 0
        %v3835 = vperm.slane %v3819, 1
        %v3836 = vperm.slane %v3821, 0
        %v3837 = vperm.slane %v3821, 1
        %v3838 = vperm.slane %v3823, 0
        %v3839 = vperm.slane %v3823, 1
        %v3840 = vperm.slane %v3825, 0
        %v3841 = vperm.slane %v3825, 1
        %v3842 = vperm.slane %v3827, 0
        %v3843 = vperm.slane %v3827, 1
        %v3844 = vperm.slane %v3829, 0
        %v3845 = vperm.slane %v3829, 1
        %v3846 = vperm.slane %v3831, 0
        %v3847 = vperm.slane %v3831, 1
        %v3864 = vadd.f32 %v3804, %v3832
        %v3865 = vadd.f32 %v3805, %v3833
        %v3866 = vadd.f32 %v3804, %v3834
        %v3867 = vadd.f32 %v3805, %v3835
        %v3868 = vadd.f32 %v3804, %v3836
        %v3869 = vadd.f32 %v3805, %v3837
        %v3870 = vadd.f32 %v3804, %v3838
        %v3871 = vadd.f32 %v3805, %v3839
        %v3872 = vadd.f32 %v3804, %v3840
        %v3873 = vadd.f32 %v3805, %v3841
        %v3874 = vadd.f32 %v3804, %v3842
        %v3875 = vadd.f32 %v3805, %v3843
        %v3876 = vadd.f32 %v3804, %v3844
        %v3877 = vadd.f32 %v3805, %v3845
        %v3878 = vadd.f32 %v3804, %v3846
        %v3879 = vadd.f32 %v3805, %v3847
        %v3880 = vperm.slane %v3305, 2
        %v3881 = vperm.slane %v3305, 6
        %v3884 = vperm.slane %v3880, 2
        %v3885 = vperm.slane %v3881, 2
        %v3886 = vmul.f32 %v1166, %v3884
        %v3887 = vmul.f32 %v1166, %v3885
        %v3888 = vmul.f32 %v1173, %v3884
        %v3889 = vmul.f32 %v1173, %v3885
        %v3890 = vmul.f32 %v1180, %v3884
        %v3891 = vmul.f32 %v1180, %v3885
        %v3892 = vmul.f32 %v1187, %v3884
        %v3893 = vmul.f32 %v1187, %v3885
        %v3894 = vmul.f32 %v1194, %v3884
        %v3895 = vmul.f32 %v1194, %v3885
        %v3896 = vmul.f32 %v1201, %v3884
        %v3897 = vmul.f32 %v1201, %v3885
        %v3898 = vmul.f32 %v1208, %v3884
        %v3899 = vmul.f32 %v1208, %v3885
        %v3900 = vmul.f32 %v1215, %v3884
        %v3901 = vmul.f32 %v1215, %v3885
        %v3902 = vadd.f32 %v3864, %v3886
        %v3903 = vadd.f32 %v3865, %v3887
        %v3904 = vadd.f32 %v3866, %v3888
        %v3905 = vadd.f32 %v3867, %v3889
        %v3906 = vadd.f32 %v3868, %v3890
        %v3907 = vadd.f32 %v3869, %v3891
        %v3908 = vadd.f32 %v3870, %v3892
        %v3909 = vadd.f32 %v3871, %v3893
        %v3910 = vadd.f32 %v3872, %v3894
        %v3911 = vadd.f32 %v3873, %v3895
        %v3912 = vadd.f32 %v3874, %v3896
        %v3913 = vadd.f32 %v3875, %v3897
        %v3914 = vadd.f32 %v3876, %v3898
        %v3915 = vadd.f32 %v3877, %v3899
        %v3916 = vadd.f32 %v3878, %v3900
        %v3917 = vadd.f32 %v3879, %v3901
        %v3918 = vmul.f32 %v3902, 0.2
        %v3919 = vmul.f32 %v3903, 0.2
        %v3920 = vmul.f32 %v3904, 0.2
        %v3921 = vmul.f32 %v3905, 0.2
        %v3922 = vmul.f32 %v3906, 0.2
        %v3923 = vmul.f32 %v3907, 0.2
        %v3924 = vmul.f32 %v3908, 0.2
        %v3925 = vmul.f32 %v3909, 0.2
        %v3926 = vmul.f32 %v3910, 0.2
        %v3927 = vmul.f32 %v3911, 0.2
        %v3928 = vmul.f32 %v3912, 0.2
        %v3929 = vmul.f32 %v3913, 0.2
        %v3930 = vmul.f32 %v3914, 0.2
        %v3931 = vmul.f32 %v3915, 0.2
        %v3932 = vmul.f32 %v3916, 0.2
        %v3933 = vmul.f32 %v3917, 0.2
        %v3934 = vmax.f32 %v3902, %v3918
        %v3935 = vmax.f32 %v3903, %v3919
        %v3936 = vmax.f32 %v3904, %v3920
        %v3937 = vmax.f32 %v3905, %v3921
        %v3938 = vmax.f32 %v3906, %v3922
        %v3939 = vmax.f32 %v3907, %v3923
        %v3940 = vmax.f32 %v3908, %v3924
        %v3941 = vmax.f32 %v3909, %v3925
        %v3942 = vmax.f32 %v3910, %v3926
        %v3943 = vmax.f32 %v3911, %v3927
        %v3944 = vmax.f32 %v3912, %v3928
        %v3945 = vmax.f32 %v3913, %v3929
        %v3946 = vmax.f32 %v3914, %v3930
        %v3947 = vmax.f32 %v3915, %v3931
        %v3948 = vmax.f32 %v3916, %v3932
        %v3949 = vmax.f32 %v3917, %v3933
        %v3950 = vpack.c.bf16 %v3936, %v3934
        %v3951 = vpack.c.bf16 %v3937, %v3935
        %v3952 = vpack.c.bf16 %v3940, %v3938
        %v3953 = vpack.c.bf16 %v3941, %v3939
        %v3954 = vpack.c.bf16 %v3944, %v3942
        %v3955 = vpack.c.bf16 %v3945, %v3943
        %v3956 = vpack.c.bf16 %v3948, %v3946
        %v3957 = vpack.c.bf16 %v3949, %v3947
        %s3958 = scalar_lea.vmem %s6, 256
        %v3959 = vld [vmem:[%s3958] sm:$0xf]
        %v3960 = vld [vmem:[%s3958 + $0x4] sm:$0xf]
        %v3961 = vld [vmem:[%s3958 + $0x8] sm:$0xf]
        %v3962 = vld [vmem:[%s3958 + $0xc] sm:$0xf]
        %v3963 = vld [vmem:[%s3958 + $0x10] sm:$0xf]
        %v3964 = vld [vmem:[%s3958 + $0x14] sm:$0xf]
        %v3965 = vld [vmem:[%s3958 + $0x18] sm:$0xf]
        %v3966 = vld [vmem:[%s3958 + $0x1c] sm:$0xf]
        %v3967 = vld [vmem:[%s3958 + $0x20] sm:$0xf]
        %v3968 = vld [vmem:[%s3958 + $0x24] sm:$0xf]
        %v3969 = vld [vmem:[%s3958 + $0x28] sm:$0xf]
        %v3970 = vld [vmem:[%s3958 + $0x2c] sm:$0xf]
        %v3971 = vld [vmem:[%s3958 + $0x30] sm:$0xf]
        %v3972 = vld [vmem:[%s3958 + $0x34] sm:$0xf]
        %v3973 = vld [vmem:[%s3958 + $0x38] sm:$0xf]
        %v3974 = vld [vmem:[%s3958 + $0x3c] sm:$0xf]
        %v3975 = vld [vmem:[%s3958 + $0x40] sm:$0xf]
        %v3976 = vld [vmem:[%s3958 + $0x44] sm:$0xf]
        %v3977 = vld [vmem:[%s3958 + $0x48] sm:$0xf]
        %v3978 = vld [vmem:[%s3958 + $0x4c] sm:$0xf]
        %v3979 = vld [vmem:[%s3958 + $0x50] sm:$0xf]
        %v3980 = vld [vmem:[%s3958 + $0x54] sm:$0xf]
        %v3981 = vld [vmem:[%s3958 + $0x58] sm:$0xf]
        %v3982 = vld [vmem:[%s3958 + $0x5c] sm:$0xf]
        %v3983 = vld [vmem:[%s3958 + $0x60] sm:$0xf]
        %v3984 = vld [vmem:[%s3958 + $0x64] sm:$0xf]
        %v3985 = vld [vmem:[%s3958 + $0x68] sm:$0xf]
        %v3986 = vld [vmem:[%s3958 + $0x6c] sm:$0xf]
        %v3987 = vld [vmem:[%s3958 + $0x70] sm:$0xf]
        %v3988 = vld [vmem:[%s3958 + $0x74] sm:$0xf]
        %v3989 = vld [vmem:[%s3958 + $0x78] sm:$0xf]
        %v3990 = vld [vmem:[%s3958 + $0x7c] sm:$0xf]
        %v4023 = vunpack.c.l.b16 %v3959
        %v4024 = vunpack.c.l.b16 %v3960
        %v4025 = vunpack.c.l.b16 %v3961
        %v4026 = vunpack.c.l.b16 %v3962
        %v4027 = vunpack.c.l.b16 %v3963
        %v4028 = vunpack.c.l.b16 %v3964
        %v4029 = vunpack.c.l.b16 %v3965
        %v4030 = vunpack.c.l.b16 %v3966
        %v4031 = vunpack.c.l.b16 %v3967
        %v4032 = vunpack.c.l.b16 %v3968
        %v4033 = vunpack.c.l.b16 %v3969
        %v4034 = vunpack.c.l.b16 %v3970
        %v4035 = vunpack.c.l.b16 %v3971
        %v4036 = vunpack.c.l.b16 %v3972
        %v4037 = vunpack.c.l.b16 %v3973
        %v4038 = vunpack.c.l.b16 %v3974
        %v4039 = vunpack.c.l.b16 %v3975
        %v4040 = vunpack.c.l.b16 %v3976
        %v4041 = vunpack.c.l.b16 %v3977
        %v4042 = vunpack.c.l.b16 %v3978
        %v4043 = vunpack.c.l.b16 %v3979
        %v4044 = vunpack.c.l.b16 %v3980
        %v4045 = vunpack.c.l.b16 %v3981
        %v4046 = vunpack.c.l.b16 %v3982
        %v4047 = vunpack.c.l.b16 %v3983
        %v4048 = vunpack.c.l.b16 %v3984
        %v4049 = vunpack.c.l.b16 %v3985
        %v4050 = vunpack.c.l.b16 %v3986
        %v4051 = vunpack.c.l.b16 %v3987
        %v4052 = vunpack.c.l.b16 %v3988
        %v4053 = vunpack.c.l.b16 %v3989
        %v4054 = vunpack.c.l.b16 %v3990
        %v4055 = vpack.c.b16 %v4024, %v4023
        %v4056 = vpack.c.b16 %v4026, %v4025
        %v4057 = vpack.c.b16 %v4028, %v4027
        %v4058 = vpack.c.b16 %v4030, %v4029
        %v4059 = vpack.c.b16 %v4032, %v4031
        %v4060 = vpack.c.b16 %v4034, %v4033
        %v4061 = vpack.c.b16 %v4036, %v4035
        %v4062 = vpack.c.b16 %v4038, %v4037
        %v4063 = vpack.c.b16 %v4040, %v4039
        %v4064 = vpack.c.b16 %v4042, %v4041
        %v4065 = vpack.c.b16 %v4044, %v4043
        %v4066 = vpack.c.b16 %v4046, %v4045
        %v4067 = vpack.c.b16 %v4048, %v4047
        %v4068 = vpack.c.b16 %v4050, %v4049
        %v4069 = vpack.c.b16 %v4052, %v4051
        %v4070 = vpack.c.b16 %v4054, %v4053
        %4087 = vmatpush.bf16.msra.mxu0 %v4062
        %4088 = vmatpush.bf16.msra.mxu0 %v4061
        %4089 = vmatpush.bf16.msra.mxu0 %v4060
        %4090 = vmatpush.bf16.msra.mxu0 %v4059
        %4091 = vmatpush.bf16.msra.mxu0 %v4058
        %4092 = vmatpush.bf16.msra.mxu0 %v4057
        %4093 = vmatpush.bf16.msra.mxu0 %v4056
        %4094 = vmatpush.bf16.msra.mxu0 %v4055
        %4095 = vmatmul.bf16.gmra.mxu0 %v3950
        %v4096 = vpop.f32.mrf.mxu0
        %v4097 = vadd.f32 0.0, %v4096
        %v4098 = vpop.f32.mrf.mxu0
        %v4099 = vadd.f32 0.0, %v4098
        %4100 = vmatmul.bf16.gmra.mxu0 %v3952
        %v4101 = vpop.f32.mrf.mxu0
        %v4102 = vadd.f32 0.0, %v4101
        %v4103 = vpop.f32.mrf.mxu0
        %v4104 = vadd.f32 0.0, %v4103
        %4105 = vmatmul.bf16.gmra.mxu0 %v3954
        %v4106 = vpop.f32.mrf.mxu0
        %v4107 = vadd.f32 0.0, %v4106
        %v4108 = vpop.f32.mrf.mxu0
        %v4109 = vadd.f32 0.0, %v4108
        %4110 = vmatmul.bf16.gmra.mxu0 %v3956
        %v4111 = vpop.f32.mrf.mxu0
        %v4112 = vadd.f32 0.0, %v4111
        %v4113 = vpop.f32.mrf.mxu0
        %v4114 = vadd.f32 0.0, %v4113
        %4115 = vdwg.mxu0
        %4116 = vmatpush.bf16.msra.mxu0 %v4070
        %4117 = vmatpush.bf16.msra.mxu0 %v4069
        %4118 = vmatpush.bf16.msra.mxu0 %v4068
        %4119 = vmatpush.bf16.msra.mxu0 %v4067
        %4120 = vmatpush.bf16.msra.mxu0 %v4066
        %4121 = vmatpush.bf16.msra.mxu0 %v4065
        %4122 = vmatpush.bf16.msra.mxu0 %v4064
        %4123 = vmatpush.bf16.msra.mxu0 %v4063
        %4124 = vmatmul.bf16.gmra.mxu0 %v3951
        %v4125 = vpop.f32.mrf.mxu0
        %v4126 = vadd.f32 %v4097, %v4125
        %v4127 = vpop.f32.mrf.mxu0
        %v4128 = vadd.f32 %v4099, %v4127
        %4129 = vmatmul.bf16.gmra.mxu0 %v3953
        %v4130 = vpop.f32.mrf.mxu0
        %v4131 = vadd.f32 %v4102, %v4130
        %v4132 = vpop.f32.mrf.mxu0
        %v4133 = vadd.f32 %v4104, %v4132
        %4134 = vmatmul.bf16.gmra.mxu0 %v3955
        %v4135 = vpop.f32.mrf.mxu0
        %v4136 = vadd.f32 %v4107, %v4135
        %v4137 = vpop.f32.mrf.mxu0
        %v4138 = vadd.f32 %v4109, %v4137
        %4139 = vmatmul.bf16.gmra.mxu0 %v3957
        %v4140 = vpop.f32.mrf.mxu0
        %v4141 = vadd.f32 %v4112, %v4140
        %v4142 = vpop.f32.mrf.mxu0
        %v4143 = vadd.f32 %v4114, %v4142
        %4144 = vdwg.mxu0
        %v4145 = vsel %vm1552, %v4126, -1e+30
        %v4146 = vsel %vm1553, %v4128, -1e+30
        %v4147 = vsel %vm1554, %v4131, -1e+30
        %v4148 = vsel %vm1555, %v4133, -1e+30
        %v4149 = vsel %vm1556, %v4136, -1e+30
        %v4150 = vsel %vm1557, %v4138, -1e+30
        %v4151 = vsel %vm1558, %v4141, -1e+30
        %v4152 = vsel %vm1559, %v4143, -1e+30
        %vm4153 = vcmask 15360
        %v4154 = vsel %vm4153, %v4145, -inf
        %v4155 = vrot.slane %v4154, 4
        %v4156 = vmax.f32 %v4154, %v4155
        %v4157 = vrot.slane %v4156, 2
        %v4158 = vmax.f32 %v4156, %v4157
        %v4159 = vrot.slane %v4158, 1
        %v4160 = vmax.f32 %v4158, %v4159
        %v4161 = vsel %vm4153, %v4146, -inf
        %v4162 = vrot.slane %v4161, 4
        %v4163 = vmax.f32 %v4161, %v4162
        %v4164 = vrot.slane %v4163, 2
        %v4165 = vmax.f32 %v4163, %v4164
        %v4166 = vrot.slane %v4165, 1
        %v4167 = vmax.f32 %v4165, %v4166
        %v4168 = vsel %vm4153, %v4147, -inf
        %v4169 = vrot.slane %v4168, 4
        %v4170 = vmax.f32 %v4168, %v4169
        %v4171 = vrot.slane %v4170, 2
        %v4172 = vmax.f32 %v4170, %v4171
        %v4173 = vrot.slane %v4172, 1
        %v4174 = vmax.f32 %v4172, %v4173
        %v4175 = vsel %vm4153, %v4148, -inf
        %v4176 = vrot.slane %v4175, 4
        %v4177 = vmax.f32 %v4175, %v4176
        %v4178 = vrot.slane %v4177, 2
        %v4179 = vmax.f32 %v4177, %v4178
        %v4180 = vrot.slane %v4179, 1
        %v4181 = vmax.f32 %v4179, %v4180
        %v4182 = vsel %vm4153, %v4149, -inf
        %v4183 = vrot.slane %v4182, 4
        %v4184 = vmax.f32 %v4182, %v4183
        %v4185 = vrot.slane %v4184, 2
        %v4186 = vmax.f32 %v4184, %v4185
        %v4187 = vrot.slane %v4186, 1
        %v4188 = vmax.f32 %v4186, %v4187
        %v4189 = vsel %vm4153, %v4150, -inf
        %v4190 = vrot.slane %v4189, 4
        %v4191 = vmax.f32 %v4189, %v4190
        %v4192 = vrot.slane %v4191, 2
        %v4193 = vmax.f32 %v4191, %v4192
        %v4194 = vrot.slane %v4193, 1
        %v4195 = vmax.f32 %v4193, %v4194
        %v4196 = vsel %vm4153, %v4151, -inf
        %v4197 = vrot.slane %v4196, 4
        %v4198 = vmax.f32 %v4196, %v4197
        %v4199 = vrot.slane %v4198, 2
        %v4200 = vmax.f32 %v4198, %v4199
        %v4201 = vrot.slane %v4200, 1
        %v4202 = vmax.f32 %v4200, %v4201
        %v4203 = vsel %vm4153, %v4152, -inf
        %v4204 = vrot.slane %v4203, 4
        %v4205 = vmax.f32 %v4203, %v4204
        %v4206 = vrot.slane %v4205, 2
        %v4207 = vmax.f32 %v4205, %v4206
        %v4208 = vrot.slane %v4207, 1
        %v4209 = vmax.f32 %v4207, %v4208
        %v4210 = vsub.f32 %v4145, %v4160
        %v4211 = vsub.f32 %v4146, %v4167
        %v4212 = vsub.f32 %v4147, %v4174
        %v4213 = vsub.f32 %v4148, %v4181
        %v4214 = vsub.f32 %v4149, %v4188
        %v4215 = vsub.f32 %v4150, %v4195
        %v4216 = vsub.f32 %v4151, %v4202
        %v4217 = vsub.f32 %v4152, %v4209
        %v4218 = vmul.f32 %v4210, 1.442695
        %v4219 = vpow.pop %v4218
        %v4220 = vmul.f32 %v4211, 1.442695
        %v4221 = vpow.pop %v4220
        %v4222 = vmul.f32 %v4212, 1.442695
        %v4223 = vpow.pop %v4222
        %v4224 = vmul.f32 %v4213, 1.442695
        %v4225 = vpow.pop %v4224
        %v4226 = vmul.f32 %v4214, 1.442695
        %v4227 = vpow.pop %v4226
        %v4228 = vmul.f32 %v4215, 1.442695
        %v4229 = vpow.pop %v4228
        %v4230 = vmul.f32 %v4216, 1.442695
        %v4231 = vpow.pop %v4230
        %v4232 = vmul.f32 %v4217, 1.442695
        %v4233 = vpow.pop %v4232
        %v4234 = vsel %vm4153, %v4219, 0.0
        %v4235 = vrot.slane %v4234, 4
        %v4236 = vadd.f32 %v4234, %v4235
        %v4237 = vrot.slane %v4236, 2
        %v4238 = vadd.f32 %v4236, %v4237
        %v4239 = vrot.slane %v4238, 1
        %v4240 = vadd.f32 %v4238, %v4239
        %v4241 = vsel %vm4153, %v4221, 0.0
        %v4242 = vrot.slane %v4241, 4
        %v4243 = vadd.f32 %v4241, %v4242
        %v4244 = vrot.slane %v4243, 2
        %v4245 = vadd.f32 %v4243, %v4244
        %v4246 = vrot.slane %v4245, 1
        %v4247 = vadd.f32 %v4245, %v4246
        %v4248 = vsel %vm4153, %v4223, 0.0
        %v4249 = vrot.slane %v4248, 4
        %v4250 = vadd.f32 %v4248, %v4249
        %v4251 = vrot.slane %v4250, 2
        %v4252 = vadd.f32 %v4250, %v4251
        %v4253 = vrot.slane %v4252, 1
        %v4254 = vadd.f32 %v4252, %v4253
        %v4255 = vsel %vm4153, %v4225, 0.0
        %v4256 = vrot.slane %v4255, 4
        %v4257 = vadd.f32 %v4255, %v4256
        %v4258 = vrot.slane %v4257, 2
        %v4259 = vadd.f32 %v4257, %v4258
        %v4260 = vrot.slane %v4259, 1
        %v4261 = vadd.f32 %v4259, %v4260
        %v4262 = vsel %vm4153, %v4227, 0.0
        %v4263 = vrot.slane %v4262, 4
        %v4264 = vadd.f32 %v4262, %v4263
        %v4265 = vrot.slane %v4264, 2
        %v4266 = vadd.f32 %v4264, %v4265
        %v4267 = vrot.slane %v4266, 1
        %v4268 = vadd.f32 %v4266, %v4267
        %v4269 = vsel %vm4153, %v4229, 0.0
        %v4270 = vrot.slane %v4269, 4
        %v4271 = vadd.f32 %v4269, %v4270
        %v4272 = vrot.slane %v4271, 2
        %v4273 = vadd.f32 %v4271, %v4272
        %v4274 = vrot.slane %v4273, 1
        %v4275 = vadd.f32 %v4273, %v4274
        %v4276 = vsel %vm4153, %v4231, 0.0
        %v4277 = vrot.slane %v4276, 4
        %v4278 = vadd.f32 %v4276, %v4277
        %v4279 = vrot.slane %v4278, 2
        %v4280 = vadd.f32 %v4278, %v4279
        %v4281 = vrot.slane %v4280, 1
        %v4282 = vadd.f32 %v4280, %v4281
        %v4283 = vsel %vm4153, %v4233, 0.0
        %v4284 = vrot.slane %v4283, 4
        %v4285 = vadd.f32 %v4283, %v4284
        %v4286 = vrot.slane %v4285, 2
        %v4287 = vadd.f32 %v4285, %v4286
        %v4288 = vrot.slane %v4287, 1
        %v4289 = vadd.f32 %v4287, %v4288
        %v4290 = vrcp.pop %v4240
        %v4291 = vrcp.pop %v4247
        %v4292 = vrcp.pop %v4254
        %v4293 = vrcp.pop %v4261
        %v4294 = vrcp.pop %v4268
        %v4295 = vrcp.pop %v4275
        %v4296 = vrcp.pop %v4282
        %v4297 = vrcp.pop %v4289
        %v4298 = vmul.f32 %v4219, %v4290
        %v4299 = vmul.f32 %v4221, %v4291
        %v4300 = vmul.f32 %v4223, %v4292
        %v4301 = vmul.f32 %v4225, %v4293
        %v4302 = vmul.f32 %v4227, %v4294
        %v4303 = vmul.f32 %v4229, %v4295
        %v4304 = vmul.f32 %v4231, %v4296
        %v4305 = vmul.f32 %v4233, %v4297
        %v4306 = vpack.c.bf16 %v4298, %v4298
        %v4307 = vpack.c.bf16 %v4299, %v4299
        %v4308 = vpack.c.bf16 %v4300, %v4300
        %v4309 = vpack.c.bf16 %v4301, %v4301
        %v4310 = vpack.c.bf16 %v4302, %v4302
        %v4311 = vpack.c.bf16 %v4303, %v4303
        %v4312 = vpack.c.bf16 %v4304, %v4304
        %v4313 = vpack.c.bf16 %v4305, %v4305
        %v4314 = vpack.c.bf16 %v3804, %v3804
        %v4323 = vunpack.c.l.b16 %v4306
        %v4324 = vunpack.c.l.b16 %v4307
        %v4325 = vunpack.c.l.b16 %v4308
        %v4326 = vunpack.c.l.b16 %v4309
        %v4327 = vunpack.c.l.b16 %v4310
        %v4328 = vunpack.c.l.b16 %v4311
        %v4329 = vunpack.c.l.b16 %v4312
        %v4330 = vunpack.c.l.b16 %v4313
        %4331 = vset.pattern.permute.xlu0 0
        %4332 = vperm.xlu0 %4331, %v4323
        %v4333 = vpop.permute.xlu0 %4332
        %4334 = vset.pattern.permute.xlu0 0
        %4335 = vperm.xlu0 %4334, %v4324
        %v4336 = vpop.permute.xlu0 %4335
        %4337 = vset.pattern.permute.xlu0 0
        %4338 = vperm.xlu0 %4337, %v4325
        %v4339 = vpop.permute.xlu0 %4338
        %4340 = vset.pattern.permute.xlu0 0
        %4341 = vperm.xlu0 %4340, %v4326
        %v4342 = vpop.permute.xlu0 %4341
        %4343 = vset.pattern.permute.xlu0 0
        %4344 = vperm.xlu0 %4343, %v4327
        %v4345 = vpop.permute.xlu0 %4344
        %4346 = vset.pattern.permute.xlu0 0
        %4347 = vperm.xlu0 %4346, %v4328
        %v4348 = vpop.permute.xlu0 %4347
        %4349 = vset.pattern.permute.xlu0 0
        %4350 = vperm.xlu0 %4349, %v4329
        %v4351 = vpop.permute.xlu0 %4350
        %4352 = vset.pattern.permute.xlu0 0
        %4353 = vperm.xlu0 %4352, %v4330
        %v4354 = vpop.permute.xlu0 %4353
        %v4355 = vperm.slane %v4333, %v1771
        %v4356 = vperm.slane %v4336, %v1771
        %v4357 = vperm.slane %v4339, %v1771
        %v4358 = vperm.slane %v4342, %v1771
        %v4359 = vperm.slane %v4345, %v1771
        %v4360 = vperm.slane %v4348, %v1771
        %v4361 = vperm.slane %v4351, %v1771
        %v4362 = vperm.slane %v4354, %v1771
        %v4363 = vsel %vm1091, %v4356, %v4355
        %v4364 = vsel %vm1094, %v4357, %v4363
        %v4365 = vsel %vm1097, %v4358, %v4364
        %v4366 = vsel %vm1100, %v4359, %v4365
        %v4367 = vsel %vm1103, %v4360, %v4366
        %v4368 = vsel %vm1106, %v4361, %v4367
        %v4369 = vsel %vm1786, %v4362, %v4368
        %v4370 = vpack.c.b16 %v4369, %v4369
        %v4372 = vsel %vm1789, %v4370, 0
        %v4375 = vsel %vm1793, %v4314, 0
        %4377 = vmatpush.bf16.msra.mxu0 0
        %4378 = vmatpush.bf16.msra.mxu0 0
        %4379 = vmatpush.bf16.msra.mxu0 0
        %4380 = vmatpush.bf16.msra.mxu0 0
        %4381 = vmatpush.bf16.msra.mxu0 0
        %4382 = vmatpush.bf16.msra.mxu0 0
        %4383 = vmatpush.bf16.msra.mxu0 0
        %4384 = vmatpush.bf16.msra.mxu0 %v4375
        %4385 = vmatmul.bf16.gmra.mxu0 %v4372
        %v4386 = vpop.f32.mrf.mxu0
        %v4387 = vadd.f32 0.0, %v4386
        %v4388 = vpop.f32.mrf.mxu0
        %4389 = vdwg.mxu0
        %v4390 = vpack.c.bf16 %v3805, %v3805
        %4391 = vset.pattern.permute.xlu0 1
        %4392 = vperm.xlu0 %4391, %v4323
        %v4393 = vpop.permute.xlu0 %4392
        %4394 = vset.pattern.permute.xlu0 1
        %4395 = vperm.xlu0 %4394, %v4324
        %v4396 = vpop.permute.xlu0 %4395
        %4397 = vset.pattern.permute.xlu0 1
        %4398 = vperm.xlu0 %4397, %v4325
        %v4399 = vpop.permute.xlu0 %4398
        %4400 = vset.pattern.permute.xlu0 1
        %4401 = vperm.xlu0 %4400, %v4326
        %v4402 = vpop.permute.xlu0 %4401
        %4403 = vset.pattern.permute.xlu0 1
        %4404 = vperm.xlu0 %4403, %v4327
        %v4405 = vpop.permute.xlu0 %4404
        %4406 = vset.pattern.permute.xlu0 1
        %4407 = vperm.xlu0 %4406, %v4328
        %v4408 = vpop.permute.xlu0 %4407
        %4409 = vset.pattern.permute.xlu0 1
        %4410 = vperm.xlu0 %4409, %v4329
        %v4411 = vpop.permute.xlu0 %4410
        %4412 = vset.pattern.permute.xlu0 1
        %4413 = vperm.xlu0 %4412, %v4330
        %v4414 = vpop.permute.xlu0 %4413
        %v4415 = vperm.slane %v4393, %v1771
        %v4416 = vperm.slane %v4396, %v1771
        %v4417 = vperm.slane %v4399, %v1771
        %v4418 = vperm.slane %v4402, %v1771
        %v4419 = vperm.slane %v4405, %v1771
        %v4420 = vperm.slane %v4408, %v1771
        %v4421 = vperm.slane %v4411, %v1771
        %v4422 = vperm.slane %v4414, %v1771
        %v4423 = vsel %vm1091, %v4416, %v4415
        %v4424 = vsel %vm1094, %v4417, %v4423
        %v4425 = vsel %vm1097, %v4418, %v4424
        %v4426 = vsel %vm1100, %v4419, %v4425
        %v4427 = vsel %vm1103, %v4420, %v4426
        %v4428 = vsel %vm1106, %v4421, %v4427
        %v4429 = vsel %vm1786, %v4422, %v4428
        %v4430 = vpack.c.b16 %v4429, %v4429
        %v4432 = vsel %vm1789, %v4430, 0
        %v4435 = vsel %vm1793, %v4390, 0
        %4437 = vmatpush.bf16.msra.mxu0 0
        %4438 = vmatpush.bf16.msra.mxu0 0
        %4439 = vmatpush.bf16.msra.mxu0 0
        %4440 = vmatpush.bf16.msra.mxu0 0
        %4441 = vmatpush.bf16.msra.mxu0 0
        %4442 = vmatpush.bf16.msra.mxu0 0
        %4443 = vmatpush.bf16.msra.mxu0 0
        %4444 = vmatpush.bf16.msra.mxu0 %v4435
        %4445 = vmatmul.bf16.gmra.mxu0 %v4432
        %v4446 = vpop.f32.mrf.mxu0
        %v4447 = vadd.f32 0.0, %v4446
        %v4448 = vpop.f32.mrf.mxu0
        %4449 = vdwg.mxu0
        %v4450 = vperm.slane %v3305, 3
        %v4451 = vperm.slane %v3305, 7
        %v4454 = vperm.slane %v4450, 3
        %v4455 = vperm.slane %v4451, 3
        %v4456 = vadd.f32 %v4387, %v4454
        %v4457 = vadd.f32 %v4447, %v4455
        %v4458 = vmax.f32 %v4456, 0.0
        %v4459 = vmax.f32 %v4457, 0.0
        %v4460 = vpack.c.bf16 %v4458, %v4458
        %v4461 = vpack.c.bf16 %v4459, %v4459
        %s4462 = scalar_lea.vmem %s6, 384
        %v4463 = vld [vmem:[%s4462] sm:$0xf]
        %v4464 = vld [vmem:[%s4462 + $0x4] sm:$0xf]
        %v4465 = vld [vmem:[%s4462 + $0x8] sm:$0xf]
        %v4466 = vld [vmem:[%s4462 + $0xc] sm:$0xf]
        %v4467 = vld [vmem:[%s4462 + $0x10] sm:$0xf]
        %v4468 = vld [vmem:[%s4462 + $0x14] sm:$0xf]
        %v4469 = vld [vmem:[%s4462 + $0x18] sm:$0xf]
        %v4470 = vld [vmem:[%s4462 + $0x1c] sm:$0xf]
        %v4471 = vld [vmem:[%s4462 + $0x20] sm:$0xf]
        %v4472 = vld [vmem:[%s4462 + $0x24] sm:$0xf]
        %v4473 = vld [vmem:[%s4462 + $0x28] sm:$0xf]
        %v4474 = vld [vmem:[%s4462 + $0x2c] sm:$0xf]
        %v4475 = vld [vmem:[%s4462 + $0x30] sm:$0xf]
        %v4476 = vld [vmem:[%s4462 + $0x34] sm:$0xf]
        %v4477 = vld [vmem:[%s4462 + $0x38] sm:$0xf]
        %v4478 = vld [vmem:[%s4462 + $0x3c] sm:$0xf]
        %v4479 = vld [vmem:[%s4462 + $0x40] sm:$0xf]
        %v4480 = vld [vmem:[%s4462 + $0x44] sm:$0xf]
        %v4481 = vld [vmem:[%s4462 + $0x48] sm:$0xf]
        %v4482 = vld [vmem:[%s4462 + $0x4c] sm:$0xf]
        %v4483 = vld [vmem:[%s4462 + $0x50] sm:$0xf]
        %v4484 = vld [vmem:[%s4462 + $0x54] sm:$0xf]
        %v4485 = vld [vmem:[%s4462 + $0x58] sm:$0xf]
        %v4486 = vld [vmem:[%s4462 + $0x5c] sm:$0xf]
        %v4487 = vld [vmem:[%s4462 + $0x60] sm:$0xf]
        %v4488 = vld [vmem:[%s4462 + $0x64] sm:$0xf]
        %v4489 = vld [vmem:[%s4462 + $0x68] sm:$0xf]
        %v4490 = vld [vmem:[%s4462 + $0x6c] sm:$0xf]
        %v4491 = vld [vmem:[%s4462 + $0x70] sm:$0xf]
        %v4492 = vld [vmem:[%s4462 + $0x74] sm:$0xf]
        %v4493 = vld [vmem:[%s4462 + $0x78] sm:$0xf]
        %v4494 = vld [vmem:[%s4462 + $0x7c] sm:$0xf]
        %v4495 = vld [vmem:[#allocation14 + $0x7] ss:$0 sm:$0xff]
        %v4528 = vunpack.c.l.b16 %v4463
        %v4529 = vunpack.c.l.b16 %v4464
        %v4530 = vunpack.c.l.b16 %v4465
        %v4531 = vunpack.c.l.b16 %v4466
        %v4532 = vunpack.c.l.b16 %v4467
        %v4533 = vunpack.c.l.b16 %v4468
        %v4534 = vunpack.c.l.b16 %v4469
        %v4535 = vunpack.c.l.b16 %v4470
        %v4536 = vunpack.c.l.b16 %v4471
        %v4537 = vunpack.c.l.b16 %v4472
        %v4538 = vunpack.c.l.b16 %v4473
        %v4539 = vunpack.c.l.b16 %v4474
        %v4540 = vunpack.c.l.b16 %v4475
        %v4541 = vunpack.c.l.b16 %v4476
        %v4542 = vunpack.c.l.b16 %v4477
        %v4543 = vunpack.c.l.b16 %v4478
        %v4544 = vunpack.c.l.b16 %v4479
        %v4545 = vunpack.c.l.b16 %v4480
        %v4546 = vunpack.c.l.b16 %v4481
        %v4547 = vunpack.c.l.b16 %v4482
        %v4548 = vunpack.c.l.b16 %v4483
        %v4549 = vunpack.c.l.b16 %v4484
        %v4550 = vunpack.c.l.b16 %v4485
        %v4551 = vunpack.c.l.b16 %v4486
        %v4552 = vunpack.c.l.b16 %v4487
        %v4553 = vunpack.c.l.b16 %v4488
        %v4554 = vunpack.c.l.b16 %v4489
        %v4555 = vunpack.c.l.b16 %v4490
        %v4556 = vunpack.c.l.b16 %v4491
        %v4557 = vunpack.c.l.b16 %v4492
        %v4558 = vunpack.c.l.b16 %v4493
        %v4559 = vunpack.c.l.b16 %v4494
        %v4560 = vpack.c.b16 %v4529, %v4528
        %v4561 = vpack.c.b16 %v4531, %v4530
        %v4562 = vpack.c.b16 %v4533, %v4532
        %v4563 = vpack.c.b16 %v4535, %v4534
        %v4564 = vpack.c.b16 %v4537, %v4536
        %v4565 = vpack.c.b16 %v4539, %v4538
        %v4566 = vpack.c.b16 %v4541, %v4540
        %v4567 = vpack.c.b16 %v4543, %v4542
        %v4568 = vpack.c.b16 %v4545, %v4544
        %v4569 = vpack.c.b16 %v4547, %v4546
        %v4570 = vpack.c.b16 %v4549, %v4548
        %v4571 = vpack.c.b16 %v4551, %v4550
        %v4572 = vpack.c.b16 %v4553, %v4552
        %v4573 = vpack.c.b16 %v4555, %v4554
        %v4574 = vpack.c.b16 %v4557, %v4556
        %v4575 = vpack.c.b16 %v4559, %v4558
        %4592 = vmatpush.bf16.msra.mxu0 %v4567
        %4593 = vmatpush.bf16.msra.mxu0 %v4566
        %4594 = vmatpush.bf16.msra.mxu0 %v4565
        %4595 = vmatpush.bf16.msra.mxu0 %v4564
        %4596 = vmatpush.bf16.msra.mxu0 %v4563
        %4597 = vmatpush.bf16.msra.mxu0 %v4562
        %4598 = vmatpush.bf16.msra.mxu0 %v4561
        %4599 = vmatpush.bf16.msra.mxu0 %v4560
        %4600 = vmatmul.bf16.gmra.mxu0 %v4460
        %v4601 = vpop.f32.mrf.mxu0
        %v4602 = vadd.f32 %v4495, %v4601
        %v4603 = vpop.f32.mrf.mxu0
        %4604 = vdwg.mxu0
        %4605 = vmatpush.bf16.msra.mxu0 %v4575
        %4606 = vmatpush.bf16.msra.mxu0 %v4574
        %4607 = vmatpush.bf16.msra.mxu0 %v4573
        %4608 = vmatpush.bf16.msra.mxu0 %v4572
        %4609 = vmatpush.bf16.msra.mxu0 %v4571
        %4610 = vmatpush.bf16.msra.mxu0 %v4570
        %4611 = vmatpush.bf16.msra.mxu0 %v4569
        %4612 = vmatpush.bf16.msra.mxu0 %v4568
        %4613 = vmatmul.bf16.gmra.mxu0 %v4461
        %v4614 = vpop.f32.mrf.mxu0
        %v4615 = vadd.f32 %v4602, %v4614
        %v4616 = vpop.f32.mrf.mxu0
        %4617 = vdwg.mxu0
        %v4618 = vld [vmem:[%s572] sm:$0xff]
        %vm4619 = vcmp.gt.f32.partialorder %v4618, 0.0
        %4621 = vset.pattern.permute.xlu0 0
        %4622 = vperm.xlu0 %4621, %v4615
        %v4623 = vpop.permute.xlu0 %4622
        %v4625 = vsel %vm4619, %v4623, -1e+30
        %v4626 = vsel %vm4153, %v4625, -inf
        %v4627 = vrot.slane %v4626, 4
        %v4628 = vmax.f32 %v4626, %v4627
        %v4629 = vrot.slane %v4628, 2
        %v4630 = vmax.f32 %v4628, %v4629
        %v4631 = vrot.slane %v4630, 1
        %v4632 = vmax.f32 %v4630, %v4631
        %v4633 = vsub.f32 %v4625, %v4632
        %v4634 = vmul.f32 %v4633, 1.442695
        %v4635 = vpow.pop %v4634
        %v4636 = vsel %vm4153, %v4635, 0.0
        %v4637 = vrot.slane %v4636, 4
        %v4638 = vadd.f32 %v4636, %v4637
        %v4639 = vrot.slane %v4638, 2
        %v4640 = vadd.f32 %v4638, %v4639
        %v4641 = vrot.slane %v4640, 1
        %v4642 = vadd.f32 %v4640, %v4641
        %v4643 = vrcp.pop %v4642
        %v4644 = vmul.f32 %v4635, %v4643
        %v4645 = vpack.c.bf16 %v4644, %v4644
        %4646 = vxpose.xlu0.c.b16.start [1/8] %v4645, 128
        %4647 = vxpose.xlu0.c.b16.cont [2/8] 0, 128
        %4648 = vxpose.xlu0.c.b16.cont [3/8] 0, 128
        %4649 = vxpose.xlu0.c.b16.cont [4/8] 0, 128
        %4650 = vxpose.xlu0.c.b16.cont [5/8] 0, 128
        %4651 = vxpose.xlu0.c.b16.cont [6/8] 0, 128
        %4652 = vxpose.xlu0.c.b16.cont [7/8] 0, 128
        %4653 = vxpose.xlu0.c.b16.end [8/8] 0, 128
        %v4654 = vpop.trf.xlu0
        %v4655 = vpop.trf.xlu0
        %v4656 = vpop.trf.xlu0
        %v4657 = vpop.trf.xlu0
        %v4658 = vpop.trf.xlu0
        %v4659 = vpop.trf.xlu0
        %v4660 = vpop.trf.xlu0
        %v4661 = vpop.trf.xlu0
        %v4663 = vsel %vm1789, %v4654, 0
        %v4666 = vsel %vm1793, %v4460, 0
        %v4669 = vsel %vm1793, %v4461, 0
        %4671 = vmatpush.bf16.msra.mxu0 0
        %4672 = vmatpush.bf16.msra.mxu0 0
        %4673 = vmatpush.bf16.msra.mxu0 0
        %4674 = vmatpush.bf16.msra.mxu0 0
        %4675 = vmatpush.bf16.msra.mxu0 0
        %4676 = vmatpush.bf16.msra.mxu0 0
        %4677 = vmatpush.bf16.msra.mxu0 0
        %4678 = vmatpush.bf16.msra.mxu0 %v4666
        %4679 = vmatmul.bf16.gmra.mxu0 %v4663
        %v4680 = vpop.f32.mrf.mxu0
        %v4681 = vadd.f32 0.0, %v4680
        %v4682 = vpop.f32.mrf.mxu0
        %4683 = vdwg.mxu0
        %4684 = vmatpush.bf16.msra.mxu0 0
        %4685 = vmatpush.bf16.msra.mxu0 0
        %4686 = vmatpush.bf16.msra.mxu0 0
        %4687 = vmatpush.bf16.msra.mxu0 0
        %4688 = vmatpush.bf16.msra.mxu0 0
        %4689 = vmatpush.bf16.msra.mxu0 0
        %4690 = vmatpush.bf16.msra.mxu0 0
        %4691 = vmatpush.bf16.msra.mxu0 %v4669
        %4692 = vmatmul.bf16.gmra.mxu0 %v4663
        %v4693 = vpop.f32.mrf.mxu0
        %v4694 = vadd.f32 0.0, %v4693
        %v4695 = vpop.f32.mrf.mxu0
        %4696 = vdwg.mxu0
        %v4697 = vld [vmem:[%s492] sm:$0x3]
        %v4698 = vld [vmem:[#allocation11] sm:$0xff]
        %v4699 = vld [vmem:[#allocation11 + $0x8] sm:$0xff]
        %v4700 = vld [vmem:[#allocation11 + $0x3c] sm:$0xff]
        %v4701 = vld [vmem:[#allocation11 + $0x44] sm:$0xff]
        %v4702 = vld [vmem:[#allocation11 + $0x78] sm:$0xff]
        %v4703 = vld [vmem:[#allocation11 + $0x80] sm:$0xff]
        %v4704 = vld [vmem:[#allocation11 + $0xb4] sm:$0xff]
        %v4705 = vld [vmem:[#allocation11 + $0xbc] sm:$0xff]
        %v4706 = vld [vmem:[#allocation11 + $0xf0] sm:$0xff]
        %v4707 = vld [vmem:[#allocation11 + $0xf8] sm:$0xff]
        %v4708 = vld [vmem:[#allocation11 + $0x12c] sm:$0xff]
        %v4709 = vld [vmem:[#allocation11 + $0x134] sm:$0xff]
        %v4710 = vld [vmem:[#allocation11 + $0x168] sm:$0xff]
        %v4711 = vld [vmem:[#allocation11 + $0x170] sm:$0xff]
        %v4712 = vld [vmem:[#allocation11 + $0x1a4] sm:$0xff]
        %v4713 = vld [vmem:[#allocation11 + $0x1ac] sm:$0xff]
        %v4714 = vld [vmem:[#allocation11 + $0x1e0] sm:$0xff]
        %v4715 = vld [vmem:[#allocation11 + $0x1e8] sm:$0xff]
        %v4716 = vld [vmem:[#allocation11 + $0x21c] sm:$0xff]
        %v4717 = vld [vmem:[#allocation11 + $0x224] sm:$0xff]
        %v4718 = vld [vmem:[#allocation11 + $0x258] sm:$0xff]
        %v4719 = vld [vmem:[#allocation11 + $0x260] sm:$0xff]
        %v4720 = vld [vmem:[#allocation11 + $0x294] sm:$0xff]
        %v4721 = vld [vmem:[#allocation11 + $0x29c] sm:$0xff]
        %v4722 = vld [vmem:[#allocation11 + $0x2d0] sm:$0xff]
        %v4723 = vld [vmem:[#allocation11 + $0x2d8] sm:$0xff]
        %v4724 = vld [vmem:[#allocation11 + $0x30c] sm:$0xff]
        %v4725 = vld [vmem:[#allocation11 + $0x314] sm:$0xff]
        %v4726 = vld [vmem:[#allocation11 + $0x348] sm:$0xff]
        %v4727 = vld [vmem:[#allocation11 + $0x350] sm:$0xff]
        %v4728 = vld [vmem:[#allocation11 + $0x384] sm:$0xff]
        %v4729 = vld [vmem:[#allocation11 + $0x38c] sm:$0xff]
        %v4730 = vld [vmem:[#allocation11 + $0x3c0] sm:$0xff]
        %v4731 = vld [vmem:[#allocation11 + $0x3c8] sm:$0xff]
        %v4732 = vld [vmem:[#allocation11 + $0x3fc] sm:$0xff]
        %v4733 = vld [vmem:[#allocation11 + $0x404] sm:$0xff]
        %v4734 = vld [vmem:[#allocation11 + $0x438] sm:$0xff]
        %v4735 = vld [vmem:[#allocation11 + $0x440] sm:$0xff]
        %v4736 = vld [vmem:[#allocation11 + $0x474] sm:$0xff]
        %v4737 = vld [vmem:[#allocation11 + $0x47c] sm:$0xff]
        %v4738 = vld [vmem:[#allocation11 + $0x4b0] sm:$0xff]
        %v4739 = vld [vmem:[#allocation11 + $0x4b8] sm:$0xff]
        %v4740 = vld [vmem:[#allocation11 + $0x4ec] sm:$0xff]
        %v4741 = vld [vmem:[#allocation11 + $0x4f4] sm:$0xff]
        %v4742 = vld [vmem:[#allocation11 + $0x528] sm:$0xff]
        %v4743 = vld [vmem:[#allocation11 + $0x530] sm:$0xff]
        %v4744 = vld [vmem:[#allocation11 + $0x564] sm:$0xff]
        %v4745 = vld [vmem:[#allocation11 + $0x56c] sm:$0xff]
        %v4746 = vld [vmem:[#allocation11 + $0x5a0] sm:$0xff]
        %v4747 = vld [vmem:[#allocation11 + $0x5a8] sm:$0xff]
        %v4748 = vld [vmem:[#allocation11 + $0x5dc] sm:$0xff]
        %v4749 = vld [vmem:[#allocation11 + $0x5e4] sm:$0xff]
        %v4750 = vld [vmem:[#allocation11 + $0x618] sm:$0xff]
        %v4751 = vld [vmem:[#allocation11 + $0x620] sm:$0xff]
        %v4752 = vld [vmem:[#allocation11 + $0x654] sm:$0xff]
        %v4753 = vld [vmem:[#allocation11 + $0x65c] sm:$0xff]
        %v4754 = vld [vmem:[#allocation11 + $0x690] sm:$0xff]
        %v4755 = vld [vmem:[#allocation11 + $0x698] sm:$0xff]
        %v4756 = vld [vmem:[#allocation11 + $0x6cc] sm:$0xff]
        %v4757 = vld [vmem:[#allocation11 + $0x6d4] sm:$0xff]
        %v4758 = vld [vmem:[#allocation11 + $0x708] sm:$0xff]
        %v4759 = vld [vmem:[#allocation11 + $0x710] sm:$0xff]
        %v4760 = vld [vmem:[#allocation11 + $0x744] sm:$0xff]
        %v4761 = vld [vmem:[#allocation11 + $0x74c] sm:$0xff]
        %v4762 = vld [vmem:[#allocation11 + $0x780] sm:$0xff]
        %v4763 = vld [vmem:[#allocation11 + $0x788] sm:$0xff]
        %v4764 = vld [vmem:[#allocation11 + $0x7bc] sm:$0xff]
        %v4765 = vld [vmem:[#allocation11 + $0x7c4] sm:$0xff]
        %v4766 = vld [vmem:[#allocation11 + $0x7f8] sm:$0xff]
        %v4767 = vld [vmem:[#allocation11 + $0x800] sm:$0xff]
        %v4768 = vld [vmem:[#allocation11 + $0x834] sm:$0xff]
        %v4769 = vld [vmem:[#allocation11 + $0x83c] sm:$0xff]
        %v4770 = vld [vmem:[#allocation11 + $0x870] sm:$0xff]
        %v4771 = vld [vmem:[#allocation11 + $0x878] sm:$0xff]
        %v4772 = vld [vmem:[#allocation11 + $0x8ac] sm:$0xff]
        %v4773 = vld [vmem:[#allocation11 + $0x8b4] sm:$0xff]
        %v4774 = vld [vmem:[#allocation11 + $0x8e8] sm:$0xff]
        %v4775 = vld [vmem:[#allocation11 + $0x8f0] sm:$0xff]
        %v4776 = vld [vmem:[#allocation11 + $0x924] sm:$0xff]
        %v4777 = vld [vmem:[#allocation11 + $0x92c] sm:$0xff]
        %v4778 = vld [vmem:[#allocation11 + $0x960] sm:$0xff]
        %v4779 = vld [vmem:[#allocation11 + $0x968] sm:$0xff]
        %v4780 = vld [vmem:[#allocation11 + $0x99c] sm:$0xff]
        %v4781 = vld [vmem:[#allocation11 + $0x9a4] sm:$0xff]
        %v4782 = vld [vmem:[#allocation11 + $0x9d8] sm:$0xff]
        %v4783 = vld [vmem:[#allocation11 + $0x9e0] sm:$0xff]
        %v4784 = vld [vmem:[#allocation11 + $0xa14] sm:$0xff]
        %v4785 = vld [vmem:[#allocation11 + $0xa1c] sm:$0xff]
        %v4786 = vld [vmem:[#allocation11 + $0xa50] sm:$0xff]
        %v4787 = vld [vmem:[#allocation11 + $0xa58] sm:$0xff]
        %v4788 = vld [vmem:[#allocation11 + $0xa8c] sm:$0xff]
        %v4789 = vld [vmem:[#allocation11 + $0xa94] sm:$0xff]
        %v4790 = vld [vmem:[#allocation11 + $0xac8] sm:$0xff]
        %v4791 = vld [vmem:[#allocation11 + $0xad0] sm:$0xff]
        %v4792 = vld [vmem:[#allocation11 + $0xb04] sm:$0xff]
        %v4793 = vld [vmem:[#allocation11 + $0xb0c] sm:$0xff]
        %v4794 = vpack.c.bf16 %v4681, %v4681
        %v4795 = vpack.c.bf16 %v4694, %v4694
        %v4796 = vpack.c.bf16 %v4697, %v4697
        %v4797 = vld [vmem:[#allocation14] ss:$8 sm:$0xf]
        %v4799 = vperm.slane %v4797, 0
        %v4800 = vperm.slane %v4797, 1
        %v4801 = vperm.slane %v4797, 2
        %v4802 = vperm.slane %v4797, 3
        %v4903 = vunpack.c.l.b16 %v4698
        %v4904 = vunpack.c.h.b16 %v4698
        %v4905 = vunpack.c.l.b16 %v4699
        %v4906 = vunpack.c.h.b16 %v4699
        %v4907 = vunpack.c.l.b16 %v4700
        %v4908 = vunpack.c.h.b16 %v4700
        %v4909 = vunpack.c.l.b16 %v4701
        %v4910 = vunpack.c.h.b16 %v4701
        %v4911 = vunpack.c.l.b16 %v4702
        %v4912 = vunpack.c.h.b16 %v4702
        %v4913 = vunpack.c.l.b16 %v4703
        %v4914 = vunpack.c.h.b16 %v4703
        %v4915 = vunpack.c.l.b16 %v4704
        %v4916 = vunpack.c.h.b16 %v4704
        %v4917 = vunpack.c.l.b16 %v4705
        %v4918 = vunpack.c.h.b16 %v4705
        %v4919 = vunpack.c.l.b16 %v4706
        %v4920 = vunpack.c.h.b16 %v4706
        %v4921 = vunpack.c.l.b16 %v4707
        %v4922 = vunpack.c.h.b16 %v4707
        %v4923 = vunpack.c.l.b16 %v4708
        %v4924 = vunpack.c.h.b16 %v4708
        %v4925 = vunpack.c.l.b16 %v4709
        %v4926 = vunpack.c.h.b16 %v4709
        %v4927 = vunpack.c.l.b16 %v4710
        %v4928 = vunpack.c.h.b16 %v4710
        %v4929 = vunpack.c.l.b16 %v4711
        %v4930 = vunpack.c.h.b16 %v4711
        %v4931 = vunpack.c.l.b16 %v4712
        %v4932 = vunpack.c.h.b16 %v4712
        %v4933 = vunpack.c.l.b16 %v4713
        %v4934 = vunpack.c.h.b16 %v4713
        %v4935 = vunpack.c.l.b16 %v4714
        %v4936 = vunpack.c.h.b16 %v4714
        %v4937 = vunpack.c.l.b16 %v4715
        %v4938 = vunpack.c.h.b16 %v4715
        %v4939 = vunpack.c.l.b16 %v4716
        %v4940 = vunpack.c.h.b16 %v4716
        %v4941 = vunpack.c.l.b16 %v4717
        %v4942 = vunpack.c.h.b16 %v4717
        %v4943 = vunpack.c.l.b16 %v4718
        %v4944 = vunpack.c.h.b16 %v4718
        %v4945 = vunpack.c.l.b16 %v4719
        %v4946 = vunpack.c.h.b16 %v4719
        %v4947 = vunpack.c.l.b16 %v4720
        %v4948 = vunpack.c.h.b16 %v4720
        %v4949 = vunpack.c.l.b16 %v4721
        %v4950 = vunpack.c.h.b16 %v4721
        %v4951 = vunpack.c.l.b16 %v4722
        %v4952 = vunpack.c.h.b16 %v4722
        %v4953 = vunpack.c.l.b16 %v4723
        %v4954 = vunpack.c.h.b16 %v4723
        %v4955 = vunpack.c.l.b16 %v4724
        %v4956 = vunpack.c.h.b16 %v4724
        %v4957 = vunpack.c.l.b16 %v4725
        %v4958 = vunpack.c.h.b16 %v4725
        %v4959 = vunpack.c.l.b16 %v4726
        %v4960 = vunpack.c.h.b16 %v4726
        %v4961 = vunpack.c.l.b16 %v4727
        %v4962 = vunpack.c.h.b16 %v4727
        %v4963 = vunpack.c.l.b16 %v4728
        %v4964 = vunpack.c.h.b16 %v4728
        %v4965 = vunpack.c.l.b16 %v4729
        %v4966 = vunpack.c.h.b16 %v4729
        %v4967 = vunpack.c.l.b16 %v4730
        %v4968 = vunpack.c.h.b16 %v4730
        %v4969 = vunpack.c.l.b16 %v4731
        %v4970 = vunpack.c.h.b16 %v4731
        %v4971 = vunpack.c.l.b16 %v4732
        %v4972 = vunpack.c.h.b16 %v4732
        %v4973 = vunpack.c.l.b16 %v4733
        %v4974 = vunpack.c.h.b16 %v4733
        %v4975 = vunpack.c.l.b16 %v4734
        %v4976 = vunpack.c.h.b16 %v4734
        %v4977 = vunpack.c.l.b16 %v4735
        %v4978 = vunpack.c.h.b16 %v4735
        %v4979 = vunpack.c.l.b16 %v4736
        %v4980 = vunpack.c.h.b16 %v4736
        %v4981 = vunpack.c.l.b16 %v4737
        %v4982 = vunpack.c.h.b16 %v4737
        %v4983 = vunpack.c.l.b16 %v4738
        %v4984 = vunpack.c.h.b16 %v4738
        %v4985 = vunpack.c.l.b16 %v4739
        %v4986 = vunpack.c.h.b16 %v4739
        %v4987 = vunpack.c.l.b16 %v4740
        %v4988 = vunpack.c.h.b16 %v4740
        %v4989 = vunpack.c.l.b16 %v4741
        %v4990 = vunpack.c.h.b16 %v4741
        %v4991 = vunpack.c.l.b16 %v4742
        %v4992 = vunpack.c.h.b16 %v4742
        %v4993 = vunpack.c.l.b16 %v4743
        %v4994 = vunpack.c.h.b16 %v4743
        %v4995 = vunpack.c.l.b16 %v4744
        %v4996 = vunpack.c.h.b16 %v4744
        %v4997 = vunpack.c.l.b16 %v4745
        %v4998 = vunpack.c.h.b16 %v4745
        %v4999 = vunpack.c.l.b16 %v4746
        %v5000 = vunpack.c.h.b16 %v4746
        %v5001 = vunpack.c.l.b16 %v4747
        %v5002 = vunpack.c.h.b16 %v4747
        %v5003 = vunpack.c.l.b16 %v4748
        %v5004 = vunpack.c.h.b16 %v4748
        %v5005 = vunpack.c.l.b16 %v4749
        %v5006 = vunpack.c.h.b16 %v4749
        %v5007 = vunpack.c.l.b16 %v4750
        %v5008 = vunpack.c.h.b16 %v4750
        %v5009 = vunpack.c.l.b16 %v4751
        %v5010 = vunpack.c.h.b16 %v4751
        %v5011 = vunpack.c.l.b16 %v4752
        %v5012 = vunpack.c.h.b16 %v4752
        %v5013 = vunpack.c.l.b16 %v4753
        %v5014 = vunpack.c.h.b16 %v4753
        %v5015 = vunpack.c.l.b16 %v4754
        %v5016 = vunpack.c.h.b16 %v4754
        %v5017 = vunpack.c.l.b16 %v4755
        %v5018 = vunpack.c.h.b16 %v4755
        %v5019 = vunpack.c.l.b16 %v4756
        %v5020 = vunpack.c.h.b16 %v4756
        %v5021 = vunpack.c.l.b16 %v4757
        %v5022 = vunpack.c.h.b16 %v4757
        %v5023 = vunpack.c.l.b16 %v4758
        %v5024 = vunpack.c.h.b16 %v4758
        %v5025 = vunpack.c.l.b16 %v4759
        %v5026 = vunpack.c.h.b16 %v4759
        %v5027 = vunpack.c.l.b16 %v4760
        %v5028 = vunpack.c.h.b16 %v4760
        %v5029 = vunpack.c.l.b16 %v4761
        %v5030 = vunpack.c.h.b16 %v4761
        %v5031 = vunpack.c.l.b16 %v4762
        %v5032 = vunpack.c.h.b16 %v4762
        %v5033 = vunpack.c.l.b16 %v4763
        %v5034 = vunpack.c.h.b16 %v4763
        %v5035 = vunpack.c.l.b16 %v4764
        %v5036 = vunpack.c.h.b16 %v4764
        %v5037 = vunpack.c.l.b16 %v4765
        %v5038 = vunpack.c.h.b16 %v4765
        %v5039 = vunpack.c.l.b16 %v4766
        %v5040 = vunpack.c.h.b16 %v4766
        %v5041 = vunpack.c.l.b16 %v4767
        %v5042 = vunpack.c.h.b16 %v4767
        %v5043 = vunpack.c.l.b16 %v4768
        %v5044 = vunpack.c.h.b16 %v4768
        %v5045 = vunpack.c.l.b16 %v4769
        %v5046 = vunpack.c.h.b16 %v4769
        %v5047 = vunpack.c.l.b16 %v4770
        %v5048 = vunpack.c.h.b16 %v4770
        %v5049 = vunpack.c.l.b16 %v4771
        %v5050 = vunpack.c.h.b16 %v4771
        %v5051 = vunpack.c.l.b16 %v4772
        %v5052 = vunpack.c.h.b16 %v4772
        %v5053 = vunpack.c.l.b16 %v4773
        %v5054 = vunpack.c.h.b16 %v4773
        %v5055 = vunpack.c.l.b16 %v4774
        %v5056 = vunpack.c.h.b16 %v4774
        %v5057 = vunpack.c.l.b16 %v4775
        %v5058 = vunpack.c.h.b16 %v4775
        %v5059 = vunpack.c.l.b16 %v4776
        %v5060 = vunpack.c.h.b16 %v4776
        %v5061 = vunpack.c.l.b16 %v4777
        %v5062 = vunpack.c.h.b16 %v4777
        %v5063 = vunpack.c.l.b16 %v4778
        %v5064 = vunpack.c.h.b16 %v4778
        %v5065 = vunpack.c.l.b16 %v4779
        %v5066 = vunpack.c.h.b16 %v4779
        %v5067 = vunpack.c.l.b16 %v4780
        %v5068 = vunpack.c.h.b16 %v4780
        %v5069 = vunpack.c.l.b16 %v4781
        %v5070 = vunpack.c.h.b16 %v4781
        %v5071 = vunpack.c.l.b16 %v4782
        %v5072 = vunpack.c.h.b16 %v4782
        %v5073 = vunpack.c.l.b16 %v4783
        %v5074 = vunpack.c.h.b16 %v4783
        %v5075 = vunpack.c.l.b16 %v4784
        %v5076 = vunpack.c.h.b16 %v4784
        %v5077 = vunpack.c.l.b16 %v4785
        %v5078 = vunpack.c.h.b16 %v4785
        %v5079 = vunpack.c.l.b16 %v4786
        %v5080 = vunpack.c.h.b16 %v4786
        %v5081 = vunpack.c.l.b16 %v4787
        %v5082 = vunpack.c.h.b16 %v4787
        %v5083 = vunpack.c.l.b16 %v4788
        %v5084 = vunpack.c.h.b16 %v4788
        %v5085 = vunpack.c.l.b16 %v4789
        %v5086 = vunpack.c.h.b16 %v4789
        %v5087 = vunpack.c.l.b16 %v4790
        %v5088 = vunpack.c.h.b16 %v4790
        %v5089 = vunpack.c.l.b16 %v4791
        %v5090 = vunpack.c.h.b16 %v4791
        %v5091 = vunpack.c.l.b16 %v4792
        %v5092 = vunpack.c.h.b16 %v4792
        %v5093 = vunpack.c.l.b16 %v4793
        %v5094 = vunpack.c.h.b16 %v4793
        %v5095 = vpack.c.b16 %v4907, %v4903
        %v5096 = vpack.c.b16 %v4908, %v4904
        %v5097 = vpack.c.b16 %v4909, %v4905
        %v5098 = vpack.c.b16 %v4910, %v4906
        %v5099 = vpack.c.b16 %v4915, %v4911
        %v5100 = vpack.c.b16 %v4916, %v4912
        %v5101 = vpack.c.b16 %v4917, %v4913
        %v5102 = vpack.c.b16 %v4918, %v4914
        %v5103 = vpack.c.b16 %v4923, %v4919
        %v5104 = vpack.c.b16 %v4924, %v4920
        %v5105 = vpack.c.b16 %v4925, %v4921
        %v5106 = vpack.c.b16 %v4926, %v4922
        %v5107 = vpack.c.b16 %v4931, %v4927
        %v5108 = vpack.c.b16 %v4932, %v4928
        %v5109 = vpack.c.b16 %v4933, %v4929
        %v5110 = vpack.c.b16 %v4934, %v4930
        %v5111 = vpack.c.b16 %v4939, %v4935
        %v5112 = vpack.c.b16 %v4940, %v4936
        %v5113 = vpack.c.b16 %v4941, %v4937
        %v5114 = vpack.c.b16 %v4942, %v4938
        %v5115 = vpack.c.b16 %v4947, %v4943
        %v5116 = vpack.c.b16 %v4948, %v4944
        %v5117 = vpack.c.b16 %v4949, %v4945
        %v5118 = vpack.c.b16 %v4950, %v4946
        %v5119 = vpack.c.b16 %v4955, %v4951
        %v5120 = vpack.c.b16 %v4956, %v4952
        %v5121 = vpack.c.b16 %v4957, %v4953
        %v5122 = vpack.c.b16 %v4958, %v4954
        %v5123 = vpack.c.b16 %v4963, %v4959
        %v5124 = vpack.c.b16 %v4964, %v4960
        %v5125 = vpack.c.b16 %v4965, %v4961
        %v5126 = vpack.c.b16 %v4966, %v4962
        %v5127 = vpack.c.b16 %v4971, %v4967
        %v5128 = vpack.c.b16 %v4972, %v4968
        %v5129 = vpack.c.b16 %v4973, %v4969
        %v5130 = vpack.c.b16 %v4974, %v4970
        %v5131 = vpack.c.b16 %v4979, %v4975
        %v5132 = vpack.c.b16 %v4980, %v4976
        %v5133 = vpack.c.b16 %v4981, %v4977
        %v5134 = vpack.c.b16 %v4982, %v4978
        %v5135 = vpack.c.b16 %v4987, %v4983
        %v5136 = vpack.c.b16 %v4988, %v4984
        %v5137 = vpack.c.b16 %v4989, %v4985
        %v5138 = vpack.c.b16 %v4990, %v4986
        %v5139 = vpack.c.b16 %v4995, %v4991
        %v5140 = vpack.c.b16 %v4996, %v4992
        %v5141 = vpack.c.b16 %v4997, %v4993
        %v5142 = vpack.c.b16 %v4998, %v4994
        %v5143 = vpack.c.b16 %v5003, %v4999
        %v5144 = vpack.c.b16 %v5004, %v5000
        %v5145 = vpack.c.b16 %v5005, %v5001
        %v5146 = vpack.c.b16 %v5006, %v5002
        %v5147 = vpack.c.b16 %v5011, %v5007
        %v5148 = vpack.c.b16 %v5012, %v5008
        %v5149 = vpack.c.b16 %v5013, %v5009
        %v5150 = vpack.c.b16 %v5014, %v5010
        %v5151 = vpack.c.b16 %v5019, %v5015
        %v5152 = vpack.c.b16 %v5020, %v5016
        %v5153 = vpack.c.b16 %v5021, %v5017
        %v5154 = vpack.c.b16 %v5022, %v5018
        %v5155 = vpack.c.b16 %v5027, %v5023
        %v5156 = vpack.c.b16 %v5028, %v5024
        %v5157 = vpack.c.b16 %v5029, %v5025
        %v5158 = vpack.c.b16 %v5030, %v5026
        %v5159 = vpack.c.b16 %v5035, %v5031
        %v5160 = vpack.c.b16 %v5036, %v5032
        %v5161 = vpack.c.b16 %v5037, %v5033
        %v5162 = vpack.c.b16 %v5038, %v5034
        %v5163 = vpack.c.b16 %v5043, %v5039
        %v5164 = vpack.c.b16 %v5044, %v5040
        %v5165 = vpack.c.b16 %v5045, %v5041
        %v5166 = vpack.c.b16 %v5046, %v5042
        %v5167 = vpack.c.b16 %v5051, %v5047
        %v5168 = vpack.c.b16 %v5052, %v5048
        %v5169 = vpack.c.b16 %v5053, %v5049
        %v5170 = vpack.c.b16 %v5054, %v5050
        %v5171 = vpack.c.b16 %v5059, %v5055
        %v5172 = vpack.c.b16 %v5060, %v5056
        %v5173 = vpack.c.b16 %v5061, %v5057
        %v5174 = vpack.c.b16 %v5062, %v5058
        %v5175 = vpack.c.b16 %v5067, %v5063
        %v5176 = vpack.c.b16 %v5068, %v5064
        %v5177 = vpack.c.b16 %v5069, %v5065
        %v5178 = vpack.c.b16 %v5070, %v5066
        %v5179 = vpack.c.b16 %v5075, %v5071
        %v5180 = vpack.c.b16 %v5076, %v5072
        %v5181 = vpack.c.b16 %v5077, %v5073
        %v5182 = vpack.c.b16 %v5078, %v5074
        %v5183 = vpack.c.b16 %v5083, %v5079
        %v5184 = vpack.c.b16 %v5084, %v5080
        %v5185 = vpack.c.b16 %v5085, %v5081
        %v5186 = vpack.c.b16 %v5086, %v5082
        %v5187 = vpack.c.b16 %v5091, %v5087
        %v5188 = vpack.c.b16 %v5092, %v5088
        %v5189 = vpack.c.b16 %v5093, %v5089
        %v5190 = vpack.c.b16 %v5094, %v5090
        %5287 = vmatpush.bf16.msra.mxu0 %v5123
        %5288 = vmatpush.bf16.msra.mxu0 %v5119
        %5289 = vmatpush.bf16.msra.mxu0 %v5115
        %5290 = vmatpush.bf16.msra.mxu0 %v5111
        %5291 = vmatpush.bf16.msra.mxu0 %v5107
        %5292 = vmatpush.bf16.msra.mxu0 %v5103
        %5293 = vmatpush.bf16.msra.mxu0 %v5099
        %5294 = vmatpush.bf16.msra.mxu0 %v5095
        %5295 = vmatmul.bf16.gmra.mxu0 %v4794
        %v5296 = vpop.f32.mrf.mxu0
        %v5297 = vadd.f32 %v4799, %v5296
        %v5298 = vpop.f32.mrf.mxu0
        %5299 = vdwg.mxu0
        %5300 = vmatpush.bf16.msra.mxu0 %v5155
        %5301 = vmatpush.bf16.msra.mxu0 %v5151
        %5302 = vmatpush.bf16.msra.mxu0 %v5147
        %5303 = vmatpush.bf16.msra.mxu0 %v5143
        %5304 = vmatpush.bf16.msra.mxu0 %v5139
        %5305 = vmatpush.bf16.msra.mxu0 %v5135
        %5306 = vmatpush.bf16.msra.mxu0 %v5131
        %5307 = vmatpush.bf16.msra.mxu0 %v5127
        %5308 = vmatmul.bf16.gmra.mxu0 %v4795
        %v5309 = vpop.f32.mrf.mxu0
        %v5310 = vadd.f32 %v5297, %v5309
        %v5311 = vpop.f32.mrf.mxu0
        %5312 = vdwg.mxu0
        %5313 = vmatpush.bf16.msra.mxu0 %v5187
        %5314 = vmatpush.bf16.msra.mxu0 %v5183
        %5315 = vmatpush.bf16.msra.mxu0 %v5179
        %5316 = vmatpush.bf16.msra.mxu0 %v5175
        %5317 = vmatpush.bf16.msra.mxu0 %v5171
        %5318 = vmatpush.bf16.msra.mxu0 %v5167
        %5319 = vmatpush.bf16.msra.mxu0 %v5163
        %5320 = vmatpush.bf16.msra.mxu0 %v5159
        %5321 = vmatmul.bf16.gmra.mxu0 %v4796
        %v5322 = vpop.f32.mrf.mxu0
        %v5323 = vadd.f32 %v5310, %v5322
        %v5324 = vpop.f32.mrf.mxu0
        %5325 = vdwg.mxu0
        %5326 = vmatpush.bf16.msra.mxu0 %v5124
        %5327 = vmatpush.bf16.msra.mxu0 %v5120
        %5328 = vmatpush.bf16.msra.mxu0 %v5116
        %5329 = vmatpush.bf16.msra.mxu0 %v5112
        %5330 = vmatpush.bf16.msra.mxu0 %v5108
        %5331 = vmatpush.bf16.msra.mxu0 %v5104
        %5332 = vmatpush.bf16.msra.mxu0 %v5100
        %5333 = vmatpush.bf16.msra.mxu0 %v5096
        %5334 = vmatmul.bf16.gmra.mxu0 %v4794
        %v5335 = vpop.f32.mrf.mxu0
        %v5336 = vadd.f32 %v4800, %v5335
        %v5337 = vpop.f32.mrf.mxu0
        %5338 = vdwg.mxu0
        %5339 = vmatpush.bf16.msra.mxu0 %v5156
        %5340 = vmatpush.bf16.msra.mxu0 %v5152
        %5341 = vmatpush.bf16.msra.mxu0 %v5148
        %5342 = vmatpush.bf16.msra.mxu0 %v5144
        %5343 = vmatpush.bf16.msra.mxu0 %v5140
        %5344 = vmatpush.bf16.msra.mxu0 %v5136
        %5345 = vmatpush.bf16.msra.mxu0 %v5132
        %5346 = vmatpush.bf16.msra.mxu0 %v5128
        %5347 = vmatmul.bf16.gmra.mxu0 %v4795
        %v5348 = vpop.f32.mrf.mxu0
        %v5349 = vadd.f32 %v5336, %v5348
        %v5350 = vpop.f32.mrf.mxu0
        %5351 = vdwg.mxu0
        %5352 = vmatpush.bf16.msra.mxu0 %v5188
        %5353 = vmatpush.bf16.msra.mxu0 %v5184
        %5354 = vmatpush.bf16.msra.mxu0 %v5180
        %5355 = vmatpush.bf16.msra.mxu0 %v5176
        %5356 = vmatpush.bf16.msra.mxu0 %v5172
        %5357 = vmatpush.bf16.msra.mxu0 %v5168
        %5358 = vmatpush.bf16.msra.mxu0 %v5164
        %5359 = vmatpush.bf16.msra.mxu0 %v5160
        %5360 = vmatmul.bf16.gmra.mxu0 %v4796
        %v5361 = vpop.f32.mrf.mxu0
        %v5362 = vadd.f32 %v5349, %v5361
        %v5363 = vpop.f32.mrf.mxu0
        %5364 = vdwg.mxu0
        %5365 = vmatpush.bf16.msra.mxu0 %v5125
        %5366 = vmatpush.bf16.msra.mxu0 %v5121
        %5367 = vmatpush.bf16.msra.mxu0 %v5117
        %5368 = vmatpush.bf16.msra.mxu0 %v5113
        %5369 = vmatpush.bf16.msra.mxu0 %v5109
        %5370 = vmatpush.bf16.msra.mxu0 %v5105
        %5371 = vmatpush.bf16.msra.mxu0 %v5101
        %5372 = vmatpush.bf16.msra.mxu0 %v5097
        %5373 = vmatmul.bf16.gmra.mxu0 %v4794
        %v5374 = vpop.f32.mrf.mxu0
        %v5375 = vadd.f32 %v4801, %v5374
        %v5376 = vpop.f32.mrf.mxu0
        %5377 = vdwg.mxu0
        %5378 = vmatpush.bf16.msra.mxu0 %v5157
        %5379 = vmatpush.bf16.msra.mxu0 %v5153
        %5380 = vmatpush.bf16.msra.mxu0 %v5149
        %5381 = vmatpush.bf16.msra.mxu0 %v5145
        %5382 = vmatpush.bf16.msra.mxu0 %v5141
        %5383 = vmatpush.bf16.msra.mxu0 %v5137
        %5384 = vmatpush.bf16.msra.mxu0 %v5133
        %5385 = vmatpush.bf16.msra.mxu0 %v5129
        %5386 = vmatmul.bf16.gmra.mxu0 %v4795
        %v5387 = vpop.f32.mrf.mxu0
        %v5388 = vadd.f32 %v5375, %v5387
        %v5389 = vpop.f32.mrf.mxu0
        %5390 = vdwg.mxu0
        %5391 = vmatpush.bf16.msra.mxu0 %v5189
        %5392 = vmatpush.bf16.msra.mxu0 %v5185
        %5393 = vmatpush.bf16.msra.mxu0 %v5181
        %5394 = vmatpush.bf16.msra.mxu0 %v5177
        %5395 = vmatpush.bf16.msra.mxu0 %v5173
        %5396 = vmatpush.bf16.msra.mxu0 %v5169
        %5397 = vmatpush.bf16.msra.mxu0 %v5165
        %5398 = vmatpush.bf16.msra.mxu0 %v5161
        %5399 = vmatmul.bf16.gmra.mxu0 %v4796
        %v5400 = vpop.f32.mrf.mxu0
        %v5401 = vadd.f32 %v5388, %v5400
        %v5402 = vpop.f32.mrf.mxu0
        %5403 = vdwg.mxu0
        %5404 = vmatpush.bf16.msra.mxu0 %v5126
        %5405 = vmatpush.bf16.msra.mxu0 %v5122
        %5406 = vmatpush.bf16.msra.mxu0 %v5118
        %5407 = vmatpush.bf16.msra.mxu0 %v5114
        %5408 = vmatpush.bf16.msra.mxu0 %v5110
        %5409 = vmatpush.bf16.msra.mxu0 %v5106
        %5410 = vmatpush.bf16.msra.mxu0 %v5102
        %5411 = vmatpush.bf16.msra.mxu0 %v5098
        %5412 = vmatmul.bf16.gmra.mxu0 %v4794
        %v5413 = vpop.f32.mrf.mxu0
        %v5414 = vadd.f32 %v4802, %v5413
        %v5415 = vpop.f32.mrf.mxu0
        %5416 = vdwg.mxu0
        %5417 = vmatpush.bf16.msra.mxu0 %v5158
        %5418 = vmatpush.bf16.msra.mxu0 %v5154
        %5419 = vmatpush.bf16.msra.mxu0 %v5150
        %5420 = vmatpush.bf16.msra.mxu0 %v5146
        %5421 = vmatpush.bf16.msra.mxu0 %v5142
        %5422 = vmatpush.bf16.msra.mxu0 %v5138
        %5423 = vmatpush.bf16.msra.mxu0 %v5134
        %5424 = vmatpush.bf16.msra.mxu0 %v5130
        %5425 = vmatmul.bf16.gmra.mxu0 %v4795
        %v5426 = vpop.f32.mrf.mxu0
        %v5427 = vadd.f32 %v5414, %v5426
        %v5428 = vpop.f32.mrf.mxu0
        %5429 = vdwg.mxu0
        %5430 = vmatpush.bf16.msra.mxu0 %v5190
        %5431 = vmatpush.bf16.msra.mxu0 %v5186
        %5432 = vmatpush.bf16.msra.mxu0 %v5182
        %5433 = vmatpush.bf16.msra.mxu0 %v5178
        %5434 = vmatpush.bf16.msra.mxu0 %v5174
        %5435 = vmatpush.bf16.msra.mxu0 %v5170
        %5436 = vmatpush.bf16.msra.mxu0 %v5166
        %5437 = vmatpush.bf16.msra.mxu0 %v5162
        %5438 = vmatmul.bf16.gmra.mxu0 %v4796
        %v5439 = vpop.f32.mrf.mxu0
        %v5440 = vadd.f32 %v5427, %v5439
        %v5441 = vpop.f32.mrf.mxu0
        %5442 = vdwg.mxu0
        %v5443 = vmax.f32 %v5323, 0.0
        %v5444 = vmax.f32 %v5362, 0.0
        %v5445 = vmax.f32 %v5401, 0.0
        %v5446 = vmax.f32 %v5440, 0.0
        %v5447 = vld [vmem:[#allocation11 + $0x10] sm:$0xff]
        %v5448 = vld [vmem:[#allocation11 + $0x18] sm:$0xff]
        %v5449 = vld [vmem:[#allocation11 + $0x4c] sm:$0xff]
        %v5450 = vld [vmem:[#allocation11 + $0x54] sm:$0xff]
        %v5451 = vld [vmem:[#allocation11 + $0x88] sm:$0xff]
        %v5452 = vld [vmem:[#allocation11 + $0x90] sm:$0xff]
        %v5453 = vld [vmem:[#allocation11 + $0xc4] sm:$0xff]
        %v5454 = vld [vmem:[#allocation11 + $0xcc] sm:$0xff]
        %v5455 = vld [vmem:[#allocation11 + $0x100] sm:$0xff]
        %v5456 = vld [vmem:[#allocation11 + $0x108] sm:$0xff]
        %v5457 = vld [vmem:[#allocation11 + $0x13c] sm:$0xff]
        %v5458 = vld [vmem:[#allocation11 + $0x144] sm:$0xff]
        %v5459 = vld [vmem:[#allocation11 + $0x178] sm:$0xff]
        %v5460 = vld [vmem:[#allocation11 + $0x180] sm:$0xff]
        %v5461 = vld [vmem:[#allocation11 + $0x1b4] sm:$0xff]
        %v5462 = vld [vmem:[#allocation11 + $0x1bc] sm:$0xff]
        %v5463 = vld [vmem:[#allocation11 + $0x1f0] sm:$0xff]
        %v5464 = vld [vmem:[#allocation11 + $0x1f8] sm:$0xff]
        %v5465 = vld [vmem:[#allocation11 + $0x22c] sm:$0xff]
        %v5466 = vld [vmem:[#allocation11 + $0x234] sm:$0xff]
        %v5467 = vld [vmem:[#allocation11 + $0x268] sm:$0xff]
        %v5468 = vld [vmem:[#allocation11 + $0x270] sm:$0xff]
        %v5469 = vld [vmem:[#allocation11 + $0x2a4] sm:$0xff]
        %v5470 = vld [vmem:[#allocation11 + $0x2ac] sm:$0xff]
        %v5471 = vld [vmem:[#allocation11 + $0x2e0] sm:$0xff]
        %v5472 = vld [vmem:[#allocation11 + $0x2e8] sm:$0xff]
        %v5473 = vld [vmem:[#allocation11 + $0x31c] sm:$0xff]
        %v5474 = vld [vmem:[#allocation11 + $0x324] sm:$0xff]
        %v5475 = vld [vmem:[#allocation11 + $0x358] sm:$0xff]
        %v5476 = vld [vmem:[#allocation11 + $0x360] sm:$0xff]
        %v5477 = vld [vmem:[#allocation11 + $0x394] sm:$0xff]
        %v5478 = vld [vmem:[#allocation11 + $0x39c] sm:$0xff]
        %v5479 = vld [vmem:[#allocation11 + $0x3d0] sm:$0xff]
        %v5480 = vld [vmem:[#allocation11 + $0x3d8] sm:$0xff]
        %v5481 = vld [vmem:[#allocation11 + $0x40c] sm:$0xff]
        %v5482 = vld [vmem:[#allocation11 + $0x414] sm:$0xff]
        %v5483 = vld [vmem:[#allocation11 + $0x448] sm:$0xff]
        %v5484 = vld [vmem:[#allocation11 + $0x450] sm:$0xff]
        %v5485 = vld [vmem:[#allocation11 + $0x484] sm:$0xff]
        %v5486 = vld [vmem:[#allocation11 + $0x48c] sm:$0xff]
        %v5487 = vld [vmem:[#allocation11 + $0x4c0] sm:$0xff]
        %v5488 = vld [vmem:[#allocation11 + $0x4c8] sm:$0xff]
        %v5489 = vld [vmem:[#allocation11 + $0x4fc] sm:$0xff]
        %v5490 = vld [vmem:[#allocation11 + $0x504] sm:$0xff]
        %v5491 = vld [vmem:[#allocation11 + $0x538] sm:$0xff]
        %v5492 = vld [vmem:[#allocation11 + $0x540] sm:$0xff]
        %v5493 = vld [vmem:[#allocation11 + $0x574] sm:$0xff]
        %v5494 = vld [vmem:[#allocation11 + $0x57c] sm:$0xff]
        %v5495 = vld [vmem:[#allocation11 + $0x5b0] sm:$0xff]
        %v5496 = vld [vmem:[#allocation11 + $0x5b8] sm:$0xff]
        %v5497 = vld [vmem:[#allocation11 + $0x5ec] sm:$0xff]
        %v5498 = vld [vmem:[#allocation11 + $0x5f4] sm:$0xff]
        %v5499 = vld [vmem:[#allocation11 + $0x628] sm:$0xff]
        %v5500 = vld [vmem:[#allocation11 + $0x630] sm:$0xff]
        %v5501 = vld [vmem:[#allocation11 + $0x664] sm:$0xff]
        %v5502 = vld [vmem:[#allocation11 + $0x66c] sm:$0xff]
        %v5503 = vld [vmem:[#allocation11 + $0x6a0] sm:$0xff]
        %v5504 = vld [vmem:[#allocation11 + $0x6a8] sm:$0xff]
        %v5505 = vld [vmem:[#allocation11 + $0x6dc] sm:$0xff]
        %v5506 = vld [vmem:[#allocation11 + $0x6e4] sm:$0xff]
        %v5507 = vld [vmem:[#allocation11 + $0x718] sm:$0xff]
        %v5508 = vld [vmem:[#allocation11 + $0x720] sm:$0xff]
        %v5509 = vld [vmem:[#allocation11 + $0x754] sm:$0xff]
        %v5510 = vld [vmem:[#allocation11 + $0x75c] sm:$0xff]
        %v5511 = vld [vmem:[#allocation11 + $0x790] sm:$0xff]
        %v5512 = vld [vmem:[#allocation11 + $0x798] sm:$0xff]
        %v5513 = vld [vmem:[#allocation11 + $0x7cc] sm:$0xff]
        %v5514 = vld [vmem:[#allocation11 + $0x7d4] sm:$0xff]
        %v5515 = vld [vmem:[#allocation11 + $0x808] sm:$0xff]
        %v5516 = vld [vmem:[#allocation11 + $0x810] sm:$0xff]
        %v5517 = vld [vmem:[#allocation11 + $0x844] sm:$0xff]
        %v5518 = vld [vmem:[#allocation11 + $0x84c] sm:$0xff]
        %v5519 = vld [vmem:[#allocation11 + $0x880] sm:$0xff]
        %v5520 = vld [vmem:[#allocation11 + $0x888] sm:$0xff]
        %v5521 = vld [vmem:[#allocation11 + $0x8bc] sm:$0xff]
        %v5522 = vld [vmem:[#allocation11 + $0x8c4] sm:$0xff]
        %v5523 = vld [vmem:[#allocation11 + $0x8f8] sm:$0xff]
        %v5524 = vld [vmem:[#allocation11 + $0x900] sm:$0xff]
        %v5525 = vld [vmem:[#allocation11 + $0x934] sm:$0xff]
        %v5526 = vld [vmem:[#allocation11 + $0x93c] sm:$0xff]
        %v5527 = vld [vmem:[#allocation11 + $0x970] sm:$0xff]
        %v5528 = vld [vmem:[#allocation11 + $0x978] sm:$0xff]
        %v5529 = vld [vmem:[#allocation11 + $0x9ac] sm:$0xff]
        %v5530 = vld [vmem:[#allocation11 + $0x9b4] sm:$0xff]
        %v5531 = vld [vmem:[#allocation11 + $0x9e8] sm:$0xff]
        %v5532 = vld [vmem:[#allocation11 + $0x9f0] sm:$0xff]
        %v5533 = vld [vmem:[#allocation11 + $0xa24] sm:$0xff]
        %v5534 = vld [vmem:[#allocation11 + $0xa2c] sm:$0xff]
        %v5535 = vld [vmem:[#allocation11 + $0xa60] sm:$0xff]
        %v5536 = vld [vmem:[#allocation11 + $0xa68] sm:$0xff]
        %v5537 = vld [vmem:[#allocation11 + $0xa9c] sm:$0xff]
        %v5538 = vld [vmem:[#allocation11 + $0xaa4] sm:$0xff]
        %v5539 = vld [vmem:[#allocation11 + $0xad8] sm:$0xff]
        %v5540 = vld [vmem:[#allocation11 + $0xae0] sm:$0xff]
        %v5541 = vld [vmem:[#allocation11 + $0xb14] sm:$0xff]
        %v5542 = vld [vmem:[#allocation11 + $0xb1c] sm:$0xff]
        %v5543 = vld [vmem:[#allocation11 + $0xb50] sm:$0xff]
        %v5544 = vld [vmem:[#allocation11 + $0xb58] sm:$0xff]
        %v5545 = vld [vmem:[#allocation11 + $0xb8c] sm:$0xff]
        %v5546 = vld [vmem:[#allocation11 + $0xb94] sm:$0xff]
        %v5547 = vld [vmem:[#allocation11 + $0xbc8] sm:$0xff]
        %v5548 = vld [vmem:[#allocation11 + $0xbd0] sm:$0xff]
        %v5549 = vld [vmem:[#allocation11 + $0xc04] sm:$0xff]
        %v5550 = vld [vmem:[#allocation11 + $0xc0c] sm:$0xff]
        %v5551 = vld [vmem:[#allocation11 + $0xc40] sm:$0xff]
        %v5552 = vld [vmem:[#allocation11 + $0xc48] sm:$0xff]
        %v5553 = vld [vmem:[#allocation11 + $0xc7c] sm:$0xff]
        %v5554 = vld [vmem:[#allocation11 + $0xc84] sm:$0xff]
        %v5555 = vld [vmem:[#allocation11 + $0xcb8] sm:$0xff]
        %v5556 = vld [vmem:[#allocation11 + $0xcc0] sm:$0xff]
        %v5557 = vld [vmem:[#allocation11 + $0xcf4] sm:$0xff]
        %v5558 = vld [vmem:[#allocation11 + $0xcfc] sm:$0xff]
        %v5559 = vld [vmem:[#allocation11 + $0xd30] sm:$0xff]
        %v5560 = vld [vmem:[#allocation11 + $0xd38] sm:$0xff]
        %v5561 = vld [vmem:[#allocation11 + $0xd6c] sm:$0xff]
        %v5562 = vld [vmem:[#allocation11 + $0xd74] sm:$0xff]
        %v5563 = vld [vmem:[#allocation11 + $0xda8] sm:$0xff]
        %v5564 = vld [vmem:[#allocation11 + $0xdb0] sm:$0xff]
        %v5565 = vld [vmem:[#allocation11 + $0xde4] sm:$0xff]
        %v5566 = vld [vmem:[#allocation11 + $0xdec] sm:$0xff]
        %v5567 = vld [vmem:[#allocation11 + $0xe20] sm:$0xff]
        %v5568 = vld [vmem:[#allocation11 + $0xe28] sm:$0xff]
        %v5569 = vld [vmem:[#allocation11 + $0xe5c] sm:$0xff]
        %v5570 = vld [vmem:[#allocation11 + $0xe64] sm:$0xff]
        %v5571 = vld [vmem:[#allocation11 + $0xe98] sm:$0xff]
        %v5572 = vld [vmem:[#allocation11 + $0xea0] sm:$0xff]
        %v5573 = vld [vmem:[#allocation11 + $0xed4] sm:$0xff]
        %v5574 = vld [vmem:[#allocation11 + $0xedc] sm:$0xff]
        %v5575 = vpack.c.bf16 %v5443, %v5443
        %v5576 = vpack.c.bf16 %v5444, %v5444
        %v5577 = vpack.c.bf16 %v5445, %v5445
        %v5578 = vpack.c.bf16 %v5446, %v5446
        %s5579 = scalar_lea.vmem [#allocation14], 1
        %v5580 = vld [vmem:[%s5579] ss:$8 sm:$0xf]
        %v5582 = vperm.slane %v5580, 0
        %v5583 = vperm.slane %v5580, 1
        %v5584 = vperm.slane %v5580, 2
        %v5585 = vperm.slane %v5580, 3
        %v5718 = vunpack.c.l.b16 %v5447
        %v5719 = vunpack.c.h.b16 %v5447
        %v5720 = vunpack.c.l.b16 %v5448
        %v5721 = vunpack.c.h.b16 %v5448
        %v5722 = vunpack.c.l.b16 %v5449
        %v5723 = vunpack.c.h.b16 %v5449
        %v5724 = vunpack.c.l.b16 %v5450
        %v5725 = vunpack.c.h.b16 %v5450
        %v5726 = vunpack.c.l.b16 %v5451
        %v5727 = vunpack.c.h.b16 %v5451
        %v5728 = vunpack.c.l.b16 %v5452
        %v5729 = vunpack.c.h.b16 %v5452
        %v5730 = vunpack.c.l.b16 %v5453
        %v5731 = vunpack.c.h.b16 %v5453
        %v5732 = vunpack.c.l.b16 %v5454
        %v5733 = vunpack.c.h.b16 %v5454
        %v5734 = vunpack.c.l.b16 %v5455
        %v5735 = vunpack.c.h.b16 %v5455
        %v5736 = vunpack.c.l.b16 %v5456
        %v5737 = vunpack.c.h.b16 %v5456
        %v5738 = vunpack.c.l.b16 %v5457
        %v5739 = vunpack.c.h.b16 %v5457
        %v5740 = vunpack.c.l.b16 %v5458
        %v5741 = vunpack.c.h.b16 %v5458
        %v5742 = vunpack.c.l.b16 %v5459
        %v5743 = vunpack.c.h.b16 %v5459
        %v5744 = vunpack.c.l.b16 %v5460
        %v5745 = vunpack.c.h.b16 %v5460
        %v5746 = vunpack.c.l.b16 %v5461
        %v5747 = vunpack.c.h.b16 %v5461
        %v5748 = vunpack.c.l.b16 %v5462
        %v5749 = vunpack.c.h.b16 %v5462
        %v5750 = vunpack.c.l.b16 %v5463
        %v5751 = vunpack.c.h.b16 %v5463
        %v5752 = vunpack.c.l.b16 %v5464
        %v5753 = vunpack.c.h.b16 %v5464
        %v5754 = vunpack.c.l.b16 %v5465
        %v5755 = vunpack.c.h.b16 %v5465
        %v5756 = vunpack.c.l.b16 %v5466
        %v5757 = vunpack.c.h.b16 %v5466
        %v5758 = vunpack.c.l.b16 %v5467
        %v5759 = vunpack.c.h.b16 %v5467
        %v5760 = vunpack.c.l.b16 %v5468
        %v5761 = vunpack.c.h.b16 %v5468
        %v5762 = vunpack.c.l.b16 %v5469
        %v5763 = vunpack.c.h.b16 %v5469
        %v5764 = vunpack.c.l.b16 %v5470
        %v5765 = vunpack.c.h.b16 %v5470
        %v5766 = vunpack.c.l.b16 %v5471
        %v5767 = vunpack.c.h.b16 %v5471
        %v5768 = vunpack.c.l.b16 %v5472
        %v5769 = vunpack.c.h.b16 %v5472
        %v5770 = vunpack.c.l.b16 %v5473
        %v5771 = vunpack.c.h.b16 %v5473
        %v5772 = vunpack.c.l.b16 %v5474
        %v5773 = vunpack.c.h.b16 %v5474
        %v5774 = vunpack.c.l.b16 %v5475
        %v5775 = vunpack.c.h.b16 %v5475
        %v5776 = vunpack.c.l.b16 %v5476
        %v5777 = vunpack.c.h.b16 %v5476
        %v5778 = vunpack.c.l.b16 %v5477
        %v5779 = vunpack.c.h.b16 %v5477
        %v5780 = vunpack.c.l.b16 %v5478
        %v5781 = vunpack.c.h.b16 %v5478
        %v5782 = vunpack.c.l.b16 %v5479
        %v5783 = vunpack.c.h.b16 %v5479
        %v5784 = vunpack.c.l.b16 %v5480
        %v5785 = vunpack.c.h.b16 %v5480
        %v5786 = vunpack.c.l.b16 %v5481
        %v5787 = vunpack.c.h.b16 %v5481
        %v5788 = vunpack.c.l.b16 %v5482
        %v5789 = vunpack.c.h.b16 %v5482
        %v5790 = vunpack.c.l.b16 %v5483
        %v5791 = vunpack.c.h.b16 %v5483
        %v5792 = vunpack.c.l.b16 %v5484
        %v5793 = vunpack.c.h.b16 %v5484
        %v5794 = vunpack.c.l.b16 %v5485
        %v5795 = vunpack.c.h.b16 %v5485
        %v5796 = vunpack.c.l.b16 %v5486
        %v5797 = vunpack.c.h.b16 %v5486
        %v5798 = vunpack.c.l.b16 %v5487
        %v5799 = vunpack.c.h.b16 %v5487
        %v5800 = vunpack.c.l.b16 %v5488
        %v5801 = vunpack.c.h.b16 %v5488
        %v5802 = vunpack.c.l.b16 %v5489
        %v5803 = vunpack.c.h.b16 %v5489
        %v5804 = vunpack.c.l.b16 %v5490
        %v5805 = vunpack.c.h.b16 %v5490
        %v5806 = vunpack.c.l.b16 %v5491
        %v5807 = vunpack.c.h.b16 %v5491
        %v5808 = vunpack.c.l.b16 %v5492
        %v5809 = vunpack.c.h.b16 %v5492
        %v5810 = vunpack.c.l.b16 %v5493
        %v5811 = vunpack.c.h.b16 %v5493
        %v5812 = vunpack.c.l.b16 %v5494
        %v5813 = vunpack.c.h.b16 %v5494
        %v5814 = vunpack.c.l.b16 %v5495
        %v5815 = vunpack.c.h.b16 %v5495
        %v5816 = vunpack.c.l.b16 %v5496
        %v5817 = vunpack.c.h.b16 %v5496
        %v5818 = vunpack.c.l.b16 %v5497
        %v5819 = vunpack.c.h.b16 %v5497
        %v5820 = vunpack.c.l.b16 %v5498
        %v5821 = vunpack.c.h.b16 %v5498
        %v5822 = vunpack.c.l.b16 %v5499
        %v5823 = vunpack.c.h.b16 %v5499
        %v5824 = vunpack.c.l.b16 %v5500
        %v5825 = vunpack.c.h.b16 %v5500
        %v5826 = vunpack.c.l.b16 %v5501
        %v5827 = vunpack.c.h.b16 %v5501
        %v5828 = vunpack.c.l.b16 %v5502
        %v5829 = vunpack.c.h.b16 %v5502
        %v5830 = vunpack.c.l.b16 %v5503
        %v5831 = vunpack.c.h.b16 %v5503
        %v5832 = vunpack.c.l.b16 %v5504
        %v5833 = vunpack.c.h.b16 %v5504
        %v5834 = vunpack.c.l.b16 %v5505
        %v5835 = vunpack.c.h.b16 %v5505
        %v5836 = vunpack.c.l.b16 %v5506
        %v5837 = vunpack.c.h.b16 %v5506
        %v5838 = vunpack.c.l.b16 %v5507
        %v5839 = vunpack.c.h.b16 %v5507
        %v5840 = vunpack.c.l.b16 %v5508
        %v5841 = vunpack.c.h.b16 %v5508
        %v5842 = vunpack.c.l.b16 %v5509
        %v5843 = vunpack.c.h.b16 %v5509
        %v5844 = vunpack.c.l.b16 %v5510
        %v5845 = vunpack.c.h.b16 %v5510
        %v5846 = vunpack.c.l.b16 %v5511
        %v5847 = vunpack.c.h.b16 %v5511
        %v5848 = vunpack.c.l.b16 %v5512
        %v5849 = vunpack.c.h.b16 %v5512
        %v5850 = vunpack.c.l.b16 %v5513
        %v5851 = vunpack.c.h.b16 %v5513
        %v5852 = vunpack.c.l.b16 %v5514
        %v5853 = vunpack.c.h.b16 %v5514
        %v5854 = vunpack.c.l.b16 %v5515
        %v5855 = vunpack.c.h.b16 %v5515
        %v5856 = vunpack.c.l.b16 %v5516
        %v5857 = vunpack.c.h.b16 %v5516
        %v5858 = vunpack.c.l.b16 %v5517
        %v5859 = vunpack.c.h.b16 %v5517
        %v5860 = vunpack.c.l.b16 %v5518
        %v5861 = vunpack.c.h.b16 %v5518
        %v5862 = vunpack.c.l.b16 %v5519
        %v5863 = vunpack.c.h.b16 %v5519
        %v5864 = vunpack.c.l.b16 %v5520
        %v5865 = vunpack.c.h.b16 %v5520
        %v5866 = vunpack.c.l.b16 %v5521
        %v5867 = vunpack.c.h.b16 %v5521
        %v5868 = vunpack.c.l.b16 %v5522
        %v5869 = vunpack.c.h.b16 %v5522
        %v5870 = vunpack.c.l.b16 %v5523
        %v5871 = vunpack.c.h.b16 %v5523
        %v5872 = vunpack.c.l.b16 %v5524
        %v5873 = vunpack.c.h.b16 %v5524
        %v5874 = vunpack.c.l.b16 %v5525
        %v5875 = vunpack.c.h.b16 %v5525
        %v5876 = vunpack.c.l.b16 %v5526
        %v5877 = vunpack.c.h.b16 %v5526
        %v5878 = vunpack.c.l.b16 %v5527
        %v5879 = vunpack.c.h.b16 %v5527
        %v5880 = vunpack.c.l.b16 %v5528
        %v5881 = vunpack.c.h.b16 %v5528
        %v5882 = vunpack.c.l.b16 %v5529
        %v5883 = vunpack.c.h.b16 %v5529
        %v5884 = vunpack.c.l.b16 %v5530
        %v5885 = vunpack.c.h.b16 %v5530
        %v5886 = vunpack.c.l.b16 %v5531
        %v5887 = vunpack.c.h.b16 %v5531
        %v5888 = vunpack.c.l.b16 %v5532
        %v5889 = vunpack.c.h.b16 %v5532
        %v5890 = vunpack.c.l.b16 %v5533
        %v5891 = vunpack.c.h.b16 %v5533
        %v5892 = vunpack.c.l.b16 %v5534
        %v5893 = vunpack.c.h.b16 %v5534
        %v5894 = vunpack.c.l.b16 %v5535
        %v5895 = vunpack.c.h.b16 %v5535
        %v5896 = vunpack.c.l.b16 %v5536
        %v5897 = vunpack.c.h.b16 %v5536
        %v5898 = vunpack.c.l.b16 %v5537
        %v5899 = vunpack.c.h.b16 %v5537
        %v5900 = vunpack.c.l.b16 %v5538
        %v5901 = vunpack.c.h.b16 %v5538
        %v5902 = vunpack.c.l.b16 %v5539
        %v5903 = vunpack.c.h.b16 %v5539
        %v5904 = vunpack.c.l.b16 %v5540
        %v5905 = vunpack.c.h.b16 %v5540
        %v5906 = vunpack.c.l.b16 %v5541
        %v5907 = vunpack.c.h.b16 %v5541
        %v5908 = vunpack.c.l.b16 %v5542
        %v5909 = vunpack.c.h.b16 %v5542
        %v5910 = vunpack.c.l.b16 %v5543
        %v5911 = vunpack.c.h.b16 %v5543
        %v5912 = vunpack.c.l.b16 %v5544
        %v5913 = vunpack.c.h.b16 %v5544
        %v5914 = vunpack.c.l.b16 %v5545
        %v5915 = vunpack.c.h.b16 %v5545
        %v5916 = vunpack.c.l.b16 %v5546
        %v5917 = vunpack.c.h.b16 %v5546
        %v5918 = vunpack.c.l.b16 %v5547
        %v5919 = vunpack.c.h.b16 %v5547
        %v5920 = vunpack.c.l.b16 %v5548
        %v5921 = vunpack.c.h.b16 %v5548
        %v5922 = vunpack.c.l.b16 %v5549
        %v5923 = vunpack.c.h.b16 %v5549
        %v5924 = vunpack.c.l.b16 %v5550
        %v5925 = vunpack.c.h.b16 %v5550
        %v5926 = vunpack.c.l.b16 %v5551
        %v5927 = vunpack.c.h.b16 %v5551
        %v5928 = vunpack.c.l.b16 %v5552
        %v5929 = vunpack.c.h.b16 %v5552
        %v5930 = vunpack.c.l.b16 %v5553
        %v5931 = vunpack.c.h.b16 %v5553
        %v5932 = vunpack.c.l.b16 %v5554
        %v5933 = vunpack.c.h.b16 %v5554
        %v5934 = vunpack.c.l.b16 %v5555
        %v5935 = vunpack.c.h.b16 %v5555
        %v5936 = vunpack.c.l.b16 %v5556
        %v5937 = vunpack.c.h.b16 %v5556
        %v5938 = vunpack.c.l.b16 %v5557
        %v5939 = vunpack.c.h.b16 %v5557
        %v5940 = vunpack.c.l.b16 %v5558
        %v5941 = vunpack.c.h.b16 %v5558
        %v5942 = vunpack.c.l.b16 %v5559
        %v5943 = vunpack.c.h.b16 %v5559
        %v5944 = vunpack.c.l.b16 %v5560
        %v5945 = vunpack.c.h.b16 %v5560
        %v5946 = vunpack.c.l.b16 %v5561
        %v5947 = vunpack.c.h.b16 %v5561
        %v5948 = vunpack.c.l.b16 %v5562
        %v5949 = vunpack.c.h.b16 %v5562
        %v5950 = vunpack.c.l.b16 %v5563
        %v5951 = vunpack.c.h.b16 %v5563
        %v5952 = vunpack.c.l.b16 %v5564
        %v5953 = vunpack.c.h.b16 %v5564
        %v5954 = vunpack.c.l.b16 %v5565
        %v5955 = vunpack.c.h.b16 %v5565
        %v5956 = vunpack.c.l.b16 %v5566
        %v5957 = vunpack.c.h.b16 %v5566
        %v5958 = vunpack.c.l.b16 %v5567
        %v5959 = vunpack.c.h.b16 %v5567
        %v5960 = vunpack.c.l.b16 %v5568
        %v5961 = vunpack.c.h.b16 %v5568
        %v5962 = vunpack.c.l.b16 %v5569
        %v5963 = vunpack.c.h.b16 %v5569
        %v5964 = vunpack.c.l.b16 %v5570
        %v5965 = vunpack.c.h.b16 %v5570
        %v5966 = vunpack.c.l.b16 %v5571
        %v5967 = vunpack.c.h.b16 %v5571
        %v5968 = vunpack.c.l.b16 %v5572
        %v5969 = vunpack.c.h.b16 %v5572
        %v5970 = vunpack.c.l.b16 %v5573
        %v5971 = vunpack.c.h.b16 %v5573
        %v5972 = vunpack.c.l.b16 %v5574
        %v5973 = vunpack.c.h.b16 %v5574
        %v5974 = vpack.c.b16 %v5722, %v5718
        %v5975 = vpack.c.b16 %v5723, %v5719
        %v5976 = vpack.c.b16 %v5724, %v5720
        %v5977 = vpack.c.b16 %v5725, %v5721
        %v5978 = vpack.c.b16 %v5730, %v5726
        %v5979 = vpack.c.b16 %v5731, %v5727
        %v5980 = vpack.c.b16 %v5732, %v5728
        %v5981 = vpack.c.b16 %v5733, %v5729
        %v5982 = vpack.c.b16 %v5738, %v5734
        %v5983 = vpack.c.b16 %v5739, %v5735
        %v5984 = vpack.c.b16 %v5740, %v5736
        %v5985 = vpack.c.b16 %v5741, %v5737
        %v5986 = vpack.c.b16 %v5746, %v5742
        %v5987 = vpack.c.b16 %v5747, %v5743
        %v5988 = vpack.c.b16 %v5748, %v5744
        %v5989 = vpack.c.b16 %v5749, %v5745
        %v5990 = vpack.c.b16 %v5754, %v5750
        %v5991 = vpack.c.b16 %v5755, %v5751
        %v5992 = vpack.c.b16 %v5756, %v5752
        %v5993 = vpack.c.b16 %v5757, %v5753
        %v5994 = vpack.c.b16 %v5762, %v5758
        %v5995 = vpack.c.b16 %v5763, %v5759
        %v5996 = vpack.c.b16 %v5764, %v5760
        %v5997 = vpack.c.b16 %v5765, %v5761
        %v5998 = vpack.c.b16 %v5770, %v5766
        %v5999 = vpack.c.b16 %v5771, %v5767
        %v6000 = vpack.c.b16 %v5772, %v5768
        %v6001 = vpack.c.b16 %v5773, %v5769
        %v6002 = vpack.c.b16 %v5778, %v5774
        %v6003 = vpack.c.b16 %v5779, %v5775
        %v6004 = vpack.c.b16 %v5780, %v5776
        %v6005 = vpack.c.b16 %v5781, %v5777
        %v6006 = vpack.c.b16 %v5786, %v5782
        %v6007 = vpack.c.b16 %v5787, %v5783
        %v6008 = vpack.c.b16 %v5788, %v5784
        %v6009 = vpack.c.b16 %v5789, %v5785
        %v6010 = vpack.c.b16 %v5794, %v5790
        %v6011 = vpack.c.b16 %v5795, %v5791
        %v6012 = vpack.c.b16 %v5796, %v5792
        %v6013 = vpack.c.b16 %v5797, %v5793
        %v6014 = vpack.c.b16 %v5802, %v5798
        %v6015 = vpack.c.b16 %v5803, %v5799
        %v6016 = vpack.c.b16 %v5804, %v5800
        %v6017 = vpack.c.b16 %v5805, %v5801
        %v6018 = vpack.c.b16 %v5810, %v5806
        %v6019 = vpack.c.b16 %v5811, %v5807
        %v6020 = vpack.c.b16 %v5812, %v5808
        %v6021 = vpack.c.b16 %v5813, %v5809
        %v6022 = vpack.c.b16 %v5818, %v5814
        %v6023 = vpack.c.b16 %v5819, %v5815
        %v6024 = vpack.c.b16 %v5820, %v5816
        %v6025 = vpack.c.b16 %v5821, %v5817
        %v6026 = vpack.c.b16 %v5826, %v5822
        %v6027 = vpack.c.b16 %v5827, %v5823
        %v6028 = vpack.c.b16 %v5828, %v5824
        %v6029 = vpack.c.b16 %v5829, %v5825
        %v6030 = vpack.c.b16 %v5834, %v5830
        %v6031 = vpack.c.b16 %v5835, %v5831
        %v6032 = vpack.c.b16 %v5836, %v5832
        %v6033 = vpack.c.b16 %v5837, %v5833
        %v6034 = vpack.c.b16 %v5842, %v5838
        %v6035 = vpack.c.b16 %v5843, %v5839
        %v6036 = vpack.c.b16 %v5844, %v5840
        %v6037 = vpack.c.b16 %v5845, %v5841
        %v6038 = vpack.c.b16 %v5850, %v5846
        %v6039 = vpack.c.b16 %v5851, %v5847
        %v6040 = vpack.c.b16 %v5852, %v5848
        %v6041 = vpack.c.b16 %v5853, %v5849
        %v6042 = vpack.c.b16 %v5858, %v5854
        %v6043 = vpack.c.b16 %v5859, %v5855
        %v6044 = vpack.c.b16 %v5860, %v5856
        %v6045 = vpack.c.b16 %v5861, %v5857
        %v6046 = vpack.c.b16 %v5866, %v5862
        %v6047 = vpack.c.b16 %v5867, %v5863
        %v6048 = vpack.c.b16 %v5868, %v5864
        %v6049 = vpack.c.b16 %v5869, %v5865
        %v6050 = vpack.c.b16 %v5874, %v5870
        %v6051 = vpack.c.b16 %v5875, %v5871
        %v6052 = vpack.c.b16 %v5876, %v5872
        %v6053 = vpack.c.b16 %v5877, %v5873
        %v6054 = vpack.c.b16 %v5882, %v5878
        %v6055 = vpack.c.b16 %v5883, %v5879
        %v6056 = vpack.c.b16 %v5884, %v5880
        %v6057 = vpack.c.b16 %v5885, %v5881
        %v6058 = vpack.c.b16 %v5890, %v5886
        %v6059 = vpack.c.b16 %v5891, %v5887
        %v6060 = vpack.c.b16 %v5892, %v5888
        %v6061 = vpack.c.b16 %v5893, %v5889
        %v6062 = vpack.c.b16 %v5898, %v5894
        %v6063 = vpack.c.b16 %v5899, %v5895
        %v6064 = vpack.c.b16 %v5900, %v5896
        %v6065 = vpack.c.b16 %v5901, %v5897
        %v6066 = vpack.c.b16 %v5906, %v5902
        %v6067 = vpack.c.b16 %v5907, %v5903
        %v6068 = vpack.c.b16 %v5908, %v5904
        %v6069 = vpack.c.b16 %v5909, %v5905
        %v6070 = vpack.c.b16 %v5914, %v5910
        %v6071 = vpack.c.b16 %v5915, %v5911
        %v6072 = vpack.c.b16 %v5916, %v5912
        %v6073 = vpack.c.b16 %v5917, %v5913
        %v6074 = vpack.c.b16 %v5922, %v5918
        %v6075 = vpack.c.b16 %v5923, %v5919
        %v6076 = vpack.c.b16 %v5924, %v5920
        %v6077 = vpack.c.b16 %v5925, %v5921
        %v6078 = vpack.c.b16 %v5930, %v5926
        %v6079 = vpack.c.b16 %v5931, %v5927
        %v6080 = vpack.c.b16 %v5932, %v5928
        %v6081 = vpack.c.b16 %v5933, %v5929
        %v6082 = vpack.c.b16 %v5938, %v5934
        %v6083 = vpack.c.b16 %v5939, %v5935
        %v6084 = vpack.c.b16 %v5940, %v5936
        %v6085 = vpack.c.b16 %v5941, %v5937
        %v6086 = vpack.c.b16 %v5946, %v5942
        %v6087 = vpack.c.b16 %v5947, %v5943
        %v6088 = vpack.c.b16 %v5948, %v5944
        %v6089 = vpack.c.b16 %v5949, %v5945
        %v6090 = vpack.c.b16 %v5954, %v5950
        %v6091 = vpack.c.b16 %v5955, %v5951
        %v6092 = vpack.c.b16 %v5956, %v5952
        %v6093 = vpack.c.b16 %v5957, %v5953
        %v6094 = vpack.c.b16 %v5962, %v5958
        %v6095 = vpack.c.b16 %v5963, %v5959
        %v6096 = vpack.c.b16 %v5964, %v5960
        %v6097 = vpack.c.b16 %v5965, %v5961
        %v6098 = vpack.c.b16 %v5970, %v5966
        %v6099 = vpack.c.b16 %v5971, %v5967
        %v6100 = vpack.c.b16 %v5972, %v5968
        %v6101 = vpack.c.b16 %v5973, %v5969
        %6230 = vmatpush.bf16.msra.mxu0 %v6002
        %6231 = vmatpush.bf16.msra.mxu0 %v5998
        %6232 = vmatpush.bf16.msra.mxu0 %v5994
        %6233 = vmatpush.bf16.msra.mxu0 %v5990
        %6234 = vmatpush.bf16.msra.mxu0 %v5986
        %6235 = vmatpush.bf16.msra.mxu0 %v5982
        %6236 = vmatpush.bf16.msra.mxu0 %v5978
        %6237 = vmatpush.bf16.msra.mxu0 %v5974
        %6238 = vmatmul.bf16.gmra.mxu0 %v5575
        %v6239 = vpop.f32.mrf.mxu0
        %v6240 = vadd.f32 %v5582, %v6239
        %v6241 = vpop.f32.mrf.mxu0
        %6242 = vdwg.mxu0
        %6243 = vmatpush.bf16.msra.mxu0 %v6034
        %6244 = vmatpush.bf16.msra.mxu0 %v6030
        %6245 = vmatpush.bf16.msra.mxu0 %v6026
        %6246 = vmatpush.bf16.msra.mxu0 %v6022
        %6247 = vmatpush.bf16.msra.mxu0 %v6018
        %6248 = vmatpush.bf16.msra.mxu0 %v6014
        %6249 = vmatpush.bf16.msra.mxu0 %v6010
        %6250 = vmatpush.bf16.msra.mxu0 %v6006
        %6251 = vmatmul.bf16.gmra.mxu0 %v5576
        %v6252 = vpop.f32.mrf.mxu0
        %v6253 = vadd.f32 %v6240, %v6252
        %v6254 = vpop.f32.mrf.mxu0
        %6255 = vdwg.mxu0
        %6256 = vmatpush.bf16.msra.mxu0 %v6066
        %6257 = vmatpush.bf16.msra.mxu0 %v6062
        %6258 = vmatpush.bf16.msra.mxu0 %v6058
        %6259 = vmatpush.bf16.msra.mxu0 %v6054
        %6260 = vmatpush.bf16.msra.mxu0 %v6050
        %6261 = vmatpush.bf16.msra.mxu0 %v6046
        %6262 = vmatpush.bf16.msra.mxu0 %v6042
        %6263 = vmatpush.bf16.msra.mxu0 %v6038
        %6264 = vmatmul.bf16.gmra.mxu0 %v5577
        %v6265 = vpop.f32.mrf.mxu0
        %v6266 = vadd.f32 %v6253, %v6265
        %v6267 = vpop.f32.mrf.mxu0
        %6268 = vdwg.mxu0
        %6269 = vmatpush.bf16.msra.mxu0 %v6098
        %6270 = vmatpush.bf16.msra.mxu0 %v6094
        %6271 = vmatpush.bf16.msra.mxu0 %v6090
        %6272 = vmatpush.bf16.msra.mxu0 %v6086
        %6273 = vmatpush.bf16.msra.mxu0 %v6082
        %6274 = vmatpush.bf16.msra.mxu0 %v6078
        %6275 = vmatpush.bf16.msra.mxu0 %v6074
        %6276 = vmatpush.bf16.msra.mxu0 %v6070
        %6277 = vmatmul.bf16.gmra.mxu0 %v5578
        %v6278 = vpop.f32.mrf.mxu0
        %v6279 = vadd.f32 %v6266, %v6278
        %v6280 = vpop.f32.mrf.mxu0
        %6281 = vdwg.mxu0
        %6282 = vmatpush.bf16.msra.mxu0 %v6003
        %6283 = vmatpush.bf16.msra.mxu0 %v5999
        %6284 = vmatpush.bf16.msra.mxu0 %v5995
        %6285 = vmatpush.bf16.msra.mxu0 %v5991
        %6286 = vmatpush.bf16.msra.mxu0 %v5987
        %6287 = vmatpush.bf16.msra.mxu0 %v5983
        %6288 = vmatpush.bf16.msra.mxu0 %v5979
        %6289 = vmatpush.bf16.msra.mxu0 %v5975
        %6290 = vmatmul.bf16.gmra.mxu0 %v5575
        %v6291 = vpop.f32.mrf.mxu0
        %v6292 = vadd.f32 %v5583, %v6291
        %v6293 = vpop.f32.mrf.mxu0
        %6294 = vdwg.mxu0
        %6295 = vmatpush.bf16.msra.mxu0 %v6035
        %6296 = vmatpush.bf16.msra.mxu0 %v6031
        %6297 = vmatpush.bf16.msra.mxu0 %v6027
        %6298 = vmatpush.bf16.msra.mxu0 %v6023
        %6299 = vmatpush.bf16.msra.mxu0 %v6019
        %6300 = vmatpush.bf16.msra.mxu0 %v6015
        %6301 = vmatpush.bf16.msra.mxu0 %v6011
        %6302 = vmatpush.bf16.msra.mxu0 %v6007
        %6303 = vmatmul.bf16.gmra.mxu0 %v5576
        %v6304 = vpop.f32.mrf.mxu0
        %v6305 = vadd.f32 %v6292, %v6304
        %v6306 = vpop.f32.mrf.mxu0
        %6307 = vdwg.mxu0
        %6308 = vmatpush.bf16.msra.mxu0 %v6067
        %6309 = vmatpush.bf16.msra.mxu0 %v6063
        %6310 = vmatpush.bf16.msra.mxu0 %v6059
        %6311 = vmatpush.bf16.msra.mxu0 %v6055
        %6312 = vmatpush.bf16.msra.mxu0 %v6051
        %6313 = vmatpush.bf16.msra.mxu0 %v6047
        %6314 = vmatpush.bf16.msra.mxu0 %v6043
        %6315 = vmatpush.bf16.msra.mxu0 %v6039
        %6316 = vmatmul.bf16.gmra.mxu0 %v5577
        %v6317 = vpop.f32.mrf.mxu0
        %v6318 = vadd.f32 %v6305, %v6317
        %v6319 = vpop.f32.mrf.mxu0
        %6320 = vdwg.mxu0
        %6321 = vmatpush.bf16.msra.mxu0 %v6099
        %6322 = vmatpush.bf16.msra.mxu0 %v6095
        %6323 = vmatpush.bf16.msra.mxu0 %v6091
        %6324 = vmatpush.bf16.msra.mxu0 %v6087
        %6325 = vmatpush.bf16.msra.mxu0 %v6083
        %6326 = vmatpush.bf16.msra.mxu0 %v6079
        %6327 = vmatpush.bf16.msra.mxu0 %v6075
        %6328 = vmatpush.bf16.msra.mxu0 %v6071
        %6329 = vmatmul.bf16.gmra.mxu0 %v5578
        %v6330 = vpop.f32.mrf.mxu0
        %v6331 = vadd.f32 %v6318, %v6330
        %v6332 = vpop.f32.mrf.mxu0
        %6333 = vdwg.mxu0
        %6334 = vmatpush.bf16.msra.mxu0 %v6004
        %6335 = vmatpush.bf16.msra.mxu0 %v6000
        %6336 = vmatpush.bf16.msra.mxu0 %v5996
        %6337 = vmatpush.bf16.msra.mxu0 %v5992
        %6338 = vmatpush.bf16.msra.mxu0 %v5988
        %6339 = vmatpush.bf16.msra.mxu0 %v5984
        %6340 = vmatpush.bf16.msra.mxu0 %v5980
        %6341 = vmatpush.bf16.msra.mxu0 %v5976
        %6342 = vmatmul.bf16.gmra.mxu0 %v5575
        %v6343 = vpop.f32.mrf.mxu0
        %v6344 = vadd.f32 %v5584, %v6343
        %v6345 = vpop.f32.mrf.mxu0
        %6346 = vdwg.mxu0
        %6347 = vmatpush.bf16.msra.mxu0 %v6036
        %6348 = vmatpush.bf16.msra.mxu0 %v6032
        %6349 = vmatpush.bf16.msra.mxu0 %v6028
        %6350 = vmatpush.bf16.msra.mxu0 %v6024
        %6351 = vmatpush.bf16.msra.mxu0 %v6020
        %6352 = vmatpush.bf16.msra.mxu0 %v6016
        %6353 = vmatpush.bf16.msra.mxu0 %v6012
        %6354 = vmatpush.bf16.msra.mxu0 %v6008
        %6355 = vmatmul.bf16.gmra.mxu0 %v5576
        %v6356 = vpop.f32.mrf.mxu0
        %v6357 = vadd.f32 %v6344, %v6356
        %v6358 = vpop.f32.mrf.mxu0
        %6359 = vdwg.mxu0
        %6360 = vmatpush.bf16.msra.mxu0 %v6068
        %6361 = vmatpush.bf16.msra.mxu0 %v6064
        %6362 = vmatpush.bf16.msra.mxu0 %v6060
        %6363 = vmatpush.bf16.msra.mxu0 %v6056
        %6364 = vmatpush.bf16.msra.mxu0 %v6052
        %6365 = vmatpush.bf16.msra.mxu0 %v6048
        %6366 = vmatpush.bf16.msra.mxu0 %v6044
        %6367 = vmatpush.bf16.msra.mxu0 %v6040
        %6368 = vmatmul.bf16.gmra.mxu0 %v5577
        %v6369 = vpop.f32.mrf.mxu0
        %v6370 = vadd.f32 %v6357, %v6369
        %v6371 = vpop.f32.mrf.mxu0
        %6372 = vdwg.mxu0
        %6373 = vmatpush.bf16.msra.mxu0 %v6100
        %6374 = vmatpush.bf16.msra.mxu0 %v6096
        %6375 = vmatpush.bf16.msra.mxu0 %v6092
        %6376 = vmatpush.bf16.msra.mxu0 %v6088
        %6377 = vmatpush.bf16.msra.mxu0 %v6084
        %6378 = vmatpush.bf16.msra.mxu0 %v6080
        %6379 = vmatpush.bf16.msra.mxu0 %v6076
        %6380 = vmatpush.bf16.msra.mxu0 %v6072
        %6381 = vmatmul.bf16.gmra.mxu0 %v5578
        %v6382 = vpop.f32.mrf.mxu0
        %v6383 = vadd.f32 %v6370, %v6382
        %v6384 = vpop.f32.mrf.mxu0
        %6385 = vdwg.mxu0
        %6386 = vmatpush.bf16.msra.mxu0 %v6005
        %6387 = vmatpush.bf16.msra.mxu0 %v6001
        %6388 = vmatpush.bf16.msra.mxu0 %v5997
        %6389 = vmatpush.bf16.msra.mxu0 %v5993
        %6390 = vmatpush.bf16.msra.mxu0 %v5989
        %6391 = vmatpush.bf16.msra.mxu0 %v5985
        %6392 = vmatpush.bf16.msra.mxu0 %v5981
        %6393 = vmatpush.bf16.msra.mxu0 %v5977
        %6394 = vmatmul.bf16.gmra.mxu0 %v5575
        %v6395 = vpop.f32.mrf.mxu0
        %v6396 = vadd.f32 %v5585, %v6395
        %v6397 = vpop.f32.mrf.mxu0
        %6398 = vdwg.mxu0
        %6399 = vmatpush.bf16.msra.mxu0 %v6037
        %6400 = vmatpush.bf16.msra.mxu0 %v6033
        %6401 = vmatpush.bf16.msra.mxu0 %v6029
        %6402 = vmatpush.bf16.msra.mxu0 %v6025
        %6403 = vmatpush.bf16.msra.mxu0 %v6021
        %6404 = vmatpush.bf16.msra.mxu0 %v6017
        %6405 = vmatpush.bf16.msra.mxu0 %v6013
        %6406 = vmatpush.bf16.msra.mxu0 %v6009
        %6407 = vmatmul.bf16.gmra.mxu0 %v5576
        %v6408 = vpop.f32.mrf.mxu0
        %v6409 = vadd.f32 %v6396, %v6408
        %v6410 = vpop.f32.mrf.mxu0
        %6411 = vdwg.mxu0
        %6412 = vmatpush.bf16.msra.mxu0 %v6069
        %6413 = vmatpush.bf16.msra.mxu0 %v6065
        %6414 = vmatpush.bf16.msra.mxu0 %v6061
        %6415 = vmatpush.bf16.msra.mxu0 %v6057
        %6416 = vmatpush.bf16.msra.mxu0 %v6053
        %6417 = vmatpush.bf16.msra.mxu0 %v6049
        %6418 = vmatpush.bf16.msra.mxu0 %v6045
        %6419 = vmatpush.bf16.msra.mxu0 %v6041
        %6420 = vmatmul.bf16.gmra.mxu0 %v5577
        %v6421 = vpop.f32.mrf.mxu0
        %v6422 = vadd.f32 %v6409, %v6421
        %v6423 = vpop.f32.mrf.mxu0
        %6424 = vdwg.mxu0
        %6425 = vmatpush.bf16.msra.mxu0 %v6101
        %6426 = vmatpush.bf16.msra.mxu0 %v6097
        %6427 = vmatpush.bf16.msra.mxu0 %v6093
        %6428 = vmatpush.bf16.msra.mxu0 %v6089
        %6429 = vmatpush.bf16.msra.mxu0 %v6085
        %6430 = vmatpush.bf16.msra.mxu0 %v6081
        %6431 = vmatpush.bf16.msra.mxu0 %v6077
        %6432 = vmatpush.bf16.msra.mxu0 %v6073
        %6433 = vmatmul.bf16.gmra.mxu0 %v5578
        %v6434 = vpop.f32.mrf.mxu0
        %v6435 = vadd.f32 %v6422, %v6434
        %v6436 = vpop.f32.mrf.mxu0
        %6437 = vdwg.mxu0
        %v6438 = vmax.f32 %v6279, 0.0
        %v6439 = vmax.f32 %v6331, 0.0
        %v6440 = vmax.f32 %v6383, 0.0
        %v6441 = vmax.f32 %v6435, 0.0
        %v6442 = vld [vmem:[#allocation11 + $0x20] sm:$0xff]
        %v6443 = vld [vmem:[#allocation11 + $0x5c] sm:$0xff]
        %v6444 = vld [vmem:[#allocation11 + $0x98] sm:$0xff]
        %v6445 = vld [vmem:[#allocation11 + $0xd4] sm:$0xff]
        %v6446 = vld [vmem:[#allocation11 + $0x110] sm:$0xff]
        %v6447 = vld [vmem:[#allocation11 + $0x14c] sm:$0xff]
        %v6448 = vld [vmem:[#allocation11 + $0x188] sm:$0xff]
        %v6449 = vld [vmem:[#allocation11 + $0x1c4] sm:$0xff]
        %v6450 = vld [vmem:[#allocation11 + $0x200] sm:$0xff]
        %v6451 = vld [vmem:[#allocation11 + $0x23c] sm:$0xff]
        %v6452 = vld [vmem:[#allocation11 + $0x278] sm:$0xff]
        %v6453 = vld [vmem:[#allocation11 + $0x2b4] sm:$0xff]
        %v6454 = vld [vmem:[#allocation11 + $0x2f0] sm:$0xff]
        %v6455 = vld [vmem:[#allocation11 + $0x32c] sm:$0xff]
        %v6456 = vld [vmem:[#allocation11 + $0x368] sm:$0xff]
        %v6457 = vld [vmem:[#allocation11 + $0x3a4] sm:$0xff]
        %v6458 = vld [vmem:[#allocation11 + $0x3e0] sm:$0xff]
        %v6459 = vld [vmem:[#allocation11 + $0x41c] sm:$0xff]
        %v6460 = vld [vmem:[#allocation11 + $0x458] sm:$0xff]
        %v6461 = vld [vmem:[#allocation11 + $0x494] sm:$0xff]
        %v6462 = vld [vmem:[#allocation11 + $0x4d0] sm:$0xff]
        %v6463 = vld [vmem:[#allocation11 + $0x50c] sm:$0xff]
        %v6464 = vld [vmem:[#allocation11 + $0x548] sm:$0xff]
        %v6465 = vld [vmem:[#allocation11 + $0x584] sm:$0xff]
        %v6466 = vld [vmem:[#allocation11 + $0x5c0] sm:$0xff]
        %v6467 = vld [vmem:[#allocation11 + $0x5fc] sm:$0xff]
        %v6468 = vld [vmem:[#allocation11 + $0x638] sm:$0xff]
        %v6469 = vld [vmem:[#allocation11 + $0x674] sm:$0xff]
        %v6470 = vld [vmem:[#allocation11 + $0x6b0] sm:$0xff]
        %v6471 = vld [vmem:[#allocation11 + $0x6ec] sm:$0xff]
        %v6472 = vld [vmem:[#allocation11 + $0x728] sm:$0xff]
        %v6473 = vld [vmem:[#allocation11 + $0x764] sm:$0xff]
        %v6474 = vld [vmem:[#allocation11 + $0x7a0] sm:$0xff]
        %v6475 = vld [vmem:[#allocation11 + $0x7dc] sm:$0xff]
        %v6476 = vld [vmem:[#allocation11 + $0x818] sm:$0xff]
        %v6477 = vld [vmem:[#allocation11 + $0x854] sm:$0xff]
        %v6478 = vld [vmem:[#allocation11 + $0x890] sm:$0xff]
        %v6479 = vld [vmem:[#allocation11 + $0x8cc] sm:$0xff]
        %v6480 = vld [vmem:[#allocation11 + $0x908] sm:$0xff]
        %v6481 = vld [vmem:[#allocation11 + $0x944] sm:$0xff]
        %v6482 = vld [vmem:[#allocation11 + $0x980] sm:$0xff]
        %v6483 = vld [vmem:[#allocation11 + $0x9bc] sm:$0xff]
        %v6484 = vld [vmem:[#allocation11 + $0x9f8] sm:$0xff]
        %v6485 = vld [vmem:[#allocation11 + $0xa34] sm:$0xff]
        %v6486 = vld [vmem:[#allocation11 + $0xa70] sm:$0xff]
        %v6487 = vld [vmem:[#allocation11 + $0xaac] sm:$0xff]
        %v6488 = vld [vmem:[#allocation11 + $0xae8] sm:$0xff]
        %v6489 = vld [vmem:[#allocation11 + $0xb24] sm:$0xff]
        %v6490 = vld [vmem:[#allocation11 + $0xb60] sm:$0xff]
        %v6491 = vld [vmem:[#allocation11 + $0xb9c] sm:$0xff]
        %v6492 = vld [vmem:[#allocation11 + $0xbd8] sm:$0xff]
        %v6493 = vld [vmem:[#allocation11 + $0xc14] sm:$0xff]
        %v6494 = vld [vmem:[#allocation11 + $0xc50] sm:$0xff]
        %v6495 = vld [vmem:[#allocation11 + $0xc8c] sm:$0xff]
        %v6496 = vld [vmem:[#allocation11 + $0xcc8] sm:$0xff]
        %v6497 = vld [vmem:[#allocation11 + $0xd04] sm:$0xff]
        %v6498 = vld [vmem:[#allocation11 + $0xd40] sm:$0xff]
        %v6499 = vld [vmem:[#allocation11 + $0xd7c] sm:$0xff]
        %v6500 = vld [vmem:[#allocation11 + $0xdb8] sm:$0xff]
        %v6501 = vld [vmem:[#allocation11 + $0xdf4] sm:$0xff]
        %v6502 = vld [vmem:[#allocation11 + $0xe30] sm:$0xff]
        %v6503 = vld [vmem:[#allocation11 + $0xe6c] sm:$0xff]
        %v6504 = vld [vmem:[#allocation11 + $0xea8] sm:$0xff]
        %v6505 = vld [vmem:[#allocation11 + $0xee4] sm:$0xff]
        %v6506 = vpack.c.bf16 %v6438, %v6438
        %v6507 = vpack.c.bf16 %v6439, %v6439
        %v6508 = vpack.c.bf16 %v6440, %v6440
        %v6509 = vpack.c.bf16 %v6441, %v6441
        %s6510 = scalar_lea.vmem [#allocation14], 2
        %v6511 = vld [vmem:[%s6510] ss:$8 sm:$0x3]
        %v6513 = vperm.slane %v6511, 0
        %v6514 = vperm.slane %v6511, 1
        %v6581 = vunpack.c.l.b16 %v6442
        %v6582 = vunpack.c.h.b16 %v6442
        %v6583 = vunpack.c.l.b16 %v6443
        %v6584 = vunpack.c.h.b16 %v6443
        %v6585 = vunpack.c.l.b16 %v6444
        %v6586 = vunpack.c.h.b16 %v6444
        %v6587 = vunpack.c.l.b16 %v6445
        %v6588 = vunpack.c.h.b16 %v6445
        %v6589 = vunpack.c.l.b16 %v6446
        %v6590 = vunpack.c.h.b16 %v6446
        %v6591 = vunpack.c.l.b16 %v6447
        %v6592 = vunpack.c.h.b16 %v6447
        %v6593 = vunpack.c.l.b16 %v6448
        %v6594 = vunpack.c.h.b16 %v6448
        %v6595 = vunpack.c.l.b16 %v6449
        %v6596 = vunpack.c.h.b16 %v6449
        %v6597 = vunpack.c.l.b16 %v6450
        %v6598 = vunpack.c.h.b16 %v6450
        %v6599 = vunpack.c.l.b16 %v6451
        %v6600 = vunpack.c.h.b16 %v6451
        %v6601 = vunpack.c.l.b16 %v6452
        %v6602 = vunpack.c.h.b16 %v6452
        %v6603 = vunpack.c.l.b16 %v6453
        %v6604 = vunpack.c.h.b16 %v6453
        %v6605 = vunpack.c.l.b16 %v6454
        %v6606 = vunpack.c.h.b16 %v6454
        %v6607 = vunpack.c.l.b16 %v6455
        %v6608 = vunpack.c.h.b16 %v6455
        %v6609 = vunpack.c.l.b16 %v6456
        %v6610 = vunpack.c.h.b16 %v6456
        %v6611 = vunpack.c.l.b16 %v6457
        %v6612 = vunpack.c.h.b16 %v6457
        %v6613 = vunpack.c.l.b16 %v6458
        %v6614 = vunpack.c.h.b16 %v6458
        %v6615 = vunpack.c.l.b16 %v6459
        %v6616 = vunpack.c.h.b16 %v6459
        %v6617 = vunpack.c.l.b16 %v6460
        %v6618 = vunpack.c.h.b16 %v6460
        %v6619 = vunpack.c.l.b16 %v6461
        %v6620 = vunpack.c.h.b16 %v6461
        %v6621 = vunpack.c.l.b16 %v6462
        %v6622 = vunpack.c.h.b16 %v6462
        %v6623 = vunpack.c.l.b16 %v6463
        %v6624 = vunpack.c.h.b16 %v6463
        %v6625 = vunpack.c.l.b16 %v6464
        %v6626 = vunpack.c.h.b16 %v6464
        %v6627 = vunpack.c.l.b16 %v6465
        %v6628 = vunpack.c.h.b16 %v6465
        %v6629 = vunpack.c.l.b16 %v6466
        %v6630 = vunpack.c.h.b16 %v6466
        %v6631 = vunpack.c.l.b16 %v6467
        %v6632 = vunpack.c.h.b16 %v6467
        %v6633 = vunpack.c.l.b16 %v6468
        %v6634 = vunpack.c.h.b16 %v6468
        %v6635 = vunpack.c.l.b16 %v6469
        %v6636 = vunpack.c.h.b16 %v6469
        %v6637 = vunpack.c.l.b16 %v6470
        %v6638 = vunpack.c.h.b16 %v6470
        %v6639 = vunpack.c.l.b16 %v6471
        %v6640 = vunpack.c.h.b16 %v6471
        %v6641 = vunpack.c.l.b16 %v6472
        %v6642 = vunpack.c.h.b16 %v6472
        %v6643 = vunpack.c.l.b16 %v6473
        %v6644 = vunpack.c.h.b16 %v6473
        %v6645 = vunpack.c.l.b16 %v6474
        %v6646 = vunpack.c.h.b16 %v6474
        %v6647 = vunpack.c.l.b16 %v6475
        %v6648 = vunpack.c.h.b16 %v6475
        %v6649 = vunpack.c.l.b16 %v6476
        %v6650 = vunpack.c.h.b16 %v6476
        %v6651 = vunpack.c.l.b16 %v6477
        %v6652 = vunpack.c.h.b16 %v6477
        %v6653 = vunpack.c.l.b16 %v6478
        %v6654 = vunpack.c.h.b16 %v6478
        %v6655 = vunpack.c.l.b16 %v6479
        %v6656 = vunpack.c.h.b16 %v6479
        %v6657 = vunpack.c.l.b16 %v6480
        %v6658 = vunpack.c.h.b16 %v6480
        %v6659 = vunpack.c.l.b16 %v6481
        %v6660 = vunpack.c.h.b16 %v6481
        %v6661 = vunpack.c.l.b16 %v6482
        %v6662 = vunpack.c.h.b16 %v6482
        %v6663 = vunpack.c.l.b16 %v6483
        %v6664 = vunpack.c.h.b16 %v6483
        %v6665 = vunpack.c.l.b16 %v6484
        %v6666 = vunpack.c.h.b16 %v6484
        %v6667 = vunpack.c.l.b16 %v6485
        %v6668 = vunpack.c.h.b16 %v6485
        %v6669 = vunpack.c.l.b16 %v6486
        %v6670 = vunpack.c.h.b16 %v6486
        %v6671 = vunpack.c.l.b16 %v6487
        %v6672 = vunpack.c.h.b16 %v6487
        %v6673 = vunpack.c.l.b16 %v6488
        %v6674 = vunpack.c.h.b16 %v6488
        %v6675 = vunpack.c.l.b16 %v6489
        %v6676 = vunpack.c.h.b16 %v6489
        %v6677 = vunpack.c.l.b16 %v6490
        %v6678 = vunpack.c.h.b16 %v6490
        %v6679 = vunpack.c.l.b16 %v6491
        %v6680 = vunpack.c.h.b16 %v6491
        %v6681 = vunpack.c.l.b16 %v6492
        %v6682 = vunpack.c.h.b16 %v6492
        %v6683 = vunpack.c.l.b16 %v6493
        %v6684 = vunpack.c.h.b16 %v6493
        %v6685 = vunpack.c.l.b16 %v6494
        %v6686 = vunpack.c.h.b16 %v6494
        %v6687 = vunpack.c.l.b16 %v6495
        %v6688 = vunpack.c.h.b16 %v6495
        %v6689 = vunpack.c.l.b16 %v6496
        %v6690 = vunpack.c.h.b16 %v6496
        %v6691 = vunpack.c.l.b16 %v6497
        %v6692 = vunpack.c.h.b16 %v6497
        %v6693 = vunpack.c.l.b16 %v6498
        %v6694 = vunpack.c.h.b16 %v6498
        %v6695 = vunpack.c.l.b16 %v6499
        %v6696 = vunpack.c.h.b16 %v6499
        %v6697 = vunpack.c.l.b16 %v6500
        %v6698 = vunpack.c.h.b16 %v6500
        %v6699 = vunpack.c.l.b16 %v6501
        %v6700 = vunpack.c.h.b16 %v6501
        %v6701 = vunpack.c.l.b16 %v6502
        %v6702 = vunpack.c.h.b16 %v6502
        %v6703 = vunpack.c.l.b16 %v6503
        %v6704 = vunpack.c.h.b16 %v6503
        %v6705 = vunpack.c.l.b16 %v6504
        %v6706 = vunpack.c.h.b16 %v6504
        %v6707 = vunpack.c.l.b16 %v6505
        %v6708 = vunpack.c.h.b16 %v6505
        %v6709 = vpack.c.b16 %v6583, %v6581
        %v6710 = vpack.c.b16 %v6584, %v6582
        %v6711 = vpack.c.b16 %v6587, %v6585
        %v6712 = vpack.c.b16 %v6588, %v6586
        %v6713 = vpack.c.b16 %v6591, %v6589
        %v6714 = vpack.c.b16 %v6592, %v6590
        %v6715 = vpack.c.b16 %v6595, %v6593
        %v6716 = vpack.c.b16 %v6596, %v6594
        %v6717 = vpack.c.b16 %v6599, %v6597
        %v6718 = vpack.c.b16 %v6600, %v6598
        %v6719 = vpack.c.b16 %v6603, %v6601
        %v6720 = vpack.c.b16 %v6604, %v6602
        %v6721 = vpack.c.b16 %v6607, %v6605
        %v6722 = vpack.c.b16 %v6608, %v6606
        %v6723 = vpack.c.b16 %v6611, %v6609
        %v6724 = vpack.c.b16 %v6612, %v6610
        %v6725 = vpack.c.b16 %v6615, %v6613
        %v6726 = vpack.c.b16 %v6616, %v6614
        %v6727 = vpack.c.b16 %v6619, %v6617
        %v6728 = vpack.c.b16 %v6620, %v6618
        %v6729 = vpack.c.b16 %v6623, %v6621
        %v6730 = vpack.c.b16 %v6624, %v6622
        %v6731 = vpack.c.b16 %v6627, %v6625
        %v6732 = vpack.c.b16 %v6628, %v6626
        %v6733 = vpack.c.b16 %v6631, %v6629
        %v6734 = vpack.c.b16 %v6632, %v6630
        %v6735 = vpack.c.b16 %v6635, %v6633
        %v6736 = vpack.c.b16 %v6636, %v6634
        %v6737 = vpack.c.b16 %v6639, %v6637
        %v6738 = vpack.c.b16 %v6640, %v6638
        %v6739 = vpack.c.b16 %v6643, %v6641
        %v6740 = vpack.c.b16 %v6644, %v6642
        %v6741 = vpack.c.b16 %v6647, %v6645
        %v6742 = vpack.c.b16 %v6648, %v6646
        %v6743 = vpack.c.b16 %v6651, %v6649
        %v6744 = vpack.c.b16 %v6652, %v6650
        %v6745 = vpack.c.b16 %v6655, %v6653
        %v6746 = vpack.c.b16 %v6656, %v6654
        %v6747 = vpack.c.b16 %v6659, %v6657
        %v6748 = vpack.c.b16 %v6660, %v6658
        %v6749 = vpack.c.b16 %v6663, %v6661
        %v6750 = vpack.c.b16 %v6664, %v6662
        %v6751 = vpack.c.b16 %v6667, %v6665
        %v6752 = vpack.c.b16 %v6668, %v6666
        %v6753 = vpack.c.b16 %v6671, %v6669
        %v6754 = vpack.c.b16 %v6672, %v6670
        %v6755 = vpack.c.b16 %v6675, %v6673
        %v6756 = vpack.c.b16 %v6676, %v6674
        %v6757 = vpack.c.b16 %v6679, %v6677
        %v6758 = vpack.c.b16 %v6680, %v6678
        %v6759 = vpack.c.b16 %v6683, %v6681
        %v6760 = vpack.c.b16 %v6684, %v6682
        %v6761 = vpack.c.b16 %v6687, %v6685
        %v6762 = vpack.c.b16 %v6688, %v6686
        %v6763 = vpack.c.b16 %v6691, %v6689
        %v6764 = vpack.c.b16 %v6692, %v6690
        %v6765 = vpack.c.b16 %v6695, %v6693
        %v6766 = vpack.c.b16 %v6696, %v6694
        %v6767 = vpack.c.b16 %v6699, %v6697
        %v6768 = vpack.c.b16 %v6700, %v6698
        %v6769 = vpack.c.b16 %v6703, %v6701
        %v6770 = vpack.c.b16 %v6704, %v6702
        %v6771 = vpack.c.b16 %v6707, %v6705
        %v6772 = vpack.c.b16 %v6708, %v6706
        %6837 = vmatpush.bf16.msra.mxu0 %v6723
        %6838 = vmatpush.bf16.msra.mxu0 %v6721
        %6839 = vmatpush.bf16.msra.mxu0 %v6719
        %6840 = vmatpush.bf16.msra.mxu0 %v6717
        %6841 = vmatpush.bf16.msra.mxu0 %v6715
        %6842 = vmatpush.bf16.msra.mxu0 %v6713
        %6843 = vmatpush.bf16.msra.mxu0 %v6711
        %6844 = vmatpush.bf16.msra.mxu0 %v6709
        %6845 = vmatmul.bf16.gmra.mxu0 %v6506
        %v6846 = vpop.f32.mrf.mxu0
        %v6847 = vadd.f32 %v6513, %v6846
        %v6848 = vpop.f32.mrf.mxu0
        %6849 = vdwg.mxu0
        %6850 = vmatpush.bf16.msra.mxu0 %v6739
        %6851 = vmatpush.bf16.msra.mxu0 %v6737
        %6852 = vmatpush.bf16.msra.mxu0 %v6735
        %6853 = vmatpush.bf16.msra.mxu0 %v6733
        %6854 = vmatpush.bf16.msra.mxu0 %v6731
        %6855 = vmatpush.bf16.msra.mxu0 %v6729
        %6856 = vmatpush.bf16.msra.mxu0 %v6727
        %6857 = vmatpush.bf16.msra.mxu0 %v6725
        %6858 = vmatmul.bf16.gmra.mxu0 %v6507
        %v6859 = vpop.f32.mrf.mxu0
        %v6860 = vadd.f32 %v6847, %v6859
        %v6861 = vpop.f32.mrf.mxu0
        %6862 = vdwg.mxu0
        %6863 = vmatpush.bf16.msra.mxu0 %v6755
        %6864 = vmatpush.bf16.msra.mxu0 %v6753
        %6865 = vmatpush.bf16.msra.mxu0 %v6751
        %6866 = vmatpush.bf16.msra.mxu0 %v6749
        %6867 = vmatpush.bf16.msra.mxu0 %v6747
        %6868 = vmatpush.bf16.msra.mxu0 %v6745
        %6869 = vmatpush.bf16.msra.mxu0 %v6743
        %6870 = vmatpush.bf16.msra.mxu0 %v6741
        %6871 = vmatmul.bf16.gmra.mxu0 %v6508
        %v6872 = vpop.f32.mrf.mxu0
        %v6873 = vadd.f32 %v6860, %v6872
        %v6874 = vpop.f32.mrf.mxu0
        %6875 = vdwg.mxu0
        %6876 = vmatpush.bf16.msra.mxu0 %v6771
        %6877 = vmatpush.bf16.msra.mxu0 %v6769
        %6878 = vmatpush.bf16.msra.mxu0 %v6767
        %6879 = vmatpush.bf16.msra.mxu0 %v6765
        %6880 = vmatpush.bf16.msra.mxu0 %v6763
        %6881 = vmatpush.bf16.msra.mxu0 %v6761
        %6882 = vmatpush.bf16.msra.mxu0 %v6759
        %6883 = vmatpush.bf16.msra.mxu0 %v6757
        %6884 = vmatmul.bf16.gmra.mxu0 %v6509
        %v6885 = vpop.f32.mrf.mxu0
        %v6886 = vadd.f32 %v6873, %v6885
        %v6887 = vpop.f32.mrf.mxu0
        %6888 = vdwg.mxu0
        %6889 = vmatpush.bf16.msra.mxu0 %v6724
        %6890 = vmatpush.bf16.msra.mxu0 %v6722
        %6891 = vmatpush.bf16.msra.mxu0 %v6720
        %6892 = vmatpush.bf16.msra.mxu0 %v6718
        %6893 = vmatpush.bf16.msra.mxu0 %v6716
        %6894 = vmatpush.bf16.msra.mxu0 %v6714
        %6895 = vmatpush.bf16.msra.mxu0 %v6712
        %6896 = vmatpush.bf16.msra.mxu0 %v6710
        %6897 = vmatmul.bf16.gmra.mxu0 %v6506
        %v6898 = vpop.f32.mrf.mxu0
        %v6899 = vadd.f32 %v6514, %v6898
        %v6900 = vpop.f32.mrf.mxu0
        %6901 = vdwg.mxu0
        %6902 = vmatpush.bf16.msra.mxu0 %v6740
        %6903 = vmatpush.bf16.msra.mxu0 %v6738
        %6904 = vmatpush.bf16.msra.mxu0 %v6736
        %6905 = vmatpush.bf16.msra.mxu0 %v6734
        %6906 = vmatpush.bf16.msra.mxu0 %v6732
        %6907 = vmatpush.bf16.msra.mxu0 %v6730
        %6908 = vmatpush.bf16.msra.mxu0 %v6728
        %6909 = vmatpush.bf16.msra.mxu0 %v6726
        %6910 = vmatmul.bf16.gmra.mxu0 %v6507
        %v6911 = vpop.f32.mrf.mxu0
        %v6912 = vadd.f32 %v6899, %v6911
        %v6913 = vpop.f32.mrf.mxu0
        %6914 = vdwg.mxu0
        %6915 = vmatpush.bf16.msra.mxu0 %v6756
        %6916 = vmatpush.bf16.msra.mxu0 %v6754
        %6917 = vmatpush.bf16.msra.mxu0 %v6752
        %6918 = vmatpush.bf16.msra.mxu0 %v6750
        %6919 = vmatpush.bf16.msra.mxu0 %v6748
        %6920 = vmatpush.bf16.msra.mxu0 %v6746
        %6921 = vmatpush.bf16.msra.mxu0 %v6744
        %6922 = vmatpush.bf16.msra.mxu0 %v6742
        %6923 = vmatmul.bf16.gmra.mxu0 %v6508
        %v6924 = vpop.f32.mrf.mxu0
        %v6925 = vadd.f32 %v6912, %v6924
        %v6926 = vpop.f32.mrf.mxu0
        %6927 = vdwg.mxu0
        %6928 = vmatpush.bf16.msra.mxu0 %v6772
        %6929 = vmatpush.bf16.msra.mxu0 %v6770
        %6930 = vmatpush.bf16.msra.mxu0 %v6768
        %6931 = vmatpush.bf16.msra.mxu0 %v6766
        %6932 = vmatpush.bf16.msra.mxu0 %v6764
        %6933 = vmatpush.bf16.msra.mxu0 %v6762
        %6934 = vmatpush.bf16.msra.mxu0 %v6760
        %6935 = vmatpush.bf16.msra.mxu0 %v6758
        %6936 = vmatmul.bf16.gmra.mxu0 %v6509
        %v6937 = vpop.f32.mrf.mxu0
        %v6938 = vadd.f32 %v6925, %v6937
        %v6939 = vpop.f32.mrf.mxu0
        %6940 = vdwg.mxu0
        %v6941 = vmax.f32 %v6886, 0.0
        %v6942 = vmax.f32 %v6938, 0.0
        %v6943 = vld [vmem:[#allocation11 + $0x28] sm:$0xf]
        %v6944 = vld [vmem:[#allocation11 + $0x64] sm:$0xf]
        %v6945 = vld [vmem:[#allocation11 + $0xa0] sm:$0xf]
        %v6946 = vld [vmem:[#allocation11 + $0xdc] sm:$0xf]
        %v6947 = vld [vmem:[#allocation11 + $0x118] sm:$0xf]
        %v6948 = vld [vmem:[#allocation11 + $0x154] sm:$0xf]
        %v6949 = vld [vmem:[#allocation11 + $0x190] sm:$0xf]
        %v6950 = vld [vmem:[#allocation11 + $0x1cc] sm:$0xf]
        %v6951 = vld [vmem:[#allocation11 + $0x208] sm:$0xf]
        %v6952 = vld [vmem:[#allocation11 + $0x244] sm:$0xf]
        %v6953 = vld [vmem:[#allocation11 + $0x280] sm:$0xf]
        %v6954 = vld [vmem:[#allocation11 + $0x2bc] sm:$0xf]
        %v6955 = vld [vmem:[#allocation11 + $0x2f8] sm:$0xf]
        %v6956 = vld [vmem:[#allocation11 + $0x334] sm:$0xf]
        %v6957 = vld [vmem:[#allocation11 + $0x370] sm:$0xf]
        %v6958 = vld [vmem:[#allocation11 + $0x3ac] sm:$0xf]
        %v6959 = vld [vmem:[#allocation11 + $0x3e8] sm:$0xf]
        %v6960 = vld [vmem:[#allocation11 + $0x424] sm:$0xf]
        %v6961 = vld [vmem:[#allocation11 + $0x460] sm:$0xf]
        %v6962 = vld [vmem:[#allocation11 + $0x49c] sm:$0xf]
        %v6963 = vld [vmem:[#allocation11 + $0x4d8] sm:$0xf]
        %v6964 = vld [vmem:[#allocation11 + $0x514] sm:$0xf]
        %v6965 = vld [vmem:[#allocation11 + $0x550] sm:$0xf]
        %v6966 = vld [vmem:[#allocation11 + $0x58c] sm:$0xf]
        %v6967 = vld [vmem:[#allocation11 + $0x5c8] sm:$0xf]
        %v6968 = vld [vmem:[#allocation11 + $0x604] sm:$0xf]
        %v6969 = vld [vmem:[#allocation11 + $0x640] sm:$0xf]
        %v6970 = vld [vmem:[#allocation11 + $0x67c] sm:$0xf]
        %v6971 = vld [vmem:[#allocation11 + $0x6b8] sm:$0xf]
        %v6972 = vld [vmem:[#allocation11 + $0x6f4] sm:$0xf]
        %v6973 = vld [vmem:[#allocation11 + $0x730] sm:$0xf]
        %v6974 = vld [vmem:[#allocation11 + $0x76c] sm:$0xf]
        %v6975 = vpack.c.bf16 %v6941, %v6941
        %v6976 = vpack.c.bf16 %v6942, %v6942
        %v6977 = vld [vmem:[#allocation14 + $0x3] ss:$0 sm:$0xff]
        %v7010 = vunpack.c.l.b16 %v6943
        %v7011 = vunpack.c.l.b16 %v6944
        %v7012 = vunpack.c.l.b16 %v6945
        %v7013 = vunpack.c.l.b16 %v6946
        %v7014 = vunpack.c.l.b16 %v6947
        %v7015 = vunpack.c.l.b16 %v6948
        %v7016 = vunpack.c.l.b16 %v6949
        %v7017 = vunpack.c.l.b16 %v6950
        %v7018 = vunpack.c.l.b16 %v6951
        %v7019 = vunpack.c.l.b16 %v6952
        %v7020 = vunpack.c.l.b16 %v6953
        %v7021 = vunpack.c.l.b16 %v6954
        %v7022 = vunpack.c.l.b16 %v6955
        %v7023 = vunpack.c.l.b16 %v6956
        %v7024 = vunpack.c.l.b16 %v6957
        %v7025 = vunpack.c.l.b16 %v6958
        %v7026 = vunpack.c.l.b16 %v6959
        %v7027 = vunpack.c.l.b16 %v6960
        %v7028 = vunpack.c.l.b16 %v6961
        %v7029 = vunpack.c.l.b16 %v6962
        %v7030 = vunpack.c.l.b16 %v6963
        %v7031 = vunpack.c.l.b16 %v6964
        %v7032 = vunpack.c.l.b16 %v6965
        %v7033 = vunpack.c.l.b16 %v6966
        %v7034 = vunpack.c.l.b16 %v6967
        %v7035 = vunpack.c.l.b16 %v6968
        %v7036 = vunpack.c.l.b16 %v6969
        %v7037 = vunpack.c.l.b16 %v6970
        %v7038 = vunpack.c.l.b16 %v6971
        %v7039 = vunpack.c.l.b16 %v6972
        %v7040 = vunpack.c.l.b16 %v6973
        %v7041 = vunpack.c.l.b16 %v6974
        %v7042 = vpack.c.b16 %v7011, %v7010
        %v7043 = vpack.c.b16 %v7013, %v7012
        %v7044 = vpack.c.b16 %v7015, %v7014
        %v7045 = vpack.c.b16 %v7017, %v7016
        %v7046 = vpack.c.b16 %v7019, %v7018
        %v7047 = vpack.c.b16 %v7021, %v7020
        %v7048 = vpack.c.b16 %v7023, %v7022
        %v7049 = vpack.c.b16 %v7025, %v7024
        %v7050 = vpack.c.b16 %v7027, %v7026
        %v7051 = vpack.c.b16 %v7029, %v7028
        %v7052 = vpack.c.b16 %v7031, %v7030
        %v7053 = vpack.c.b16 %v7033, %v7032
        %v7054 = vpack.c.b16 %v7035, %v7034
        %v7055 = vpack.c.b16 %v7037, %v7036
        %v7056 = vpack.c.b16 %v7039, %v7038
        %v7057 = vpack.c.b16 %v7041, %v7040
        %7074 = vmatpush.bf16.msra.mxu0 %v7049
        %7075 = vmatpush.bf16.msra.mxu0 %v7048
        %7076 = vmatpush.bf16.msra.mxu0 %v7047
        %7077 = vmatpush.bf16.msra.mxu0 %v7046
        %7078 = vmatpush.bf16.msra.mxu0 %v7045
        %7079 = vmatpush.bf16.msra.mxu0 %v7044
        %7080 = vmatpush.bf16.msra.mxu0 %v7043
        %7081 = vmatpush.bf16.msra.mxu0 %v7042
        %7082 = vmatmul.bf16.gmra.mxu0 %v6975
        %v7083 = vpop.f32.mrf.mxu0
        %v7084 = vadd.f32 %v6977, %v7083
        %v7085 = vpop.f32.mrf.mxu0
        %7086 = vdwg.mxu0
        %7087 = vmatpush.bf16.msra.mxu0 %v7057
        %7088 = vmatpush.bf16.msra.mxu0 %v7056
        %7089 = vmatpush.bf16.msra.mxu0 %v7055
        %7090 = vmatpush.bf16.msra.mxu0 %v7054
        %7091 = vmatpush.bf16.msra.mxu0 %v7053
        %7092 = vmatpush.bf16.msra.mxu0 %v7052
        %7093 = vmatpush.bf16.msra.mxu0 %v7051
        %7094 = vmatpush.bf16.msra.mxu0 %v7050
        %7095 = vmatmul.bf16.gmra.mxu0 %v6976
        %v7096 = vpop.f32.mrf.mxu0
        %v7097 = vadd.f32 %v7084, %v7096
        %v7098 = vpop.f32.mrf.mxu0
        %7099 = vdwg.mxu0
        %v7100 = vld [vmem:[#allocation11 + $0x2c] sm:$0xff]
        %v7101 = vld [vmem:[#allocation11 + $0x68] sm:$0xff]
        %v7102 = vld [vmem:[#allocation11 + $0xa4] sm:$0xff]
        %v7103 = vld [vmem:[#allocation11 + $0xe0] sm:$0xff]
        %v7104 = vld [vmem:[#allocation11 + $0x11c] sm:$0xff]
        %v7105 = vld [vmem:[#allocation11 + $0x158] sm:$0xff]
        %v7106 = vld [vmem:[#allocation11 + $0x194] sm:$0xff]
        %v7107 = vld [vmem:[#allocation11 + $0x1d0] sm:$0xff]
        %v7108 = vld [vmem:[#allocation11 + $0x20c] sm:$0xff]
        %v7109 = vld [vmem:[#allocation11 + $0x248] sm:$0xff]
        %v7110 = vld [vmem:[#allocation11 + $0x284] sm:$0xff]
        %v7111 = vld [vmem:[#allocation11 + $0x2c0] sm:$0xff]
        %v7112 = vld [vmem:[#allocation11 + $0x2fc] sm:$0xff]
        %v7113 = vld [vmem:[#allocation11 + $0x338] sm:$0xff]
        %v7114 = vld [vmem:[#allocation11 + $0x374] sm:$0xff]
        %v7115 = vld [vmem:[#allocation11 + $0x3b0] sm:$0xff]
        %v7116 = vpack.c.bf16 %v7097, %v7097
        %s7117 = scalar_lea.vmem [#allocation14], 4
        %v7118 = vld [vmem:[%s7117] ss:$8 sm:$0x3]
        %v7120 = vperm.slane %v7118, 0
        %v7121 = vperm.slane %v7118, 1
        %v7140 = vunpack.c.l.b16 %v7100
        %v7141 = vunpack.c.h.b16 %v7100
        %v7142 = vunpack.c.l.b16 %v7101
        %v7143 = vunpack.c.h.b16 %v7101
        %v7144 = vunpack.c.l.b16 %v7102
        %v7145 = vunpack.c.h.b16 %v7102
        %v7146 = vunpack.c.l.b16 %v7103
        %v7147 = vunpack.c.h.b16 %v7103
        %v7148 = vunpack.c.l.b16 %v7104
        %v7149 = vunpack.c.h.b16 %v7104
        %v7150 = vunpack.c.l.b16 %v7105
        %v7151 = vunpack.c.h.b16 %v7105
        %v7152 = vunpack.c.l.b16 %v7106
        %v7153 = vunpack.c.h.b16 %v7106
        %v7154 = vunpack.c.l.b16 %v7107
        %v7155 = vunpack.c.h.b16 %v7107
        %v7156 = vunpack.c.l.b16 %v7108
        %v7157 = vunpack.c.h.b16 %v7108
        %v7158 = vunpack.c.l.b16 %v7109
        %v7159 = vunpack.c.h.b16 %v7109
        %v7160 = vunpack.c.l.b16 %v7110
        %v7161 = vunpack.c.h.b16 %v7110
        %v7162 = vunpack.c.l.b16 %v7111
        %v7163 = vunpack.c.h.b16 %v7111
        %v7164 = vunpack.c.l.b16 %v7112
        %v7165 = vunpack.c.h.b16 %v7112
        %v7166 = vunpack.c.l.b16 %v7113
        %v7167 = vunpack.c.h.b16 %v7113
        %v7168 = vunpack.c.l.b16 %v7114
        %v7169 = vunpack.c.h.b16 %v7114
        %v7170 = vunpack.c.l.b16 %v7115
        %v7171 = vunpack.c.h.b16 %v7115
        %v7172 = vpack.c.b16 %v7142, %v7140
        %v7173 = vpack.c.b16 %v7143, %v7141
        %v7174 = vpack.c.b16 %v7146, %v7144
        %v7175 = vpack.c.b16 %v7147, %v7145
        %v7176 = vpack.c.b16 %v7150, %v7148
        %v7177 = vpack.c.b16 %v7151, %v7149
        %v7178 = vpack.c.b16 %v7154, %v7152
        %v7179 = vpack.c.b16 %v7155, %v7153
        %v7180 = vpack.c.b16 %v7158, %v7156
        %v7181 = vpack.c.b16 %v7159, %v7157
        %v7182 = vpack.c.b16 %v7162, %v7160
        %v7183 = vpack.c.b16 %v7163, %v7161
        %v7184 = vpack.c.b16 %v7166, %v7164
        %v7185 = vpack.c.b16 %v7167, %v7165
        %v7186 = vpack.c.b16 %v7170, %v7168
        %v7187 = vpack.c.b16 %v7171, %v7169
        %7204 = vmatpush.bf16.msra.mxu0 %v7186
        %7205 = vmatpush.bf16.msra.mxu0 %v7184
        %7206 = vmatpush.bf16.msra.mxu0 %v7182
        %7207 = vmatpush.bf16.msra.mxu0 %v7180
        %7208 = vmatpush.bf16.msra.mxu0 %v7178
        %7209 = vmatpush.bf16.msra.mxu0 %v7176
        %7210 = vmatpush.bf16.msra.mxu0 %v7174
        %7211 = vmatpush.bf16.msra.mxu0 %v7172
        %7212 = vmatmul.bf16.gmra.mxu0 %v7116
        %v7213 = vpop.f32.mrf.mxu0
        %v7214 = vadd.f32 %v7120, %v7213
        %v7215 = vpop.f32.mrf.mxu0
        %7216 = vdwg.mxu0
        %7217 = vmatpush.bf16.msra.mxu0 %v7187
        %7218 = vmatpush.bf16.msra.mxu0 %v7185
        %7219 = vmatpush.bf16.msra.mxu0 %v7183
        %7220 = vmatpush.bf16.msra.mxu0 %v7181
        %7221 = vmatpush.bf16.msra.mxu0 %v7179
        %7222 = vmatpush.bf16.msra.mxu0 %v7177
        %7223 = vmatpush.bf16.msra.mxu0 %v7175
        %7224 = vmatpush.bf16.msra.mxu0 %v7173
        %7225 = vmatmul.bf16.gmra.mxu0 %v7116
        %v7226 = vpop.f32.mrf.mxu0
        %v7227 = vadd.f32 %v7121, %v7226
        %v7228 = vpop.f32.mrf.mxu0
        %7229 = vdwg.mxu0
        %v7230 = vmax.f32 %v7214, 0.0
        %v7231 = vmax.f32 %v7227, 0.0
        %v7232 = vld [vmem:[#allocation11 + $0x34] sm:$0xf]
        %v7233 = vld [vmem:[#allocation11 + $0x70] sm:$0xf]
        %v7234 = vld [vmem:[#allocation11 + $0xac] sm:$0xf]
        %v7235 = vld [vmem:[#allocation11 + $0xe8] sm:$0xf]
        %v7236 = vld [vmem:[#allocation11 + $0x124] sm:$0xf]
        %v7237 = vld [vmem:[#allocation11 + $0x160] sm:$0xf]
        %v7238 = vld [vmem:[#allocation11 + $0x19c] sm:$0xf]
        %v7239 = vld [vmem:[#allocation11 + $0x1d8] sm:$0xf]
        %v7240 = vld [vmem:[#allocation11 + $0x214] sm:$0xf]
        %v7241 = vld [vmem:[#allocation11 + $0x250] sm:$0xf]
        %v7242 = vld [vmem:[#allocation11 + $0x28c] sm:$0xf]
        %v7243 = vld [vmem:[#allocation11 + $0x2c8] sm:$0xf]
        %v7244 = vld [vmem:[#allocation11 + $0x304] sm:$0xf]
        %v7245 = vld [vmem:[#allocation11 + $0x340] sm:$0xf]
        %v7246 = vld [vmem:[#allocation11 + $0x37c] sm:$0xf]
        %v7247 = vld [vmem:[#allocation11 + $0x3b8] sm:$0xf]
        %v7248 = vld [vmem:[#allocation11 + $0x3f4] sm:$0xf]
        %v7249 = vld [vmem:[#allocation11 + $0x430] sm:$0xf]
        %v7250 = vld [vmem:[#allocation11 + $0x46c] sm:$0xf]
        %v7251 = vld [vmem:[#allocation11 + $0x4a8] sm:$0xf]
        %v7252 = vld [vmem:[#allocation11 + $0x4e4] sm:$0xf]
        %v7253 = vld [vmem:[#allocation11 + $0x520] sm:$0xf]
        %v7254 = vld [vmem:[#allocation11 + $0x55c] sm:$0xf]
        %v7255 = vld [vmem:[#allocation11 + $0x598] sm:$0xf]
        %v7256 = vld [vmem:[#allocation11 + $0x5d4] sm:$0xf]
        %v7257 = vld [vmem:[#allocation11 + $0x610] sm:$0xf]
        %v7258 = vld [vmem:[#allocation11 + $0x64c] sm:$0xf]
        %v7259 = vld [vmem:[#allocation11 + $0x688] sm:$0xf]
        %v7260 = vld [vmem:[#allocation11 + $0x6c4] sm:$0xf]
        %v7261 = vld [vmem:[#allocation11 + $0x700] sm:$0xf]
        %v7262 = vld [vmem:[#allocation11 + $0x73c] sm:$0xf]
        %v7263 = vld [vmem:[#allocation11 + $0x778] sm:$0xf]
        %v7264 = vpack.c.bf16 %v7230, %v7230
        %v7265 = vpack.c.bf16 %v7231, %v7231
        %v7266 = vld [vmem:[#allocation14 + $0x5] ss:$0 sm:$0xff]
        %v7299 = vunpack.c.l.b16 %v7232
        %v7300 = vunpack.c.l.b16 %v7233
        %v7301 = vunpack.c.l.b16 %v7234
        %v7302 = vunpack.c.l.b16 %v7235
        %v7303 = vunpack.c.l.b16 %v7236
        %v7304 = vunpack.c.l.b16 %v7237
        %v7305 = vunpack.c.l.b16 %v7238
        %v7306 = vunpack.c.l.b16 %v7239
        %v7307 = vunpack.c.l.b16 %v7240
        %v7308 = vunpack.c.l.b16 %v7241
        %v7309 = vunpack.c.l.b16 %v7242
        %v7310 = vunpack.c.l.b16 %v7243
        %v7311 = vunpack.c.l.b16 %v7244
        %v7312 = vunpack.c.l.b16 %v7245
        %v7313 = vunpack.c.l.b16 %v7246
        %v7314 = vunpack.c.l.b16 %v7247
        %v7315 = vunpack.c.l.b16 %v7248
        %v7316 = vunpack.c.l.b16 %v7249
        %v7317 = vunpack.c.l.b16 %v7250
        %v7318 = vunpack.c.l.b16 %v7251
        %v7319 = vunpack.c.l.b16 %v7252
        %v7320 = vunpack.c.l.b16 %v7253
        %v7321 = vunpack.c.l.b16 %v7254
        %v7322 = vunpack.c.l.b16 %v7255
        %v7323 = vunpack.c.l.b16 %v7256
        %v7324 = vunpack.c.l.b16 %v7257
        %v7325 = vunpack.c.l.b16 %v7258
        %v7326 = vunpack.c.l.b16 %v7259
        %v7327 = vunpack.c.l.b16 %v7260
        %v7328 = vunpack.c.l.b16 %v7261
        %v7329 = vunpack.c.l.b16 %v7262
        %v7330 = vunpack.c.l.b16 %v7263
        %v7331 = vpack.c.b16 %v7300, %v7299
        %v7332 = vpack.c.b16 %v7302, %v7301
        %v7333 = vpack.c.b16 %v7304, %v7303
        %v7334 = vpack.c.b16 %v7306, %v7305
        %v7335 = vpack.c.b16 %v7308, %v7307
        %v7336 = vpack.c.b16 %v7310, %v7309
        %v7337 = vpack.c.b16 %v7312, %v7311
        %v7338 = vpack.c.b16 %v7314, %v7313
        %v7339 = vpack.c.b16 %v7316, %v7315
        %v7340 = vpack.c.b16 %v7318, %v7317
        %v7341 = vpack.c.b16 %v7320, %v7319
        %v7342 = vpack.c.b16 %v7322, %v7321
        %v7343 = vpack.c.b16 %v7324, %v7323
        %v7344 = vpack.c.b16 %v7326, %v7325
        %v7345 = vpack.c.b16 %v7328, %v7327
        %v7346 = vpack.c.b16 %v7330, %v7329
        %7363 = vmatpush.bf16.msra.mxu0 %v7338
        %7364 = vmatpush.bf16.msra.mxu0 %v7337
        %7365 = vmatpush.bf16.msra.mxu0 %v7336
        %7366 = vmatpush.bf16.msra.mxu0 %v7335
        %7367 = vmatpush.bf16.msra.mxu0 %v7334
        %7368 = vmatpush.bf16.msra.mxu0 %v7333
        %7369 = vmatpush.bf16.msra.mxu0 %v7332
        %7370 = vmatpush.bf16.msra.mxu0 %v7331
        %7371 = vmatmul.bf16.gmra.mxu0 %v7264
        %v7372 = vpop.f32.mrf.mxu0
        %v7373 = vadd.f32 %v7266, %v7372
        %v7374 = vpop.f32.mrf.mxu0
        %7375 = vdwg.mxu0
        %7376 = vmatpush.bf16.msra.mxu0 %v7346
        %7377 = vmatpush.bf16.msra.mxu0 %v7345
        %7378 = vmatpush.bf16.msra.mxu0 %v7344
        %7379 = vmatpush.bf16.msra.mxu0 %v7343
        %7380 = vmatpush.bf16.msra.mxu0 %v7342
        %7381 = vmatpush.bf16.msra.mxu0 %v7341
        %7382 = vmatpush.bf16.msra.mxu0 %v7340
        %7383 = vmatpush.bf16.msra.mxu0 %v7339
        %7384 = vmatmul.bf16.gmra.mxu0 %v7265
        %v7385 = vpop.f32.mrf.mxu0
        %v7386 = vadd.f32 %v7373, %v7385
        %v7387 = vpop.f32.mrf.mxu0
        %7388 = vdwg.mxu0
        %v7389 = vmax.f32 %v7386, 0.0
        %v7390 = vld [vmem:[#allocation11 + $0x38] sm:$0xf]
        %v7391 = vld [vmem:[#allocation11 + $0x74] sm:$0xf]
        %v7392 = vld [vmem:[#allocation11 + $0xb0] sm:$0xf]
        %v7393 = vld [vmem:[#allocation11 + $0xec] sm:$0xf]
        %v7394 = vld [vmem:[#allocation11 + $0x128] sm:$0xf]
        %v7395 = vld [vmem:[#allocation11 + $0x164] sm:$0xf]
        %v7396 = vld [vmem:[#allocation11 + $0x1a0] sm:$0xf]
        %v7397 = vld [vmem:[#allocation11 + $0x1dc] sm:$0xf]
        %v7398 = vld [vmem:[#allocation11 + $0x218] sm:$0xf]
        %v7399 = vld [vmem:[#allocation11 + $0x254] sm:$0xf]
        %v7400 = vld [vmem:[#allocation11 + $0x290] sm:$0xf]
        %v7401 = vld [vmem:[#allocation11 + $0x2cc] sm:$0xf]
        %v7402 = vld [vmem:[#allocation11 + $0x308] sm:$0xf]
        %v7403 = vld [vmem:[#allocation11 + $0x344] sm:$0xf]
        %v7404 = vld [vmem:[#allocation11 + $0x380] sm:$0xf]
        %v7405 = vld [vmem:[#allocation11 + $0x3bc] sm:$0xf]
        %v7406 = vpack.c.bf16 %v7389, %v7389
        %v7407 = vld [vmem:[#allocation14 + $0x6] ss:$0 sm:$0xff]
        %v7424 = vunpack.c.l.b16 %v7390
        %v7425 = vunpack.c.l.b16 %v7391
        %v7426 = vunpack.c.l.b16 %v7392
        %v7427 = vunpack.c.l.b16 %v7393
        %v7428 = vunpack.c.l.b16 %v7394
        %v7429 = vunpack.c.l.b16 %v7395
        %v7430 = vunpack.c.l.b16 %v7396
        %v7431 = vunpack.c.l.b16 %v7397
        %v7432 = vunpack.c.l.b16 %v7398
        %v7433 = vunpack.c.l.b16 %v7399
        %v7434 = vunpack.c.l.b16 %v7400
        %v7435 = vunpack.c.l.b16 %v7401
        %v7436 = vunpack.c.l.b16 %v7402
        %v7437 = vunpack.c.l.b16 %v7403
        %v7438 = vunpack.c.l.b16 %v7404
        %v7439 = vunpack.c.l.b16 %v7405
        %v7440 = vpack.c.b16 %v7425, %v7424
        %v7441 = vpack.c.b16 %v7427, %v7426
        %v7442 = vpack.c.b16 %v7429, %v7428
        %v7443 = vpack.c.b16 %v7431, %v7430
        %v7444 = vpack.c.b16 %v7433, %v7432
        %v7445 = vpack.c.b16 %v7435, %v7434
        %v7446 = vpack.c.b16 %v7437, %v7436
        %v7447 = vpack.c.b16 %v7439, %v7438
        %7456 = vmatpush.bf16.msra.mxu0 %v7447
        %7457 = vmatpush.bf16.msra.mxu0 %v7446
        %7458 = vmatpush.bf16.msra.mxu0 %v7445
        %7459 = vmatpush.bf16.msra.mxu0 %v7444
        %7460 = vmatpush.bf16.msra.mxu0 %v7443
        %7461 = vmatpush.bf16.msra.mxu0 %v7442
        %7462 = vmatpush.bf16.msra.mxu0 %v7441
        %7463 = vmatpush.bf16.msra.mxu0 %v7440
        %7464 = vmatmul.bf16.gmra.mxu0 %v7406
        %v7465 = vpop.f32.mrf.mxu0
        %v7466 = vadd.f32 %v7407, %v7465
        %v7467 = vpop.f32.mrf.mxu0
        %7468 = vdwg.mxu0
        %7469 = vst [vmem:[%s568] sm:$0x3] %v7466
        %s7470 = sand.u32 %s278, 1
        %s7471 = scalar_lea.sflag [#allocation4], %s7470
        %s7472 = sand.u32 %s278, 1
        %s7473 = smul.addr %s7472, 2
        %s7474 = scalar_lea.vmem [#allocation16], %s7473
        // Predicated region
        $region93: #{tpu_custom_call.1} parent=59 // pred_check
          %p7475 = pneg %p288
        $region94: #{tpu_custom_call.1} parent=59 // pred_check_branch
          %7477 = sbr.rel (%p7475) target = $region96
        $region95: #{tpu_custom_call.1} parent=59 // pred_region
          %7479 = vsyncadd %s7471, 0
          %s7480 = smul.addr %s35, 2
          %s7481 = scalar_lea.hbm %s10, %s7480
          %s7483 = sshll.u32 %s7474, 4
          %s7484 = int_to_ptr.vmem [resolvable:$true] %s7483
          %s7485 = sshll.u32 %s7481, 4
          %s7486 = int_to_ptr.hbm [resolvable:$true] %s7485
          %7488 = dma.vmem_to_hbm [thread:$0]  %s7484, 32, %s7486, %s7471
        $region96: #{tpu_custom_call.1} parent=59 // pred_fallthru
          _
      $region60: #{tpu_custom_call.1} parent=5 // pred_fallthru
        _
      %p7489 = scmp.le.s32.totalorder 2, %s30
      // Predicated region
      $region97: #{tpu_custom_call.1} parent=5 // pred_check
        %p7490 = pneg %p7489
      $region98: #{tpu_custom_call.1} parent=5 // pred_check_branch
        %7492 = sbr.rel (%p7490) target = $region100
      $region99: #{tpu_custom_call.1} parent=5 // pred_region
        %s7493 = ssub.s32 %s30, 2
        // Predicated region
        $region101: #{tpu_custom_call.1} parent=99 // pred_check
          %p7494 = pneg %p294
        $region102: #{tpu_custom_call.1} parent=99 // pred_check_branch
          %7496 = sbr.rel (%p7494) target = $region104
        $region103: #{tpu_custom_call.1} parent=99 // pred_region
          %s7497 = sand.u32 %s279, 1
          %s7498 = scalar_lea.sflag [#allocation4], %s7497
          %s7499 = sand.u32 %s279, 1
          %s7500 = smul.addr %s7499, 2
          %s7501 = scalar_lea.vmem [#allocation16], %s7500
          %7503 = dma.done %s7498, 32
        $region104: #{tpu_custom_call.1} parent=99 // pred_fallthru
          _
      $region100: #{tpu_custom_call.1} parent=5 // pred_fallthru
        _
    $region6: #{tpu_custom_call.1} parent=1 // loop_footer
      %s34 = sadd.s32 1, %s30
    $region7: #{tpu_custom_call.1} parent=1 // loop_footer_branch
      %29 = sbr.rel target = $region3
    $region8: #{tpu_custom_call.1} parent=1 // loop_exit
      _
    %7504 = vsyncpa [#allocation3], 1
    %s7505 = scalar_lea.sflag [#allocation3], 1
    %7506 = vsyncpa %s7505, 1
    %7507 = vsyncpa [#allocation6], 1
    %s7508 = scalar_lea.sflag [#allocation6], 1
    %7509 = vsyncpa %s7508, 1
    %7510 = vsyncpa [#allocation9], 1
    %s7511 = scalar_lea.sflag [#allocation9], 1
    %7512 = vsyncpa %s7511, 1
    %7513 = vsyncpa [#allocation12], 1
    %7514 = vsyncpa [#allocation15], 1
    %7515 = vsyncpa [#allocation4], 1
    %s7516 = scalar_lea.sflag [#allocation4], 1
    %7517 = vsyncpa %s7516, 1

</llo_original>
